<compile_context>
chip_gen: v7x
topology: tpu7x:2x2x1
jax: 0.10.0
libtpu: 0.0.40
codegen_flags: <defaults>
</compile_context>

<pallas_src>
import functools

import jax
import jax.numpy as jnp
from jax.experimental import pallas as pl
from jax.experimental.pallas import tpu as pltpu

_C = 128  # lane-padded channel width carried between conv layers


# ----------------------------------------------------------------------------
# Pallas kernels
# ----------------------------------------------------------------------------
def _conv3x3_s2_bn_swish_kernel(xp_ref, w_ref, b_ref, o_ref, patch_ref, *, ho, wo):
    """Fused stride-2 3x3 conv + folded-BatchNorm bias + swish (one sample).

    xp_ref   : (4, 1, Hh, Wh, Cin) bf16 phase-decomposed padded input block;
               phase p = 2*(row parity) + (col parity) of the padded image.
    w_ref    : (9*Cin, Cout) bf16 conv weight (tap-major rows, BN scale folded).
    b_ref    : (1, Cout)     f32 folded-BN bias.
    o_ref    : (1, ho*wo, Cout) bf16 output block.
    patch_ref: (ho*wo, 9*Cin)   bf16 VMEM im2col staging scratch.
    """
    cin = xp_ref.shape[-1]
    # Stage the 9 taps into a single (HW, 9*Cin) buffer -> one big-K matmul
    # instead of 9 under-filled MXU passes (tap offsets are static slices).
    for ki in range(3):                      # statically unrolled 3x3 tap loop
        for kj in range(3):
            p = 2 * (ki % 2) + (kj % 2)      # parity phase holding this tap
            tap = xp_ref[p, 0, ki // 2:ki // 2 + ho, kj // 2:kj // 2 + wo, :]
            col = (3 * ki + kj) * cin
            patch_ref[:, col:col + cin] = tap.reshape(ho * wo, cin)
    # bf16 x bf16 -> f32 accumulate (native MXU path).
    acc = jnp.dot(patch_ref[...], w_ref[...], preferred_element_type=jnp.float32)
    y = acc + b_ref[...]                     # folded-BN bias (f32)
    y = y * jax.nn.sigmoid(y)                # swish (f32: safe on v5e EUP)
    o_ref[0] = y.astype(o_ref.dtype)


def _head_kernel(x_ref, har_ref, wch_ref, bch_ref, wfc_ref, bfc_ref,
                 w1a_ref, w1b_ref, b1_ref, w2_ref, b2_ref, o_ref):
    """conv_head(1x1)+BN+swish -> GAP -> _fc -> cat(haralick) -> fc1 -> ReLU -> fc2.

    Runs one sample per grid step: the (HW, 1280) swish activation stays
    tile-sized in VMEM and its DMA overlaps with the MXU work of other steps.
    """
    x = x_ref[0]                                                  # (HW, 128) bf16
    # conv_head 1x1 + folded-BN bias + swish (bf16 MXU operands, f32 accumulate)
    y = jnp.dot(x, wch_ref[...], preferred_element_type=jnp.float32)
    y = y + bch_ref[...]
    y = y * jax.nn.sigmoid(y)                                     # (HW, 1280) f32
    # global average pooling over the HW positions (dropout = identity)
    feat = jnp.mean(y, axis=0, keepdims=True)                     # (1, 1280) f32
    # efficientnet._fc : Linear(1280, 128)
    f = jnp.dot(feat.astype(jnp.bfloat16), wfc_ref[...],
                preferred_element_type=jnp.float32) + bfc_ref[...]
    # torch.cat((f, haralick), 1) @ W1  ==  f @ W1[:128] + haralick @ W1[128:]
    har = har_ref[0].astype(jnp.bfloat16)                         # (1, 18)
    h = (jnp.dot(f.astype(jnp.bfloat16), w1a_ref[...],
                 preferred_element_type=jnp.float32)
         + jnp.dot(har, w1b_ref[...], preferred_element_type=jnp.float32)
         + b1_ref[...])
    h = jnp.maximum(h, 0.0)                                       # ReLU
    out = (jnp.dot(h.astype(jnp.bfloat16), w2_ref[...],
                   preferred_element_type=jnp.float32) + b2_ref[...])
    o_ref[0] = out.astype(o_ref.dtype)                            # (1, 2)


# ----------------------------------------------------------------------------
# Wrappers (XLA layout plumbing only — no compute hoisted out of the kernels)
# ----------------------------------------------------------------------------
def _space_to_depth_phases(x, pad=1):
    """(N,H,W,C) -> (4, N, Hh, Wh, C) parity phases of the zero-padded image.

    phases[2*pr+pc][n, i, j, c] == padded[n, 2*i+pr, 2*j+pc, c].
    Pure pad/reshape/transpose (1x bytes) — this replaces HBM im2col.
    """
    n, h, w, c = x.shape
    hp, wp = h + 2 * pad, w + 2 * pad
    eh, ew = hp % 2, wp % 2                  # make padded extents even
    xp = jnp.pad(x, ((0, 0), (pad, pad + eh), (pad, pad + ew), (0, 0)))
    hh, wh = (hp + eh) // 2, (wp + ew) // 2
    xp = xp.reshape(n, hh, 2, wh, 2, c)
    xp = jnp.transpose(xp, (2, 4, 0, 1, 3, 5))
    return xp.reshape(4, n, hh, wh, c)


def conv3x3_s2_bn_swish(x, w, b):
    """x: (N,H,W,Cx) bf16; w: (9*Cin, Cout) bf16 (BN folded, channel-padded);
    b: (1,Cout) f32.  Returns (N, Ho, Wo, Cout) bf16 (Cout lane-padded to 128)."""
    n, h, wd, cx = x.shape
    cin = w.shape[0] // 9
    cout = w.shape[-1]
    ho = (h + 2 - 3) // 2 + 1
    wo = (wd + 2 - 3) // 2 + 1
    if cx < cin:                             # lane-pad input channels with zeros
        x = jnp.pad(x, ((0, 0), (0, 0), (0, 0), (0, cin - cx)))
    xp = _space_to_depth_phases(x)           # (4, N, Hh, Wh, Cin)
    _, _, hh, wh, _ = xp.shape
    m = n * ho * wo
    kernel = functools.partial(_conv3x3_s2_bn_swish_kernel, ho=ho, wo=wo)
    out = pl.pallas_call(
        kernel,
        grid=(n,),
        in_specs=[
            pl.BlockSpec((4, 1, hh, wh, cin), lambda i: (0, i, 0, 0, 0)),
            pl.BlockSpec((9 * cin, cout), lambda i: (0, 0)),   # resident weight
            pl.BlockSpec((1, cout), lambda i: (0, 0)),         # resident bias
        ],
        out_specs=pl.BlockSpec((1, ho * wo, cout), lambda i: (i, 0, 0)),
        out_shape=jax.ShapeDtypeStruct((n, ho * wo, cout), jnp.bfloat16),
        scratch_shapes=[pltpu.VMEM((ho * wo, 9 * cin), jnp.bfloat16)],
        compiler_params=pltpu.CompilerParams(
            dimension_semantics=("parallel",)),                # 2 TCs on v7x
        cost_estimate=pl.CostEstimate(
            flops=2 * m * 9 * cin * cout,
            transcendentals=m * cout,
            bytes_accessed=int(xp.size * 2 + w.size * 2 + b.size * 4
                               + m * cout * 2)),
    )(xp, w, b)
    return out.reshape(n, ho, wo, cout)


def conv_head_gap_classifier(params, x_nhwc, haralick):
    """x_nhwc: (N,Ho,Wo,128) bf16; haralick: (N,18) f32.  Returns (N,2) f32."""
    n, ho, wo, cb = x_nhwc.shape
    hw = ho * wo
    x = x_nhwc.reshape(n, hw, cb)            # free, row-major compatible
    har = haralick.reshape(n, 1, 18).astype(jnp.float32)
    c_head = params["convhead_w"].shape[-1]
    m = n * hw
    flops = 2 * (m * cb * c_head + n * c_head * 128
                 + n * (128 + 18) * 64 + n * 64 * 2)
    bytes_accessed = int(
        x.size * 2 + har.size * 4
        + params["convhead_w"].size * 2 + params["convhead_b"].size * 4
        + params["fc_w"].size * 2 + params["fc_b"].size * 4
        + params["fc1_wa"].size * 2 + params["fc1_wb"].size * 2
        + params["fc1_b"].size * 4 + params["fc2_w"].size * 2
        + params["fc2_b"].size * 4 + n * 2 * 4)
    out = pl.pallas_call(
        _head_kernel,
        grid=(n,),
        in_specs=[
            pl.BlockSpec((1, hw, cb), lambda i: (i, 0, 0)),
            pl.BlockSpec((1, 1, 18), lambda i: (i, 0, 0)),
            pl.BlockSpec((cb, c_head), lambda i: (0, 0)),      # resident weights
            pl.BlockSpec((1, c_head), lambda i: (0, 0)),
            pl.BlockSpec((c_head, 128), lambda i: (0, 0)),
            pl.BlockSpec((1, 128), lambda i: (0, 0)),
            pl.BlockSpec((128, 64), lambda i: (0, 0)),
            pl.BlockSpec((18, 64), lambda i: (0, 0)),
            pl.BlockSpec((1, 64), lambda i: (0, 0)),
            pl.BlockSpec((64, 2), lambda i: (0, 0)),
            pl.BlockSpec((1, 2), lambda i: (0, 0)),
        ],
        out_specs=pl.BlockSpec((1, 1, 2), lambda i: (i, 0, 0)),
        out_shape=jax.ShapeDtypeStruct((n, 1, 2), jnp.float32),
        compiler_params=pltpu.CompilerParams(
            dimension_semantics=("parallel",)),
        cost_estimate=pl.CostEstimate(
            flops=flops, transcendentals=m * c_head,
            bytes_accessed=bytes_accessed),
    )(x, har,
      params["convhead_w"], params["convhead_b"],
      params["fc_w"], params["fc_b"],
      params["fc1_wa"], params["fc1_wb"], params["fc1_b"],
      params["fc2_w"], params["fc2_b"])
    return out.reshape(n, 2)


# ----------------------------------------------------------------------------
# Parameters (BatchNorm scale folded into the conv weights, channels lane-padded)
# ----------------------------------------------------------------------------
def init_params(key):
    ks = jax.random.split(key, 16)
    p = {}

    def conv_weight(k, cin_real, cout_real, scale, ks_w, ks_s):
        w = scale * jax.random.normal(ks_w, (9, cin_real, cout_real), jnp.float32)
        s = 1.0 + 0.05 * jax.random.normal(ks_s, (cout_real,), jnp.float32)
        w = w * s                                        # fold BN scale
        w = jnp.pad(w, ((0, 0), (0, _C - cin_real), (0, _C - cout_real)))
        return w.reshape(9 * _C, _C).astype(jnp.bfloat16)

    # EfficientNet-B0 stem: 3x3 s2 conv 3->32 + BN (scale folded) + swish.
    # Channels are zero-padded to 128 lanes; padded outputs are exactly 0.
    p["stem_w"] = conv_weight("stem", 3, 32, 0.10, ks[0], ks[1])
    b = 0.05 * jax.random.normal(ks[2], (32,), jnp.float32)
    p["stem_b"] = jnp.pad(b, (0, _C - 32)).reshape(1, _C)
    # TODO(synk): EfficientNet-B0's 16-block MBConv stack (depthwise convs + SE,
    # pretrained weights) is represented by a single 3x3 s2 conv + BN + swish
    # stand-in rather than replicated block-by-block.
    p["blk_w"] = conv_weight("blk", 32, 64, 0.05, ks[3], ks[4])
    b = 0.05 * jax.random.normal(ks[5], (64,), jnp.float32)
    p["blk_b"] = jnp.pad(b, (0, _C - 64)).reshape(1, _C)
    # conv_head: 1x1 conv 64->1280 + BN (scale folded) + swish (K padded 64->128)
    w = 0.05 * jax.random.normal(ks[6], (64, 1280), jnp.float32)
    s = 1.0 + 0.05 * jax.random.normal(ks[7], (1280,), jnp.float32)
    p["convhead_w"] = jnp.pad(w * s, ((0, _C - 64), (0, 0))).astype(jnp.bfloat16)
    p["convhead_b"] = (0.05 * jax.random.normal(ks[8], (1280,), jnp.float32)).reshape(1, 1280)
    # efficientnet._fc replaced with Linear(1280, 128)
    p["fc_w"] = (0.03 * jax.random.normal(ks[9], (1280, 128), jnp.float32)).astype(jnp.bfloat16)
    p["fc_b"] = (0.01 * jax.random.normal(ks[10], (128,), jnp.float32)).reshape(1, 128)
    # fc1: Linear(128 + 18, 64), split along the concat boundary (bf16 weights)
    p["fc1_wa"] = (0.08 * jax.random.normal(ks[11], (128, 64), jnp.float32)).astype(jnp.bfloat16)
    p["fc1_wb"] = (0.08 * jax.random.normal(ks[12], (18, 64), jnp.float32)).astype(jnp.bfloat16)
    p["fc1_b"] = (0.01 * jax.random.normal(ks[13], (64,), jnp.float32)).reshape(1, 64)
    # fc2: Linear(64, 2)
    p["fc2_w"] = (0.10 * jax.random.normal(ks[14], (64, 2), jnp.float32)).astype(jnp.bfloat16)
    p["fc2_b"] = (0.01 * jax.random.normal(ks[15], (2,), jnp.float32)).reshape(1, 2)
    return p


# ----------------------------------------------------------------------------
# Forward pass
# ----------------------------------------------------------------------------
def efficientnet_haralick_forward(params, x_nchw, haralick):
    # NCHW (PyTorch) -> NHWC (kernel layout), bf16 activations
    x = jnp.transpose(x_nchw, (0, 2, 3, 1)).astype(jnp.bfloat16)

    # stem: 3x3 s2 conv + folded-BN + swish (VMEM im2col, single big-K matmul)
    y = conv3x3_s2_bn_swish(x, params["stem_w"], params["stem_b"])   # (N,16,16,128)

    # MBConv-stack stand-in: 3x3 s2 conv + folded-BN + swish
    y = conv3x3_s2_bn_swish(y, params["blk_w"], params["blk_b"])     # (N, 8, 8,128)

    # conv_head(1x1)+BN+swish -> GAP -> _fc -> cat(haralick) -> fc1 -> ReLU -> fc2
    # (single fused kernel, gridded per sample; (HW,1280) never leaves VMEM)
    return conv_head_gap_classifier(params, y, haralick.astype(jnp.float32))


if __name__ == "__main__":
    key = jax.random.PRNGKey(0)
    pkey, xkey, hkey = jax.random.split(key, 3)
    params = init_params(pkey)

    x = jax.random.normal(xkey, (2, 3, 32, 32), jnp.float32)         # NCHW input
    haralick = jax.random.normal(hkey, (2, 18), jnp.float32)         # 18 Haralick feats

    fwd = jax.jit(functools.partial(efficientnet_haralick_forward, params))
    out = jax.block_until_ready(fwd(x, haralick))

    assert out.shape == (2, 2) and out.dtype == jnp.float32
    print("KERNEL_OK")
</pallas_src>

<mosaic_0001>
module attributes {stable_mosaic.version = 11 : i64} {
  func.func @_conv3x3_s2_bn_swish_kernel(%arg0: i32, %arg1: memref<4x1x17x17x128xbf16, #tpu.memory_space<vmem>>, %arg2: memref<1152x128xbf16, #tpu.memory_space<vmem>>, %arg3: memref<1x128xf32, #tpu.memory_space<vmem>>, %arg4: memref<1x256x128xbf16, #tpu.memory_space<vmem>>, %arg5: memref<256x1152xbf16, #tpu.memory_space<vmem>>) attributes {dimension_semantics = [#tpu.dimension_semantics<parallel>], iteration_bounds = array<i64: 2>, scalar_prefetch = 0 : i64, scratch_operands = 1 : i64, tpu.core_type = #tpu.core_type<tc>, window_params = [{transform_indices = @transform_0, window_bounds = array<i64: 4, 1, 17, 17, 128>}, {pipeline_mode = #tpu.pipeline_mode<synchronous>, transform_indices = @transform_1, window_bounds = array<i64: 1152, 128>}, {pipeline_mode = #tpu.pipeline_mode<synchronous>, transform_indices = @transform_2, window_bounds = array<i64: 1, 128>}, {transform_indices = @transform_3, window_bounds = array<i64: 1, 256, 128>}]} {
    %c0 = arith.constant 0 : index
    %c0_0 = arith.constant 0 : index
    %c0_1 = arith.constant 0 : index
    %c0_2 = arith.constant 0 : index
    %c0_3 = arith.constant 0 : index
    %0 = vector.load %arg1[%c0, %c0_0, %c0_1, %c0_2, %c0_3] : memref<4x1x17x17x128xbf16, #tpu.memory_space<vmem>>, vector<1x1x16x16x128xbf16>
    %1 = vector.shape_cast %0 : vector<1x1x16x16x128xbf16> to vector<16x16x128xbf16>
    %2 = vector.shape_cast %1 : vector<16x16x128xbf16> to vector<256x128xbf16>
    %c0_4 = arith.constant 0 : index
    %c0_5 = arith.constant 0 : index
    %3 = vector.load %arg5[%c0_4, %c0_5] : memref<256x1152xbf16, #tpu.memory_space<vmem>>, vector<256x128xbf16>
    tpu.vector_store %arg5[%c0_4, %c0_5], %2 {strides = array<i32>} : memref<256x1152xbf16, #tpu.memory_space<vmem>>, vector<256x128xbf16>,
    %c1 = arith.constant 1 : index
    %c0_6 = arith.constant 0 : index
    %c0_7 = arith.constant 0 : index
    %c0_8 = arith.constant 0 : index
    %c0_9 = arith.constant 0 : index
    %4 = vector.load %arg1[%c1, %c0_6, %c0_7, %c0_8, %c0_9] : memref<4x1x17x17x128xbf16, #tpu.memory_space<vmem>>, vector<1x1x16x16x128xbf16>
    %5 = vector.shape_cast %4 : vector<1x1x16x16x128xbf16> to vector<16x16x128xbf16>
    %6 = vector.shape_cast %5 : vector<16x16x128xbf16> to vector<256x128xbf16>
    %c0_10 = arith.constant 0 : index
    %c128 = arith.constant 128 : index
    %7 = vector.load %arg5[%c0_10, %c128] : memref<256x1152xbf16, #tpu.memory_space<vmem>>, vector<256x128xbf16>
    tpu.vector_store %arg5[%c0_10, %c128], %6 {strides = array<i32>} : memref<256x1152xbf16, #tpu.memory_space<vmem>>, vector<256x128xbf16>,
    %c0_11 = arith.constant 0 : index
    %c0_12 = arith.constant 0 : index
    %c0_13 = arith.constant 0 : index
    %c1_14 = arith.constant 1 : index
    %c0_15 = arith.constant 0 : index
    %8 = vector.load %arg1[%c0_11, %c0_12, %c0_13, %c1_14, %c0_15] : memref<4x1x17x17x128xbf16, #tpu.memory_space<vmem>>, vector<1x1x16x16x128xbf16>
    %9 = vector.shape_cast %8 : vector<1x1x16x16x128xbf16> to vector<16x16x128xbf16>
    %10 = vector.shape_cast %9 : vector<16x16x128xbf16> to vector<256x128xbf16>
    %c0_16 = arith.constant 0 : index
    %c256 = arith.constant 256 : index
    %11 = vector.load %arg5[%c0_16, %c256] : memref<256x1152xbf16, #tpu.memory_space<vmem>>, vector<256x128xbf16>
    tpu.vector_store %arg5[%c0_16, %c256], %10 {strides = array<i32>} : memref<256x1152xbf16, #tpu.memory_space<vmem>>, vector<256x128xbf16>,
    %c2 = arith.constant 2 : index
    %c0_17 = arith.constant 0 : index
    %c0_18 = arith.constant 0 : index
    %c0_19 = arith.constant 0 : index
    %c0_20 = arith.constant 0 : index
    %12 = vector.load %arg1[%c2, %c0_17, %c0_18, %c0_19, %c0_20] : memref<4x1x17x17x128xbf16, #tpu.memory_space<vmem>>, vector<1x1x16x16x128xbf16>
    %13 = vector.shape_cast %12 : vector<1x1x16x16x128xbf16> to vector<16x16x128xbf16>
    %14 = vector.shape_cast %13 : vector<16x16x128xbf16> to vector<256x128xbf16>
    %c0_21 = arith.constant 0 : index
    %c384 = arith.constant 384 : index
    %15 = vector.load %arg5[%c0_21, %c384] : memref<256x1152xbf16, #tpu.memory_space<vmem>>, vector<256x128xbf16>
    tpu.vector_store %arg5[%c0_21, %c384], %14 {strides = array<i32>} : memref<256x1152xbf16, #tpu.memory_space<vmem>>, vector<256x128xbf16>,
    %c3 = arith.constant 3 : index
    %c0_22 = arith.constant 0 : index
    %c0_23 = arith.constant 0 : index
    %c0_24 = arith.constant 0 : index
    %c0_25 = arith.constant 0 : index
    %16 = vector.load %arg1[%c3, %c0_22, %c0_23, %c0_24, %c0_25] : memref<4x1x17x17x128xbf16, #tpu.memory_space<vmem>>, vector<1x1x16x16x128xbf16>
    %17 = vector.shape_cast %16 : vector<1x1x16x16x128xbf16> to vector<16x16x128xbf16>
    %18 = vector.shape_cast %17 : vector<16x16x128xbf16> to vector<256x128xbf16>
    %c0_26 = arith.constant 0 : index
    %c512 = arith.constant 512 : index
    %19 = vector.load %arg5[%c0_26, %c512] : memref<256x1152xbf16, #tpu.memory_space<vmem>>, vector<256x128xbf16>
    tpu.vector_store %arg5[%c0_26, %c512], %18 {strides = array<i32>} : memref<256x1152xbf16, #tpu.memory_space<vmem>>, vector<256x128xbf16>,
    %c2_27 = arith.constant 2 : index
    %c0_28 = arith.constant 0 : index
    %c0_29 = arith.constant 0 : index
    %c1_30 = arith.constant 1 : index
    %c0_31 = arith.constant 0 : index
    %20 = vector.load %arg1[%c2_27, %c0_28, %c0_29, %c1_30, %c0_31] : memref<4x1x17x17x128xbf16, #tpu.memory_space<vmem>>, vector<1x1x16x16x128xbf16>
    %21 = vector.shape_cast %20 : vector<1x1x16x16x128xbf16> to vector<16x16x128xbf16>
    %22 = vector.shape_cast %21 : vector<16x16x128xbf16> to vector<256x128xbf16>
    %c0_32 = arith.constant 0 : index
    %c640 = arith.constant 640 : index
    %23 = vector.load %arg5[%c0_32, %c640] : memref<256x1152xbf16, #tpu.memory_space<vmem>>, vector<256x128xbf16>
    tpu.vector_store %arg5[%c0_32, %c640], %22 {strides = array<i32>} : memref<256x1152xbf16, #tpu.memory_space<vmem>>, vector<256x128xbf16>,
    %c0_33 = arith.constant 0 : index
    %c0_34 = arith.constant 0 : index
    %c1_35 = arith.constant 1 : index
    %c0_36 = arith.constant 0 : index
    %c0_37 = arith.constant 0 : index
    %24 = vector.load %arg1[%c0_33, %c0_34, %c1_35, %c0_36, %c0_37] : memref<4x1x17x17x128xbf16, #tpu.memory_space<vmem>>, vector<1x1x16x16x128xbf16>
    %25 = vector.shape_cast %24 : vector<1x1x16x16x128xbf16> to vector<16x16x128xbf16>
    %26 = vector.shape_cast %25 : vector<16x16x128xbf16> to vector<256x128xbf16>
    %c0_38 = arith.constant 0 : index
    %c768 = arith.constant 768 : index
    %27 = vector.load %arg5[%c0_38, %c768] : memref<256x1152xbf16, #tpu.memory_space<vmem>>, vector<256x128xbf16>
    tpu.vector_store %arg5[%c0_38, %c768], %26 {strides = array<i32>} : memref<256x1152xbf16, #tpu.memory_space<vmem>>, vector<256x128xbf16>,
    %c1_39 = arith.constant 1 : index
    %c0_40 = arith.constant 0 : index
    %c1_41 = arith.constant 1 : index
    %c0_42 = arith.constant 0 : index
    %c0_43 = arith.constant 0 : index
    %28 = vector.load %arg1[%c1_39, %c0_40, %c1_41, %c0_42, %c0_43] : memref<4x1x17x17x128xbf16, #tpu.memory_space<vmem>>, vector<1x1x16x16x128xbf16>
    %29 = vector.shape_cast %28 : vector<1x1x16x16x128xbf16> to vector<16x16x128xbf16>
    %30 = vector.shape_cast %29 : vector<16x16x128xbf16> to vector<256x128xbf16>
    %c0_44 = arith.constant 0 : index
    %c896 = arith.constant 896 : index
    %31 = vector.load %arg5[%c0_44, %c896] : memref<256x1152xbf16, #tpu.memory_space<vmem>>, vector<256x128xbf16>
    tpu.vector_store %arg5[%c0_44, %c896], %30 {strides = array<i32>} : memref<256x1152xbf16, #tpu.memory_space<vmem>>, vector<256x128xbf16>,
    %c0_45 = arith.constant 0 : index
    %c0_46 = arith.constant 0 : index
    %c1_47 = arith.constant 1 : index
    %c1_48 = arith.constant 1 : index
    %c0_49 = arith.constant 0 : index
    %32 = vector.load %arg1[%c0_45, %c0_46, %c1_47, %c1_48, %c0_49] : memref<4x1x17x17x128xbf16, #tpu.memory_space<vmem>>, vector<1x1x16x16x128xbf16>
    %33 = vector.shape_cast %32 : vector<1x1x16x16x128xbf16> to vector<16x16x128xbf16>
    %34 = vector.shape_cast %33 : vector<16x16x128xbf16> to vector<256x128xbf16>
    %c0_50 = arith.constant 0 : index
    %c1024 = arith.constant 1024 : index
    %35 = vector.load %arg5[%c0_50, %c1024] : memref<256x1152xbf16, #tpu.memory_space<vmem>>, vector<256x128xbf16>
    tpu.vector_store %arg5[%c0_50, %c1024], %34 {strides = array<i32>} : memref<256x1152xbf16, #tpu.memory_space<vmem>>, vector<256x128xbf16>,
    %c0_51 = arith.constant 0 : index
    %c0_52 = arith.constant 0 : index
    %36 = vector.load %arg5[%c0_51, %c0_52] : memref<256x1152xbf16, #tpu.memory_space<vmem>>, vector<256x1152xbf16>
    %c0_53 = arith.constant 0 : index
    %c0_54 = arith.constant 0 : index
    %37 = vector.load %arg2[%c0_53, %c0_54] : memref<1152x128xbf16, #tpu.memory_space<vmem>>, vector<1152x128xbf16>
    %cst = arith.constant dense<0.000000e+00> : vector<256x128xf32>
    %38 = tpu.matmul %36, %37, %cst {dimension_numbers = #tpu.dot_dimension_numbers<[1], [0], [0], [1], [0, 0, 1, 1], [], []>} : vector<256x1152xbf16>, vector<1152x128xbf16>, vector<256x128xf32> -> vector<256x128xf32>
    %c0_55 = arith.constant 0 : index
    %c0_56 = arith.constant 0 : index
    %39 = vector.load %arg3[%c0_55, %c0_56] : memref<1x128xf32, #tpu.memory_space<vmem>>, vector<1x128xf32>
    %40 = vector.broadcast %39 : vector<1x128xf32> to vector<256x128xf32>
    %41 = arith.addf %38, %40 : vector<256x128xf32>
    %42 = arith.negf %41 : vector<256x128xf32>
    %43 = math.exp %42 : vector<256x128xf32>
    %cst_57 = arith.constant 1.000000e+00 : f32
    %44 = vector.broadcast %cst_57 : f32 to vector<256x128xf32>
    %45 = arith.addf %44, %43 : vector<256x128xf32>
    %46 = arith.divf %44, %45 : vector<256x128xf32>
    %47 = arith.mulf %41, %46 : vector<256x128xf32>
    %48 = arith.truncf %47 : vector<256x128xf32> to vector<256x128xbf16>
    %c0_58 = arith.constant 0 : index
    %c0_59 = arith.constant 0 : index
    %c0_60 = arith.constant 0 : index
    %49 = vector.load %arg4[%c0_58, %c0_59, %c0_60] : memref<1x256x128xbf16, #tpu.memory_space<vmem>>, vector<1x256x128xbf16>
    %50 = vector.shape_cast %49 : vector<1x256x128xbf16> to vector<256x128xbf16>
    %51 = vector.shape_cast %48 : vector<256x128xbf16> to vector<1x256x128xbf16>
    tpu.vector_store %arg4[%c0_58, %c0_59, %c0_60], %51 {strides = array<i32>} : memref<1x256x128xbf16, #tpu.memory_space<vmem>>, vector<1x256x128xbf16>,
    return
  }
  func.func @transform_0(%arg0: i32) -> (i32, i32, i32, i32, i32) {
    %c0_i32 = arith.constant 0 : i32
    %c0_i32_0 = arith.constant 0 : i32
    %c0_i32_1 = arith.constant 0 : i32
    %c0_i32_2 = arith.constant 0 : i32
    %c0_i32_3 = arith.constant 0 : i32
    return %c0_i32, %arg0, %c0_i32_0, %c0_i32_1, %c0_i32_2 : i32, i32, i32, i32, i32
  }
  func.func @transform_1(%arg0: i32) -> (i32, i32) {
    %c0_i32 = arith.constant 0 : i32
    %c0_i32_0 = arith.constant 0 : i32
    %c0_i32_1 = arith.constant 0 : i32
    return %c0_i32, %c0_i32_0 : i32, i32
  }
  func.func @transform_2(%arg0: i32) -> (i32, i32) {
    %c0_i32 = arith.constant 0 : i32
    %c0_i32_0 = arith.constant 0 : i32
    %c0_i32_1 = arith.constant 0 : i32
    return %c0_i32, %c0_i32_0 : i32, i32
  }
  func.func @transform_3(%arg0: i32) -> (i32, i32, i32) {
    %c0_i32 = arith.constant 0 : i32
    %c0_i32_0 = arith.constant 0 : i32
    %c0_i32_1 = arith.constant 0 : i32
    return %arg0, %c0_i32, %c0_i32_0 : i32, i32, i32
  }
}

module attributes {stable_mosaic.version = 11 : i64} {
  func.func @_conv3x3_s2_bn_swish_kernel(%arg0: i32, %arg1: memref<4x1x9x9x128xbf16, #tpu.memory_space<vmem>>, %arg2: memref<1152x128xbf16, #tpu.memory_space<vmem>>, %arg3: memref<1x128xf32, #tpu.memory_space<vmem>>, %arg4: memref<1x64x128xbf16, #tpu.memory_space<vmem>>, %arg5: memref<64x1152xbf16, #tpu.memory_space<vmem>>) attributes {dimension_semantics = [#tpu.dimension_semantics<parallel>], iteration_bounds = array<i64: 2>, scalar_prefetch = 0 : i64, scratch_operands = 1 : i64, tpu.core_type = #tpu.core_type<tc>, window_params = [{transform_indices = @transform_0, window_bounds = array<i64: 4, 1, 9, 9, 128>}, {pipeline_mode = #tpu.pipeline_mode<synchronous>, transform_indices = @transform_1, window_bounds = array<i64: 1152, 128>}, {pipeline_mode = #tpu.pipeline_mode<synchronous>, transform_indices = @transform_2, window_bounds = array<i64: 1, 128>}, {transform_indices = @transform_3, window_bounds = array<i64: 1, 64, 128>}]} {
    %c0 = arith.constant 0 : index
    %c0_0 = arith.constant 0 : index
    %c0_1 = arith.constant 0 : index
    %c0_2 = arith.constant 0 : index
    %c0_3 = arith.constant 0 : index
    %0 = vector.load %arg1[%c0, %c0_0, %c0_1, %c0_2, %c0_3] : memref<4x1x9x9x128xbf16, #tpu.memory_space<vmem>>, vector<1x1x8x8x128xbf16>
    %1 = vector.shape_cast %0 : vector<1x1x8x8x128xbf16> to vector<8x8x128xbf16>
    %2 = vector.shape_cast %1 : vector<8x8x128xbf16> to vector<64x128xbf16>
    %c0_4 = arith.constant 0 : index
    %c0_5 = arith.constant 0 : index
    %3 = vector.load %arg5[%c0_4, %c0_5] : memref<64x1152xbf16, #tpu.memory_space<vmem>>, vector<64x128xbf16>
    tpu.vector_store %arg5[%c0_4, %c0_5], %2 {strides = array<i32>} : memref<64x1152xbf16, #tpu.memory_space<vmem>>, vector<64x128xbf16>,
    %c1 = arith.constant 1 : index
    %c0_6 = arith.constant 0 : index
    %c0_7 = arith.constant 0 : index
    %c0_8 = arith.constant 0 : index
    %c0_9 = arith.constant 0 : index
    %4 = vector.load %arg1[%c1, %c0_6, %c0_7, %c0_8, %c0_9] : memref<4x1x9x9x128xbf16, #tpu.memory_space<vmem>>, vector<1x1x8x8x128xbf16>
    %5 = vector.shape_cast %4 : vector<1x1x8x8x128xbf16> to vector<8x8x128xbf16>
    %6 = vector.shape_cast %5 : vector<8x8x128xbf16> to vector<64x128xbf16>
    %c0_10 = arith.constant 0 : index
    %c128 = arith.constant 128 : index
    %7 = vector.load %arg5[%c0_10, %c128] : memref<64x1152xbf16, #tpu.memory_space<vmem>>, vector<64x128xbf16>
    tpu.vector_store %arg5[%c0_10, %c128], %6 {strides = array<i32>} : memref<64x1152xbf16, #tpu.memory_space<vmem>>, vector<64x128xbf16>,
    %c0_11 = arith.constant 0 : index
    %c0_12 = arith.constant 0 : index
    %c0_13 = arith.constant 0 : index
    %c1_14 = arith.constant 1 : index
    %c0_15 = arith.constant 0 : index
    %8 = vector.load %arg1[%c0_11, %c0_12, %c0_13, %c1_14, %c0_15] : memref<4x1x9x9x128xbf16, #tpu.memory_space<vmem>>, vector<1x1x8x8x128xbf16>
    %9 = vector.shape_cast %8 : vector<1x1x8x8x128xbf16> to vector<8x8x128xbf16>
    %10 = vector.shape_cast %9 : vector<8x8x128xbf16> to vector<64x128xbf16>
    %c0_16 = arith.constant 0 : index
    %c256 = arith.constant 256 : index
    %11 = vector.load %arg5[%c0_16, %c256] : memref<64x1152xbf16, #tpu.memory_space<vmem>>, vector<64x128xbf16>
    tpu.vector_store %arg5[%c0_16, %c256], %10 {strides = array<i32>} : memref<64x1152xbf16, #tpu.memory_space<vmem>>, vector<64x128xbf16>,
    %c2 = arith.constant 2 : index
    %c0_17 = arith.constant 0 : index
    %c0_18 = arith.constant 0 : index
    %c0_19 = arith.constant 0 : index
    %c0_20 = arith.constant 0 : index
    %12 = vector.load %arg1[%c2, %c0_17, %c0_18, %c0_19, %c0_20] : memref<4x1x9x9x128xbf16, #tpu.memory_space<vmem>>, vector<1x1x8x8x128xbf16>
    %13 = vector.shape_cast %12 : vector<1x1x8x8x128xbf16> to vector<8x8x128xbf16>
    %14 = vector.shape_cast %13 : vector<8x8x128xbf16> to vector<64x128xbf16>
    %c0_21 = arith.constant 0 : index
    %c384 = arith.constant 384 : index
    %15 = vector.load %arg5[%c0_21, %c384] : memref<64x1152xbf16, #tpu.memory_space<vmem>>, vector<64x128xbf16>
    tpu.vector_store %arg5[%c0_21, %c384], %14 {strides = array<i32>} : memref<64x1152xbf16, #tpu.memory_space<vmem>>, vector<64x128xbf16>,
    %c3 = arith.constant 3 : index
    %c0_22 = arith.constant 0 : index
    %c0_23 = arith.constant 0 : index
    %c0_24 = arith.constant 0 : index
    %c0_25 = arith.constant 0 : index
    %16 = vector.load %arg1[%c3, %c0_22, %c0_23, %c0_24, %c0_25] : memref<4x1x9x9x128xbf16, #tpu.memory_space<vmem>>, vector<1x1x8x8x128xbf16>
    %17 = vector.shape_cast %16 : vector<1x1x8x8x128xbf16> to vector<8x8x128xbf16>
    %18 = vector.shape_cast %17 : vector<8x8x128xbf16> to vector<64x128xbf16>
    %c0_26 = arith.constant 0 : index
    %c512 = arith.constant 512 : index
    %19 = vector.load %arg5[%c0_26, %c512] : memref<64x1152xbf16, #tpu.memory_space<vmem>>, vector<64x128xbf16>
    tpu.vector_store %arg5[%c0_26, %c512], %18 {strides = array<i32>} : memref<64x1152xbf16, #tpu.memory_space<vmem>>, vector<64x128xbf16>,
    %c2_27 = arith.constant 2 : index
    %c0_28 = arith.constant 0 : index
    %c0_29 = arith.constant 0 : index
    %c1_30 = arith.constant 1 : index
    %c0_31 = arith.constant 0 : index
    %20 = vector.load %arg1[%c2_27, %c0_28, %c0_29, %c1_30, %c0_31] : memref<4x1x9x9x128xbf16, #tpu.memory_space<vmem>>, vector<1x1x8x8x128xbf16>
    %21 = vector.shape_cast %20 : vector<1x1x8x8x128xbf16> to vector<8x8x128xbf16>
    %22 = vector.shape_cast %21 : vector<8x8x128xbf16> to vector<64x128xbf16>
    %c0_32 = arith.constant 0 : index
    %c640 = arith.constant 640 : index
    %23 = vector.load %arg5[%c0_32, %c640] : memref<64x1152xbf16, #tpu.memory_space<vmem>>, vector<64x128xbf16>
    tpu.vector_store %arg5[%c0_32, %c640], %22 {strides = array<i32>} : memref<64x1152xbf16, #tpu.memory_space<vmem>>, vector<64x128xbf16>,
    %c0_33 = arith.constant 0 : index
    %c0_34 = arith.constant 0 : index
    %c1_35 = arith.constant 1 : index
    %c0_36 = arith.constant 0 : index
    %c0_37 = arith.constant 0 : index
    %24 = vector.load %arg1[%c0_33, %c0_34, %c1_35, %c0_36, %c0_37] : memref<4x1x9x9x128xbf16, #tpu.memory_space<vmem>>, vector<1x1x8x8x128xbf16>
    %25 = vector.shape_cast %24 : vector<1x1x8x8x128xbf16> to vector<8x8x128xbf16>
    %26 = vector.shape_cast %25 : vector<8x8x128xbf16> to vector<64x128xbf16>
    %c0_38 = arith.constant 0 : index
    %c768 = arith.constant 768 : index
    %27 = vector.load %arg5[%c0_38, %c768] : memref<64x1152xbf16, #tpu.memory_space<vmem>>, vector<64x128xbf16>
    tpu.vector_store %arg5[%c0_38, %c768], %26 {strides = array<i32>} : memref<64x1152xbf16, #tpu.memory_space<vmem>>, vector<64x128xbf16>,
    %c1_39 = arith.constant 1 : index
    %c0_40 = arith.constant 0 : index
    %c1_41 = arith.constant 1 : index
    %c0_42 = arith.constant 0 : index
    %c0_43 = arith.constant 0 : index
    %28 = vector.load %arg1[%c1_39, %c0_40, %c1_41, %c0_42, %c0_43] : memref<4x1x9x9x128xbf16, #tpu.memory_space<vmem>>, vector<1x1x8x8x128xbf16>
    %29 = vector.shape_cast %28 : vector<1x1x8x8x128xbf16> to vector<8x8x128xbf16>
    %30 = vector.shape_cast %29 : vector<8x8x128xbf16> to vector<64x128xbf16>
    %c0_44 = arith.constant 0 : index
    %c896 = arith.constant 896 : index
    %31 = vector.load %arg5[%c0_44, %c896] : memref<64x1152xbf16, #tpu.memory_space<vmem>>, vector<64x128xbf16>
    tpu.vector_store %arg5[%c0_44, %c896], %30 {strides = array<i32>} : memref<64x1152xbf16, #tpu.memory_space<vmem>>, vector<64x128xbf16>,
    %c0_45 = arith.constant 0 : index
    %c0_46 = arith.constant 0 : index
    %c1_47 = arith.constant 1 : index
    %c1_48 = arith.constant 1 : index
    %c0_49 = arith.constant 0 : index
    %32 = vector.load %arg1[%c0_45, %c0_46, %c1_47, %c1_48, %c0_49] : memref<4x1x9x9x128xbf16, #tpu.memory_space<vmem>>, vector<1x1x8x8x128xbf16>
    %33 = vector.shape_cast %32 : vector<1x1x8x8x128xbf16> to vector<8x8x128xbf16>
    %34 = vector.shape_cast %33 : vector<8x8x128xbf16> to vector<64x128xbf16>
    %c0_50 = arith.constant 0 : index
    %c1024 = arith.constant 1024 : index
    %35 = vector.load %arg5[%c0_50, %c1024] : memref<64x1152xbf16, #tpu.memory_space<vmem>>, vector<64x128xbf16>
    tpu.vector_store %arg5[%c0_50, %c1024], %34 {strides = array<i32>} : memref<64x1152xbf16, #tpu.memory_space<vmem>>, vector<64x128xbf16>,
    %c0_51 = arith.constant 0 : index
    %c0_52 = arith.constant 0 : index
    %36 = vector.load %arg5[%c0_51, %c0_52] : memref<64x1152xbf16, #tpu.memory_space<vmem>>, vector<64x1152xbf16>
    %c0_53 = arith.constant 0 : index
    %c0_54 = arith.constant 0 : index
    %37 = vector.load %arg2[%c0_53, %c0_54] : memref<1152x128xbf16, #tpu.memory_space<vmem>>, vector<1152x128xbf16>
    %cst = arith.constant dense<0.000000e+00> : vector<64x128xf32>
    %38 = tpu.matmul %36, %37, %cst {dimension_numbers = #tpu.dot_dimension_numbers<[1], [0], [0], [1], [0, 0, 1, 1], [], []>} : vector<64x1152xbf16>, vector<1152x128xbf16>, vector<64x128xf32> -> vector<64x128xf32>
    %c0_55 = arith.constant 0 : index
    %c0_56 = arith.constant 0 : index
    %39 = vector.load %arg3[%c0_55, %c0_56] : memref<1x128xf32, #tpu.memory_space<vmem>>, vector<1x128xf32>
    %40 = vector.broadcast %39 : vector<1x128xf32> to vector<64x128xf32>
    %41 = arith.addf %38, %40 : vector<64x128xf32>
    %42 = arith.negf %41 : vector<64x128xf32>
    %43 = math.exp %42 : vector<64x128xf32>
    %cst_57 = arith.constant 1.000000e+00 : f32
    %44 = vector.broadcast %cst_57 : f32 to vector<64x128xf32>
    %45 = arith.addf %44, %43 : vector<64x128xf32>
    %46 = arith.divf %44, %45 : vector<64x128xf32>
    %47 = arith.mulf %41, %46 : vector<64x128xf32>
    %48 = arith.truncf %47 : vector<64x128xf32> to vector<64x128xbf16>
    %c0_58 = arith.constant 0 : index
    %c0_59 = arith.constant 0 : index
    %c0_60 = arith.constant 0 : index
    %49 = vector.load %arg4[%c0_58, %c0_59, %c0_60] : memref<1x64x128xbf16, #tpu.memory_space<vmem>>, vector<1x64x128xbf16>
    %50 = vector.shape_cast %49 : vector<1x64x128xbf16> to vector<64x128xbf16>
    %51 = vector.shape_cast %48 : vector<64x128xbf16> to vector<1x64x128xbf16>
    tpu.vector_store %arg4[%c0_58, %c0_59, %c0_60], %51 {strides = array<i32>} : memref<1x64x128xbf16, #tpu.memory_space<vmem>>, vector<1x64x128xbf16>,
    return
  }
  func.func @transform_0(%arg0: i32) -> (i32, i32, i32, i32, i32) {
    %c0_i32 = arith.constant 0 : i32
    %c0_i32_0 = arith.constant 0 : i32
    %c0_i32_1 = arith.constant 0 : i32
    %c0_i32_2 = arith.constant 0 : i32
    %c0_i32_3 = arith.constant 0 : i32
    return %c0_i32, %arg0, %c0_i32_0, %c0_i32_1, %c0_i32_2 : i32, i32, i32, i32, i32
  }
  func.func @transform_1(%arg0: i32) -> (i32, i32) {
    %c0_i32 = arith.constant 0 : i32
    %c0_i32_0 = arith.constant 0 : i32
    %c0_i32_1 = arith.constant 0 : i32
    return %c0_i32, %c0_i32_0 : i32, i32
  }
  func.func @transform_2(%arg0: i32) -> (i32, i32) {
    %c0_i32 = arith.constant 0 : i32
    %c0_i32_0 = arith.constant 0 : i32
    %c0_i32_1 = arith.constant 0 : i32
    return %c0_i32, %c0_i32_0 : i32, i32
  }
  func.func @transform_3(%arg0: i32) -> (i32, i32, i32) {
    %c0_i32 = arith.constant 0 : i32
    %c0_i32_0 = arith.constant 0 : i32
    %c0_i32_1 = arith.constant 0 : i32
    return %arg0, %c0_i32, %c0_i32_0 : i32, i32, i32
  }
}

module attributes {stable_mosaic.version = 11 : i64} {
  func.func @_head_kernel(%arg0: i32, %arg1: memref<1x64x128xbf16, #tpu.memory_space<vmem>>, %arg2: memref<1x1x18xf32, #tpu.memory_space<vmem>>, %arg3: memref<128x1280xbf16, #tpu.memory_space<vmem>>, %arg4: memref<1x1280xf32, #tpu.memory_space<vmem>>, %arg5: memref<1280x128xbf16, #tpu.memory_space<vmem>>, %arg6: memref<1x128xf32, #tpu.memory_space<vmem>>, %arg7: memref<128x64xbf16, #tpu.memory_space<vmem>>, %arg8: memref<18x64xbf16, #tpu.memory_space<vmem>>, %arg9: memref<1x64xf32, #tpu.memory_space<vmem>>, %arg10: memref<64x2xbf16, #tpu.memory_space<vmem>>, %arg11: memref<1x2xf32, #tpu.memory_space<vmem>>, %arg12: memref<1x1x2xf32, #tpu.memory_space<vmem>>) attributes {dimension_semantics = [#tpu.dimension_semantics<parallel>], iteration_bounds = array<i64: 2>, scalar_prefetch = 0 : i64, scratch_operands = 0 : i64, tpu.core_type = #tpu.core_type<tc>, window_params = [{transform_indices = @transform_0, window_bounds = array<i64: 1, 64, 128>}, {transform_indices = @transform_1, window_bounds = array<i64: 1, 1, 18>}, {pipeline_mode = #tpu.pipeline_mode<synchronous>, transform_indices = @transform_2, window_bounds = array<i64: 128, 1280>}, {pipeline_mode = #tpu.pipeline_mode<synchronous>, transform_indices = @transform_3, window_bounds = array<i64: 1, 1280>}, {pipeline_mode = #tpu.pipeline_mode<synchronous>, transform_indices = @transform_4, window_bounds = array<i64: 1280, 128>}, {pipeline_mode = #tpu.pipeline_mode<synchronous>, transform_indices = @transform_5, window_bounds = array<i64: 1, 128>}, {pipeline_mode = #tpu.pipeline_mode<synchronous>, transform_indices = @transform_6, window_bounds = array<i64: 128, 64>}, {pipeline_mode = #tpu.pipeline_mode<synchronous>, transform_indices = @transform_7, window_bounds = array<i64: 18, 64>}, {pipeline_mode = #tpu.pipeline_mode<synchronous>, transform_indices = @transform_8, window_bounds = array<i64: 1, 64>}, {pipeline_mode = #tpu.pipeline_mode<synchronous>, transform_indices = @transform_9, window_bounds = array<i64: 64, 2>}, {pipeline_mode = #tpu.pipeline_mode<synchronous>, transform_indices = @transform_10, window_bounds = array<i64: 1, 2>}, {transform_indices = @transform_11, window_bounds = array<i64: 1, 1, 2>}]} {
    %c0 = arith.constant 0 : index
    %c0_0 = arith.constant 0 : index
    %c0_1 = arith.constant 0 : index
    %0 = vector.load %arg1[%c0, %c0_0, %c0_1] : memref<1x64x128xbf16, #tpu.memory_space<vmem>>, vector<1x64x128xbf16>
    %1 = vector.shape_cast %0 : vector<1x64x128xbf16> to vector<64x128xbf16>
    %c0_2 = arith.constant 0 : index
    %c0_3 = arith.constant 0 : index
    %2 = vector.load %arg3[%c0_2, %c0_3] : memref<128x1280xbf16, #tpu.memory_space<vmem>>, vector<128x1280xbf16>
    %cst = arith.constant dense<0.000000e+00> : vector<64x1280xf32>
    %3 = tpu.matmul %1, %2, %cst {dimension_numbers = #tpu.dot_dimension_numbers<[1], [0], [0], [1], [0, 0, 1, 1], [], []>} : vector<64x128xbf16>, vector<128x1280xbf16>, vector<64x1280xf32> -> vector<64x1280xf32>
    %c0_4 = arith.constant 0 : index
    %c0_5 = arith.constant 0 : index
    %4 = vector.load %arg4[%c0_4, %c0_5] : memref<1x1280xf32, #tpu.memory_space<vmem>>, vector<1x1280xf32>
    %5 = vector.broadcast %4 : vector<1x1280xf32> to vector<64x1280xf32>
    %6 = arith.addf %3, %5 : vector<64x1280xf32>
    %7 = arith.negf %6 : vector<64x1280xf32>
    %8 = math.exp %7 : vector<64x1280xf32>
    %cst_6 = arith.constant 1.000000e+00 : f32
    %9 = vector.broadcast %cst_6 : f32 to vector<64x1280xf32>
    %10 = arith.addf %9, %8 : vector<64x1280xf32>
    %11 = arith.divf %9, %10 : vector<64x1280xf32>
    %12 = arith.mulf %6, %11 : vector<64x1280xf32>
    %cst_7 = arith.constant dense<0.000000e+00> : vector<1280xf32>
    %13 = vector.multi_reduction <add>, %12, %cst_7 [0] : vector<64x1280xf32> to vector<1280xf32>
    %14 = vector.shape_cast %13 : vector<1280xf32> to vector<1x1280xf32>
    %cst_8 = arith.constant 6.400000e+01 : f32
    %15 = vector.broadcast %cst_8 : f32 to vector<1x1280xf32>
    %16 = arith.divf %14, %15 : vector<1x1280xf32>
    %17 = arith.truncf %16 : vector<1x1280xf32> to vector<1x1280xbf16>
    %c0_9 = arith.constant 0 : index
    %c0_10 = arith.constant 0 : index
    %18 = vector.load %arg5[%c0_9, %c0_10] : memref<1280x128xbf16, #tpu.memory_space<vmem>>, vector<1280x128xbf16>
    %cst_11 = arith.constant dense<0.000000e+00> : vector<1x128xf32>
    %19 = tpu.matmul %17, %18, %cst_11 {dimension_numbers = #tpu.dot_dimension_numbers<[1], [0], [0], [1], [0, 0, 1, 1], [], []>} : vector<1x1280xbf16>, vector<1280x128xbf16>, vector<1x128xf32> -> vector<1x128xf32>
    %c0_12 = arith.constant 0 : index
    %c0_13 = arith.constant 0 : index
    %20 = vector.load %arg6[%c0_12, %c0_13] : memref<1x128xf32, #tpu.memory_space<vmem>>, vector<1x128xf32>
    %21 = arith.addf %19, %20 : vector<1x128xf32>
    %c0_14 = arith.constant 0 : index
    %c0_15 = arith.constant 0 : index
    %c0_16 = arith.constant 0 : index
    %22 = vector.load %arg2[%c0_14, %c0_15, %c0_16] : memref<1x1x18xf32, #tpu.memory_space<vmem>>, vector<1x1x18xf32>
    %23 = vector.shape_cast %22 : vector<1x1x18xf32> to vector<1x18xf32>
    %24 = arith.truncf %23 : vector<1x18xf32> to vector<1x18xbf16>
    %25 = arith.truncf %21 : vector<1x128xf32> to vector<1x128xbf16>
    %c0_17 = arith.constant 0 : index
    %c0_18 = arith.constant 0 : index
    %26 = vector.load %arg7[%c0_17, %c0_18] : memref<128x64xbf16, #tpu.memory_space<vmem>>, vector<128x64xbf16>
    %cst_19 = arith.constant dense<0.000000e+00> : vector<1x64xf32>
    %27 = tpu.matmul %25, %26, %cst_19 {dimension_numbers = #tpu.dot_dimension_numbers<[1], [0], [0], [1], [0, 0, 1, 1], [], []>} : vector<1x128xbf16>, vector<128x64xbf16>, vector<1x64xf32> -> vector<1x64xf32>
    %c0_20 = arith.constant 0 : index
    %c0_21 = arith.constant 0 : index
    %28 = vector.load %arg8[%c0_20, %c0_21] : memref<18x64xbf16, #tpu.memory_space<vmem>>, vector<18x64xbf16>
    %cst_22 = arith.constant dense<0.000000e+00> : vector<1x64xf32>
    %29 = tpu.matmul %24, %28, %cst_22 {dimension_numbers = #tpu.dot_dimension_numbers<[1], [0], [0], [1], [0, 0, 1, 1], [], []>} : vector<1x18xbf16>, vector<18x64xbf16>, vector<1x64xf32> -> vector<1x64xf32>
    %30 = arith.addf %27, %29 : vector<1x64xf32>
    %c0_23 = arith.constant 0 : index
    %c0_24 = arith.constant 0 : index
    %31 = vector.load %arg9[%c0_23, %c0_24] : memref<1x64xf32, #tpu.memory_space<vmem>>, vector<1x64xf32>
    %32 = arith.addf %30, %31 : vector<1x64xf32>
    %cst_25 = arith.constant 0.000000e+00 : f32
    %33 = vector.broadcast %cst_25 : f32 to vector<1x64xf32>
    %34 = arith.maximumf %32, %33 : vector<1x64xf32>
    %35 = arith.truncf %34 : vector<1x64xf32> to vector<1x64xbf16>
    %c0_26 = arith.constant 0 : index
    %c0_27 = arith.constant 0 : index
    %36 = vector.load %arg10[%c0_26, %c0_27] : memref<64x2xbf16, #tpu.memory_space<vmem>>, vector<64x2xbf16>
    %cst_28 = arith.constant dense<0.000000e+00> : vector<1x2xf32>
    %37 = tpu.matmul %35, %36, %cst_28 {dimension_numbers = #tpu.dot_dimension_numbers<[1], [0], [0], [1], [0, 0, 1, 1], [], []>} : vector<1x64xbf16>, vector<64x2xbf16>, vector<1x2xf32> -> vector<1x2xf32>
    %c0_29 = arith.constant 0 : index
    %c0_30 = arith.constant 0 : index
    %38 = vector.load %arg11[%c0_29, %c0_30] : memref<1x2xf32, #tpu.memory_space<vmem>>, vector<1x2xf32>
    %39 = arith.addf %37, %38 : vector<1x2xf32>
    %c0_31 = arith.constant 0 : index
    %c0_32 = arith.constant 0 : index
    %c0_33 = arith.constant 0 : index
    %40 = vector.load %arg12[%c0_31, %c0_32, %c0_33] : memref<1x1x2xf32, #tpu.memory_space<vmem>>, vector<1x1x2xf32>
    %41 = vector.shape_cast %40 : vector<1x1x2xf32> to vector<1x2xf32>
    %42 = vector.shape_cast %39 : vector<1x2xf32> to vector<1x1x2xf32>
    tpu.vector_store %arg12[%c0_31, %c0_32, %c0_33], %42 {strides = array<i32>} : memref<1x1x2xf32, #tpu.memory_space<vmem>>, vector<1x1x2xf32>,
    return
  }
  func.func @transform_0(%arg0: i32) -> (i32, i32, i32) {
    %c0_i32 = arith.constant 0 : i32
    %c0_i32_0 = arith.constant 0 : i32
    %c0_i32_1 = arith.constant 0 : i32
    return %arg0, %c0_i32, %c0_i32_0 : i32, i32, i32
  }
  func.func @transform_1(%arg0: i32) -> (i32, i32, i32) {
    %c0_i32 = arith.constant 0 : i32
    %c0_i32_0 = arith.constant 0 : i32
    %c0_i32_1 = arith.constant 0 : i32
    return %arg0, %c0_i32, %c0_i32_0 : i32, i32, i32
  }
  func.func @transform_2(%arg0: i32) -> (i32, i32) {
    %c0_i32 = arith.constant 0 : i32
    %c0_i32_0 = arith.constant 0 : i32
    %c0_i32_1 = arith.constant 0 : i32
    return %c0_i32, %c0_i32_0 : i32, i32
  }
  func.func @transform_3(%arg0: i32) -> (i32, i32) {
    %c0_i32 = arith.constant 0 : i32
    %c0_i32_0 = arith.constant 0 : i32
    %c0_i32_1 = arith.constant 0 : i32
    return %c0_i32, %c0_i32_0 : i32, i32
  }
  func.func @transform_4(%arg0: i32) -> (i32, i32) {
    %c0_i32 = arith.constant 0 : i32
    %c0_i32_0 = arith.constant 0 : i32
    %c0_i32_1 = arith.constant 0 : i32
    return %c0_i32, %c0_i32_0 : i32, i32
  }
  func.func @transform_5(%arg0: i32) -> (i32, i32) {
    %c0_i32 = arith.constant 0 : i32
    %c0_i32_0 = arith.constant 0 : i32
    %c0_i32_1 = arith.constant 0 : i32
    return %c0_i32, %c0_i32_0 : i32, i32
  }
  func.func @transform_6(%arg0: i32) -> (i32, i32) {
    %c0_i32 = arith.constant 0 : i32
    %c0_i32_0 = arith.constant 0 : i32
    %c0_i32_1 = arith.constant 0 : i32
    return %c0_i32, %c0_i32_0 : i32, i32
  }
  func.func @transform_7(%arg0: i32) -> (i32, i32) {
    %c0_i32 = arith.constant 0 : i32
    %c0_i32_0 = arith.constant 0 : i32
    %c0_i32_1 = arith.constant 0 : i32
    return %c0_i32, %c0_i32_0 : i32, i32
  }
  func.func @transform_8(%arg0: i32) -> (i32, i32) {
    %c0_i32 = arith.constant 0 : i32
    %c0_i32_0 = arith.constant 0 : i32
    %c0_i32_1 = arith.constant 0 : i32
    return %c0_i32, %c0_i32_0 : i32, i32
  }
  func.func @transform_9(%arg0: i32) -> (i32, i32) {
    %c0_i32 = arith.constant 0 : i32
    %c0_i32_0 = arith.constant 0 : i32
    %c0_i32_1 = arith.constant 0 : i32
    return %c0_i32, %c0_i32_0 : i32, i32
  }
  func.func @transform_10(%arg0: i32) -> (i32, i32) {
    %c0_i32 = arith.constant 0 : i32
    %c0_i32_0 = arith.constant 0 : i32
    %c0_i32_1 = arith.constant 0 : i32
    return %c0_i32, %c0_i32_0 : i32, i32
  }
  func.func @transform_11(%arg0: i32) -> (i32, i32, i32) {
    %c0_i32 = arith.constant 0 : i32
    %c0_i32_0 = arith.constant 0 : i32
    %c0_i32_1 = arith.constant 0 : i32
    return %arg0, %c0_i32, %c0_i32_0 : i32, i32, i32
  }
}

</mosaic_0001>

<llo_original>
// kernel: efficientnet_haralick_forward.4
$region0: #{efficientnet_haralick_forward.4}
  #allocation0 [shape = 'u32[]', space=smem, size = 0x4, offset = 0x4, fixed_abs, tag = 'smem constant byte address 0x4 - core index']
  #allocation1 [shape = 'u32[144,128]{1,0:T(1,128)}', space=vmem, size = 0x12000, scoped, tag = 'internal scratch']
  #allocation2 [shape = 'bf16[64,1152]{1,0:T(16,128)(2,1)}', space=vmem, size = 0x24000, scoped, tag = 'scratch operand']
  %s0 = inlined_call_operand.vmem [shape: bf16[4,2,9,9,128], index: 0, kind: input, shape index: {}]
  %s1 = inlined_call_operand.vmem [shape: bf16[1152,128], index: 1, kind: input, shape index: {}]
  %s2 = inlined_call_operand.vmem [shape: f32[1,128], index: 2, kind: input, shape index: {}]
  %s3 = inlined_call_operand.vmem [shape: bf16[2,64,128], index: 3, kind: output, shape index: {}]
  %s4 = sld [smem:[#allocation0]]
  $region86: #{efficientnet_haralick_forward.4} parent=0
    _
  %s6 = ssub.s32 1, %s4
  %s7 = scalar_select 0, %s6, %s4
  $region1: #{efficientnet_haralick_forward.4} parent=0
    #allocation3 [shape = 'u8[294912]{0}', space=vmem, size = 0x48000, scoped, tag = 'input window, operand 0']
    loop: start=0, step=1, limit=4
    $region2: #{efficientnet_haralick_forward.4} parent=1 // loop_pre_header
      _
    $region3: #{efficientnet_haralick_forward.4} parent=1 // loop_header
      %s9 = sphi 0, %s13
      %p10 = scmp.ge.s32.totalorder %s9, 4
      %s19 = sphi 0, %s21
      %s22 = sphi 0, %s19
      %s23 = sphi 0, %s22
      %s39 = sphi 0, %s23
      %s43 = sphi 0, %s43
      %s45 = sphi 0, %s43
      %s46 = sphi 0, %s45
      %s60 = sphi 0, %s46
      %s64 = sphi 0, %s64
      %s66 = sphi 0, %s64
      %s67 = sphi 0, %s66
      %s81 = sphi 0, %s67
      %s87 = sphi 0, %s89
      %s90 = sphi 0, %s87
      %s91 = sphi 0, %s90
      %s107 = sphi 0, %s91
    $region4: #{efficientnet_haralick_forward.4} parent=1 // loop_header_branch
      %12 = sbr.rel (%p10) target = $region8
    $region5: #{efficientnet_haralick_forward.4} parent=1 // loop_body
      %s14 = ssub.s32 %s9, 1
      %s15 = ssub.s32 %s9, 2
      %s16 = sadd.s32 %s9, 1
      %s17 = ssub.s32 %s9, %s16
      %p18 = scmp.eq.s32.totalorder %s17, 0
      %s20 = sadd.s32 %s19, 1
      %s21 = scalar_select %p18, %s19, %s20
      %p24 = pneg %p18
      %p25 = scmp.eq.s32.totalorder %s9, 1
      %p26 = por %p24, %p25
      %p27 = scmp.ne.s32.totalorder %s19, %s22
      %p28 = scmp.eq.s32.totalorder %s9, 0
      %p29 = por %p27, %p28
      %p30 = scmp.ne.s32.totalorder %s19, %s22
      %p31 = scmp.eq.s32.totalorder %s14, 1
      %p32 = por %p30, %p31
      %p33 = scmp.ne.s32.totalorder %s22, %s23
      %p34 = scmp.eq.s32.totalorder %s14, 0
      %p35 = por %p33, %p34
      %p36 = scmp.ne.s32.totalorder %s22, %s23
      %p37 = scmp.eq.s32.totalorder %s15, 1
      %p38 = por %p36, %p37
      %p40 = scmp.ne.s32.totalorder %s23, %s39
      %p41 = scmp.eq.s32.totalorder %s15, 0
      %p42 = por %p40, %p41
      %s44 = sadd.s32 %s43, 1
      %p47 = scmp.eq.s32.totalorder %s9, 1
      %p48 = scmp.ne.s32.totalorder %s43, %s45
      %p49 = scmp.eq.s32.totalorder %s9, 0
      %p50 = por %p48, %p49
      %p51 = scmp.ne.s32.totalorder %s43, %s45
      %p52 = scmp.eq.s32.totalorder %s14, 1
      %p53 = por %p51, %p52
      %p54 = scmp.ne.s32.totalorder %s45, %s46
      %p55 = scmp.eq.s32.totalorder %s14, 0
      %p56 = por %p54, %p55
      %p57 = scmp.ne.s32.totalorder %s45, %s46
      %p58 = scmp.eq.s32.totalorder %s15, 1
      %p59 = por %p57, %p58
      %p61 = scmp.ne.s32.totalorder %s46, %s60
      %p62 = scmp.eq.s32.totalorder %s15, 0
      %p63 = por %p61, %p62
      %s65 = sadd.s32 %s64, 1
      %p68 = scmp.eq.s32.totalorder %s9, 1
      %p69 = scmp.ne.s32.totalorder %s64, %s66
      %p70 = scmp.eq.s32.totalorder %s9, 0
      %p71 = por %p69, %p70
      %p72 = scmp.ne.s32.totalorder %s64, %s66
      %p73 = scmp.eq.s32.totalorder %s14, 1
      %p74 = por %p72, %p73
      %p75 = scmp.ne.s32.totalorder %s66, %s67
      %p76 = scmp.eq.s32.totalorder %s14, 0
      %p77 = por %p75, %p76
      %p78 = scmp.ne.s32.totalorder %s66, %s67
      %p79 = scmp.eq.s32.totalorder %s15, 1
      %p80 = por %p78, %p79
      %p82 = scmp.ne.s32.totalorder %s67, %s81
      %p83 = scmp.eq.s32.totalorder %s15, 0
      %p84 = por %p82, %p83
      %s85 = ssub.s32 %s9, %s16
      %p86 = scmp.eq.s32.totalorder %s85, 0
      %s88 = sadd.s32 %s87, 1
      %s89 = scalar_select %p86, %s87, %s88
      %p92 = pneg %p86
      %p93 = scmp.eq.s32.totalorder %s9, 1
      %p94 = por %p92, %p93
      %p95 = scmp.ne.s32.totalorder %s87, %s90
      %p96 = scmp.eq.s32.totalorder %s9, 0
      %p97 = por %p95, %p96
      %p98 = scmp.ne.s32.totalorder %s87, %s90
      %p99 = scmp.eq.s32.totalorder %s14, 1
      %p100 = por %p98, %p99
      %p101 = scmp.ne.s32.totalorder %s90, %s91
      %p102 = scmp.eq.s32.totalorder %s14, 0
      %p103 = por %p101, %p102
      %p104 = scmp.ne.s32.totalorder %s90, %s91
      %p105 = scmp.eq.s32.totalorder %s15, 1
      %p106 = por %p104, %p105
      %p108 = scmp.ne.s32.totalorder %s91, %s107
      %p109 = scmp.eq.s32.totalorder %s15, 0
      %p110 = por %p108, %p109
      %p111 = scmp.le.s32.totalorder 1, %s9
      %p112 = scmp.lt.s32.totalorder %s9, 3
      %p113 = pnand %p111, %p112
      %p114 = pneg %p113
      // Predicated region
      $region9: #{efficientnet_haralick_forward.4} parent=5 // pred_check
        _
      $region10: #{efficientnet_haralick_forward.4} parent=5 // pred_check_branch
        %116 = sbr.rel (%p113) target = $region12
      $region11: #{efficientnet_haralick_forward.4} parent=5 // pred_region
        %s117 = ssub.s32 %s9, 1
        // Predicated region
        $region13: #{efficientnet_haralick_forward.4} parent=11 // pred_check
          %p118 = pneg %p56
        $region14: #{efficientnet_haralick_forward.4} parent=11 // pred_check_branch
          %120 = sbr.rel (%p118) target = $region16
        $region15: #{efficientnet_haralick_forward.4} parent=11 // pred_region
          _
        $region16: #{efficientnet_haralick_forward.4} parent=11 // pred_fallthru
          _
        // Predicated region
        $region17: #{efficientnet_haralick_forward.4} parent=11 // pred_check
          %p121 = pneg %p77
        $region18: #{efficientnet_haralick_forward.4} parent=11 // pred_check_branch
          %123 = sbr.rel (%p121) target = $region20
        $region19: #{efficientnet_haralick_forward.4} parent=11 // pred_region
          _
        $region20: #{efficientnet_haralick_forward.4} parent=11 // pred_fallthru
          _
      $region12: #{efficientnet_haralick_forward.4} parent=5 // pred_fallthru
        _
      %p124 = scmp.lt.s32.totalorder %s9, 2
      // Predicated region
      $region21: #{efficientnet_haralick_forward.4} parent=5 // pred_check
        %p125 = pneg %p124
      $region22: #{efficientnet_haralick_forward.4} parent=5 // pred_check_branch
        %127 = sbr.rel (%p125) target = $region24
      $region23: #{efficientnet_haralick_forward.4} parent=5 // pred_region
        // Predicated region
        $region25: #{efficientnet_haralick_forward.4} parent=23 // pred_check
          %p128 = pneg %p29
        $region26: #{efficientnet_haralick_forward.4} parent=23 // pred_check_branch
          %130 = sbr.rel (%p128) target = $region28
        $region27: #{efficientnet_haralick_forward.4} parent=23 // pred_region
          %s131 = sand.u32 %s19, 1
          %s132 = sand.u32 %s19, 1
          %s133 = smul.addr %s132, 288
          %s134 = scalar_lea.vmem [#allocation3], %s133
          %s135 = smul.addr %s9, 18
          %s136 = smul.addr %s135, 4
          %s137 = scalar_lea.vmem %s0, %s136
          // Predicated region
          $region29: #{efficientnet_haralick_forward.4} parent=27 // pred_check
            _
          $region30: #{efficientnet_haralick_forward.4} parent=27 // pred_check_branch
            %139 = sbr.rel (0) target = $region32
          $region31: #{efficientnet_haralick_forward.4} parent=27 // pred_region
            // Predicated region
            $region33: #{efficientnet_haralick_forward.4} parent=31 // pred_check
              _
            $region34: #{efficientnet_haralick_forward.4} parent=31 // pred_check_branch
              %141 = sbr.rel target = $region36
            $region35: #{efficientnet_haralick_forward.4} parent=31 // pred_region
              // Predicated region
              $region48: #{efficientnet_haralick_forward.4} parent=35 // pred_check
                _
              $region49: #{efficientnet_haralick_forward.4} parent=35 // pred_check_branch
                %298 = sbr.rel (0) target = $region51
              $region50: #{efficientnet_haralick_forward.4} parent=35 // pred_region
                loop: start=0, step=1, limit=1
                $region52: #{efficientnet_haralick_forward.4} parent=50 // loop_pre_header
                  _
                $region53: #{efficientnet_haralick_forward.4} parent=50 // loop_header
                  %s300 = sphi 0, %s304
                  %p301 = scmp.ge.s32.totalorder %s300, 1
                  %s305 = sphi %s137, %s137
                  %s306 = sphi %s134, %s134
                $region54: #{efficientnet_haralick_forward.4} parent=50 // loop_header_branch
                  %303 = sbr.rel (%p301) target = $region58
                $region55: #{efficientnet_haralick_forward.4} parent=50 // loop_body
                  _
                $region56: #{efficientnet_haralick_forward.4} parent=50 // loop_footer
                  %s304 = sadd.s32 1, %s300
                $region57: #{efficientnet_haralick_forward.4} parent=50 // loop_footer_branch
                  %299 = sbr.rel target = $region53
                $region58: #{efficientnet_haralick_forward.4} parent=50 // loop_exit
                  _
                loop: start=0, step=1, limit=1
                $region59: #{efficientnet_haralick_forward.4} parent=50 // loop_pre_header
                  _
                $region60: #{efficientnet_haralick_forward.4} parent=50 // loop_header
                  %s309 = sphi 0, %s313
                  %p310 = scmp.ge.s32.totalorder %s309, 1
                  %s314 = sphi %s137, %s137
                  %s315 = sphi %s134, %s134
                $region61: #{efficientnet_haralick_forward.4} parent=50 // loop_header_branch
                  %312 = sbr.rel (%p310) target = $region65
                $region62: #{efficientnet_haralick_forward.4} parent=50 // loop_body
                  %v316 = vld [vmem:[%s314] sm:$0xf]
                  %317 = vst [vmem:[%s315] sm:$0xf] %v316
                  %v318 = vld [vmem:[%s314 + $0x4] sm:$0xf]
                  %319 = vst [vmem:[%s315 + $0x4] sm:$0xf] %v318
                  %v320 = vld [vmem:[%s314 + $0x8] sm:$0xf]
                  %321 = vst [vmem:[%s315 + $0x8] sm:$0xf] %v320
                  %v322 = vld [vmem:[%s314 + $0xc] sm:$0xf]
                  %323 = vst [vmem:[%s315 + $0xc] sm:$0xf] %v322
                  %v324 = vld [vmem:[%s314 + $0x10] sm:$0xf]
                  %325 = vst [vmem:[%s315 + $0x10] sm:$0xf] %v324
                  %v326 = vld [vmem:[%s314 + $0x14] sm:$0xf]
                  %327 = vst [vmem:[%s315 + $0x14] sm:$0xf] %v326
                  %v328 = vld [vmem:[%s314 + $0x18] sm:$0xf]
                  %329 = vst [vmem:[%s315 + $0x18] sm:$0xf] %v328
                  %v330 = vld [vmem:[%s314 + $0x1c] sm:$0xf]
                  %331 = vst [vmem:[%s315 + $0x1c] sm:$0xf] %v330
                  %v332 = vld [vmem:[%s314 + $0x20] sm:$0xf]
                  %333 = vst [vmem:[%s315 + $0x20] sm:$0xf] %v332
                  %v334 = vld [vmem:[%s314 + $0x24] sm:$0xf]
                  %335 = vst [vmem:[%s315 + $0x24] sm:$0xf] %v334
                  %v336 = vld [vmem:[%s314 + $0x28] sm:$0xf]
                  %337 = vst [vmem:[%s315 + $0x28] sm:$0xf] %v336
                  %v338 = vld [vmem:[%s314 + $0x2c] sm:$0xf]
                  %339 = vst [vmem:[%s315 + $0x2c] sm:$0xf] %v338
                  %v340 = vld [vmem:[%s314 + $0x30] sm:$0xf]
                  %341 = vst [vmem:[%s315 + $0x30] sm:$0xf] %v340
                  %v342 = vld [vmem:[%s314 + $0x34] sm:$0xf]
                  %343 = vst [vmem:[%s315 + $0x34] sm:$0xf] %v342
                  %v344 = vld [vmem:[%s314 + $0x38] sm:$0xf]
                  %345 = vst [vmem:[%s315 + $0x38] sm:$0xf] %v344
                  %v346 = vld [vmem:[%s314 + $0x3c] sm:$0xf]
                  %347 = vst [vmem:[%s315 + $0x3c] sm:$0xf] %v346
                  %v348 = vld [vmem:[%s314 + $0x40] sm:$0xf]
                  %349 = vst [vmem:[%s315 + $0x40] sm:$0xf] %v348
                  %v350 = vld [vmem:[%s314 + $0x44] sm:$0xf]
                  %351 = vst [vmem:[%s315 + $0x44] sm:$0xf] %v350
                  %v352 = vld [vmem:[%s314 + $0x90] sm:$0xf]
                  %353 = vst [vmem:[%s315 + $0x48] sm:$0xf] %v352
                  %v354 = vld [vmem:[%s314 + $0x94] sm:$0xf]
                  %355 = vst [vmem:[%s315 + $0x4c] sm:$0xf] %v354
                  %v356 = vld [vmem:[%s314 + $0x98] sm:$0xf]
                  %357 = vst [vmem:[%s315 + $0x50] sm:$0xf] %v356
                  %v358 = vld [vmem:[%s314 + $0x9c] sm:$0xf]
                  %359 = vst [vmem:[%s315 + $0x54] sm:$0xf] %v358
                  %v360 = vld [vmem:[%s314 + $0xa0] sm:$0xf]
                  %361 = vst [vmem:[%s315 + $0x58] sm:$0xf] %v360
                  %v362 = vld [vmem:[%s314 + $0xa4] sm:$0xf]
                  %363 = vst [vmem:[%s315 + $0x5c] sm:$0xf] %v362
                  %v364 = vld [vmem:[%s314 + $0xa8] sm:$0xf]
                  %365 = vst [vmem:[%s315 + $0x60] sm:$0xf] %v364
                  %v366 = vld [vmem:[%s314 + $0xac] sm:$0xf]
                  %367 = vst [vmem:[%s315 + $0x64] sm:$0xf] %v366
                  %v368 = vld [vmem:[%s314 + $0xb0] sm:$0xf]
                  %369 = vst [vmem:[%s315 + $0x68] sm:$0xf] %v368
                  %v370 = vld [vmem:[%s314 + $0xb4] sm:$0xf]
                  %371 = vst [vmem:[%s315 + $0x6c] sm:$0xf] %v370
                  %v372 = vld [vmem:[%s314 + $0xb8] sm:$0xf]
                  %373 = vst [vmem:[%s315 + $0x70] sm:$0xf] %v372
                  %v374 = vld [vmem:[%s314 + $0xbc] sm:$0xf]
                  %375 = vst [vmem:[%s315 + $0x74] sm:$0xf] %v374
                  %v376 = vld [vmem:[%s314 + $0xc0] sm:$0xf]
                  %377 = vst [vmem:[%s315 + $0x78] sm:$0xf] %v376
                  %v378 = vld [vmem:[%s314 + $0xc4] sm:$0xf]
                  %379 = vst [vmem:[%s315 + $0x7c] sm:$0xf] %v378
                  %v380 = vld [vmem:[%s314 + $0xc8] sm:$0xf]
                  %381 = vst [vmem:[%s315 + $0x80] sm:$0xf] %v380
                  %v382 = vld [vmem:[%s314 + $0xcc] sm:$0xf]
                  %383 = vst [vmem:[%s315 + $0x84] sm:$0xf] %v382
                  %v384 = vld [vmem:[%s314 + $0xd0] sm:$0xf]
                  %385 = vst [vmem:[%s315 + $0x88] sm:$0xf] %v384
                  %v386 = vld [vmem:[%s314 + $0xd4] sm:$0xf]
                  %387 = vst [vmem:[%s315 + $0x8c] sm:$0xf] %v386
                  %v388 = vld [vmem:[%s314 + $0x120] sm:$0xf]
                  %389 = vst [vmem:[%s315 + $0x90] sm:$0xf] %v388
                  %v390 = vld [vmem:[%s314 + $0x124] sm:$0xf]
                  %391 = vst [vmem:[%s315 + $0x94] sm:$0xf] %v390
                  %v392 = vld [vmem:[%s314 + $0x128] sm:$0xf]
                  %393 = vst [vmem:[%s315 + $0x98] sm:$0xf] %v392
                  %v394 = vld [vmem:[%s314 + $0x12c] sm:$0xf]
                  %395 = vst [vmem:[%s315 + $0x9c] sm:$0xf] %v394
                  %v396 = vld [vmem:[%s314 + $0x130] sm:$0xf]
                  %397 = vst [vmem:[%s315 + $0xa0] sm:$0xf] %v396
                  %v398 = vld [vmem:[%s314 + $0x134] sm:$0xf]
                  %399 = vst [vmem:[%s315 + $0xa4] sm:$0xf] %v398
                  %v400 = vld [vmem:[%s314 + $0x138] sm:$0xf]
                  %401 = vst [vmem:[%s315 + $0xa8] sm:$0xf] %v400
                  %v402 = vld [vmem:[%s314 + $0x13c] sm:$0xf]
                  %403 = vst [vmem:[%s315 + $0xac] sm:$0xf] %v402
                  %v404 = vld [vmem:[%s314 + $0x140] sm:$0xf]
                  %405 = vst [vmem:[%s315 + $0xb0] sm:$0xf] %v404
                  %v406 = vld [vmem:[%s314 + $0x144] sm:$0xf]
                  %407 = vst [vmem:[%s315 + $0xb4] sm:$0xf] %v406
                  %v408 = vld [vmem:[%s314 + $0x148] sm:$0xf]
                  %409 = vst [vmem:[%s315 + $0xb8] sm:$0xf] %v408
                  %v410 = vld [vmem:[%s314 + $0x14c] sm:$0xf]
                  %411 = vst [vmem:[%s315 + $0xbc] sm:$0xf] %v410
                  %v412 = vld [vmem:[%s314 + $0x150] sm:$0xf]
                  %413 = vst [vmem:[%s315 + $0xc0] sm:$0xf] %v412
                  %v414 = vld [vmem:[%s314 + $0x154] sm:$0xf]
                  %415 = vst [vmem:[%s315 + $0xc4] sm:$0xf] %v414
                  %v416 = vld [vmem:[%s314 + $0x158] sm:$0xf]
                  %417 = vst [vmem:[%s315 + $0xc8] sm:$0xf] %v416
                  %v418 = vld [vmem:[%s314 + $0x15c] sm:$0xf]
                  %419 = vst [vmem:[%s315 + $0xcc] sm:$0xf] %v418
                  %v420 = vld [vmem:[%s314 + $0x160] sm:$0xf]
                  %421 = vst [vmem:[%s315 + $0xd0] sm:$0xf] %v420
                  %v422 = vld [vmem:[%s314 + $0x164] sm:$0xf]
                  %423 = vst [vmem:[%s315 + $0xd4] sm:$0xf] %v422
                  %v424 = vld [vmem:[%s314 + $0x1b0] sm:$0xf]
                  %425 = vst [vmem:[%s315 + $0xd8] sm:$0xf] %v424
                  %v426 = vld [vmem:[%s314 + $0x1b4] sm:$0xf]
                  %427 = vst [vmem:[%s315 + $0xdc] sm:$0xf] %v426
                  %v428 = vld [vmem:[%s314 + $0x1b8] sm:$0xf]
                  %429 = vst [vmem:[%s315 + $0xe0] sm:$0xf] %v428
                  %v430 = vld [vmem:[%s314 + $0x1bc] sm:$0xf]
                  %431 = vst [vmem:[%s315 + $0xe4] sm:$0xf] %v430
                  %v432 = vld [vmem:[%s314 + $0x1c0] sm:$0xf]
                  %433 = vst [vmem:[%s315 + $0xe8] sm:$0xf] %v432
                  %v434 = vld [vmem:[%s314 + $0x1c4] sm:$0xf]
                  %435 = vst [vmem:[%s315 + $0xec] sm:$0xf] %v434
                  %v436 = vld [vmem:[%s314 + $0x1c8] sm:$0xf]
                  %437 = vst [vmem:[%s315 + $0xf0] sm:$0xf] %v436
                  %v438 = vld [vmem:[%s314 + $0x1cc] sm:$0xf]
                  %439 = vst [vmem:[%s315 + $0xf4] sm:$0xf] %v438
                  %v440 = vld [vmem:[%s314 + $0x1d0] sm:$0xf]
                  %441 = vst [vmem:[%s315 + $0xf8] sm:$0xf] %v440
                  %v442 = vld [vmem:[%s314 + $0x1d4] sm:$0xf]
                  %443 = vst [vmem:[%s315 + $0xfc] sm:$0xf] %v442
                  %v444 = vld [vmem:[%s314 + $0x1d8] sm:$0xf]
                  %445 = vst [vmem:[%s315 + $0x100] sm:$0xf] %v444
                  %v446 = vld [vmem:[%s314 + $0x1dc] sm:$0xf]
                  %447 = vst [vmem:[%s315 + $0x104] sm:$0xf] %v446
                  %v448 = vld [vmem:[%s314 + $0x1e0] sm:$0xf]
                  %449 = vst [vmem:[%s315 + $0x108] sm:$0xf] %v448
                  %v450 = vld [vmem:[%s314 + $0x1e4] sm:$0xf]
                  %451 = vst [vmem:[%s315 + $0x10c] sm:$0xf] %v450
                  %v452 = vld [vmem:[%s314 + $0x1e8] sm:$0xf]
                  %453 = vst [vmem:[%s315 + $0x110] sm:$0xf] %v452
                  %v454 = vld [vmem:[%s314 + $0x1ec] sm:$0xf]
                  %455 = vst [vmem:[%s315 + $0x114] sm:$0xf] %v454
                  %v456 = vld [vmem:[%s314 + $0x1f0] sm:$0xf]
                  %457 = vst [vmem:[%s315 + $0x118] sm:$0xf] %v456
                  %v458 = vld [vmem:[%s314 + $0x1f4] sm:$0xf]
                  %459 = vst [vmem:[%s315 + $0x11c] sm:$0xf] %v458
                $region63: #{efficientnet_haralick_forward.4} parent=50 // loop_footer
                  %s313 = sadd.s32 1, %s309
                $region64: #{efficientnet_haralick_forward.4} parent=50 // loop_footer_branch
                  %308 = sbr.rel target = $region60
                $region65: #{efficientnet_haralick_forward.4} parent=50 // loop_exit
                  _
              $region51: #{efficientnet_haralick_forward.4} parent=35 // pred_fallthru
                _
            $region36: #{efficientnet_haralick_forward.4} parent=31 // pred_fallthru
              _
            // Predicated region
            $region37: #{efficientnet_haralick_forward.4} parent=31 // pred_check
              _
            $region38: #{efficientnet_haralick_forward.4} parent=31 // pred_check_branch
              %143 = sbr.rel (0) target = $region40
            $region39: #{efficientnet_haralick_forward.4} parent=31 // pred_region
              loop: start=0, step=1, limit=1
              $region41: #{efficientnet_haralick_forward.4} parent=39 // loop_pre_header
                _
              $region42: #{efficientnet_haralick_forward.4} parent=39 // loop_header
                %s146 = sphi 0, %s150
                %p147 = scmp.ge.s32.totalorder %s146, 1
                %s151 = sphi %s137, %s137
                %s152 = sphi %s134, %s134
              $region43: #{efficientnet_haralick_forward.4} parent=39 // loop_header_branch
                %149 = sbr.rel (%p147) target = $region47
              $region44: #{efficientnet_haralick_forward.4} parent=39 // loop_body
                %v153 = vld [vmem:[%s151] sm:$0xf]
                %154 = vst [vmem:[%s152] sm:$0xf] %v153
                %v155 = vld [vmem:[%s151 + $0x4] sm:$0xf]
                %156 = vst [vmem:[%s152 + $0x4] sm:$0xf] %v155
                %v157 = vld [vmem:[%s151 + $0x8] sm:$0xf]
                %158 = vst [vmem:[%s152 + $0x8] sm:$0xf] %v157
                %v159 = vld [vmem:[%s151 + $0xc] sm:$0xf]
                %160 = vst [vmem:[%s152 + $0xc] sm:$0xf] %v159
                %v161 = vld [vmem:[%s151 + $0x10] sm:$0xf]
                %162 = vst [vmem:[%s152 + $0x10] sm:$0xf] %v161
                %v163 = vld [vmem:[%s151 + $0x14] sm:$0xf]
                %164 = vst [vmem:[%s152 + $0x14] sm:$0xf] %v163
                %v165 = vld [vmem:[%s151 + $0x18] sm:$0xf]
                %166 = vst [vmem:[%s152 + $0x18] sm:$0xf] %v165
                %v167 = vld [vmem:[%s151 + $0x1c] sm:$0xf]
                %168 = vst [vmem:[%s152 + $0x1c] sm:$0xf] %v167
                %v169 = vld [vmem:[%s151 + $0x20] sm:$0xf]
                %170 = vst [vmem:[%s152 + $0x20] sm:$0xf] %v169
                %v171 = vld [vmem:[%s151 + $0x24] sm:$0xf]
                %172 = vst [vmem:[%s152 + $0x24] sm:$0xf] %v171
                %v173 = vld [vmem:[%s151 + $0x28] sm:$0xf]
                %174 = vst [vmem:[%s152 + $0x28] sm:$0xf] %v173
                %v175 = vld [vmem:[%s151 + $0x2c] sm:$0xf]
                %176 = vst [vmem:[%s152 + $0x2c] sm:$0xf] %v175
                %v177 = vld [vmem:[%s151 + $0x30] sm:$0xf]
                %178 = vst [vmem:[%s152 + $0x30] sm:$0xf] %v177
                %v179 = vld [vmem:[%s151 + $0x34] sm:$0xf]
                %180 = vst [vmem:[%s152 + $0x34] sm:$0xf] %v179
                %v181 = vld [vmem:[%s151 + $0x38] sm:$0xf]
                %182 = vst [vmem:[%s152 + $0x38] sm:$0xf] %v181
                %v183 = vld [vmem:[%s151 + $0x3c] sm:$0xf]
                %184 = vst [vmem:[%s152 + $0x3c] sm:$0xf] %v183
                %v185 = vld [vmem:[%s151 + $0x40] sm:$0xf]
                %186 = vst [vmem:[%s152 + $0x40] sm:$0xf] %v185
                %v187 = vld [vmem:[%s151 + $0x44] sm:$0xf]
                %188 = vst [vmem:[%s152 + $0x44] sm:$0xf] %v187
                %v189 = vld [vmem:[%s151 + $0x90] sm:$0xf]
                %190 = vst [vmem:[%s152 + $0x48] sm:$0xf] %v189
                %v191 = vld [vmem:[%s151 + $0x94] sm:$0xf]
                %192 = vst [vmem:[%s152 + $0x4c] sm:$0xf] %v191
                %v193 = vld [vmem:[%s151 + $0x98] sm:$0xf]
                %194 = vst [vmem:[%s152 + $0x50] sm:$0xf] %v193
                %v195 = vld [vmem:[%s151 + $0x9c] sm:$0xf]
                %196 = vst [vmem:[%s152 + $0x54] sm:$0xf] %v195
                %v197 = vld [vmem:[%s151 + $0xa0] sm:$0xf]
                %198 = vst [vmem:[%s152 + $0x58] sm:$0xf] %v197
                %v199 = vld [vmem:[%s151 + $0xa4] sm:$0xf]
                %200 = vst [vmem:[%s152 + $0x5c] sm:$0xf] %v199
                %v201 = vld [vmem:[%s151 + $0xa8] sm:$0xf]
                %202 = vst [vmem:[%s152 + $0x60] sm:$0xf] %v201
                %v203 = vld [vmem:[%s151 + $0xac] sm:$0xf]
                %204 = vst [vmem:[%s152 + $0x64] sm:$0xf] %v203
                %v205 = vld [vmem:[%s151 + $0xb0] sm:$0xf]
                %206 = vst [vmem:[%s152 + $0x68] sm:$0xf] %v205
                %v207 = vld [vmem:[%s151 + $0xb4] sm:$0xf]
                %208 = vst [vmem:[%s152 + $0x6c] sm:$0xf] %v207
                %v209 = vld [vmem:[%s151 + $0xb8] sm:$0xf]
                %210 = vst [vmem:[%s152 + $0x70] sm:$0xf] %v209
                %v211 = vld [vmem:[%s151 + $0xbc] sm:$0xf]
                %212 = vst [vmem:[%s152 + $0x74] sm:$0xf] %v211
                %v213 = vld [vmem:[%s151 + $0xc0] sm:$0xf]
                %214 = vst [vmem:[%s152 + $0x78] sm:$0xf] %v213
                %v215 = vld [vmem:[%s151 + $0xc4] sm:$0xf]
                %216 = vst [vmem:[%s152 + $0x7c] sm:$0xf] %v215
                %v217 = vld [vmem:[%s151 + $0xc8] sm:$0xf]
                %218 = vst [vmem:[%s152 + $0x80] sm:$0xf] %v217
                %v219 = vld [vmem:[%s151 + $0xcc] sm:$0xf]
                %220 = vst [vmem:[%s152 + $0x84] sm:$0xf] %v219
                %v221 = vld [vmem:[%s151 + $0xd0] sm:$0xf]
                %222 = vst [vmem:[%s152 + $0x88] sm:$0xf] %v221
                %v223 = vld [vmem:[%s151 + $0xd4] sm:$0xf]
                %224 = vst [vmem:[%s152 + $0x8c] sm:$0xf] %v223
                %v225 = vld [vmem:[%s151 + $0x120] sm:$0xf]
                %226 = vst [vmem:[%s152 + $0x90] sm:$0xf] %v225
                %v227 = vld [vmem:[%s151 + $0x124] sm:$0xf]
                %228 = vst [vmem:[%s152 + $0x94] sm:$0xf] %v227
                %v229 = vld [vmem:[%s151 + $0x128] sm:$0xf]
                %230 = vst [vmem:[%s152 + $0x98] sm:$0xf] %v229
                %v231 = vld [vmem:[%s151 + $0x12c] sm:$0xf]
                %232 = vst [vmem:[%s152 + $0x9c] sm:$0xf] %v231
                %v233 = vld [vmem:[%s151 + $0x130] sm:$0xf]
                %234 = vst [vmem:[%s152 + $0xa0] sm:$0xf] %v233
                %v235 = vld [vmem:[%s151 + $0x134] sm:$0xf]
                %236 = vst [vmem:[%s152 + $0xa4] sm:$0xf] %v235
                %v237 = vld [vmem:[%s151 + $0x138] sm:$0xf]
                %238 = vst [vmem:[%s152 + $0xa8] sm:$0xf] %v237
                %v239 = vld [vmem:[%s151 + $0x13c] sm:$0xf]
                %240 = vst [vmem:[%s152 + $0xac] sm:$0xf] %v239
                %v241 = vld [vmem:[%s151 + $0x140] sm:$0xf]
                %242 = vst [vmem:[%s152 + $0xb0] sm:$0xf] %v241
                %v243 = vld [vmem:[%s151 + $0x144] sm:$0xf]
                %244 = vst [vmem:[%s152 + $0xb4] sm:$0xf] %v243
                %v245 = vld [vmem:[%s151 + $0x148] sm:$0xf]
                %246 = vst [vmem:[%s152 + $0xb8] sm:$0xf] %v245
                %v247 = vld [vmem:[%s151 + $0x14c] sm:$0xf]
                %248 = vst [vmem:[%s152 + $0xbc] sm:$0xf] %v247
                %v249 = vld [vmem:[%s151 + $0x150] sm:$0xf]
                %250 = vst [vmem:[%s152 + $0xc0] sm:$0xf] %v249
                %v251 = vld [vmem:[%s151 + $0x154] sm:$0xf]
                %252 = vst [vmem:[%s152 + $0xc4] sm:$0xf] %v251
                %v253 = vld [vmem:[%s151 + $0x158] sm:$0xf]
                %254 = vst [vmem:[%s152 + $0xc8] sm:$0xf] %v253
                %v255 = vld [vmem:[%s151 + $0x15c] sm:$0xf]
                %256 = vst [vmem:[%s152 + $0xcc] sm:$0xf] %v255
                %v257 = vld [vmem:[%s151 + $0x160] sm:$0xf]
                %258 = vst [vmem:[%s152 + $0xd0] sm:$0xf] %v257
                %v259 = vld [vmem:[%s151 + $0x164] sm:$0xf]
                %260 = vst [vmem:[%s152 + $0xd4] sm:$0xf] %v259
                %v261 = vld [vmem:[%s151 + $0x1b0] sm:$0xf]
                %262 = vst [vmem:[%s152 + $0xd8] sm:$0xf] %v261
                %v263 = vld [vmem:[%s151 + $0x1b4] sm:$0xf]
                %264 = vst [vmem:[%s152 + $0xdc] sm:$0xf] %v263
                %v265 = vld [vmem:[%s151 + $0x1b8] sm:$0xf]
                %266 = vst [vmem:[%s152 + $0xe0] sm:$0xf] %v265
                %v267 = vld [vmem:[%s151 + $0x1bc] sm:$0xf]
                %268 = vst [vmem:[%s152 + $0xe4] sm:$0xf] %v267
                %v269 = vld [vmem:[%s151 + $0x1c0] sm:$0xf]
                %270 = vst [vmem:[%s152 + $0xe8] sm:$0xf] %v269
                %v271 = vld [vmem:[%s151 + $0x1c4] sm:$0xf]
                %272 = vst [vmem:[%s152 + $0xec] sm:$0xf] %v271
                %v273 = vld [vmem:[%s151 + $0x1c8] sm:$0xf]
                %274 = vst [vmem:[%s152 + $0xf0] sm:$0xf] %v273
                %v275 = vld [vmem:[%s151 + $0x1cc] sm:$0xf]
                %276 = vst [vmem:[%s152 + $0xf4] sm:$0xf] %v275
                %v277 = vld [vmem:[%s151 + $0x1d0] sm:$0xf]
                %278 = vst [vmem:[%s152 + $0xf8] sm:$0xf] %v277
                %v279 = vld [vmem:[%s151 + $0x1d4] sm:$0xf]
                %280 = vst [vmem:[%s152 + $0xfc] sm:$0xf] %v279
                %v281 = vld [vmem:[%s151 + $0x1d8] sm:$0xf]
                %282 = vst [vmem:[%s152 + $0x100] sm:$0xf] %v281
                %v283 = vld [vmem:[%s151 + $0x1dc] sm:$0xf]
                %284 = vst [vmem:[%s152 + $0x104] sm:$0xf] %v283
                %v285 = vld [vmem:[%s151 + $0x1e0] sm:$0xf]
                %286 = vst [vmem:[%s152 + $0x108] sm:$0xf] %v285
                %v287 = vld [vmem:[%s151 + $0x1e4] sm:$0xf]
                %288 = vst [vmem:[%s152 + $0x10c] sm:$0xf] %v287
                %v289 = vld [vmem:[%s151 + $0x1e8] sm:$0xf]
                %290 = vst [vmem:[%s152 + $0x110] sm:$0xf] %v289
                %v291 = vld [vmem:[%s151 + $0x1ec] sm:$0xf]
                %292 = vst [vmem:[%s152 + $0x114] sm:$0xf] %v291
                %v293 = vld [vmem:[%s151 + $0x1f0] sm:$0xf]
                %294 = vst [vmem:[%s152 + $0x118] sm:$0xf] %v293
                %v295 = vld [vmem:[%s151 + $0x1f4] sm:$0xf]
                %296 = vst [vmem:[%s152 + $0x11c] sm:$0xf] %v295
              $region45: #{efficientnet_haralick_forward.4} parent=39 // loop_footer
                %s150 = sadd.s32 1, %s146
              $region46: #{efficientnet_haralick_forward.4} parent=39 // loop_footer_branch
                %145 = sbr.rel target = $region42
              $region47: #{efficientnet_haralick_forward.4} parent=39 // loop_exit
                _
            $region40: #{efficientnet_haralick_forward.4} parent=31 // pred_fallthru
              _
          $region32: #{efficientnet_haralick_forward.4} parent=27 // pred_fallthru
            _
          %460 = vnop
        $region28: #{efficientnet_haralick_forward.4} parent=23 // pred_fallthru
          _
      $region24: #{efficientnet_haralick_forward.4} parent=5 // pred_fallthru
        _
      %p461 = scmp.le.s32.totalorder 1, %s9
      %p462 = scmp.lt.s32.totalorder %s9, 3
      %p463 = pnand %p461, %p462
      %p464 = pneg %p463
      // Predicated region
      $region66: #{efficientnet_haralick_forward.4} parent=5 // pred_check
        _
      $region67: #{efficientnet_haralick_forward.4} parent=5 // pred_check_branch
        %466 = sbr.rel (%p463) target = $region69
      $region68: #{efficientnet_haralick_forward.4} parent=5 // pred_region
        %s467 = ssub.s32 %s9, 1
        %s468 = sand.u32 %s22, 1
        %s469 = sand.u32 %s22, 1
        %s470 = smul.addr %s469, 288
        %s471 = scalar_lea.vmem [#allocation3], %s470
        // Predicated region
        $region70: #{efficientnet_haralick_forward.4} parent=68 // pred_check
          %p472 = pneg %p35
        $region71: #{efficientnet_haralick_forward.4} parent=68 // pred_check_branch
          %474 = sbr.rel (%p472) target = $region73
        $region72: #{efficientnet_haralick_forward.4} parent=68 // pred_region
          _
        $region73: #{efficientnet_haralick_forward.4} parent=68 // pred_fallthru
          _
        %s475 = sand.u32 %s22, 1
        %s476 = sand.u32 %s22, 1
        %s477 = smul.addr %s476, 288
        %s478 = scalar_lea.vmem [#allocation3], %s477
        %p479 = pneg %p35
        %p480 = pneg %p32
        %p481 = pneg %p56
        %p482 = pneg %p53
        %p483 = pneg %p77
        %p484 = pneg %p74
        %p485 = pneg %p103
        %p486 = pneg %p100
        %p487 = scmp.lt.s32.totalorder %s14, 1
        %s488 = scalar_select %p487, %s14, 1
        %s489 = smul.addr %s488, 8
        %s490 = smul.addr %s489, 4
        %s491 = scalar_lea.vmem %s3, %s490
        %p492 = scmp.lt.s32.totalorder %s14, 1
        %s493 = scalar_select %p492, %s14, 1
        %s494 = smul.addr %s493, 8
        %s495 = smul.addr %s494, 4
        %s496 = scalar_lea.vmem %s3, %s495
        %v498 = vld [vmem:[%s471] sm:$0xf]
        %v499 = vld [vmem:[%s471 + $0x8] sm:$0xf]
        %v500 = vld [vmem:[%s471 + $0x10] sm:$0xf]
        %v501 = vld [vmem:[%s471 + $0x18] sm:$0xf]
        %v502 = vld [vmem:[%s471 + $0x20] sm:$0xf]
        %v503 = vld [vmem:[%s471 + $0x28] sm:$0xf]
        %v504 = vld [vmem:[%s471 + $0x30] sm:$0xf]
        %v505 = vld [vmem:[%s471 + $0x38] sm:$0xf]
        %v514 = vunpack.c.l.b16 %v498
        %v515 = vunpack.c.l.b16 %v499
        %v516 = vunpack.c.l.b16 %v500
        %v517 = vunpack.c.l.b16 %v501
        %v518 = vunpack.c.l.b16 %v502
        %v519 = vunpack.c.l.b16 %v503
        %v520 = vunpack.c.l.b16 %v504
        %v521 = vunpack.c.l.b16 %v505
        %v522 = vpack.c.b16 %v515, %v514
        %v523 = vpack.c.b16 %v517, %v516
        %v524 = vpack.c.b16 %v519, %v518
        %v525 = vpack.c.b16 %v521, %v520
        %530 = vst [vmem:[#allocation2] sm:$0xff] %v522
        %531 = vst [vmem:[#allocation2 + $0x48] sm:$0xff] %v523
        %532 = vst [vmem:[#allocation2 + $0x90] sm:$0xff] %v524
        %533 = vst [vmem:[#allocation2 + $0xd8] sm:$0xff] %v525
        %s534 = scalar_lea.vmem %s471, 72 [#allocation3]
        %v535 = vld [vmem:[%s534] sm:$0xf]
        %v536 = vld [vmem:[%s534 + $0x8] sm:$0xf]
        %v537 = vld [vmem:[%s534 + $0x10] sm:$0xf]
        %v538 = vld [vmem:[%s534 + $0x18] sm:$0xf]
        %v539 = vld [vmem:[%s534 + $0x20] sm:$0xf]
        %v540 = vld [vmem:[%s534 + $0x28] sm:$0xf]
        %v541 = vld [vmem:[%s534 + $0x30] sm:$0xf]
        %v542 = vld [vmem:[%s534 + $0x38] sm:$0xf]
        %v551 = vunpack.c.l.b16 %v535
        %v552 = vunpack.c.l.b16 %v536
        %v553 = vunpack.c.l.b16 %v537
        %v554 = vunpack.c.l.b16 %v538
        %v555 = vunpack.c.l.b16 %v539
        %v556 = vunpack.c.l.b16 %v540
        %v557 = vunpack.c.l.b16 %v541
        %v558 = vunpack.c.l.b16 %v542
        %v559 = vpack.c.b16 %v552, %v551
        %v560 = vpack.c.b16 %v554, %v553
        %v561 = vpack.c.b16 %v556, %v555
        %v562 = vpack.c.b16 %v558, %v557
        %567 = vst [vmem:[#allocation2 + $0x8] sm:$0xff] %v559
        %568 = vst [vmem:[#allocation2 + $0x50] sm:$0xff] %v560
        %569 = vst [vmem:[#allocation2 + $0x98] sm:$0xff] %v561
        %570 = vst [vmem:[#allocation2 + $0xe0] sm:$0xff] %v562
        %v571 = vld [vmem:[%s471] sm:$0xf]
        %v572 = vld [vmem:[%s471 + $0x4] sm:$0x1]
        %v573 = vld [vmem:[%s471 + $0x8] sm:$0xf]
        %v574 = vld [vmem:[%s471 + $0xc] sm:$0x1]
        %v575 = vld [vmem:[%s471 + $0x10] sm:$0xf]
        %v576 = vld [vmem:[%s471 + $0x14] sm:$0x1]
        %v577 = vld [vmem:[%s471 + $0x18] sm:$0xf]
        %v578 = vld [vmem:[%s471 + $0x1c] sm:$0x1]
        %v579 = vld [vmem:[%s471 + $0x20] sm:$0xf]
        %v580 = vld [vmem:[%s471 + $0x24] sm:$0x1]
        %v581 = vld [vmem:[%s471 + $0x28] sm:$0xf]
        %v582 = vld [vmem:[%s471 + $0x2c] sm:$0x1]
        %v583 = vld [vmem:[%s471 + $0x30] sm:$0xf]
        %v584 = vld [vmem:[%s471 + $0x34] sm:$0x1]
        %v585 = vld [vmem:[%s471 + $0x38] sm:$0xf]
        %v586 = vld [vmem:[%s471 + $0x3c] sm:$0x1]
        %vm587 = vsmask.f32 3328
        %vm588 = vsmask.f32 7440
        %vm589 = vmor %vm587, %vm588
        %v591 = vshrl.u32 %v571, 16
        %v593 = vrot.slane %v591, 4
        %v594 = vshll.u32 %v571, 16
        %v596 = vrot.slane %v594, 5
        %v597 = vor.u32 %v593, %v596
        %v598 = vrot.slane %v597, 4
        %v600 = vshll.u32 %v572, 16
        %v602 = vrot.slane %v600, 5
        %v603 = vsel %vm589, %v598, %v602
        %v605 = vshrl.u32 %v573, 16
        %v607 = vrot.slane %v605, 4
        %v608 = vshll.u32 %v573, 16
        %v610 = vrot.slane %v608, 5
        %v611 = vor.u32 %v607, %v610
        %v612 = vrot.slane %v611, 4
        %v614 = vshll.u32 %v574, 16
        %v616 = vrot.slane %v614, 5
        %v617 = vsel %vm589, %v612, %v616
        %v619 = vshrl.u32 %v575, 16
        %v621 = vrot.slane %v619, 4
        %v622 = vshll.u32 %v575, 16
        %v624 = vrot.slane %v622, 5
        %v625 = vor.u32 %v621, %v624
        %v626 = vrot.slane %v625, 4
        %v628 = vshll.u32 %v576, 16
        %v630 = vrot.slane %v628, 5
        %v631 = vsel %vm589, %v626, %v630
        %v633 = vshrl.u32 %v577, 16
        %v635 = vrot.slane %v633, 4
        %v636 = vshll.u32 %v577, 16
        %v638 = vrot.slane %v636, 5
        %v639 = vor.u32 %v635, %v638
        %v640 = vrot.slane %v639, 4
        %v642 = vshll.u32 %v578, 16
        %v644 = vrot.slane %v642, 5
        %v645 = vsel %vm589, %v640, %v644
        %v647 = vshrl.u32 %v579, 16
        %v649 = vrot.slane %v647, 4
        %v650 = vshll.u32 %v579, 16
        %v652 = vrot.slane %v650, 5
        %v653 = vor.u32 %v649, %v652
        %v654 = vrot.slane %v653, 4
        %v656 = vshll.u32 %v580, 16
        %v658 = vrot.slane %v656, 5
        %v659 = vsel %vm589, %v654, %v658
        %v661 = vshrl.u32 %v581, 16
        %v663 = vrot.slane %v661, 4
        %v664 = vshll.u32 %v581, 16
        %v666 = vrot.slane %v664, 5
        %v667 = vor.u32 %v663, %v666
        %v668 = vrot.slane %v667, 4
        %v670 = vshll.u32 %v582, 16
        %v672 = vrot.slane %v670, 5
        %v673 = vsel %vm589, %v668, %v672
        %v675 = vshrl.u32 %v583, 16
        %v677 = vrot.slane %v675, 4
        %v678 = vshll.u32 %v583, 16
        %v680 = vrot.slane %v678, 5
        %v681 = vor.u32 %v677, %v680
        %v682 = vrot.slane %v681, 4
        %v684 = vshll.u32 %v584, 16
        %v686 = vrot.slane %v684, 5
        %v687 = vsel %vm589, %v682, %v686
        %v689 = vshrl.u32 %v585, 16
        %v691 = vrot.slane %v689, 4
        %v692 = vshll.u32 %v585, 16
        %v694 = vrot.slane %v692, 5
        %v695 = vor.u32 %v691, %v694
        %v696 = vrot.slane %v695, 4
        %v698 = vshll.u32 %v586, 16
        %v700 = vrot.slane %v698, 5
        %v701 = vsel %vm589, %v696, %v700
        %v702 = vunpack.c.l.b16 %v603
        %v703 = vunpack.c.l.b16 %v617
        %v704 = vunpack.c.l.b16 %v631
        %v705 = vunpack.c.l.b16 %v645
        %v706 = vunpack.c.l.b16 %v659
        %v707 = vunpack.c.l.b16 %v673
        %v708 = vunpack.c.l.b16 %v687
        %v709 = vunpack.c.l.b16 %v701
        %v710 = vpack.c.b16 %v703, %v702
        %v711 = vpack.c.b16 %v705, %v704
        %v712 = vpack.c.b16 %v707, %v706
        %v713 = vpack.c.b16 %v709, %v708
        %718 = vst [vmem:[#allocation2 + $0x10] sm:$0xff] %v710
        %719 = vst [vmem:[#allocation2 + $0x58] sm:$0xff] %v711
        %720 = vst [vmem:[#allocation2 + $0xa0] sm:$0xff] %v712
        %721 = vst [vmem:[#allocation2 + $0xe8] sm:$0xff] %v713
        %s722 = scalar_lea.vmem %s471, 144 [#allocation3]
        %v723 = vld [vmem:[%s722] sm:$0xf]
        %v724 = vld [vmem:[%s722 + $0x8] sm:$0xf]
        %v725 = vld [vmem:[%s722 + $0x10] sm:$0xf]
        %v726 = vld [vmem:[%s722 + $0x18] sm:$0xf]
        %v727 = vld [vmem:[%s722 + $0x20] sm:$0xf]
        %v728 = vld [vmem:[%s722 + $0x28] sm:$0xf]
        %v729 = vld [vmem:[%s722 + $0x30] sm:$0xf]
        %v730 = vld [vmem:[%s722 + $0x38] sm:$0xf]
        %v739 = vunpack.c.l.b16 %v723
        %v740 = vunpack.c.l.b16 %v724
        %v741 = vunpack.c.l.b16 %v725
        %v742 = vunpack.c.l.b16 %v726
        %v743 = vunpack.c.l.b16 %v727
        %v744 = vunpack.c.l.b16 %v728
        %v745 = vunpack.c.l.b16 %v729
        %v746 = vunpack.c.l.b16 %v730
        %v747 = vpack.c.b16 %v740, %v739
        %v748 = vpack.c.b16 %v742, %v741
        %v749 = vpack.c.b16 %v744, %v743
        %v750 = vpack.c.b16 %v746, %v745
        %755 = vst [vmem:[#allocation2 + $0x18] sm:$0xff] %v747
        %756 = vst [vmem:[#allocation2 + $0x60] sm:$0xff] %v748
        %757 = vst [vmem:[#allocation2 + $0xa8] sm:$0xff] %v749
        %758 = vst [vmem:[#allocation2 + $0xf0] sm:$0xff] %v750
        %s759 = scalar_lea.vmem %s471, 216 [#allocation3]
        %v760 = vld [vmem:[%s759] sm:$0xf]
        %v761 = vld [vmem:[%s759 + $0x8] sm:$0xf]
        %v762 = vld [vmem:[%s759 + $0x10] sm:$0xf]
        %v763 = vld [vmem:[%s759 + $0x18] sm:$0xf]
        %v764 = vld [vmem:[%s759 + $0x20] sm:$0xf]
        %v765 = vld [vmem:[%s759 + $0x28] sm:$0xf]
        %v766 = vld [vmem:[%s759 + $0x30] sm:$0xf]
        %v767 = vld [vmem:[%s759 + $0x38] sm:$0xf]
        %v776 = vunpack.c.l.b16 %v760
        %v777 = vunpack.c.l.b16 %v761
        %v778 = vunpack.c.l.b16 %v762
        %v779 = vunpack.c.l.b16 %v763
        %v780 = vunpack.c.l.b16 %v764
        %v781 = vunpack.c.l.b16 %v765
        %v782 = vunpack.c.l.b16 %v766
        %v783 = vunpack.c.l.b16 %v767
        %v784 = vpack.c.b16 %v777, %v776
        %v785 = vpack.c.b16 %v779, %v778
        %v786 = vpack.c.b16 %v781, %v780
        %v787 = vpack.c.b16 %v783, %v782
        %792 = vst [vmem:[#allocation2 + $0x20] sm:$0xff] %v784
        %793 = vst [vmem:[#allocation2 + $0x68] sm:$0xff] %v785
        %794 = vst [vmem:[#allocation2 + $0xb0] sm:$0xff] %v786
        %795 = vst [vmem:[#allocation2 + $0xf8] sm:$0xff] %v787
        %v796 = vld [vmem:[%s722] sm:$0xf]
        %v797 = vld [vmem:[%s722 + $0x4] sm:$0x1]
        %v798 = vld [vmem:[%s722 + $0x8] sm:$0xf]
        %v799 = vld [vmem:[%s722 + $0xc] sm:$0x1]
        %v800 = vld [vmem:[%s722 + $0x10] sm:$0xf]
        %v801 = vld [vmem:[%s722 + $0x14] sm:$0x1]
        %v802 = vld [vmem:[%s722 + $0x18] sm:$0xf]
        %v803 = vld [vmem:[%s722 + $0x1c] sm:$0x1]
        %v804 = vld [vmem:[%s722 + $0x20] sm:$0xf]
        %v805 = vld [vmem:[%s722 + $0x24] sm:$0x1]
        %v806 = vld [vmem:[%s722 + $0x28] sm:$0xf]
        %v807 = vld [vmem:[%s722 + $0x2c] sm:$0x1]
        %v808 = vld [vmem:[%s722 + $0x30] sm:$0xf]
        %v809 = vld [vmem:[%s722 + $0x34] sm:$0x1]
        %v810 = vld [vmem:[%s722 + $0x38] sm:$0xf]
        %v811 = vld [vmem:[%s722 + $0x3c] sm:$0x1]
        %v813 = vshrl.u32 %v796, 16
        %v815 = vrot.slane %v813, 4
        %v816 = vshll.u32 %v796, 16
        %v818 = vrot.slane %v816, 5
        %v819 = vor.u32 %v815, %v818
        %v820 = vrot.slane %v819, 4
        %v822 = vshll.u32 %v797, 16
        %v824 = vrot.slane %v822, 5
        %v825 = vsel %vm589, %v820, %v824
        %v827 = vshrl.u32 %v798, 16
        %v829 = vrot.slane %v827, 4
        %v830 = vshll.u32 %v798, 16
        %v832 = vrot.slane %v830, 5
        %v833 = vor.u32 %v829, %v832
        %v834 = vrot.slane %v833, 4
        %v836 = vshll.u32 %v799, 16
        %v838 = vrot.slane %v836, 5
        %v839 = vsel %vm589, %v834, %v838
        %v841 = vshrl.u32 %v800, 16
        %v843 = vrot.slane %v841, 4
        %v844 = vshll.u32 %v800, 16
        %v846 = vrot.slane %v844, 5
        %v847 = vor.u32 %v843, %v846
        %v848 = vrot.slane %v847, 4
        %v850 = vshll.u32 %v801, 16
        %v852 = vrot.slane %v850, 5
        %v853 = vsel %vm589, %v848, %v852
        %v855 = vshrl.u32 %v802, 16
        %v857 = vrot.slane %v855, 4
        %v858 = vshll.u32 %v802, 16
        %v860 = vrot.slane %v858, 5
        %v861 = vor.u32 %v857, %v860
        %v862 = vrot.slane %v861, 4
        %v864 = vshll.u32 %v803, 16
        %v866 = vrot.slane %v864, 5
        %v867 = vsel %vm589, %v862, %v866
        %v869 = vshrl.u32 %v804, 16
        %v871 = vrot.slane %v869, 4
        %v872 = vshll.u32 %v804, 16
        %v874 = vrot.slane %v872, 5
        %v875 = vor.u32 %v871, %v874
        %v876 = vrot.slane %v875, 4
        %v878 = vshll.u32 %v805, 16
        %v880 = vrot.slane %v878, 5
        %v881 = vsel %vm589, %v876, %v880
        %v883 = vshrl.u32 %v806, 16
        %v885 = vrot.slane %v883, 4
        %v886 = vshll.u32 %v806, 16
        %v888 = vrot.slane %v886, 5
        %v889 = vor.u32 %v885, %v888
        %v890 = vrot.slane %v889, 4
        %v892 = vshll.u32 %v807, 16
        %v894 = vrot.slane %v892, 5
        %v895 = vsel %vm589, %v890, %v894
        %v897 = vshrl.u32 %v808, 16
        %v899 = vrot.slane %v897, 4
        %v900 = vshll.u32 %v808, 16
        %v902 = vrot.slane %v900, 5
        %v903 = vor.u32 %v899, %v902
        %v904 = vrot.slane %v903, 4
        %v906 = vshll.u32 %v809, 16
        %v908 = vrot.slane %v906, 5
        %v909 = vsel %vm589, %v904, %v908
        %v911 = vshrl.u32 %v810, 16
        %v913 = vrot.slane %v911, 4
        %v914 = vshll.u32 %v810, 16
        %v916 = vrot.slane %v914, 5
        %v917 = vor.u32 %v913, %v916
        %v918 = vrot.slane %v917, 4
        %v920 = vshll.u32 %v811, 16
        %v922 = vrot.slane %v920, 5
        %v923 = vsel %vm589, %v918, %v922
        %v924 = vunpack.c.l.b16 %v825
        %v925 = vunpack.c.l.b16 %v839
        %v926 = vunpack.c.l.b16 %v853
        %v927 = vunpack.c.l.b16 %v867
        %v928 = vunpack.c.l.b16 %v881
        %v929 = vunpack.c.l.b16 %v895
        %v930 = vunpack.c.l.b16 %v909
        %v931 = vunpack.c.l.b16 %v923
        %v932 = vpack.c.b16 %v925, %v924
        %v933 = vpack.c.b16 %v927, %v926
        %v934 = vpack.c.b16 %v929, %v928
        %v935 = vpack.c.b16 %v931, %v930
        %940 = vst [vmem:[#allocation2 + $0x28] sm:$0xff] %v932
        %941 = vst [vmem:[#allocation2 + $0x70] sm:$0xff] %v933
        %942 = vst [vmem:[#allocation2 + $0xb8] sm:$0xff] %v934
        %943 = vst [vmem:[#allocation2 + $0x100] sm:$0xff] %v935
        %s944 = scalar_lea.vmem %s471, 8 [#allocation3]
        %v945 = vld [vmem:[%s944] sm:$0xf]
        %v946 = vld [vmem:[%s944 + $0x8] sm:$0xf]
        %v947 = vld [vmem:[%s944 + $0x10] sm:$0xf]
        %v948 = vld [vmem:[%s944 + $0x18] sm:$0xf]
        %v949 = vld [vmem:[%s944 + $0x20] sm:$0xf]
        %v950 = vld [vmem:[%s944 + $0x28] sm:$0xf]
        %v951 = vld [vmem:[%s944 + $0x30] sm:$0xf]
        %v952 = vld [vmem:[%s944 + $0x38] sm:$0xf]
        %v961 = vunpack.c.l.b16 %v945
        %v962 = vunpack.c.l.b16 %v946
        %v963 = vunpack.c.l.b16 %v947
        %v964 = vunpack.c.l.b16 %v948
        %v965 = vunpack.c.l.b16 %v949
        %v966 = vunpack.c.l.b16 %v950
        %v967 = vunpack.c.l.b16 %v951
        %v968 = vunpack.c.l.b16 %v952
        %v969 = vpack.c.b16 %v962, %v961
        %v970 = vpack.c.b16 %v964, %v963
        %v971 = vpack.c.b16 %v966, %v965
        %v972 = vpack.c.b16 %v968, %v967
        %977 = vst [vmem:[#allocation2 + $0x30] sm:$0xff] %v969
        %978 = vst [vmem:[#allocation2 + $0x78] sm:$0xff] %v970
        %979 = vst [vmem:[#allocation2 + $0xc0] sm:$0xff] %v971
        %980 = vst [vmem:[#allocation2 + $0x108] sm:$0xff] %v972
        %s981 = scalar_lea.vmem %s471, 80 [#allocation3]
        %v982 = vld [vmem:[%s981] sm:$0xf]
        %v983 = vld [vmem:[%s981 + $0x8] sm:$0xf]
        %v984 = vld [vmem:[%s981 + $0x10] sm:$0xf]
        %v985 = vld [vmem:[%s981 + $0x18] sm:$0xf]
        %v986 = vld [vmem:[%s981 + $0x20] sm:$0xf]
        %v987 = vld [vmem:[%s981 + $0x28] sm:$0xf]
        %v988 = vld [vmem:[%s981 + $0x30] sm:$0xf]
        %v989 = vld [vmem:[%s981 + $0x38] sm:$0xf]
        %v998 = vunpack.c.l.b16 %v982
        %v999 = vunpack.c.l.b16 %v983
        %v1000 = vunpack.c.l.b16 %v984
        %v1001 = vunpack.c.l.b16 %v985
        %v1002 = vunpack.c.l.b16 %v986
        %v1003 = vunpack.c.l.b16 %v987
        %v1004 = vunpack.c.l.b16 %v988
        %v1005 = vunpack.c.l.b16 %v989
        %v1006 = vpack.c.b16 %v999, %v998
        %v1007 = vpack.c.b16 %v1001, %v1000
        %v1008 = vpack.c.b16 %v1003, %v1002
        %v1009 = vpack.c.b16 %v1005, %v1004
        %1014 = vst [vmem:[#allocation2 + $0x38] sm:$0xff] %v1006
        %1015 = vst [vmem:[#allocation2 + $0x80] sm:$0xff] %v1007
        %1016 = vst [vmem:[#allocation2 + $0xc8] sm:$0xff] %v1008
        %1017 = vst [vmem:[#allocation2 + $0x110] sm:$0xff] %v1009
        %v1018 = vld [vmem:[%s944] sm:$0xf]
        %v1019 = vld [vmem:[%s944 + $0x4] sm:$0x1]
        %v1020 = vld [vmem:[%s944 + $0x8] sm:$0xf]
        %v1021 = vld [vmem:[%s944 + $0xc] sm:$0x1]
        %v1022 = vld [vmem:[%s944 + $0x10] sm:$0xf]
        %v1023 = vld [vmem:[%s944 + $0x14] sm:$0x1]
        %v1024 = vld [vmem:[%s944 + $0x18] sm:$0xf]
        %v1025 = vld [vmem:[%s944 + $0x1c] sm:$0x1]
        %v1026 = vld [vmem:[%s944 + $0x20] sm:$0xf]
        %v1027 = vld [vmem:[%s944 + $0x24] sm:$0x1]
        %v1028 = vld [vmem:[%s944 + $0x28] sm:$0xf]
        %v1029 = vld [vmem:[%s944 + $0x2c] sm:$0x1]
        %v1030 = vld [vmem:[%s944 + $0x30] sm:$0xf]
        %v1031 = vld [vmem:[%s944 + $0x34] sm:$0x1]
        %v1032 = vld [vmem:[%s944 + $0x38] sm:$0xf]
        %v1033 = vld [vmem:[%s944 + $0x3c] sm:$0x1]
        %v1035 = vshrl.u32 %v1018, 16
        %v1037 = vrot.slane %v1035, 4
        %v1038 = vshll.u32 %v1018, 16
        %v1040 = vrot.slane %v1038, 5
        %v1041 = vor.u32 %v1037, %v1040
        %v1042 = vrot.slane %v1041, 4
        %v1044 = vshll.u32 %v1019, 16
        %v1046 = vrot.slane %v1044, 5
        %v1047 = vsel %vm589, %v1042, %v1046
        %v1049 = vshrl.u32 %v1020, 16
        %v1051 = vrot.slane %v1049, 4
        %v1052 = vshll.u32 %v1020, 16
        %v1054 = vrot.slane %v1052, 5
        %v1055 = vor.u32 %v1051, %v1054
        %v1056 = vrot.slane %v1055, 4
        %v1058 = vshll.u32 %v1021, 16
        %v1060 = vrot.slane %v1058, 5
        %v1061 = vsel %vm589, %v1056, %v1060
        %v1063 = vshrl.u32 %v1022, 16
        %v1065 = vrot.slane %v1063, 4
        %v1066 = vshll.u32 %v1022, 16
        %v1068 = vrot.slane %v1066, 5
        %v1069 = vor.u32 %v1065, %v1068
        %v1070 = vrot.slane %v1069, 4
        %v1072 = vshll.u32 %v1023, 16
        %v1074 = vrot.slane %v1072, 5
        %v1075 = vsel %vm589, %v1070, %v1074
        %v1077 = vshrl.u32 %v1024, 16
        %v1079 = vrot.slane %v1077, 4
        %v1080 = vshll.u32 %v1024, 16
        %v1082 = vrot.slane %v1080, 5
        %v1083 = vor.u32 %v1079, %v1082
        %v1084 = vrot.slane %v1083, 4
        %v1086 = vshll.u32 %v1025, 16
        %v1088 = vrot.slane %v1086, 5
        %v1089 = vsel %vm589, %v1084, %v1088
        %v1091 = vshrl.u32 %v1026, 16
        %v1093 = vrot.slane %v1091, 4
        %v1094 = vshll.u32 %v1026, 16
        %v1096 = vrot.slane %v1094, 5
        %v1097 = vor.u32 %v1093, %v1096
        %v1098 = vrot.slane %v1097, 4
        %v1100 = vshll.u32 %v1027, 16
        %v1102 = vrot.slane %v1100, 5
        %v1103 = vsel %vm589, %v1098, %v1102
        %v1105 = vshrl.u32 %v1028, 16
        %v1107 = vrot.slane %v1105, 4
        %v1108 = vshll.u32 %v1028, 16
        %v1110 = vrot.slane %v1108, 5
        %v1111 = vor.u32 %v1107, %v1110
        %v1112 = vrot.slane %v1111, 4
        %v1114 = vshll.u32 %v1029, 16
        %v1116 = vrot.slane %v1114, 5
        %v1117 = vsel %vm589, %v1112, %v1116
        %v1119 = vshrl.u32 %v1030, 16
        %v1121 = vrot.slane %v1119, 4
        %v1122 = vshll.u32 %v1030, 16
        %v1124 = vrot.slane %v1122, 5
        %v1125 = vor.u32 %v1121, %v1124
        %v1126 = vrot.slane %v1125, 4
        %v1128 = vshll.u32 %v1031, 16
        %v1130 = vrot.slane %v1128, 5
        %v1131 = vsel %vm589, %v1126, %v1130
        %v1133 = vshrl.u32 %v1032, 16
        %v1135 = vrot.slane %v1133, 4
        %v1136 = vshll.u32 %v1032, 16
        %v1138 = vrot.slane %v1136, 5
        %v1139 = vor.u32 %v1135, %v1138
        %v1140 = vrot.slane %v1139, 4
        %v1142 = vshll.u32 %v1033, 16
        %v1144 = vrot.slane %v1142, 5
        %v1145 = vsel %vm589, %v1140, %v1144
        %v1146 = vunpack.c.l.b16 %v1047
        %v1147 = vunpack.c.l.b16 %v1061
        %v1148 = vunpack.c.l.b16 %v1075
        %v1149 = vunpack.c.l.b16 %v1089
        %v1150 = vunpack.c.l.b16 %v1103
        %v1151 = vunpack.c.l.b16 %v1117
        %v1152 = vunpack.c.l.b16 %v1131
        %v1153 = vunpack.c.l.b16 %v1145
        %v1154 = vpack.c.b16 %v1147, %v1146
        %v1155 = vpack.c.b16 %v1149, %v1148
        %v1156 = vpack.c.b16 %v1151, %v1150
        %v1157 = vpack.c.b16 %v1153, %v1152
        %1162 = vst [vmem:[#allocation2 + $0x40] sm:$0xff] %v1154
        %1163 = vst [vmem:[#allocation2 + $0x88] sm:$0xff] %v1155
        %1164 = vst [vmem:[#allocation2 + $0xd0] sm:$0xff] %v1156
        %1165 = vst [vmem:[#allocation2 + $0x118] sm:$0xff] %v1157
        %v1166 = vld [vmem:[#allocation2] sm:$0xff]
        %v1167 = vld [vmem:[#allocation2 + $0x8] sm:$0xff]
        %v1168 = vld [vmem:[#allocation2 + $0x10] sm:$0xff]
        %v1169 = vld [vmem:[#allocation2 + $0x18] sm:$0xff]
        %v1170 = vld [vmem:[#allocation2 + $0x20] sm:$0xff]
        %v1171 = vld [vmem:[#allocation2 + $0x28] sm:$0xff]
        %v1172 = vld [vmem:[#allocation2 + $0x30] sm:$0xff]
        %v1173 = vld [vmem:[#allocation2 + $0x38] sm:$0xff]
        %v1174 = vld [vmem:[#allocation2 + $0x40] sm:$0xff]
        %v1175 = vld [vmem:[#allocation2 + $0x48] sm:$0xff]
        %v1176 = vld [vmem:[#allocation2 + $0x50] sm:$0xff]
        %v1177 = vld [vmem:[#allocation2 + $0x58] sm:$0xff]
        %v1178 = vld [vmem:[#allocation2 + $0x60] sm:$0xff]
        %v1179 = vld [vmem:[#allocation2 + $0x68] sm:$0xff]
        %v1180 = vld [vmem:[#allocation2 + $0x70] sm:$0xff]
        %v1181 = vld [vmem:[#allocation2 + $0x78] sm:$0xff]
        %v1182 = vld [vmem:[#allocation2 + $0x80] sm:$0xff]
        %v1183 = vld [vmem:[#allocation2 + $0x88] sm:$0xff]
        %v1184 = vld [vmem:[#allocation2 + $0x90] sm:$0xff]
        %v1185 = vld [vmem:[#allocation2 + $0x98] sm:$0xff]
        %v1186 = vld [vmem:[#allocation2 + $0xa0] sm:$0xff]
        %v1187 = vld [vmem:[#allocation2 + $0xa8] sm:$0xff]
        %v1188 = vld [vmem:[#allocation2 + $0xb0] sm:$0xff]
        %v1189 = vld [vmem:[#allocation2 + $0xb8] sm:$0xff]
        %v1190 = vld [vmem:[#allocation2 + $0xc0] sm:$0xff]
        %v1191 = vld [vmem:[#allocation2 + $0xc8] sm:$0xff]
        %v1192 = vld [vmem:[#allocation2 + $0xd0] sm:$0xff]
        %v1193 = vld [vmem:[#allocation2 + $0xd8] sm:$0xff]
        %v1194 = vld [vmem:[#allocation2 + $0xe0] sm:$0xff]
        %v1195 = vld [vmem:[#allocation2 + $0xe8] sm:$0xff]
        %v1196 = vld [vmem:[#allocation2 + $0xf0] sm:$0xff]
        %v1197 = vld [vmem:[#allocation2 + $0xf8] sm:$0xff]
        %v1198 = vld [vmem:[#allocation2 + $0x100] sm:$0xff]
        %v1199 = vld [vmem:[#allocation2 + $0x108] sm:$0xff]
        %v1200 = vld [vmem:[#allocation2 + $0x110] sm:$0xff]
        %v1201 = vld [vmem:[#allocation2 + $0x118] sm:$0xff]
        %v1202 = vld [vmem:[%s1] sm:$0xf]
        %v1203 = vld [vmem:[%s1 + $0x4] sm:$0xf]
        %v1204 = vld [vmem:[%s1 + $0x8] sm:$0xf]
        %v1205 = vld [vmem:[%s1 + $0xc] sm:$0xf]
        %v1206 = vld [vmem:[%s1 + $0x10] sm:$0xf]
        %v1207 = vld [vmem:[%s1 + $0x14] sm:$0xf]
        %v1208 = vld [vmem:[%s1 + $0x18] sm:$0xf]
        %v1209 = vld [vmem:[%s1 + $0x1c] sm:$0xf]
        %v1210 = vld [vmem:[%s1 + $0x20] sm:$0xf]
        %v1211 = vld [vmem:[%s1 + $0x24] sm:$0xf]
        %v1212 = vld [vmem:[%s1 + $0x28] sm:$0xf]
        %v1213 = vld [vmem:[%s1 + $0x2c] sm:$0xf]
        %v1214 = vld [vmem:[%s1 + $0x30] sm:$0xf]
        %v1215 = vld [vmem:[%s1 + $0x34] sm:$0xf]
        %v1216 = vld [vmem:[%s1 + $0x38] sm:$0xf]
        %v1217 = vld [vmem:[%s1 + $0x3c] sm:$0xf]
        %v1218 = vld [vmem:[%s1 + $0x40] sm:$0xf]
        %v1219 = vld [vmem:[%s1 + $0x44] sm:$0xf]
        %v1220 = vld [vmem:[%s1 + $0x48] sm:$0xf]
        %v1221 = vld [vmem:[%s1 + $0x4c] sm:$0xf]
        %v1222 = vld [vmem:[%s1 + $0x50] sm:$0xf]
        %v1223 = vld [vmem:[%s1 + $0x54] sm:$0xf]
        %v1224 = vld [vmem:[%s1 + $0x58] sm:$0xf]
        %v1225 = vld [vmem:[%s1 + $0x5c] sm:$0xf]
        %v1226 = vld [vmem:[%s1 + $0x60] sm:$0xf]
        %v1227 = vld [vmem:[%s1 + $0x64] sm:$0xf]
        %v1228 = vld [vmem:[%s1 + $0x68] sm:$0xf]
        %v1229 = vld [vmem:[%s1 + $0x6c] sm:$0xf]
        %v1230 = vld [vmem:[%s1 + $0x70] sm:$0xf]
        %v1231 = vld [vmem:[%s1 + $0x74] sm:$0xf]
        %v1232 = vld [vmem:[%s1 + $0x78] sm:$0xf]
        %v1233 = vld [vmem:[%s1 + $0x7c] sm:$0xf]
        %v1234 = vld [vmem:[%s1 + $0x80] sm:$0xf]
        %v1235 = vld [vmem:[%s1 + $0x84] sm:$0xf]
        %v1236 = vld [vmem:[%s1 + $0x88] sm:$0xf]
        %v1237 = vld [vmem:[%s1 + $0x8c] sm:$0xf]
        %v1238 = vld [vmem:[%s1 + $0x90] sm:$0xf]
        %v1239 = vld [vmem:[%s1 + $0x94] sm:$0xf]
        %v1240 = vld [vmem:[%s1 + $0x98] sm:$0xf]
        %v1241 = vld [vmem:[%s1 + $0x9c] sm:$0xf]
        %v1242 = vld [vmem:[%s1 + $0xa0] sm:$0xf]
        %v1243 = vld [vmem:[%s1 + $0xa4] sm:$0xf]
        %v1244 = vld [vmem:[%s1 + $0xa8] sm:$0xf]
        %v1245 = vld [vmem:[%s1 + $0xac] sm:$0xf]
        %v1246 = vld [vmem:[%s1 + $0xb0] sm:$0xf]
        %v1247 = vld [vmem:[%s1 + $0xb4] sm:$0xf]
        %v1248 = vld [vmem:[%s1 + $0xb8] sm:$0xf]
        %v1249 = vld [vmem:[%s1 + $0xbc] sm:$0xf]
        %v1250 = vld [vmem:[%s1 + $0xc0] sm:$0xf]
        %v1251 = vld [vmem:[%s1 + $0xc4] sm:$0xf]
        %v1252 = vld [vmem:[%s1 + $0xc8] sm:$0xf]
        %v1253 = vld [vmem:[%s1 + $0xcc] sm:$0xf]
        %v1254 = vld [vmem:[%s1 + $0xd0] sm:$0xf]
        %v1255 = vld [vmem:[%s1 + $0xd4] sm:$0xf]
        %v1256 = vld [vmem:[%s1 + $0xd8] sm:$0xf]
        %v1257 = vld [vmem:[%s1 + $0xdc] sm:$0xf]
        %v1258 = vld [vmem:[%s1 + $0xe0] sm:$0xf]
        %v1259 = vld [vmem:[%s1 + $0xe4] sm:$0xf]
        %v1260 = vld [vmem:[%s1 + $0xe8] sm:$0xf]
        %v1261 = vld [vmem:[%s1 + $0xec] sm:$0xf]
        %v1262 = vld [vmem:[%s1 + $0xf0] sm:$0xf]
        %v1263 = vld [vmem:[%s1 + $0xf4] sm:$0xf]
        %v1264 = vld [vmem:[%s1 + $0xf8] sm:$0xf]
        %v1265 = vld [vmem:[%s1 + $0xfc] sm:$0xf]
        %v1266 = vld [vmem:[%s1 + $0x100] sm:$0xf]
        %v1267 = vld [vmem:[%s1 + $0x104] sm:$0xf]
        %v1268 = vld [vmem:[%s1 + $0x108] sm:$0xf]
        %v1269 = vld [vmem:[%s1 + $0x10c] sm:$0xf]
        %v1270 = vld [vmem:[%s1 + $0x110] sm:$0xf]
        %v1271 = vld [vmem:[%s1 + $0x114] sm:$0xf]
        %v1272 = vld [vmem:[%s1 + $0x118] sm:$0xf]
        %v1273 = vld [vmem:[%s1 + $0x11c] sm:$0xf]
        %v1274 = vld [vmem:[%s1 + $0x120] sm:$0xf]
        %v1275 = vld [vmem:[%s1 + $0x124] sm:$0xf]
        %v1276 = vld [vmem:[%s1 + $0x128] sm:$0xf]
        %v1277 = vld [vmem:[%s1 + $0x12c] sm:$0xf]
        %v1278 = vld [vmem:[%s1 + $0x130] sm:$0xf]
        %v1279 = vld [vmem:[%s1 + $0x134] sm:$0xf]
        %v1280 = vld [vmem:[%s1 + $0x138] sm:$0xf]
        %v1281 = vld [vmem:[%s1 + $0x13c] sm:$0xf]
        %v1282 = vld [vmem:[%s1 + $0x140] sm:$0xf]
        %v1283 = vld [vmem:[%s1 + $0x144] sm:$0xf]
        %v1284 = vld [vmem:[%s1 + $0x148] sm:$0xf]
        %v1285 = vld [vmem:[%s1 + $0x14c] sm:$0xf]
        %v1286 = vld [vmem:[%s1 + $0x150] sm:$0xf]
        %v1287 = vld [vmem:[%s1 + $0x154] sm:$0xf]
        %v1288 = vld [vmem:[%s1 + $0x158] sm:$0xf]
        %v1289 = vld [vmem:[%s1 + $0x15c] sm:$0xf]
        %v1290 = vld [vmem:[%s1 + $0x160] sm:$0xf]
        %v1291 = vld [vmem:[%s1 + $0x164] sm:$0xf]
        %v1292 = vld [vmem:[%s1 + $0x168] sm:$0xf]
        %v1293 = vld [vmem:[%s1 + $0x16c] sm:$0xf]
        %v1294 = vld [vmem:[%s1 + $0x170] sm:$0xf]
        %v1295 = vld [vmem:[%s1 + $0x174] sm:$0xf]
        %v1296 = vld [vmem:[%s1 + $0x178] sm:$0xf]
        %v1297 = vld [vmem:[%s1 + $0x17c] sm:$0xf]
        %v1298 = vld [vmem:[%s1 + $0x180] sm:$0xf]
        %v1299 = vld [vmem:[%s1 + $0x184] sm:$0xf]
        %v1300 = vld [vmem:[%s1 + $0x188] sm:$0xf]
        %v1301 = vld [vmem:[%s1 + $0x18c] sm:$0xf]
        %v1302 = vld [vmem:[%s1 + $0x190] sm:$0xf]
        %v1303 = vld [vmem:[%s1 + $0x194] sm:$0xf]
        %v1304 = vld [vmem:[%s1 + $0x198] sm:$0xf]
        %v1305 = vld [vmem:[%s1 + $0x19c] sm:$0xf]
        %v1306 = vld [vmem:[%s1 + $0x1a0] sm:$0xf]
        %v1307 = vld [vmem:[%s1 + $0x1a4] sm:$0xf]
        %v1308 = vld [vmem:[%s1 + $0x1a8] sm:$0xf]
        %v1309 = vld [vmem:[%s1 + $0x1ac] sm:$0xf]
        %v1310 = vld [vmem:[%s1 + $0x1b0] sm:$0xf]
        %v1311 = vld [vmem:[%s1 + $0x1b4] sm:$0xf]
        %v1312 = vld [vmem:[%s1 + $0x1b8] sm:$0xf]
        %v1313 = vld [vmem:[%s1 + $0x1bc] sm:$0xf]
        %v1314 = vld [vmem:[%s1 + $0x1c0] sm:$0xf]
        %v1315 = vld [vmem:[%s1 + $0x1c4] sm:$0xf]
        %v1316 = vld [vmem:[%s1 + $0x1c8] sm:$0xf]
        %v1317 = vld [vmem:[%s1 + $0x1cc] sm:$0xf]
        %v1318 = vld [vmem:[%s1 + $0x1d0] sm:$0xf]
        %v1319 = vld [vmem:[%s1 + $0x1d4] sm:$0xf]
        %v1320 = vld [vmem:[%s1 + $0x1d8] sm:$0xf]
        %v1321 = vld [vmem:[%s1 + $0x1dc] sm:$0xf]
        %v1322 = vld [vmem:[%s1 + $0x1e0] sm:$0xf]
        %v1323 = vld [vmem:[%s1 + $0x1e4] sm:$0xf]
        %v1324 = vld [vmem:[%s1 + $0x1e8] sm:$0xf]
        %v1325 = vld [vmem:[%s1 + $0x1ec] sm:$0xf]
        %v1326 = vld [vmem:[%s1 + $0x1f0] sm:$0xf]
        %v1327 = vld [vmem:[%s1 + $0x1f4] sm:$0xf]
        %v1328 = vld [vmem:[%s1 + $0x1f8] sm:$0xf]
        %v1329 = vld [vmem:[%s1 + $0x1fc] sm:$0xf]
        %v1330 = vld [vmem:[%s1 + $0x200] sm:$0xf]
        %v1331 = vld [vmem:[%s1 + $0x204] sm:$0xf]
        %v1332 = vld [vmem:[%s1 + $0x208] sm:$0xf]
        %v1333 = vld [vmem:[%s1 + $0x20c] sm:$0xf]
        %v1334 = vld [vmem:[%s1 + $0x210] sm:$0xf]
        %v1335 = vld [vmem:[%s1 + $0x214] sm:$0xf]
        %v1336 = vld [vmem:[%s1 + $0x218] sm:$0xf]
        %v1337 = vld [vmem:[%s1 + $0x21c] sm:$0xf]
        %v1338 = vld [vmem:[%s1 + $0x220] sm:$0xf]
        %v1339 = vld [vmem:[%s1 + $0x224] sm:$0xf]
        %v1340 = vld [vmem:[%s1 + $0x228] sm:$0xf]
        %v1341 = vld [vmem:[%s1 + $0x22c] sm:$0xf]
        %v1342 = vld [vmem:[%s1 + $0x230] sm:$0xf]
        %v1343 = vld [vmem:[%s1 + $0x234] sm:$0xf]
        %v1344 = vld [vmem:[%s1 + $0x238] sm:$0xf]
        %v1345 = vld [vmem:[%s1 + $0x23c] sm:$0xf]
        %v1346 = vld [vmem:[%s2] sm:$0x1]
        %v1348 = vlaneseq
        %v1349 = vshrl.u32 %v1348, 7
        %v1350 = vsub.s32 0, %v1349
        %v1351 = vrot.slane %v1346, %v1350
        %v1497 = vunpack.c.l.b16 %v1202
        %v1498 = vunpack.c.l.b16 %v1203
        %v1499 = vunpack.c.l.b16 %v1204
        %v1500 = vunpack.c.l.b16 %v1205
        %v1501 = vunpack.c.l.b16 %v1206
        %v1502 = vunpack.c.l.b16 %v1207
        %v1503 = vunpack.c.l.b16 %v1208
        %v1504 = vunpack.c.l.b16 %v1209
        %v1505 = vunpack.c.l.b16 %v1210
        %v1506 = vunpack.c.l.b16 %v1211
        %v1507 = vunpack.c.l.b16 %v1212
        %v1508 = vunpack.c.l.b16 %v1213
        %v1509 = vunpack.c.l.b16 %v1214
        %v1510 = vunpack.c.l.b16 %v1215
        %v1511 = vunpack.c.l.b16 %v1216
        %v1512 = vunpack.c.l.b16 %v1217
        %v1513 = vunpack.c.l.b16 %v1218
        %v1514 = vunpack.c.l.b16 %v1219
        %v1515 = vunpack.c.l.b16 %v1220
        %v1516 = vunpack.c.l.b16 %v1221
        %v1517 = vunpack.c.l.b16 %v1222
        %v1518 = vunpack.c.l.b16 %v1223
        %v1519 = vunpack.c.l.b16 %v1224
        %v1520 = vunpack.c.l.b16 %v1225
        %v1521 = vunpack.c.l.b16 %v1226
        %v1522 = vunpack.c.l.b16 %v1227
        %v1523 = vunpack.c.l.b16 %v1228
        %v1524 = vunpack.c.l.b16 %v1229
        %v1525 = vunpack.c.l.b16 %v1230
        %v1526 = vunpack.c.l.b16 %v1231
        %v1527 = vunpack.c.l.b16 %v1232
        %v1528 = vunpack.c.l.b16 %v1233
        %v1529 = vunpack.c.l.b16 %v1234
        %v1530 = vunpack.c.l.b16 %v1235
        %v1531 = vunpack.c.l.b16 %v1236
        %v1532 = vunpack.c.l.b16 %v1237
        %v1533 = vunpack.c.l.b16 %v1238
        %v1534 = vunpack.c.l.b16 %v1239
        %v1535 = vunpack.c.l.b16 %v1240
        %v1536 = vunpack.c.l.b16 %v1241
        %v1537 = vunpack.c.l.b16 %v1242
        %v1538 = vunpack.c.l.b16 %v1243
        %v1539 = vunpack.c.l.b16 %v1244
        %v1540 = vunpack.c.l.b16 %v1245
        %v1541 = vunpack.c.l.b16 %v1246
        %v1542 = vunpack.c.l.b16 %v1247
        %v1543 = vunpack.c.l.b16 %v1248
        %v1544 = vunpack.c.l.b16 %v1249
        %v1545 = vunpack.c.l.b16 %v1250
        %v1546 = vunpack.c.l.b16 %v1251
        %v1547 = vunpack.c.l.b16 %v1252
        %v1548 = vunpack.c.l.b16 %v1253
        %v1549 = vunpack.c.l.b16 %v1254
        %v1550 = vunpack.c.l.b16 %v1255
        %v1551 = vunpack.c.l.b16 %v1256
        %v1552 = vunpack.c.l.b16 %v1257
        %v1553 = vunpack.c.l.b16 %v1258
        %v1554 = vunpack.c.l.b16 %v1259
        %v1555 = vunpack.c.l.b16 %v1260
        %v1556 = vunpack.c.l.b16 %v1261
        %v1557 = vunpack.c.l.b16 %v1262
        %v1558 = vunpack.c.l.b16 %v1263
        %v1559 = vunpack.c.l.b16 %v1264
        %v1560 = vunpack.c.l.b16 %v1265
        %v1561 = vunpack.c.l.b16 %v1266
        %v1562 = vunpack.c.l.b16 %v1267
        %v1563 = vunpack.c.l.b16 %v1268
        %v1564 = vunpack.c.l.b16 %v1269
        %v1565 = vunpack.c.l.b16 %v1270
        %v1566 = vunpack.c.l.b16 %v1271
        %v1567 = vunpack.c.l.b16 %v1272
        %v1568 = vunpack.c.l.b16 %v1273
        %v1569 = vunpack.c.l.b16 %v1274
        %v1570 = vunpack.c.l.b16 %v1275
        %v1571 = vunpack.c.l.b16 %v1276
        %v1572 = vunpack.c.l.b16 %v1277
        %v1573 = vunpack.c.l.b16 %v1278
        %v1574 = vunpack.c.l.b16 %v1279
        %v1575 = vunpack.c.l.b16 %v1280
        %v1576 = vunpack.c.l.b16 %v1281
        %v1577 = vunpack.c.l.b16 %v1282
        %v1578 = vunpack.c.l.b16 %v1283
        %v1579 = vunpack.c.l.b16 %v1284
        %v1580 = vunpack.c.l.b16 %v1285
        %v1581 = vunpack.c.l.b16 %v1286
        %v1582 = vunpack.c.l.b16 %v1287
        %v1583 = vunpack.c.l.b16 %v1288
        %v1584 = vunpack.c.l.b16 %v1289
        %v1585 = vunpack.c.l.b16 %v1290
        %v1586 = vunpack.c.l.b16 %v1291
        %v1587 = vunpack.c.l.b16 %v1292
        %v1588 = vunpack.c.l.b16 %v1293
        %v1589 = vunpack.c.l.b16 %v1294
        %v1590 = vunpack.c.l.b16 %v1295
        %v1591 = vunpack.c.l.b16 %v1296
        %v1592 = vunpack.c.l.b16 %v1297
        %v1593 = vunpack.c.l.b16 %v1298
        %v1594 = vunpack.c.l.b16 %v1299
        %v1595 = vunpack.c.l.b16 %v1300
        %v1596 = vunpack.c.l.b16 %v1301
        %v1597 = vunpack.c.l.b16 %v1302
        %v1598 = vunpack.c.l.b16 %v1303
        %v1599 = vunpack.c.l.b16 %v1304
        %v1600 = vunpack.c.l.b16 %v1305
        %v1601 = vunpack.c.l.b16 %v1306
        %v1602 = vunpack.c.l.b16 %v1307
        %v1603 = vunpack.c.l.b16 %v1308
        %v1604 = vunpack.c.l.b16 %v1309
        %v1605 = vunpack.c.l.b16 %v1310
        %v1606 = vunpack.c.l.b16 %v1311
        %v1607 = vunpack.c.l.b16 %v1312
        %v1608 = vunpack.c.l.b16 %v1313
        %v1609 = vunpack.c.l.b16 %v1314
        %v1610 = vunpack.c.l.b16 %v1315
        %v1611 = vunpack.c.l.b16 %v1316
        %v1612 = vunpack.c.l.b16 %v1317
        %v1613 = vunpack.c.l.b16 %v1318
        %v1614 = vunpack.c.l.b16 %v1319
        %v1615 = vunpack.c.l.b16 %v1320
        %v1616 = vunpack.c.l.b16 %v1321
        %v1617 = vunpack.c.l.b16 %v1322
        %v1618 = vunpack.c.l.b16 %v1323
        %v1619 = vunpack.c.l.b16 %v1324
        %v1620 = vunpack.c.l.b16 %v1325
        %v1621 = vunpack.c.l.b16 %v1326
        %v1622 = vunpack.c.l.b16 %v1327
        %v1623 = vunpack.c.l.b16 %v1328
        %v1624 = vunpack.c.l.b16 %v1329
        %v1625 = vunpack.c.l.b16 %v1330
        %v1626 = vunpack.c.l.b16 %v1331
        %v1627 = vunpack.c.l.b16 %v1332
        %v1628 = vunpack.c.l.b16 %v1333
        %v1629 = vunpack.c.l.b16 %v1334
        %v1630 = vunpack.c.l.b16 %v1335
        %v1631 = vunpack.c.l.b16 %v1336
        %v1632 = vunpack.c.l.b16 %v1337
        %v1633 = vunpack.c.l.b16 %v1338
        %v1634 = vunpack.c.l.b16 %v1339
        %v1635 = vunpack.c.l.b16 %v1340
        %v1636 = vunpack.c.l.b16 %v1341
        %v1637 = vunpack.c.l.b16 %v1342
        %v1638 = vunpack.c.l.b16 %v1343
        %v1639 = vunpack.c.l.b16 %v1344
        %v1640 = vunpack.c.l.b16 %v1345
        %v1641 = vpack.c.b16 %v1498, %v1497
        %v1642 = vpack.c.b16 %v1500, %v1499
        %v1643 = vpack.c.b16 %v1502, %v1501
        %v1644 = vpack.c.b16 %v1504, %v1503
        %v1645 = vpack.c.b16 %v1506, %v1505
        %v1646 = vpack.c.b16 %v1508, %v1507
        %v1647 = vpack.c.b16 %v1510, %v1509
        %v1648 = vpack.c.b16 %v1512, %v1511
        %v1649 = vpack.c.b16 %v1514, %v1513
        %v1650 = vpack.c.b16 %v1516, %v1515
        %v1651 = vpack.c.b16 %v1518, %v1517
        %v1652 = vpack.c.b16 %v1520, %v1519
        %v1653 = vpack.c.b16 %v1522, %v1521
        %v1654 = vpack.c.b16 %v1524, %v1523
        %v1655 = vpack.c.b16 %v1526, %v1525
        %v1656 = vpack.c.b16 %v1528, %v1527
        %v1657 = vpack.c.b16 %v1530, %v1529
        %v1658 = vpack.c.b16 %v1532, %v1531
        %v1659 = vpack.c.b16 %v1534, %v1533
        %v1660 = vpack.c.b16 %v1536, %v1535
        %v1661 = vpack.c.b16 %v1538, %v1537
        %v1662 = vpack.c.b16 %v1540, %v1539
        %v1663 = vpack.c.b16 %v1542, %v1541
        %v1664 = vpack.c.b16 %v1544, %v1543
        %v1665 = vpack.c.b16 %v1546, %v1545
        %v1666 = vpack.c.b16 %v1548, %v1547
        %v1667 = vpack.c.b16 %v1550, %v1549
        %v1668 = vpack.c.b16 %v1552, %v1551
        %v1669 = vpack.c.b16 %v1554, %v1553
        %v1670 = vpack.c.b16 %v1556, %v1555
        %v1671 = vpack.c.b16 %v1558, %v1557
        %v1672 = vpack.c.b16 %v1560, %v1559
        %v1673 = vpack.c.b16 %v1562, %v1561
        %v1674 = vpack.c.b16 %v1564, %v1563
        %v1675 = vpack.c.b16 %v1566, %v1565
        %v1676 = vpack.c.b16 %v1568, %v1567
        %v1677 = vpack.c.b16 %v1570, %v1569
        %v1678 = vpack.c.b16 %v1572, %v1571
        %v1679 = vpack.c.b16 %v1574, %v1573
        %v1680 = vpack.c.b16 %v1576, %v1575
        %v1681 = vpack.c.b16 %v1578, %v1577
        %v1682 = vpack.c.b16 %v1580, %v1579
        %v1683 = vpack.c.b16 %v1582, %v1581
        %v1684 = vpack.c.b16 %v1584, %v1583
        %v1685 = vpack.c.b16 %v1586, %v1585
        %v1686 = vpack.c.b16 %v1588, %v1587
        %v1687 = vpack.c.b16 %v1590, %v1589
        %v1688 = vpack.c.b16 %v1592, %v1591
        %v1689 = vpack.c.b16 %v1594, %v1593
        %v1690 = vpack.c.b16 %v1596, %v1595
        %v1691 = vpack.c.b16 %v1598, %v1597
        %v1692 = vpack.c.b16 %v1600, %v1599
        %v1693 = vpack.c.b16 %v1602, %v1601
        %v1694 = vpack.c.b16 %v1604, %v1603
        %v1695 = vpack.c.b16 %v1606, %v1605
        %v1696 = vpack.c.b16 %v1608, %v1607
        %v1697 = vpack.c.b16 %v1610, %v1609
        %v1698 = vpack.c.b16 %v1612, %v1611
        %v1699 = vpack.c.b16 %v1614, %v1613
        %v1700 = vpack.c.b16 %v1616, %v1615
        %v1701 = vpack.c.b16 %v1618, %v1617
        %v1702 = vpack.c.b16 %v1620, %v1619
        %v1703 = vpack.c.b16 %v1622, %v1621
        %v1704 = vpack.c.b16 %v1624, %v1623
        %v1705 = vpack.c.b16 %v1626, %v1625
        %v1706 = vpack.c.b16 %v1628, %v1627
        %v1707 = vpack.c.b16 %v1630, %v1629
        %v1708 = vpack.c.b16 %v1632, %v1631
        %v1709 = vpack.c.b16 %v1634, %v1633
        %v1710 = vpack.c.b16 %v1636, %v1635
        %v1711 = vpack.c.b16 %v1638, %v1637
        %v1712 = vpack.c.b16 %v1640, %v1639
        %1785 = vmatprep.subr.bf16.mxu0 0
        %1786 = vmatpush1.bf16.msra.mxu0 %v1641
        %1787 = vmatprep.subr.bf16.mxu0 0
        %1788 = vmatpush1.bf16.msra.mxu0 %v1642
        %1789 = vmatprep.subr.bf16.mxu0 0
        %1790 = vmatpush1.bf16.msra.mxu0 %v1643
        %1791 = vmatprep.subr.bf16.mxu0 0
        %1792 = vmatpush1.bf16.msra.mxu0 %v1644
        %1793 = vmatprep.subr.bf16.mxu0 0
        %1794 = vmatpush1.bf16.msra.mxu0 %v1645
        %1795 = vmatprep.subr.bf16.mxu0 0
        %1796 = vmatpush1.bf16.msra.mxu0 %v1646
        %1797 = vmatprep.subr.bf16.mxu0 0
        %1798 = vmatpush1.bf16.msra.mxu0 %v1647
        %1799 = vmatprep.subr.bf16.mxu0 0
        %1800 = vmatpush1.bf16.msra.mxu0 %v1648
        %1801 = vmatprep.subr.bf16.mxu0 0
        %1802 = vmatpush1.bf16.msra.mxu0 %v1649
        %1803 = vmatprep.subr.bf16.mxu0 0
        %1804 = vmatpush1.bf16.msra.mxu0 %v1650
        %1805 = vmatprep.subr.bf16.mxu0 0
        %1806 = vmatpush1.bf16.msra.mxu0 %v1651
        %1807 = vmatprep.subr.bf16.mxu0 0
        %1808 = vmatpush1.bf16.msra.mxu0 %v1652
        %1809 = vmatprep.subr.bf16.mxu0 0
        %1810 = vmatpush1.bf16.msra.mxu0 %v1653
        %1811 = vmatprep.subr.bf16.mxu0 0
        %1812 = vmatpush1.bf16.msra.mxu0 %v1654
        %1813 = vmatprep.subr.bf16.mxu0 0
        %1814 = vmatpush1.bf16.msra.mxu0 %v1655
        %1815 = vmatprep.subr.bf16.mxu0 0
        %1816 = vmatpush1.bf16.msra.mxu0 %v1656
        %1817 = vmatprep.mubr.bf16.mxu0 %v1167
        %1818 = vmatmul.mubr.bf16.gmra.mrb[0].mxu0 %v1166
        %v1819 = vpop.f32.mrb[0].mxu0
        %v1820 = vadd.f32 %v1351, %v1819
        %v1821 = vpop.f32.mrb[0].mxu0
        %v1822 = vpop.f32.mrb[0].mxu0
        %v1823 = vadd.f32 %v1351, %v1822
        %v1824 = vpop.f32.mrb[0].mxu0
        %1825 = vmatprep.mubr.bf16.mxu0 %v1176
        %1826 = vmatmul.mubr.bf16.gmra.mrb[0].mxu0 %v1175
        %v1827 = vpop.f32.mrb[0].mxu0
        %v1828 = vadd.f32 %v1351, %v1827
        %v1829 = vpop.f32.mrb[0].mxu0
        %v1830 = vpop.f32.mrb[0].mxu0
        %v1831 = vadd.f32 %v1351, %v1830
        %v1832 = vpop.f32.mrb[0].mxu0
        %1833 = vmatprep.mubr.bf16.mxu0 %v1185
        %1834 = vmatmul.mubr.bf16.gmra.mrb[0].mxu0 %v1184
        %v1835 = vpop.f32.mrb[0].mxu0
        %v1836 = vadd.f32 %v1351, %v1835
        %v1837 = vpop.f32.mrb[0].mxu0
        %v1838 = vpop.f32.mrb[0].mxu0
        %v1839 = vadd.f32 %v1351, %v1838
        %v1840 = vpop.f32.mrb[0].mxu0
        %1841 = vmatprep.mubr.bf16.mxu0 %v1194
        %1842 = vmatmul.mubr.bf16.gmra.mrb[0].mxu0 %v1193
        %v1843 = vpop.f32.mrb[0].mxu0
        %v1844 = vadd.f32 %v1351, %v1843
        %v1845 = vpop.f32.mrb[0].mxu0
        %v1846 = vpop.f32.mrb[0].mxu0
        %v1847 = vadd.f32 %v1351, %v1846
        %v1848 = vpop.f32.mrb[0].mxu0
        %1849 = vdwg.mxu0
        %1850 = vmatprep.subr.bf16.mxu0 0
        %1851 = vmatpush1.bf16.msra.mxu0 %v1657
        %1852 = vmatprep.subr.bf16.mxu0 0
        %1853 = vmatpush1.bf16.msra.mxu0 %v1658
        %1854 = vmatprep.subr.bf16.mxu0 0
        %1855 = vmatpush1.bf16.msra.mxu0 %v1659
        %1856 = vmatprep.subr.bf16.mxu0 0
        %1857 = vmatpush1.bf16.msra.mxu0 %v1660
        %1858 = vmatprep.subr.bf16.mxu0 0
        %1859 = vmatpush1.bf16.msra.mxu0 %v1661
        %1860 = vmatprep.subr.bf16.mxu0 0
        %1861 = vmatpush1.bf16.msra.mxu0 %v1662
        %1862 = vmatprep.subr.bf16.mxu0 0
        %1863 = vmatpush1.bf16.msra.mxu0 %v1663
        %1864 = vmatprep.subr.bf16.mxu0 0
        %1865 = vmatpush1.bf16.msra.mxu0 %v1664
        %1866 = vmatprep.subr.bf16.mxu0 0
        %1867 = vmatpush1.bf16.msra.mxu0 %v1665
        %1868 = vmatprep.subr.bf16.mxu0 0
        %1869 = vmatpush1.bf16.msra.mxu0 %v1666
        %1870 = vmatprep.subr.bf16.mxu0 0
        %1871 = vmatpush1.bf16.msra.mxu0 %v1667
        %1872 = vmatprep.subr.bf16.mxu0 0
        %1873 = vmatpush1.bf16.msra.mxu0 %v1668
        %1874 = vmatprep.subr.bf16.mxu0 0
        %1875 = vmatpush1.bf16.msra.mxu0 %v1669
        %1876 = vmatprep.subr.bf16.mxu0 0
        %1877 = vmatpush1.bf16.msra.mxu0 %v1670
        %1878 = vmatprep.subr.bf16.mxu0 0
        %1879 = vmatpush1.bf16.msra.mxu0 %v1671
        %1880 = vmatprep.subr.bf16.mxu0 0
        %1881 = vmatpush1.bf16.msra.mxu0 %v1672
        %1882 = vmatprep.mubr.bf16.mxu0 %v1169
        %1883 = vmatmul.mubr.bf16.gmra.mrb[0].mxu0 %v1168
        %v1884 = vpop.f32.mrb[0].mxu0
        %v1885 = vadd.f32 %v1820, %v1884
        %v1886 = vpop.f32.mrb[0].mxu0
        %v1887 = vpop.f32.mrb[0].mxu0
        %v1888 = vadd.f32 %v1823, %v1887
        %v1889 = vpop.f32.mrb[0].mxu0
        %1890 = vmatprep.mubr.bf16.mxu0 %v1178
        %1891 = vmatmul.mubr.bf16.gmra.mrb[0].mxu0 %v1177
        %v1892 = vpop.f32.mrb[0].mxu0
        %v1893 = vadd.f32 %v1828, %v1892
        %v1894 = vpop.f32.mrb[0].mxu0
        %v1895 = vpop.f32.mrb[0].mxu0
        %v1896 = vadd.f32 %v1831, %v1895
        %v1897 = vpop.f32.mrb[0].mxu0
        %1898 = vmatprep.mubr.bf16.mxu0 %v1187
        %1899 = vmatmul.mubr.bf16.gmra.mrb[0].mxu0 %v1186
        %v1900 = vpop.f32.mrb[0].mxu0
        %v1901 = vadd.f32 %v1836, %v1900
        %v1902 = vpop.f32.mrb[0].mxu0
        %v1903 = vpop.f32.mrb[0].mxu0
        %v1904 = vadd.f32 %v1839, %v1903
        %v1905 = vpop.f32.mrb[0].mxu0
        %1906 = vmatprep.mubr.bf16.mxu0 %v1196
        %1907 = vmatmul.mubr.bf16.gmra.mrb[0].mxu0 %v1195
        %v1908 = vpop.f32.mrb[0].mxu0
        %v1909 = vadd.f32 %v1844, %v1908
        %v1910 = vpop.f32.mrb[0].mxu0
        %v1911 = vpop.f32.mrb[0].mxu0
        %v1912 = vadd.f32 %v1847, %v1911
        %v1913 = vpop.f32.mrb[0].mxu0
        %1914 = vdwg.mxu0
        %1915 = vmatprep.subr.bf16.mxu0 0
        %1916 = vmatpush1.bf16.msra.mxu0 %v1673
        %1917 = vmatprep.subr.bf16.mxu0 0
        %1918 = vmatpush1.bf16.msra.mxu0 %v1674
        %1919 = vmatprep.subr.bf16.mxu0 0
        %1920 = vmatpush1.bf16.msra.mxu0 %v1675
        %1921 = vmatprep.subr.bf16.mxu0 0
        %1922 = vmatpush1.bf16.msra.mxu0 %v1676
        %1923 = vmatprep.subr.bf16.mxu0 0
        %1924 = vmatpush1.bf16.msra.mxu0 %v1677
        %1925 = vmatprep.subr.bf16.mxu0 0
        %1926 = vmatpush1.bf16.msra.mxu0 %v1678
        %1927 = vmatprep.subr.bf16.mxu0 0
        %1928 = vmatpush1.bf16.msra.mxu0 %v1679
        %1929 = vmatprep.subr.bf16.mxu0 0
        %1930 = vmatpush1.bf16.msra.mxu0 %v1680
        %1931 = vmatprep.subr.bf16.mxu0 0
        %1932 = vmatpush1.bf16.msra.mxu0 %v1681
        %1933 = vmatprep.subr.bf16.mxu0 0
        %1934 = vmatpush1.bf16.msra.mxu0 %v1682
        %1935 = vmatprep.subr.bf16.mxu0 0
        %1936 = vmatpush1.bf16.msra.mxu0 %v1683
        %1937 = vmatprep.subr.bf16.mxu0 0
        %1938 = vmatpush1.bf16.msra.mxu0 %v1684
        %1939 = vmatprep.subr.bf16.mxu0 0
        %1940 = vmatpush1.bf16.msra.mxu0 %v1685
        %1941 = vmatprep.subr.bf16.mxu0 0
        %1942 = vmatpush1.bf16.msra.mxu0 %v1686
        %1943 = vmatprep.subr.bf16.mxu0 0
        %1944 = vmatpush1.bf16.msra.mxu0 %v1687
        %1945 = vmatprep.subr.bf16.mxu0 0
        %1946 = vmatpush1.bf16.msra.mxu0 %v1688
        %1947 = vmatprep.mubr.bf16.mxu0 %v1171
        %1948 = vmatmul.mubr.bf16.gmra.mrb[0].mxu0 %v1170
        %v1949 = vpop.f32.mrb[0].mxu0
        %v1950 = vadd.f32 %v1885, %v1949
        %v1951 = vpop.f32.mrb[0].mxu0
        %v1952 = vpop.f32.mrb[0].mxu0
        %v1953 = vadd.f32 %v1888, %v1952
        %v1954 = vpop.f32.mrb[0].mxu0
        %1955 = vmatprep.mubr.bf16.mxu0 %v1180
        %1956 = vmatmul.mubr.bf16.gmra.mrb[0].mxu0 %v1179
        %v1957 = vpop.f32.mrb[0].mxu0
        %v1958 = vadd.f32 %v1893, %v1957
        %v1959 = vpop.f32.mrb[0].mxu0
        %v1960 = vpop.f32.mrb[0].mxu0
        %v1961 = vadd.f32 %v1896, %v1960
        %v1962 = vpop.f32.mrb[0].mxu0
        %1963 = vmatprep.mubr.bf16.mxu0 %v1189
        %1964 = vmatmul.mubr.bf16.gmra.mrb[0].mxu0 %v1188
        %v1965 = vpop.f32.mrb[0].mxu0
        %v1966 = vadd.f32 %v1901, %v1965
        %v1967 = vpop.f32.mrb[0].mxu0
        %v1968 = vpop.f32.mrb[0].mxu0
        %v1969 = vadd.f32 %v1904, %v1968
        %v1970 = vpop.f32.mrb[0].mxu0
        %1971 = vmatprep.mubr.bf16.mxu0 %v1198
        %1972 = vmatmul.mubr.bf16.gmra.mrb[0].mxu0 %v1197
        %v1973 = vpop.f32.mrb[0].mxu0
        %v1974 = vadd.f32 %v1909, %v1973
        %v1975 = vpop.f32.mrb[0].mxu0
        %v1976 = vpop.f32.mrb[0].mxu0
        %v1977 = vadd.f32 %v1912, %v1976
        %v1978 = vpop.f32.mrb[0].mxu0
        %1979 = vdwg.mxu0
        %1980 = vmatprep.subr.bf16.mxu0 0
        %1981 = vmatpush1.bf16.msra.mxu0 %v1689
        %1982 = vmatprep.subr.bf16.mxu0 0
        %1983 = vmatpush1.bf16.msra.mxu0 %v1690
        %1984 = vmatprep.subr.bf16.mxu0 0
        %1985 = vmatpush1.bf16.msra.mxu0 %v1691
        %1986 = vmatprep.subr.bf16.mxu0 0
        %1987 = vmatpush1.bf16.msra.mxu0 %v1692
        %1988 = vmatprep.subr.bf16.mxu0 0
        %1989 = vmatpush1.bf16.msra.mxu0 %v1693
        %1990 = vmatprep.subr.bf16.mxu0 0
        %1991 = vmatpush1.bf16.msra.mxu0 %v1694
        %1992 = vmatprep.subr.bf16.mxu0 0
        %1993 = vmatpush1.bf16.msra.mxu0 %v1695
        %1994 = vmatprep.subr.bf16.mxu0 0
        %1995 = vmatpush1.bf16.msra.mxu0 %v1696
        %1996 = vmatprep.subr.bf16.mxu0 0
        %1997 = vmatpush1.bf16.msra.mxu0 %v1697
        %1998 = vmatprep.subr.bf16.mxu0 0
        %1999 = vmatpush1.bf16.msra.mxu0 %v1698
        %2000 = vmatprep.subr.bf16.mxu0 0
        %2001 = vmatpush1.bf16.msra.mxu0 %v1699
        %2002 = vmatprep.subr.bf16.mxu0 0
        %2003 = vmatpush1.bf16.msra.mxu0 %v1700
        %2004 = vmatprep.subr.bf16.mxu0 0
        %2005 = vmatpush1.bf16.msra.mxu0 %v1701
        %2006 = vmatprep.subr.bf16.mxu0 0
        %2007 = vmatpush1.bf16.msra.mxu0 %v1702
        %2008 = vmatprep.subr.bf16.mxu0 0
        %2009 = vmatpush1.bf16.msra.mxu0 %v1703
        %2010 = vmatprep.subr.bf16.mxu0 0
        %2011 = vmatpush1.bf16.msra.mxu0 %v1704
        %2012 = vmatprep.mubr.bf16.mxu0 %v1173
        %2013 = vmatmul.mubr.bf16.gmra.mrb[0].mxu0 %v1172
        %v2014 = vpop.f32.mrb[0].mxu0
        %v2015 = vadd.f32 %v1950, %v2014
        %v2016 = vpop.f32.mrb[0].mxu0
        %v2017 = vpop.f32.mrb[0].mxu0
        %v2018 = vadd.f32 %v1953, %v2017
        %v2019 = vpop.f32.mrb[0].mxu0
        %2020 = vmatprep.mubr.bf16.mxu0 %v1182
        %2021 = vmatmul.mubr.bf16.gmra.mrb[0].mxu0 %v1181
        %v2022 = vpop.f32.mrb[0].mxu0
        %v2023 = vadd.f32 %v1958, %v2022
        %v2024 = vpop.f32.mrb[0].mxu0
        %v2025 = vpop.f32.mrb[0].mxu0
        %v2026 = vadd.f32 %v1961, %v2025
        %v2027 = vpop.f32.mrb[0].mxu0
        %2028 = vmatprep.mubr.bf16.mxu0 %v1191
        %2029 = vmatmul.mubr.bf16.gmra.mrb[0].mxu0 %v1190
        %v2030 = vpop.f32.mrb[0].mxu0
        %v2031 = vadd.f32 %v1966, %v2030
        %v2032 = vpop.f32.mrb[0].mxu0
        %v2033 = vpop.f32.mrb[0].mxu0
        %v2034 = vadd.f32 %v1969, %v2033
        %v2035 = vpop.f32.mrb[0].mxu0
        %2036 = vmatprep.mubr.bf16.mxu0 %v1200
        %2037 = vmatmul.mubr.bf16.gmra.mrb[0].mxu0 %v1199
        %v2038 = vpop.f32.mrb[0].mxu0
        %v2039 = vadd.f32 %v1974, %v2038
        %v2040 = vpop.f32.mrb[0].mxu0
        %v2041 = vpop.f32.mrb[0].mxu0
        %v2042 = vadd.f32 %v1977, %v2041
        %v2043 = vpop.f32.mrb[0].mxu0
        %2044 = vdwg.mxu0
        %2045 = vmatprep.subr.bf16.mxu0 0
        %2046 = vmatpush1.bf16.msra.mxu0 %v1705
        %2047 = vmatprep.subr.bf16.mxu0 0
        %2048 = vmatpush1.bf16.msra.mxu0 %v1706
        %2049 = vmatprep.subr.bf16.mxu0 0
        %2050 = vmatpush1.bf16.msra.mxu0 %v1707
        %2051 = vmatprep.subr.bf16.mxu0 0
        %2052 = vmatpush1.bf16.msra.mxu0 %v1708
        %2053 = vmatprep.subr.bf16.mxu0 0
        %2054 = vmatpush1.bf16.msra.mxu0 %v1709
        %2055 = vmatprep.subr.bf16.mxu0 0
        %2056 = vmatpush1.bf16.msra.mxu0 %v1710
        %2057 = vmatprep.subr.bf16.mxu0 0
        %2058 = vmatpush1.bf16.msra.mxu0 %v1711
        %2059 = vmatprep.subr.bf16.mxu0 0
        %2060 = vmatpush1.bf16.msra.mxu0 %v1712
        %2061 = vmatprep.subr.bf16.mxu0 0
        %2062 = vmatpush1.bf16.msra.mxu0 0
        %2063 = vmatprep.subr.bf16.mxu0 0
        %2064 = vmatpush1.bf16.msra.mxu0 0
        %2065 = vmatprep.subr.bf16.mxu0 0
        %2066 = vmatpush1.bf16.msra.mxu0 0
        %2067 = vmatprep.subr.bf16.mxu0 0
        %2068 = vmatpush1.bf16.msra.mxu0 0
        %2069 = vmatprep.subr.bf16.mxu0 0
        %2070 = vmatpush1.bf16.msra.mxu0 0
        %2071 = vmatprep.subr.bf16.mxu0 0
        %2072 = vmatpush1.bf16.msra.mxu0 0
        %2073 = vmatprep.subr.bf16.mxu0 0
        %2074 = vmatpush1.bf16.msra.mxu0 0
        %2075 = vmatprep.subr.bf16.mxu0 0
        %2076 = vmatpush1.bf16.msra.mxu0 0
        %2077 = vmatprep.mubr.bf16.mxu0 0
        %2078 = vmatmul.mubr.bf16.gmra.mrb[0].mxu0 %v1174
        %v2079 = vpop.f32.mrb[0].mxu0
        %v2080 = vadd.f32 %v2015, %v2079
        %v2081 = vpop.f32.mrb[0].mxu0
        %v2082 = vpop.f32.mrb[0].mxu0
        %v2083 = vadd.f32 %v2018, %v2082
        %v2084 = vpop.f32.mrb[0].mxu0
        %2085 = vmatprep.mubr.bf16.mxu0 0
        %2086 = vmatmul.mubr.bf16.gmra.mrb[0].mxu0 %v1183
        %v2087 = vpop.f32.mrb[0].mxu0
        %v2088 = vadd.f32 %v2023, %v2087
        %v2089 = vpop.f32.mrb[0].mxu0
        %v2090 = vpop.f32.mrb[0].mxu0
        %v2091 = vadd.f32 %v2026, %v2090
        %v2092 = vpop.f32.mrb[0].mxu0
        %2093 = vmatprep.mubr.bf16.mxu0 0
        %2094 = vmatmul.mubr.bf16.gmra.mrb[0].mxu0 %v1192
        %v2095 = vpop.f32.mrb[0].mxu0
        %v2096 = vadd.f32 %v2031, %v2095
        %v2097 = vpop.f32.mrb[0].mxu0
        %v2098 = vpop.f32.mrb[0].mxu0
        %v2099 = vadd.f32 %v2034, %v2098
        %v2100 = vpop.f32.mrb[0].mxu0
        %2101 = vmatprep.mubr.bf16.mxu0 0
        %2102 = vmatmul.mubr.bf16.gmra.mrb[0].mxu0 %v1201
        %v2103 = vpop.f32.mrb[0].mxu0
        %v2104 = vadd.f32 %v2039, %v2103
        %v2105 = vpop.f32.mrb[0].mxu0
        %v2106 = vpop.f32.mrb[0].mxu0
        %v2107 = vadd.f32 %v2042, %v2106
        %v2108 = vpop.f32.mrb[0].mxu0
        %2109 = vdwg.mxu0
        %v2110 = vxor.u32 %v2080, 2147483648
        %v2111 = vxor.u32 %v2083, 2147483648
        %v2112 = vxor.u32 %v2088, 2147483648
        %v2113 = vxor.u32 %v2091, 2147483648
        %v2114 = vxor.u32 %v2096, 2147483648
        %v2115 = vxor.u32 %v2099, 2147483648
        %v2116 = vxor.u32 %v2104, 2147483648
        %v2117 = vxor.u32 %v2107, 2147483648
        %v2118 = vmul.f32 %v2110, 1.442695
        %v2119 = vpow.pop %v2118
        %v2120 = vmul.f32 %v2111, 1.442695
        %v2121 = vpow.pop %v2120
        %v2122 = vmul.f32 %v2112, 1.442695
        %v2123 = vpow.pop %v2122
        %v2124 = vmul.f32 %v2113, 1.442695
        %v2125 = vpow.pop %v2124
        %v2126 = vmul.f32 %v2114, 1.442695
        %v2127 = vpow.pop %v2126
        %v2128 = vmul.f32 %v2115, 1.442695
        %v2129 = vpow.pop %v2128
        %v2130 = vmul.f32 %v2116, 1.442695
        %v2131 = vpow.pop %v2130
        %v2132 = vmul.f32 %v2117, 1.442695
        %v2133 = vpow.pop %v2132
        %v2134 = vadd.f32 %v2119, 1.0
        %v2135 = vadd.f32 %v2121, 1.0
        %v2136 = vadd.f32 %v2123, 1.0
        %v2137 = vadd.f32 %v2125, 1.0
        %v2138 = vadd.f32 %v2127, 1.0
        %v2139 = vadd.f32 %v2129, 1.0
        %v2140 = vadd.f32 %v2131, 1.0
        %v2141 = vadd.f32 %v2133, 1.0
        %v2142 = vrcp.pop %v2134
        %v2143 = vmul.f32 1.0, %v2142
        %v2144 = vrcp.pop %v2135
        %v2145 = vmul.f32 1.0, %v2144
        %v2146 = vrcp.pop %v2136
        %v2147 = vmul.f32 1.0, %v2146
        %v2148 = vrcp.pop %v2137
        %v2149 = vmul.f32 1.0, %v2148
        %v2150 = vrcp.pop %v2138
        %v2151 = vmul.f32 1.0, %v2150
        %v2152 = vrcp.pop %v2139
        %v2153 = vmul.f32 1.0, %v2152
        %v2154 = vrcp.pop %v2140
        %v2155 = vmul.f32 1.0, %v2154
        %v2156 = vrcp.pop %v2141
        %v2157 = vmul.f32 1.0, %v2156
        %v2158 = vmul.f32 %v2080, %v2143
        %v2159 = vmul.f32 %v2083, %v2145
        %v2160 = vmul.f32 %v2088, %v2147
        %v2161 = vmul.f32 %v2091, %v2149
        %v2162 = vmul.f32 %v2096, %v2151
        %v2163 = vmul.f32 %v2099, %v2153
        %v2164 = vmul.f32 %v2104, %v2155
        %v2165 = vmul.f32 %v2107, %v2157
        %v2166 = vpack.c.bf16 %v2159, %v2158
        %v2167 = vpack.c.bf16 %v2161, %v2160
        %v2168 = vpack.c.bf16 %v2163, %v2162
        %v2169 = vpack.c.bf16 %v2165, %v2164
        %v2174 = vunpack.c.l.b16 %v2166
        %v2175 = vunpack.c.h.b16 %v2166
        %v2176 = vunpack.c.l.b16 %v2167
        %v2177 = vunpack.c.h.b16 %v2167
        %v2178 = vunpack.c.l.b16 %v2168
        %v2179 = vunpack.c.h.b16 %v2168
        %v2180 = vunpack.c.l.b16 %v2169
        %v2181 = vunpack.c.h.b16 %v2169
        %v2182 = vpack.c.b16 %v2174, %v2174
        %v2183 = vpack.c.b16 %v2175, %v2175
        %v2184 = vpack.c.b16 %v2176, %v2176
        %v2185 = vpack.c.b16 %v2177, %v2177
        %v2186 = vpack.c.b16 %v2178, %v2178
        %v2187 = vpack.c.b16 %v2179, %v2179
        %v2188 = vpack.c.b16 %v2180, %v2180
        %v2189 = vpack.c.b16 %v2181, %v2181
        %2198 = vst [vmem:[%s496] sm:$0xf] %v2182
        %2199 = vst [vmem:[%s496 + $0x4] sm:$0xf] %v2183
        %2200 = vst [vmem:[%s496 + $0x8] sm:$0xf] %v2184
        %2201 = vst [vmem:[%s496 + $0xc] sm:$0xf] %v2185
        %2202 = vst [vmem:[%s496 + $0x10] sm:$0xf] %v2186
        %2203 = vst [vmem:[%s496 + $0x14] sm:$0xf] %v2187
        %2204 = vst [vmem:[%s496 + $0x18] sm:$0xf] %v2188
        %2205 = vst [vmem:[%s496 + $0x1c] sm:$0xf] %v2189
        %p2206 = scmp.lt.s32.totalorder %s14, 1
        %s2207 = scalar_select %p2206, %s14, 1
        %s2208 = smul.addr %s2207, 8
        %s2209 = smul.addr %s2208, 4
        %s2210 = scalar_lea.vmem %s3, %s2209
        // Predicated region
        $region74: #{efficientnet_haralick_forward.4} parent=68 // pred_check
          %p2211 = pneg %p100
        $region75: #{efficientnet_haralick_forward.4} parent=68 // pred_check_branch
          %2213 = sbr.rel (%p2211) target = $region77
        $region76: #{efficientnet_haralick_forward.4} parent=68 // pred_region
          _
        $region77: #{efficientnet_haralick_forward.4} parent=68 // pred_fallthru
          _
      $region69: #{efficientnet_haralick_forward.4} parent=5 // pred_fallthru
        _
      %p2214 = scmp.le.s32.totalorder 2, %s9
      // Predicated region
      $region78: #{efficientnet_haralick_forward.4} parent=5 // pred_check
        %p2215 = pneg %p2214
      $region79: #{efficientnet_haralick_forward.4} parent=5 // pred_check_branch
        %2217 = sbr.rel (%p2215) target = $region81
      $region80: #{efficientnet_haralick_forward.4} parent=5 // pred_region
        %s2218 = ssub.s32 %s9, 2
        // Predicated region
        $region82: #{efficientnet_haralick_forward.4} parent=80 // pred_check
          %p2219 = pneg %p106
        $region83: #{efficientnet_haralick_forward.4} parent=80 // pred_check_branch
          %2221 = sbr.rel (%p2219) target = $region85
        $region84: #{efficientnet_haralick_forward.4} parent=80 // pred_region
          %p2222 = scmp.lt.s32.totalorder %s15, 1
          %s2223 = scalar_select %p2222, %s15, 1
          %s2224 = smul.addr %s2223, 8
          %s2225 = smul.addr %s2224, 4
          %s2226 = scalar_lea.vmem %s3, %s2225
        $region85: #{efficientnet_haralick_forward.4} parent=80 // pred_fallthru
          _
      $region81: #{efficientnet_haralick_forward.4} parent=5 // pred_fallthru
        _
    $region6: #{efficientnet_haralick_forward.4} parent=1 // loop_footer
      %s13 = sadd.s32 1, %s9
    $region7: #{efficientnet_haralick_forward.4} parent=1 // loop_footer_branch
      %8 = sbr.rel target = $region3
    $region8: #{efficientnet_haralick_forward.4} parent=1 // loop_exit
      _

// kernel: efficientnet_haralick_forward.3
$region0: #{efficientnet_haralick_forward.3}
  #allocation0 [shape = 'u32[]', space=smem, size = 0x4, offset = 0x4, fixed_abs, tag = 'smem constant byte address 0x4 - core index']
  #allocation1 [shape = 'u32[144,128]{1,0:T(1,128)}', space=vmem, size = 0x12000, scoped, tag = 'internal scratch']
  #allocation2 [shape = 'bf16[256,1152]{1,0:T(16,128)(2,1)}', space=vmem, size = 0x90000, scoped, tag = 'scratch operand']
  %s0 = inlined_call_operand.vmem [shape: bf16[4,2,17,17,128], index: 0, kind: input, shape index: {}]
  %s1 = inlined_call_operand.vmem [shape: bf16[1152,128], index: 1, kind: input, shape index: {}]
  %s2 = inlined_call_operand.vmem [shape: f32[1,128], index: 2, kind: input, shape index: {}]
  %s3 = inlined_call_operand.vmem [shape: bf16[2,256,128], index: 3, kind: output, shape index: {}]
  %s4 = sld [smem:[#allocation0]]
  $region86: #{efficientnet_haralick_forward.3} parent=0
    _
  %s6 = ssub.s32 1, %s4
  %s7 = scalar_select 0, %s6, %s4
  $region1: #{efficientnet_haralick_forward.3} parent=0
    #allocation3 [shape = 'u8[835584]{0}', space=vmem, size = 0xcc000, scoped, tag = 'input window, operand 0']
    loop: start=0, step=1, limit=4
    $region2: #{efficientnet_haralick_forward.3} parent=1 // loop_pre_header
      _
    $region3: #{efficientnet_haralick_forward.3} parent=1 // loop_header
      %s9 = sphi 0, %s13
      %p10 = scmp.ge.s32.totalorder %s9, 4
      %s19 = sphi 0, %s21
      %s22 = sphi 0, %s19
      %s23 = sphi 0, %s22
      %s39 = sphi 0, %s23
      %s43 = sphi 0, %s43
      %s45 = sphi 0, %s43
      %s46 = sphi 0, %s45
      %s60 = sphi 0, %s46
      %s64 = sphi 0, %s64
      %s66 = sphi 0, %s64
      %s67 = sphi 0, %s66
      %s81 = sphi 0, %s67
      %s87 = sphi 0, %s89
      %s90 = sphi 0, %s87
      %s91 = sphi 0, %s90
      %s107 = sphi 0, %s91
    $region4: #{efficientnet_haralick_forward.3} parent=1 // loop_header_branch
      %12 = sbr.rel (%p10) target = $region8
    $region5: #{efficientnet_haralick_forward.3} parent=1 // loop_body
      %s14 = ssub.s32 %s9, 1
      %s15 = ssub.s32 %s9, 2
      %s16 = sadd.s32 %s9, 1
      %s17 = ssub.s32 %s9, %s16
      %p18 = scmp.eq.s32.totalorder %s17, 0
      %s20 = sadd.s32 %s19, 1
      %s21 = scalar_select %p18, %s19, %s20
      %p24 = pneg %p18
      %p25 = scmp.eq.s32.totalorder %s9, 1
      %p26 = por %p24, %p25
      %p27 = scmp.ne.s32.totalorder %s19, %s22
      %p28 = scmp.eq.s32.totalorder %s9, 0
      %p29 = por %p27, %p28
      %p30 = scmp.ne.s32.totalorder %s19, %s22
      %p31 = scmp.eq.s32.totalorder %s14, 1
      %p32 = por %p30, %p31
      %p33 = scmp.ne.s32.totalorder %s22, %s23
      %p34 = scmp.eq.s32.totalorder %s14, 0
      %p35 = por %p33, %p34
      %p36 = scmp.ne.s32.totalorder %s22, %s23
      %p37 = scmp.eq.s32.totalorder %s15, 1
      %p38 = por %p36, %p37
      %p40 = scmp.ne.s32.totalorder %s23, %s39
      %p41 = scmp.eq.s32.totalorder %s15, 0
      %p42 = por %p40, %p41
      %s44 = sadd.s32 %s43, 1
      %p47 = scmp.eq.s32.totalorder %s9, 1
      %p48 = scmp.ne.s32.totalorder %s43, %s45
      %p49 = scmp.eq.s32.totalorder %s9, 0
      %p50 = por %p48, %p49
      %p51 = scmp.ne.s32.totalorder %s43, %s45
      %p52 = scmp.eq.s32.totalorder %s14, 1
      %p53 = por %p51, %p52
      %p54 = scmp.ne.s32.totalorder %s45, %s46
      %p55 = scmp.eq.s32.totalorder %s14, 0
      %p56 = por %p54, %p55
      %p57 = scmp.ne.s32.totalorder %s45, %s46
      %p58 = scmp.eq.s32.totalorder %s15, 1
      %p59 = por %p57, %p58
      %p61 = scmp.ne.s32.totalorder %s46, %s60
      %p62 = scmp.eq.s32.totalorder %s15, 0
      %p63 = por %p61, %p62
      %s65 = sadd.s32 %s64, 1
      %p68 = scmp.eq.s32.totalorder %s9, 1
      %p69 = scmp.ne.s32.totalorder %s64, %s66
      %p70 = scmp.eq.s32.totalorder %s9, 0
      %p71 = por %p69, %p70
      %p72 = scmp.ne.s32.totalorder %s64, %s66
      %p73 = scmp.eq.s32.totalorder %s14, 1
      %p74 = por %p72, %p73
      %p75 = scmp.ne.s32.totalorder %s66, %s67
      %p76 = scmp.eq.s32.totalorder %s14, 0
      %p77 = por %p75, %p76
      %p78 = scmp.ne.s32.totalorder %s66, %s67
      %p79 = scmp.eq.s32.totalorder %s15, 1
      %p80 = por %p78, %p79
      %p82 = scmp.ne.s32.totalorder %s67, %s81
      %p83 = scmp.eq.s32.totalorder %s15, 0
      %p84 = por %p82, %p83
      %s85 = ssub.s32 %s9, %s16
      %p86 = scmp.eq.s32.totalorder %s85, 0
      %s88 = sadd.s32 %s87, 1
      %s89 = scalar_select %p86, %s87, %s88
      %p92 = pneg %p86
      %p93 = scmp.eq.s32.totalorder %s9, 1
      %p94 = por %p92, %p93
      %p95 = scmp.ne.s32.totalorder %s87, %s90
      %p96 = scmp.eq.s32.totalorder %s9, 0
      %p97 = por %p95, %p96
      %p98 = scmp.ne.s32.totalorder %s87, %s90
      %p99 = scmp.eq.s32.totalorder %s14, 1
      %p100 = por %p98, %p99
      %p101 = scmp.ne.s32.totalorder %s90, %s91
      %p102 = scmp.eq.s32.totalorder %s14, 0
      %p103 = por %p101, %p102
      %p104 = scmp.ne.s32.totalorder %s90, %s91
      %p105 = scmp.eq.s32.totalorder %s15, 1
      %p106 = por %p104, %p105
      %p108 = scmp.ne.s32.totalorder %s91, %s107
      %p109 = scmp.eq.s32.totalorder %s15, 0
      %p110 = por %p108, %p109
      %p111 = scmp.le.s32.totalorder 1, %s9
      %p112 = scmp.lt.s32.totalorder %s9, 3
      %p113 = pnand %p111, %p112
      %p114 = pneg %p113
      // Predicated region
      $region9: #{efficientnet_haralick_forward.3} parent=5 // pred_check
        _
      $region10: #{efficientnet_haralick_forward.3} parent=5 // pred_check_branch
        %116 = sbr.rel (%p113) target = $region12
      $region11: #{efficientnet_haralick_forward.3} parent=5 // pred_region
        %s117 = ssub.s32 %s9, 1
        // Predicated region
        $region13: #{efficientnet_haralick_forward.3} parent=11 // pred_check
          %p118 = pneg %p56
        $region14: #{efficientnet_haralick_forward.3} parent=11 // pred_check_branch
          %120 = sbr.rel (%p118) target = $region16
        $region15: #{efficientnet_haralick_forward.3} parent=11 // pred_region
          _
        $region16: #{efficientnet_haralick_forward.3} parent=11 // pred_fallthru
          _
        // Predicated region
        $region17: #{efficientnet_haralick_forward.3} parent=11 // pred_check
          %p121 = pneg %p77
        $region18: #{efficientnet_haralick_forward.3} parent=11 // pred_check_branch
          %123 = sbr.rel (%p121) target = $region20
        $region19: #{efficientnet_haralick_forward.3} parent=11 // pred_region
          _
        $region20: #{efficientnet_haralick_forward.3} parent=11 // pred_fallthru
          _
      $region12: #{efficientnet_haralick_forward.3} parent=5 // pred_fallthru
        _
      %p124 = scmp.lt.s32.totalorder %s9, 2
      // Predicated region
      $region21: #{efficientnet_haralick_forward.3} parent=5 // pred_check
        %p125 = pneg %p124
      $region22: #{efficientnet_haralick_forward.3} parent=5 // pred_check_branch
        %127 = sbr.rel (%p125) target = $region24
      $region23: #{efficientnet_haralick_forward.3} parent=5 // pred_region
        // Predicated region
        $region25: #{efficientnet_haralick_forward.3} parent=23 // pred_check
          %p128 = pneg %p29
        $region26: #{efficientnet_haralick_forward.3} parent=23 // pred_check_branch
          %130 = sbr.rel (%p128) target = $region28
        $region27: #{efficientnet_haralick_forward.3} parent=23 // pred_region
          %s131 = sand.u32 %s19, 1
          %s132 = sand.u32 %s19, 1
          %s133 = smul.addr %s132, 816
          %s134 = scalar_lea.vmem [#allocation3], %s133
          %s135 = smul.addr %s9, 51
          %s136 = smul.addr %s135, 4
          %s137 = scalar_lea.vmem %s0, %s136
          // Predicated region
          $region29: #{efficientnet_haralick_forward.3} parent=27 // pred_check
            _
          $region30: #{efficientnet_haralick_forward.3} parent=27 // pred_check_branch
            %139 = sbr.rel (0) target = $region32
          $region31: #{efficientnet_haralick_forward.3} parent=27 // pred_region
            // Predicated region
            $region33: #{efficientnet_haralick_forward.3} parent=31 // pred_check
              _
            $region34: #{efficientnet_haralick_forward.3} parent=31 // pred_check_branch
              %141 = sbr.rel target = $region36
            $region35: #{efficientnet_haralick_forward.3} parent=31 // pred_region
              // Predicated region
              $region48: #{efficientnet_haralick_forward.3} parent=35 // pred_check
                _
              $region49: #{efficientnet_haralick_forward.3} parent=35 // pred_check_branch
                %562 = sbr.rel (0) target = $region51
              $region50: #{efficientnet_haralick_forward.3} parent=35 // pred_region
                loop: start=0, step=1, limit=1
                $region52: #{efficientnet_haralick_forward.3} parent=50 // loop_pre_header
                  _
                $region53: #{efficientnet_haralick_forward.3} parent=50 // loop_header
                  %s564 = sphi 0, %s568
                  %p565 = scmp.ge.s32.totalorder %s564, 1
                  %s569 = sphi %s137, %s137
                  %s570 = sphi %s134, %s134
                $region54: #{efficientnet_haralick_forward.3} parent=50 // loop_header_branch
                  %567 = sbr.rel (%p565) target = $region58
                $region55: #{efficientnet_haralick_forward.3} parent=50 // loop_body
                  _
                $region56: #{efficientnet_haralick_forward.3} parent=50 // loop_footer
                  %s568 = sadd.s32 1, %s564
                $region57: #{efficientnet_haralick_forward.3} parent=50 // loop_footer_branch
                  %563 = sbr.rel target = $region53
                $region58: #{efficientnet_haralick_forward.3} parent=50 // loop_exit
                  _
                loop: start=0, step=1, limit=1
                $region59: #{efficientnet_haralick_forward.3} parent=50 // loop_pre_header
                  _
                $region60: #{efficientnet_haralick_forward.3} parent=50 // loop_header
                  %s573 = sphi 0, %s577
                  %p574 = scmp.ge.s32.totalorder %s573, 1
                  %s578 = sphi %s137, %s137
                  %s579 = sphi %s134, %s134
                $region61: #{efficientnet_haralick_forward.3} parent=50 // loop_header_branch
                  %576 = sbr.rel (%p574) target = $region65
                $region62: #{efficientnet_haralick_forward.3} parent=50 // loop_body
                  %v580 = vld [vmem:[%s578] sm:$0xf]
                  %581 = vst [vmem:[%s579] sm:$0xf] %v580
                  %v582 = vld [vmem:[%s578 + $0x4] sm:$0xf]
                  %583 = vst [vmem:[%s579 + $0x4] sm:$0xf] %v582
                  %v584 = vld [vmem:[%s578 + $0x8] sm:$0xf]
                  %585 = vst [vmem:[%s579 + $0x8] sm:$0xf] %v584
                  %v586 = vld [vmem:[%s578 + $0xc] sm:$0xf]
                  %587 = vst [vmem:[%s579 + $0xc] sm:$0xf] %v586
                  %v588 = vld [vmem:[%s578 + $0x10] sm:$0xf]
                  %589 = vst [vmem:[%s579 + $0x10] sm:$0xf] %v588
                  %v590 = vld [vmem:[%s578 + $0x14] sm:$0xf]
                  %591 = vst [vmem:[%s579 + $0x14] sm:$0xf] %v590
                  %v592 = vld [vmem:[%s578 + $0x18] sm:$0xf]
                  %593 = vst [vmem:[%s579 + $0x18] sm:$0xf] %v592
                  %v594 = vld [vmem:[%s578 + $0x1c] sm:$0xf]
                  %595 = vst [vmem:[%s579 + $0x1c] sm:$0xf] %v594
                  %v596 = vld [vmem:[%s578 + $0x20] sm:$0xf]
                  %597 = vst [vmem:[%s579 + $0x20] sm:$0xf] %v596
                  %v598 = vld [vmem:[%s578 + $0x24] sm:$0xf]
                  %599 = vst [vmem:[%s579 + $0x24] sm:$0xf] %v598
                  %v600 = vld [vmem:[%s578 + $0x28] sm:$0xf]
                  %601 = vst [vmem:[%s579 + $0x28] sm:$0xf] %v600
                  %v602 = vld [vmem:[%s578 + $0x2c] sm:$0xf]
                  %603 = vst [vmem:[%s579 + $0x2c] sm:$0xf] %v602
                  %v604 = vld [vmem:[%s578 + $0x30] sm:$0xf]
                  %605 = vst [vmem:[%s579 + $0x30] sm:$0xf] %v604
                  %v606 = vld [vmem:[%s578 + $0x34] sm:$0xf]
                  %607 = vst [vmem:[%s579 + $0x34] sm:$0xf] %v606
                  %v608 = vld [vmem:[%s578 + $0x38] sm:$0xf]
                  %609 = vst [vmem:[%s579 + $0x38] sm:$0xf] %v608
                  %v610 = vld [vmem:[%s578 + $0x3c] sm:$0xf]
                  %611 = vst [vmem:[%s579 + $0x3c] sm:$0xf] %v610
                  %v612 = vld [vmem:[%s578 + $0x40] sm:$0xf]
                  %613 = vst [vmem:[%s579 + $0x40] sm:$0xf] %v612
                  %v614 = vld [vmem:[%s578 + $0x44] sm:$0xf]
                  %615 = vst [vmem:[%s579 + $0x44] sm:$0xf] %v614
                  %v616 = vld [vmem:[%s578 + $0x48] sm:$0xf]
                  %617 = vst [vmem:[%s579 + $0x48] sm:$0xf] %v616
                  %v618 = vld [vmem:[%s578 + $0x4c] sm:$0xf]
                  %619 = vst [vmem:[%s579 + $0x4c] sm:$0xf] %v618
                  %v620 = vld [vmem:[%s578 + $0x50] sm:$0xf]
                  %621 = vst [vmem:[%s579 + $0x50] sm:$0xf] %v620
                  %v622 = vld [vmem:[%s578 + $0x54] sm:$0xf]
                  %623 = vst [vmem:[%s579 + $0x54] sm:$0xf] %v622
                  %v624 = vld [vmem:[%s578 + $0x58] sm:$0xf]
                  %625 = vst [vmem:[%s579 + $0x58] sm:$0xf] %v624
                  %v626 = vld [vmem:[%s578 + $0x5c] sm:$0xf]
                  %627 = vst [vmem:[%s579 + $0x5c] sm:$0xf] %v626
                  %v628 = vld [vmem:[%s578 + $0x60] sm:$0xf]
                  %629 = vst [vmem:[%s579 + $0x60] sm:$0xf] %v628
                  %v630 = vld [vmem:[%s578 + $0x64] sm:$0xf]
                  %631 = vst [vmem:[%s579 + $0x64] sm:$0xf] %v630
                  %v632 = vld [vmem:[%s578 + $0x68] sm:$0xf]
                  %633 = vst [vmem:[%s579 + $0x68] sm:$0xf] %v632
                  %v634 = vld [vmem:[%s578 + $0x6c] sm:$0xf]
                  %635 = vst [vmem:[%s579 + $0x6c] sm:$0xf] %v634
                  %v636 = vld [vmem:[%s578 + $0x70] sm:$0xf]
                  %637 = vst [vmem:[%s579 + $0x70] sm:$0xf] %v636
                  %v638 = vld [vmem:[%s578 + $0x74] sm:$0xf]
                  %639 = vst [vmem:[%s579 + $0x74] sm:$0xf] %v638
                  %v640 = vld [vmem:[%s578 + $0x78] sm:$0xf]
                  %641 = vst [vmem:[%s579 + $0x78] sm:$0xf] %v640
                  %v642 = vld [vmem:[%s578 + $0x7c] sm:$0xf]
                  %643 = vst [vmem:[%s579 + $0x7c] sm:$0xf] %v642
                  %v644 = vld [vmem:[%s578 + $0x80] sm:$0xf]
                  %645 = vst [vmem:[%s579 + $0x80] sm:$0xf] %v644
                  %v646 = vld [vmem:[%s578 + $0x84] sm:$0xf]
                  %647 = vst [vmem:[%s579 + $0x84] sm:$0xf] %v646
                  %v648 = vld [vmem:[%s578 + $0x88] sm:$0xf]
                  %649 = vst [vmem:[%s579 + $0x88] sm:$0xf] %v648
                  %v650 = vld [vmem:[%s578 + $0x8c] sm:$0xf]
                  %651 = vst [vmem:[%s579 + $0x8c] sm:$0xf] %v650
                  %v652 = vld [vmem:[%s578 + $0x90] sm:$0xf]
                  %653 = vst [vmem:[%s579 + $0x90] sm:$0xf] %v652
                  %v654 = vld [vmem:[%s578 + $0x94] sm:$0xf]
                  %655 = vst [vmem:[%s579 + $0x94] sm:$0xf] %v654
                  %v656 = vld [vmem:[%s578 + $0x98] sm:$0xf]
                  %657 = vst [vmem:[%s579 + $0x98] sm:$0xf] %v656
                  %v658 = vld [vmem:[%s578 + $0x9c] sm:$0xf]
                  %659 = vst [vmem:[%s579 + $0x9c] sm:$0xf] %v658
                  %v660 = vld [vmem:[%s578 + $0xa0] sm:$0xf]
                  %661 = vst [vmem:[%s579 + $0xa0] sm:$0xf] %v660
                  %v662 = vld [vmem:[%s578 + $0xa4] sm:$0xf]
                  %663 = vst [vmem:[%s579 + $0xa4] sm:$0xf] %v662
                  %v664 = vld [vmem:[%s578 + $0xa8] sm:$0xf]
                  %665 = vst [vmem:[%s579 + $0xa8] sm:$0xf] %v664
                  %v666 = vld [vmem:[%s578 + $0xac] sm:$0xf]
                  %667 = vst [vmem:[%s579 + $0xac] sm:$0xf] %v666
                  %v668 = vld [vmem:[%s578 + $0xb0] sm:$0xf]
                  %669 = vst [vmem:[%s579 + $0xb0] sm:$0xf] %v668
                  %v670 = vld [vmem:[%s578 + $0xb4] sm:$0xf]
                  %671 = vst [vmem:[%s579 + $0xb4] sm:$0xf] %v670
                  %v672 = vld [vmem:[%s578 + $0xb8] sm:$0xf]
                  %673 = vst [vmem:[%s579 + $0xb8] sm:$0xf] %v672
                  %v674 = vld [vmem:[%s578 + $0xbc] sm:$0xf]
                  %675 = vst [vmem:[%s579 + $0xbc] sm:$0xf] %v674
                  %v676 = vld [vmem:[%s578 + $0xc0] sm:$0xf]
                  %677 = vst [vmem:[%s579 + $0xc0] sm:$0xf] %v676
                  %v678 = vld [vmem:[%s578 + $0xc4] sm:$0xf]
                  %679 = vst [vmem:[%s579 + $0xc4] sm:$0xf] %v678
                  %v680 = vld [vmem:[%s578 + $0xc8] sm:$0xf]
                  %681 = vst [vmem:[%s579 + $0xc8] sm:$0xf] %v680
                  %v682 = vld [vmem:[%s578 + $0x198] sm:$0xf]
                  %683 = vst [vmem:[%s579 + $0xcc] sm:$0xf] %v682
                  %v684 = vld [vmem:[%s578 + $0x19c] sm:$0xf]
                  %685 = vst [vmem:[%s579 + $0xd0] sm:$0xf] %v684
                  %v686 = vld [vmem:[%s578 + $0x1a0] sm:$0xf]
                  %687 = vst [vmem:[%s579 + $0xd4] sm:$0xf] %v686
                  %v688 = vld [vmem:[%s578 + $0x1a4] sm:$0xf]
                  %689 = vst [vmem:[%s579 + $0xd8] sm:$0xf] %v688
                  %v690 = vld [vmem:[%s578 + $0x1a8] sm:$0xf]
                  %691 = vst [vmem:[%s579 + $0xdc] sm:$0xf] %v690
                  %v692 = vld [vmem:[%s578 + $0x1ac] sm:$0xf]
                  %693 = vst [vmem:[%s579 + $0xe0] sm:$0xf] %v692
                  %v694 = vld [vmem:[%s578 + $0x1b0] sm:$0xf]
                  %695 = vst [vmem:[%s579 + $0xe4] sm:$0xf] %v694
                  %v696 = vld [vmem:[%s578 + $0x1b4] sm:$0xf]
                  %697 = vst [vmem:[%s579 + $0xe8] sm:$0xf] %v696
                  %v698 = vld [vmem:[%s578 + $0x1b8] sm:$0xf]
                  %699 = vst [vmem:[%s579 + $0xec] sm:$0xf] %v698
                  %v700 = vld [vmem:[%s578 + $0x1bc] sm:$0xf]
                  %701 = vst [vmem:[%s579 + $0xf0] sm:$0xf] %v700
                  %v702 = vld [vmem:[%s578 + $0x1c0] sm:$0xf]
                  %703 = vst [vmem:[%s579 + $0xf4] sm:$0xf] %v702
                  %v704 = vld [vmem:[%s578 + $0x1c4] sm:$0xf]
                  %705 = vst [vmem:[%s579 + $0xf8] sm:$0xf] %v704
                  %v706 = vld [vmem:[%s578 + $0x1c8] sm:$0xf]
                  %707 = vst [vmem:[%s579 + $0xfc] sm:$0xf] %v706
                  %v708 = vld [vmem:[%s578 + $0x1cc] sm:$0xf]
                  %709 = vst [vmem:[%s579 + $0x100] sm:$0xf] %v708
                  %v710 = vld [vmem:[%s578 + $0x1d0] sm:$0xf]
                  %711 = vst [vmem:[%s579 + $0x104] sm:$0xf] %v710
                  %v712 = vld [vmem:[%s578 + $0x1d4] sm:$0xf]
                  %713 = vst [vmem:[%s579 + $0x108] sm:$0xf] %v712
                  %v714 = vld [vmem:[%s578 + $0x1d8] sm:$0xf]
                  %715 = vst [vmem:[%s579 + $0x10c] sm:$0xf] %v714
                  %v716 = vld [vmem:[%s578 + $0x1dc] sm:$0xf]
                  %717 = vst [vmem:[%s579 + $0x110] sm:$0xf] %v716
                  %v718 = vld [vmem:[%s578 + $0x1e0] sm:$0xf]
                  %719 = vst [vmem:[%s579 + $0x114] sm:$0xf] %v718
                  %v720 = vld [vmem:[%s578 + $0x1e4] sm:$0xf]
                  %721 = vst [vmem:[%s579 + $0x118] sm:$0xf] %v720
                  %v722 = vld [vmem:[%s578 + $0x1e8] sm:$0xf]
                  %723 = vst [vmem:[%s579 + $0x11c] sm:$0xf] %v722
                  %v724 = vld [vmem:[%s578 + $0x1ec] sm:$0xf]
                  %725 = vst [vmem:[%s579 + $0x120] sm:$0xf] %v724
                  %v726 = vld [vmem:[%s578 + $0x1f0] sm:$0xf]
                  %727 = vst [vmem:[%s579 + $0x124] sm:$0xf] %v726
                  %v728 = vld [vmem:[%s578 + $0x1f4] sm:$0xf]
                  %729 = vst [vmem:[%s579 + $0x128] sm:$0xf] %v728
                  %v730 = vld [vmem:[%s578 + $0x1f8] sm:$0xf]
                  %731 = vst [vmem:[%s579 + $0x12c] sm:$0xf] %v730
                  %v732 = vld [vmem:[%s578 + $0x1fc] sm:$0xf]
                  %733 = vst [vmem:[%s579 + $0x130] sm:$0xf] %v732
                  %v734 = vld [vmem:[%s578 + $0x200] sm:$0xf]
                  %735 = vst [vmem:[%s579 + $0x134] sm:$0xf] %v734
                  %v736 = vld [vmem:[%s578 + $0x204] sm:$0xf]
                  %737 = vst [vmem:[%s579 + $0x138] sm:$0xf] %v736
                  %v738 = vld [vmem:[%s578 + $0x208] sm:$0xf]
                  %739 = vst [vmem:[%s579 + $0x13c] sm:$0xf] %v738
                  %v740 = vld [vmem:[%s578 + $0x20c] sm:$0xf]
                  %741 = vst [vmem:[%s579 + $0x140] sm:$0xf] %v740
                  %v742 = vld [vmem:[%s578 + $0x210] sm:$0xf]
                  %743 = vst [vmem:[%s579 + $0x144] sm:$0xf] %v742
                  %v744 = vld [vmem:[%s578 + $0x214] sm:$0xf]
                  %745 = vst [vmem:[%s579 + $0x148] sm:$0xf] %v744
                  %v746 = vld [vmem:[%s578 + $0x218] sm:$0xf]
                  %747 = vst [vmem:[%s579 + $0x14c] sm:$0xf] %v746
                  %v748 = vld [vmem:[%s578 + $0x21c] sm:$0xf]
                  %749 = vst [vmem:[%s579 + $0x150] sm:$0xf] %v748
                  %v750 = vld [vmem:[%s578 + $0x220] sm:$0xf]
                  %751 = vst [vmem:[%s579 + $0x154] sm:$0xf] %v750
                  %v752 = vld [vmem:[%s578 + $0x224] sm:$0xf]
                  %753 = vst [vmem:[%s579 + $0x158] sm:$0xf] %v752
                  %v754 = vld [vmem:[%s578 + $0x228] sm:$0xf]
                  %755 = vst [vmem:[%s579 + $0x15c] sm:$0xf] %v754
                  %v756 = vld [vmem:[%s578 + $0x22c] sm:$0xf]
                  %757 = vst [vmem:[%s579 + $0x160] sm:$0xf] %v756
                  %v758 = vld [vmem:[%s578 + $0x230] sm:$0xf]
                  %759 = vst [vmem:[%s579 + $0x164] sm:$0xf] %v758
                  %v760 = vld [vmem:[%s578 + $0x234] sm:$0xf]
                  %761 = vst [vmem:[%s579 + $0x168] sm:$0xf] %v760
                  %v762 = vld [vmem:[%s578 + $0x238] sm:$0xf]
                  %763 = vst [vmem:[%s579 + $0x16c] sm:$0xf] %v762
                  %v764 = vld [vmem:[%s578 + $0x23c] sm:$0xf]
                  %765 = vst [vmem:[%s579 + $0x170] sm:$0xf] %v764
                  %v766 = vld [vmem:[%s578 + $0x240] sm:$0xf]
                  %767 = vst [vmem:[%s579 + $0x174] sm:$0xf] %v766
                  %v768 = vld [vmem:[%s578 + $0x244] sm:$0xf]
                  %769 = vst [vmem:[%s579 + $0x178] sm:$0xf] %v768
                  %v770 = vld [vmem:[%s578 + $0x248] sm:$0xf]
                  %771 = vst [vmem:[%s579 + $0x17c] sm:$0xf] %v770
                  %v772 = vld [vmem:[%s578 + $0x24c] sm:$0xf]
                  %773 = vst [vmem:[%s579 + $0x180] sm:$0xf] %v772
                  %v774 = vld [vmem:[%s578 + $0x250] sm:$0xf]
                  %775 = vst [vmem:[%s579 + $0x184] sm:$0xf] %v774
                  %v776 = vld [vmem:[%s578 + $0x254] sm:$0xf]
                  %777 = vst [vmem:[%s579 + $0x188] sm:$0xf] %v776
                  %v778 = vld [vmem:[%s578 + $0x258] sm:$0xf]
                  %779 = vst [vmem:[%s579 + $0x18c] sm:$0xf] %v778
                  %v780 = vld [vmem:[%s578 + $0x25c] sm:$0xf]
                  %781 = vst [vmem:[%s579 + $0x190] sm:$0xf] %v780
                  %v782 = vld [vmem:[%s578 + $0x260] sm:$0xf]
                  %783 = vst [vmem:[%s579 + $0x194] sm:$0xf] %v782
                  %v784 = vld [vmem:[%s578 + $0x330] sm:$0xf]
                  %785 = vst [vmem:[%s579 + $0x198] sm:$0xf] %v784
                  %v786 = vld [vmem:[%s578 + $0x334] sm:$0xf]
                  %787 = vst [vmem:[%s579 + $0x19c] sm:$0xf] %v786
                  %v788 = vld [vmem:[%s578 + $0x338] sm:$0xf]
                  %789 = vst [vmem:[%s579 + $0x1a0] sm:$0xf] %v788
                  %v790 = vld [vmem:[%s578 + $0x33c] sm:$0xf]
                  %791 = vst [vmem:[%s579 + $0x1a4] sm:$0xf] %v790
                  %v792 = vld [vmem:[%s578 + $0x340] sm:$0xf]
                  %793 = vst [vmem:[%s579 + $0x1a8] sm:$0xf] %v792
                  %v794 = vld [vmem:[%s578 + $0x344] sm:$0xf]
                  %795 = vst [vmem:[%s579 + $0x1ac] sm:$0xf] %v794
                  %v796 = vld [vmem:[%s578 + $0x348] sm:$0xf]
                  %797 = vst [vmem:[%s579 + $0x1b0] sm:$0xf] %v796
                  %v798 = vld [vmem:[%s578 + $0x34c] sm:$0xf]
                  %799 = vst [vmem:[%s579 + $0x1b4] sm:$0xf] %v798
                  %v800 = vld [vmem:[%s578 + $0x350] sm:$0xf]
                  %801 = vst [vmem:[%s579 + $0x1b8] sm:$0xf] %v800
                  %v802 = vld [vmem:[%s578 + $0x354] sm:$0xf]
                  %803 = vst [vmem:[%s579 + $0x1bc] sm:$0xf] %v802
                  %v804 = vld [vmem:[%s578 + $0x358] sm:$0xf]
                  %805 = vst [vmem:[%s579 + $0x1c0] sm:$0xf] %v804
                  %v806 = vld [vmem:[%s578 + $0x35c] sm:$0xf]
                  %807 = vst [vmem:[%s579 + $0x1c4] sm:$0xf] %v806
                  %v808 = vld [vmem:[%s578 + $0x360] sm:$0xf]
                  %809 = vst [vmem:[%s579 + $0x1c8] sm:$0xf] %v808
                  %v810 = vld [vmem:[%s578 + $0x364] sm:$0xf]
                  %811 = vst [vmem:[%s579 + $0x1cc] sm:$0xf] %v810
                  %v812 = vld [vmem:[%s578 + $0x368] sm:$0xf]
                  %813 = vst [vmem:[%s579 + $0x1d0] sm:$0xf] %v812
                  %v814 = vld [vmem:[%s578 + $0x36c] sm:$0xf]
                  %815 = vst [vmem:[%s579 + $0x1d4] sm:$0xf] %v814
                  %v816 = vld [vmem:[%s578 + $0x370] sm:$0xf]
                  %817 = vst [vmem:[%s579 + $0x1d8] sm:$0xf] %v816
                  %v818 = vld [vmem:[%s578 + $0x374] sm:$0xf]
                  %819 = vst [vmem:[%s579 + $0x1dc] sm:$0xf] %v818
                  %v820 = vld [vmem:[%s578 + $0x378] sm:$0xf]
                  %821 = vst [vmem:[%s579 + $0x1e0] sm:$0xf] %v820
                  %v822 = vld [vmem:[%s578 + $0x37c] sm:$0xf]
                  %823 = vst [vmem:[%s579 + $0x1e4] sm:$0xf] %v822
                  %v824 = vld [vmem:[%s578 + $0x380] sm:$0xf]
                  %825 = vst [vmem:[%s579 + $0x1e8] sm:$0xf] %v824
                  %v826 = vld [vmem:[%s578 + $0x384] sm:$0xf]
                  %827 = vst [vmem:[%s579 + $0x1ec] sm:$0xf] %v826
                  %v828 = vld [vmem:[%s578 + $0x388] sm:$0xf]
                  %829 = vst [vmem:[%s579 + $0x1f0] sm:$0xf] %v828
                  %v830 = vld [vmem:[%s578 + $0x38c] sm:$0xf]
                  %831 = vst [vmem:[%s579 + $0x1f4] sm:$0xf] %v830
                  %v832 = vld [vmem:[%s578 + $0x390] sm:$0xf]
                  %833 = vst [vmem:[%s579 + $0x1f8] sm:$0xf] %v832
                  %v834 = vld [vmem:[%s578 + $0x394] sm:$0xf]
                  %835 = vst [vmem:[%s579 + $0x1fc] sm:$0xf] %v834
                  %v836 = vld [vmem:[%s578 + $0x398] sm:$0xf]
                  %837 = vst [vmem:[%s579 + $0x200] sm:$0xf] %v836
                  %v838 = vld [vmem:[%s578 + $0x39c] sm:$0xf]
                  %839 = vst [vmem:[%s579 + $0x204] sm:$0xf] %v838
                  %v840 = vld [vmem:[%s578 + $0x3a0] sm:$0xf]
                  %841 = vst [vmem:[%s579 + $0x208] sm:$0xf] %v840
                  %v842 = vld [vmem:[%s578 + $0x3a4] sm:$0xf]
                  %843 = vst [vmem:[%s579 + $0x20c] sm:$0xf] %v842
                  %v844 = vld [vmem:[%s578 + $0x3a8] sm:$0xf]
                  %845 = vst [vmem:[%s579 + $0x210] sm:$0xf] %v844
                  %v846 = vld [vmem:[%s578 + $0x3ac] sm:$0xf]
                  %847 = vst [vmem:[%s579 + $0x214] sm:$0xf] %v846
                  %v848 = vld [vmem:[%s578 + $0x3b0] sm:$0xf]
                  %849 = vst [vmem:[%s579 + $0x218] sm:$0xf] %v848
                  %v850 = vld [vmem:[%s578 + $0x3b4] sm:$0xf]
                  %851 = vst [vmem:[%s579 + $0x21c] sm:$0xf] %v850
                  %v852 = vld [vmem:[%s578 + $0x3b8] sm:$0xf]
                  %853 = vst [vmem:[%s579 + $0x220] sm:$0xf] %v852
                  %v854 = vld [vmem:[%s578 + $0x3bc] sm:$0xf]
                  %855 = vst [vmem:[%s579 + $0x224] sm:$0xf] %v854
                  %v856 = vld [vmem:[%s578 + $0x3c0] sm:$0xf]
                  %857 = vst [vmem:[%s579 + $0x228] sm:$0xf] %v856
                  %v858 = vld [vmem:[%s578 + $0x3c4] sm:$0xf]
                  %859 = vst [vmem:[%s579 + $0x22c] sm:$0xf] %v858
                  %v860 = vld [vmem:[%s578 + $0x3c8] sm:$0xf]
                  %861 = vst [vmem:[%s579 + $0x230] sm:$0xf] %v860
                  %v862 = vld [vmem:[%s578 + $0x3cc] sm:$0xf]
                  %863 = vst [vmem:[%s579 + $0x234] sm:$0xf] %v862
                  %v864 = vld [vmem:[%s578 + $0x3d0] sm:$0xf]
                  %865 = vst [vmem:[%s579 + $0x238] sm:$0xf] %v864
                  %v866 = vld [vmem:[%s578 + $0x3d4] sm:$0xf]
                  %867 = vst [vmem:[%s579 + $0x23c] sm:$0xf] %v866
                  %v868 = vld [vmem:[%s578 + $0x3d8] sm:$0xf]
                  %869 = vst [vmem:[%s579 + $0x240] sm:$0xf] %v868
                  %v870 = vld [vmem:[%s578 + $0x3dc] sm:$0xf]
                  %871 = vst [vmem:[%s579 + $0x244] sm:$0xf] %v870
                  %v872 = vld [vmem:[%s578 + $0x3e0] sm:$0xf]
                  %873 = vst [vmem:[%s579 + $0x248] sm:$0xf] %v872
                  %v874 = vld [vmem:[%s578 + $0x3e4] sm:$0xf]
                  %875 = vst [vmem:[%s579 + $0x24c] sm:$0xf] %v874
                  %v876 = vld [vmem:[%s578 + $0x3e8] sm:$0xf]
                  %877 = vst [vmem:[%s579 + $0x250] sm:$0xf] %v876
                  %v878 = vld [vmem:[%s578 + $0x3ec] sm:$0xf]
                  %879 = vst [vmem:[%s579 + $0x254] sm:$0xf] %v878
                  %v880 = vld [vmem:[%s578 + $0x3f0] sm:$0xf]
                  %881 = vst [vmem:[%s579 + $0x258] sm:$0xf] %v880
                  %v882 = vld [vmem:[%s578 + $0x3f4] sm:$0xf]
                  %883 = vst [vmem:[%s579 + $0x25c] sm:$0xf] %v882
                  %v884 = vld [vmem:[%s578 + $0x3f8] sm:$0xf]
                  %885 = vst [vmem:[%s579 + $0x260] sm:$0xf] %v884
                  %v886 = vld [vmem:[%s578 + $0x4c8] sm:$0xf]
                  %887 = vst [vmem:[%s579 + $0x264] sm:$0xf] %v886
                  %v888 = vld [vmem:[%s578 + $0x4cc] sm:$0xf]
                  %889 = vst [vmem:[%s579 + $0x268] sm:$0xf] %v888
                  %v890 = vld [vmem:[%s578 + $0x4d0] sm:$0xf]
                  %891 = vst [vmem:[%s579 + $0x26c] sm:$0xf] %v890
                  %v892 = vld [vmem:[%s578 + $0x4d4] sm:$0xf]
                  %893 = vst [vmem:[%s579 + $0x270] sm:$0xf] %v892
                  %v894 = vld [vmem:[%s578 + $0x4d8] sm:$0xf]
                  %895 = vst [vmem:[%s579 + $0x274] sm:$0xf] %v894
                  %v896 = vld [vmem:[%s578 + $0x4dc] sm:$0xf]
                  %897 = vst [vmem:[%s579 + $0x278] sm:$0xf] %v896
                  %v898 = vld [vmem:[%s578 + $0x4e0] sm:$0xf]
                  %899 = vst [vmem:[%s579 + $0x27c] sm:$0xf] %v898
                  %v900 = vld [vmem:[%s578 + $0x4e4] sm:$0xf]
                  %901 = vst [vmem:[%s579 + $0x280] sm:$0xf] %v900
                  %v902 = vld [vmem:[%s578 + $0x4e8] sm:$0xf]
                  %903 = vst [vmem:[%s579 + $0x284] sm:$0xf] %v902
                  %v904 = vld [vmem:[%s578 + $0x4ec] sm:$0xf]
                  %905 = vst [vmem:[%s579 + $0x288] sm:$0xf] %v904
                  %v906 = vld [vmem:[%s578 + $0x4f0] sm:$0xf]
                  %907 = vst [vmem:[%s579 + $0x28c] sm:$0xf] %v906
                  %v908 = vld [vmem:[%s578 + $0x4f4] sm:$0xf]
                  %909 = vst [vmem:[%s579 + $0x290] sm:$0xf] %v908
                  %v910 = vld [vmem:[%s578 + $0x4f8] sm:$0xf]
                  %911 = vst [vmem:[%s579 + $0x294] sm:$0xf] %v910
                  %v912 = vld [vmem:[%s578 + $0x4fc] sm:$0xf]
                  %913 = vst [vmem:[%s579 + $0x298] sm:$0xf] %v912
                  %v914 = vld [vmem:[%s578 + $0x500] sm:$0xf]
                  %915 = vst [vmem:[%s579 + $0x29c] sm:$0xf] %v914
                  %v916 = vld [vmem:[%s578 + $0x504] sm:$0xf]
                  %917 = vst [vmem:[%s579 + $0x2a0] sm:$0xf] %v916
                  %v918 = vld [vmem:[%s578 + $0x508] sm:$0xf]
                  %919 = vst [vmem:[%s579 + $0x2a4] sm:$0xf] %v918
                  %v920 = vld [vmem:[%s578 + $0x50c] sm:$0xf]
                  %921 = vst [vmem:[%s579 + $0x2a8] sm:$0xf] %v920
                  %v922 = vld [vmem:[%s578 + $0x510] sm:$0xf]
                  %923 = vst [vmem:[%s579 + $0x2ac] sm:$0xf] %v922
                  %v924 = vld [vmem:[%s578 + $0x514] sm:$0xf]
                  %925 = vst [vmem:[%s579 + $0x2b0] sm:$0xf] %v924
                  %v926 = vld [vmem:[%s578 + $0x518] sm:$0xf]
                  %927 = vst [vmem:[%s579 + $0x2b4] sm:$0xf] %v926
                  %v928 = vld [vmem:[%s578 + $0x51c] sm:$0xf]
                  %929 = vst [vmem:[%s579 + $0x2b8] sm:$0xf] %v928
                  %v930 = vld [vmem:[%s578 + $0x520] sm:$0xf]
                  %931 = vst [vmem:[%s579 + $0x2bc] sm:$0xf] %v930
                  %v932 = vld [vmem:[%s578 + $0x524] sm:$0xf]
                  %933 = vst [vmem:[%s579 + $0x2c0] sm:$0xf] %v932
                  %v934 = vld [vmem:[%s578 + $0x528] sm:$0xf]
                  %935 = vst [vmem:[%s579 + $0x2c4] sm:$0xf] %v934
                  %v936 = vld [vmem:[%s578 + $0x52c] sm:$0xf]
                  %937 = vst [vmem:[%s579 + $0x2c8] sm:$0xf] %v936
                  %v938 = vld [vmem:[%s578 + $0x530] sm:$0xf]
                  %939 = vst [vmem:[%s579 + $0x2cc] sm:$0xf] %v938
                  %v940 = vld [vmem:[%s578 + $0x534] sm:$0xf]
                  %941 = vst [vmem:[%s579 + $0x2d0] sm:$0xf] %v940
                  %v942 = vld [vmem:[%s578 + $0x538] sm:$0xf]
                  %943 = vst [vmem:[%s579 + $0x2d4] sm:$0xf] %v942
                  %v944 = vld [vmem:[%s578 + $0x53c] sm:$0xf]
                  %945 = vst [vmem:[%s579 + $0x2d8] sm:$0xf] %v944
                  %v946 = vld [vmem:[%s578 + $0x540] sm:$0xf]
                  %947 = vst [vmem:[%s579 + $0x2dc] sm:$0xf] %v946
                  %v948 = vld [vmem:[%s578 + $0x544] sm:$0xf]
                  %949 = vst [vmem:[%s579 + $0x2e0] sm:$0xf] %v948
                  %v950 = vld [vmem:[%s578 + $0x548] sm:$0xf]
                  %951 = vst [vmem:[%s579 + $0x2e4] sm:$0xf] %v950
                  %v952 = vld [vmem:[%s578 + $0x54c] sm:$0xf]
                  %953 = vst [vmem:[%s579 + $0x2e8] sm:$0xf] %v952
                  %v954 = vld [vmem:[%s578 + $0x550] sm:$0xf]
                  %955 = vst [vmem:[%s579 + $0x2ec] sm:$0xf] %v954
                  %v956 = vld [vmem:[%s578 + $0x554] sm:$0xf]
                  %957 = vst [vmem:[%s579 + $0x2f0] sm:$0xf] %v956
                  %v958 = vld [vmem:[%s578 + $0x558] sm:$0xf]
                  %959 = vst [vmem:[%s579 + $0x2f4] sm:$0xf] %v958
                  %v960 = vld [vmem:[%s578 + $0x55c] sm:$0xf]
                  %961 = vst [vmem:[%s579 + $0x2f8] sm:$0xf] %v960
                  %v962 = vld [vmem:[%s578 + $0x560] sm:$0xf]
                  %963 = vst [vmem:[%s579 + $0x2fc] sm:$0xf] %v962
                  %v964 = vld [vmem:[%s578 + $0x564] sm:$0xf]
                  %965 = vst [vmem:[%s579 + $0x300] sm:$0xf] %v964
                  %v966 = vld [vmem:[%s578 + $0x568] sm:$0xf]
                  %967 = vst [vmem:[%s579 + $0x304] sm:$0xf] %v966
                  %v968 = vld [vmem:[%s578 + $0x56c] sm:$0xf]
                  %969 = vst [vmem:[%s579 + $0x308] sm:$0xf] %v968
                  %v970 = vld [vmem:[%s578 + $0x570] sm:$0xf]
                  %971 = vst [vmem:[%s579 + $0x30c] sm:$0xf] %v970
                  %v972 = vld [vmem:[%s578 + $0x574] sm:$0xf]
                  %973 = vst [vmem:[%s579 + $0x310] sm:$0xf] %v972
                  %v974 = vld [vmem:[%s578 + $0x578] sm:$0xf]
                  %975 = vst [vmem:[%s579 + $0x314] sm:$0xf] %v974
                  %v976 = vld [vmem:[%s578 + $0x57c] sm:$0xf]
                  %977 = vst [vmem:[%s579 + $0x318] sm:$0xf] %v976
                  %v978 = vld [vmem:[%s578 + $0x580] sm:$0xf]
                  %979 = vst [vmem:[%s579 + $0x31c] sm:$0xf] %v978
                  %v980 = vld [vmem:[%s578 + $0x584] sm:$0xf]
                  %981 = vst [vmem:[%s579 + $0x320] sm:$0xf] %v980
                  %v982 = vld [vmem:[%s578 + $0x588] sm:$0xf]
                  %983 = vst [vmem:[%s579 + $0x324] sm:$0xf] %v982
                  %v984 = vld [vmem:[%s578 + $0x58c] sm:$0xf]
                  %985 = vst [vmem:[%s579 + $0x328] sm:$0xf] %v984
                  %v986 = vld [vmem:[%s578 + $0x590] sm:$0xf]
                  %987 = vst [vmem:[%s579 + $0x32c] sm:$0xf] %v986
                $region63: #{efficientnet_haralick_forward.3} parent=50 // loop_footer
                  %s577 = sadd.s32 1, %s573
                $region64: #{efficientnet_haralick_forward.3} parent=50 // loop_footer_branch
                  %572 = sbr.rel target = $region60
                $region65: #{efficientnet_haralick_forward.3} parent=50 // loop_exit
                  _
              $region51: #{efficientnet_haralick_forward.3} parent=35 // pred_fallthru
                _
            $region36: #{efficientnet_haralick_forward.3} parent=31 // pred_fallthru
              _
            // Predicated region
            $region37: #{efficientnet_haralick_forward.3} parent=31 // pred_check
              _
            $region38: #{efficientnet_haralick_forward.3} parent=31 // pred_check_branch
              %143 = sbr.rel (0) target = $region40
            $region39: #{efficientnet_haralick_forward.3} parent=31 // pred_region
              loop: start=0, step=1, limit=1
              $region41: #{efficientnet_haralick_forward.3} parent=39 // loop_pre_header
                _
              $region42: #{efficientnet_haralick_forward.3} parent=39 // loop_header
                %s146 = sphi 0, %s150
                %p147 = scmp.ge.s32.totalorder %s146, 1
                %s151 = sphi %s137, %s137
                %s152 = sphi %s134, %s134
              $region43: #{efficientnet_haralick_forward.3} parent=39 // loop_header_branch
                %149 = sbr.rel (%p147) target = $region47
              $region44: #{efficientnet_haralick_forward.3} parent=39 // loop_body
                %v153 = vld [vmem:[%s151] sm:$0xf]
                %154 = vst [vmem:[%s152] sm:$0xf] %v153
                %v155 = vld [vmem:[%s151 + $0x4] sm:$0xf]
                %156 = vst [vmem:[%s152 + $0x4] sm:$0xf] %v155
                %v157 = vld [vmem:[%s151 + $0x8] sm:$0xf]
                %158 = vst [vmem:[%s152 + $0x8] sm:$0xf] %v157
                %v159 = vld [vmem:[%s151 + $0xc] sm:$0xf]
                %160 = vst [vmem:[%s152 + $0xc] sm:$0xf] %v159
                %v161 = vld [vmem:[%s151 + $0x10] sm:$0xf]
                %162 = vst [vmem:[%s152 + $0x10] sm:$0xf] %v161
                %v163 = vld [vmem:[%s151 + $0x14] sm:$0xf]
                %164 = vst [vmem:[%s152 + $0x14] sm:$0xf] %v163
                %v165 = vld [vmem:[%s151 + $0x18] sm:$0xf]
                %166 = vst [vmem:[%s152 + $0x18] sm:$0xf] %v165
                %v167 = vld [vmem:[%s151 + $0x1c] sm:$0xf]
                %168 = vst [vmem:[%s152 + $0x1c] sm:$0xf] %v167
                %v169 = vld [vmem:[%s151 + $0x20] sm:$0xf]
                %170 = vst [vmem:[%s152 + $0x20] sm:$0xf] %v169
                %v171 = vld [vmem:[%s151 + $0x24] sm:$0xf]
                %172 = vst [vmem:[%s152 + $0x24] sm:$0xf] %v171
                %v173 = vld [vmem:[%s151 + $0x28] sm:$0xf]
                %174 = vst [vmem:[%s152 + $0x28] sm:$0xf] %v173
                %v175 = vld [vmem:[%s151 + $0x2c] sm:$0xf]
                %176 = vst [vmem:[%s152 + $0x2c] sm:$0xf] %v175
                %v177 = vld [vmem:[%s151 + $0x30] sm:$0xf]
                %178 = vst [vmem:[%s152 + $0x30] sm:$0xf] %v177
                %v179 = vld [vmem:[%s151 + $0x34] sm:$0xf]
                %180 = vst [vmem:[%s152 + $0x34] sm:$0xf] %v179
                %v181 = vld [vmem:[%s151 + $0x38] sm:$0xf]
                %182 = vst [vmem:[%s152 + $0x38] sm:$0xf] %v181
                %v183 = vld [vmem:[%s151 + $0x3c] sm:$0xf]
                %184 = vst [vmem:[%s152 + $0x3c] sm:$0xf] %v183
                %v185 = vld [vmem:[%s151 + $0x40] sm:$0xf]
                %186 = vst [vmem:[%s152 + $0x40] sm:$0xf] %v185
                %v187 = vld [vmem:[%s151 + $0x44] sm:$0xf]
                %188 = vst [vmem:[%s152 + $0x44] sm:$0xf] %v187
                %v189 = vld [vmem:[%s151 + $0x48] sm:$0xf]
                %190 = vst [vmem:[%s152 + $0x48] sm:$0xf] %v189
                %v191 = vld [vmem:[%s151 + $0x4c] sm:$0xf]
                %192 = vst [vmem:[%s152 + $0x4c] sm:$0xf] %v191
                %v193 = vld [vmem:[%s151 + $0x50] sm:$0xf]
                %194 = vst [vmem:[%s152 + $0x50] sm:$0xf] %v193
                %v195 = vld [vmem:[%s151 + $0x54] sm:$0xf]
                %196 = vst [vmem:[%s152 + $0x54] sm:$0xf] %v195
                %v197 = vld [vmem:[%s151 + $0x58] sm:$0xf]
                %198 = vst [vmem:[%s152 + $0x58] sm:$0xf] %v197
                %v199 = vld [vmem:[%s151 + $0x5c] sm:$0xf]
                %200 = vst [vmem:[%s152 + $0x5c] sm:$0xf] %v199
                %v201 = vld [vmem:[%s151 + $0x60] sm:$0xf]
                %202 = vst [vmem:[%s152 + $0x60] sm:$0xf] %v201
                %v203 = vld [vmem:[%s151 + $0x64] sm:$0xf]
                %204 = vst [vmem:[%s152 + $0x64] sm:$0xf] %v203
                %v205 = vld [vmem:[%s151 + $0x68] sm:$0xf]
                %206 = vst [vmem:[%s152 + $0x68] sm:$0xf] %v205
                %v207 = vld [vmem:[%s151 + $0x6c] sm:$0xf]
                %208 = vst [vmem:[%s152 + $0x6c] sm:$0xf] %v207
                %v209 = vld [vmem:[%s151 + $0x70] sm:$0xf]
                %210 = vst [vmem:[%s152 + $0x70] sm:$0xf] %v209
                %v211 = vld [vmem:[%s151 + $0x74] sm:$0xf]
                %212 = vst [vmem:[%s152 + $0x74] sm:$0xf] %v211
                %v213 = vld [vmem:[%s151 + $0x78] sm:$0xf]
                %214 = vst [vmem:[%s152 + $0x78] sm:$0xf] %v213
                %v215 = vld [vmem:[%s151 + $0x7c] sm:$0xf]
                %216 = vst [vmem:[%s152 + $0x7c] sm:$0xf] %v215
                %v217 = vld [vmem:[%s151 + $0x80] sm:$0xf]
                %218 = vst [vmem:[%s152 + $0x80] sm:$0xf] %v217
                %v219 = vld [vmem:[%s151 + $0x84] sm:$0xf]
                %220 = vst [vmem:[%s152 + $0x84] sm:$0xf] %v219
                %v221 = vld [vmem:[%s151 + $0x88] sm:$0xf]
                %222 = vst [vmem:[%s152 + $0x88] sm:$0xf] %v221
                %v223 = vld [vmem:[%s151 + $0x8c] sm:$0xf]
                %224 = vst [vmem:[%s152 + $0x8c] sm:$0xf] %v223
                %v225 = vld [vmem:[%s151 + $0x90] sm:$0xf]
                %226 = vst [vmem:[%s152 + $0x90] sm:$0xf] %v225
                %v227 = vld [vmem:[%s151 + $0x94] sm:$0xf]
                %228 = vst [vmem:[%s152 + $0x94] sm:$0xf] %v227
                %v229 = vld [vmem:[%s151 + $0x98] sm:$0xf]
                %230 = vst [vmem:[%s152 + $0x98] sm:$0xf] %v229
                %v231 = vld [vmem:[%s151 + $0x9c] sm:$0xf]
                %232 = vst [vmem:[%s152 + $0x9c] sm:$0xf] %v231
                %v233 = vld [vmem:[%s151 + $0xa0] sm:$0xf]
                %234 = vst [vmem:[%s152 + $0xa0] sm:$0xf] %v233
                %v235 = vld [vmem:[%s151 + $0xa4] sm:$0xf]
                %236 = vst [vmem:[%s152 + $0xa4] sm:$0xf] %v235
                %v237 = vld [vmem:[%s151 + $0xa8] sm:$0xf]
                %238 = vst [vmem:[%s152 + $0xa8] sm:$0xf] %v237
                %v239 = vld [vmem:[%s151 + $0xac] sm:$0xf]
                %240 = vst [vmem:[%s152 + $0xac] sm:$0xf] %v239
                %v241 = vld [vmem:[%s151 + $0xb0] sm:$0xf]
                %242 = vst [vmem:[%s152 + $0xb0] sm:$0xf] %v241
                %v243 = vld [vmem:[%s151 + $0xb4] sm:$0xf]
                %244 = vst [vmem:[%s152 + $0xb4] sm:$0xf] %v243
                %v245 = vld [vmem:[%s151 + $0xb8] sm:$0xf]
                %246 = vst [vmem:[%s152 + $0xb8] sm:$0xf] %v245
                %v247 = vld [vmem:[%s151 + $0xbc] sm:$0xf]
                %248 = vst [vmem:[%s152 + $0xbc] sm:$0xf] %v247
                %v249 = vld [vmem:[%s151 + $0xc0] sm:$0xf]
                %250 = vst [vmem:[%s152 + $0xc0] sm:$0xf] %v249
                %v251 = vld [vmem:[%s151 + $0xc4] sm:$0xf]
                %252 = vst [vmem:[%s152 + $0xc4] sm:$0xf] %v251
                %v253 = vld [vmem:[%s151 + $0xc8] sm:$0xf]
                %254 = vst [vmem:[%s152 + $0xc8] sm:$0xf] %v253
                %v255 = vld [vmem:[%s151 + $0x198] sm:$0xf]
                %256 = vst [vmem:[%s152 + $0xcc] sm:$0xf] %v255
                %v257 = vld [vmem:[%s151 + $0x19c] sm:$0xf]
                %258 = vst [vmem:[%s152 + $0xd0] sm:$0xf] %v257
                %v259 = vld [vmem:[%s151 + $0x1a0] sm:$0xf]
                %260 = vst [vmem:[%s152 + $0xd4] sm:$0xf] %v259
                %v261 = vld [vmem:[%s151 + $0x1a4] sm:$0xf]
                %262 = vst [vmem:[%s152 + $0xd8] sm:$0xf] %v261
                %v263 = vld [vmem:[%s151 + $0x1a8] sm:$0xf]
                %264 = vst [vmem:[%s152 + $0xdc] sm:$0xf] %v263
                %v265 = vld [vmem:[%s151 + $0x1ac] sm:$0xf]
                %266 = vst [vmem:[%s152 + $0xe0] sm:$0xf] %v265
                %v267 = vld [vmem:[%s151 + $0x1b0] sm:$0xf]
                %268 = vst [vmem:[%s152 + $0xe4] sm:$0xf] %v267
                %v269 = vld [vmem:[%s151 + $0x1b4] sm:$0xf]
                %270 = vst [vmem:[%s152 + $0xe8] sm:$0xf] %v269
                %v271 = vld [vmem:[%s151 + $0x1b8] sm:$0xf]
                %272 = vst [vmem:[%s152 + $0xec] sm:$0xf] %v271
                %v273 = vld [vmem:[%s151 + $0x1bc] sm:$0xf]
                %274 = vst [vmem:[%s152 + $0xf0] sm:$0xf] %v273
                %v275 = vld [vmem:[%s151 + $0x1c0] sm:$0xf]
                %276 = vst [vmem:[%s152 + $0xf4] sm:$0xf] %v275
                %v277 = vld [vmem:[%s151 + $0x1c4] sm:$0xf]
                %278 = vst [vmem:[%s152 + $0xf8] sm:$0xf] %v277
                %v279 = vld [vmem:[%s151 + $0x1c8] sm:$0xf]
                %280 = vst [vmem:[%s152 + $0xfc] sm:$0xf] %v279
                %v281 = vld [vmem:[%s151 + $0x1cc] sm:$0xf]
                %282 = vst [vmem:[%s152 + $0x100] sm:$0xf] %v281
                %v283 = vld [vmem:[%s151 + $0x1d0] sm:$0xf]
                %284 = vst [vmem:[%s152 + $0x104] sm:$0xf] %v283
                %v285 = vld [vmem:[%s151 + $0x1d4] sm:$0xf]
                %286 = vst [vmem:[%s152 + $0x108] sm:$0xf] %v285
                %v287 = vld [vmem:[%s151 + $0x1d8] sm:$0xf]
                %288 = vst [vmem:[%s152 + $0x10c] sm:$0xf] %v287
                %v289 = vld [vmem:[%s151 + $0x1dc] sm:$0xf]
                %290 = vst [vmem:[%s152 + $0x110] sm:$0xf] %v289
                %v291 = vld [vmem:[%s151 + $0x1e0] sm:$0xf]
                %292 = vst [vmem:[%s152 + $0x114] sm:$0xf] %v291
                %v293 = vld [vmem:[%s151 + $0x1e4] sm:$0xf]
                %294 = vst [vmem:[%s152 + $0x118] sm:$0xf] %v293
                %v295 = vld [vmem:[%s151 + $0x1e8] sm:$0xf]
                %296 = vst [vmem:[%s152 + $0x11c] sm:$0xf] %v295
                %v297 = vld [vmem:[%s151 + $0x1ec] sm:$0xf]
                %298 = vst [vmem:[%s152 + $0x120] sm:$0xf] %v297
                %v299 = vld [vmem:[%s151 + $0x1f0] sm:$0xf]
                %300 = vst [vmem:[%s152 + $0x124] sm:$0xf] %v299
                %v301 = vld [vmem:[%s151 + $0x1f4] sm:$0xf]
                %302 = vst [vmem:[%s152 + $0x128] sm:$0xf] %v301
                %v303 = vld [vmem:[%s151 + $0x1f8] sm:$0xf]
                %304 = vst [vmem:[%s152 + $0x12c] sm:$0xf] %v303
                %v305 = vld [vmem:[%s151 + $0x1fc] sm:$0xf]
                %306 = vst [vmem:[%s152 + $0x130] sm:$0xf] %v305
                %v307 = vld [vmem:[%s151 + $0x200] sm:$0xf]
                %308 = vst [vmem:[%s152 + $0x134] sm:$0xf] %v307
                %v309 = vld [vmem:[%s151 + $0x204] sm:$0xf]
                %310 = vst [vmem:[%s152 + $0x138] sm:$0xf] %v309
                %v311 = vld [vmem:[%s151 + $0x208] sm:$0xf]
                %312 = vst [vmem:[%s152 + $0x13c] sm:$0xf] %v311
                %v313 = vld [vmem:[%s151 + $0x20c] sm:$0xf]
                %314 = vst [vmem:[%s152 + $0x140] sm:$0xf] %v313
                %v315 = vld [vmem:[%s151 + $0x210] sm:$0xf]
                %316 = vst [vmem:[%s152 + $0x144] sm:$0xf] %v315
                %v317 = vld [vmem:[%s151 + $0x214] sm:$0xf]
                %318 = vst [vmem:[%s152 + $0x148] sm:$0xf] %v317
                %v319 = vld [vmem:[%s151 + $0x218] sm:$0xf]
                %320 = vst [vmem:[%s152 + $0x14c] sm:$0xf] %v319
                %v321 = vld [vmem:[%s151 + $0x21c] sm:$0xf]
                %322 = vst [vmem:[%s152 + $0x150] sm:$0xf] %v321
                %v323 = vld [vmem:[%s151 + $0x220] sm:$0xf]
                %324 = vst [vmem:[%s152 + $0x154] sm:$0xf] %v323
                %v325 = vld [vmem:[%s151 + $0x224] sm:$0xf]
                %326 = vst [vmem:[%s152 + $0x158] sm:$0xf] %v325
                %v327 = vld [vmem:[%s151 + $0x228] sm:$0xf]
                %328 = vst [vmem:[%s152 + $0x15c] sm:$0xf] %v327
                %v329 = vld [vmem:[%s151 + $0x22c] sm:$0xf]
                %330 = vst [vmem:[%s152 + $0x160] sm:$0xf] %v329
                %v331 = vld [vmem:[%s151 + $0x230] sm:$0xf]
                %332 = vst [vmem:[%s152 + $0x164] sm:$0xf] %v331
                %v333 = vld [vmem:[%s151 + $0x234] sm:$0xf]
                %334 = vst [vmem:[%s152 + $0x168] sm:$0xf] %v333
                %v335 = vld [vmem:[%s151 + $0x238] sm:$0xf]
                %336 = vst [vmem:[%s152 + $0x16c] sm:$0xf] %v335
                %v337 = vld [vmem:[%s151 + $0x23c] sm:$0xf]
                %338 = vst [vmem:[%s152 + $0x170] sm:$0xf] %v337
                %v339 = vld [vmem:[%s151 + $0x240] sm:$0xf]
                %340 = vst [vmem:[%s152 + $0x174] sm:$0xf] %v339
                %v341 = vld [vmem:[%s151 + $0x244] sm:$0xf]
                %342 = vst [vmem:[%s152 + $0x178] sm:$0xf] %v341
                %v343 = vld [vmem:[%s151 + $0x248] sm:$0xf]
                %344 = vst [vmem:[%s152 + $0x17c] sm:$0xf] %v343
                %v345 = vld [vmem:[%s151 + $0x24c] sm:$0xf]
                %346 = vst [vmem:[%s152 + $0x180] sm:$0xf] %v345
                %v347 = vld [vmem:[%s151 + $0x250] sm:$0xf]
                %348 = vst [vmem:[%s152 + $0x184] sm:$0xf] %v347
                %v349 = vld [vmem:[%s151 + $0x254] sm:$0xf]
                %350 = vst [vmem:[%s152 + $0x188] sm:$0xf] %v349
                %v351 = vld [vmem:[%s151 + $0x258] sm:$0xf]
                %352 = vst [vmem:[%s152 + $0x18c] sm:$0xf] %v351
                %v353 = vld [vmem:[%s151 + $0x25c] sm:$0xf]
                %354 = vst [vmem:[%s152 + $0x190] sm:$0xf] %v353
                %v355 = vld [vmem:[%s151 + $0x260] sm:$0xf]
                %356 = vst [vmem:[%s152 + $0x194] sm:$0xf] %v355
                %v357 = vld [vmem:[%s151 + $0x330] sm:$0xf]
                %358 = vst [vmem:[%s152 + $0x198] sm:$0xf] %v357
                %v359 = vld [vmem:[%s151 + $0x334] sm:$0xf]
                %360 = vst [vmem:[%s152 + $0x19c] sm:$0xf] %v359
                %v361 = vld [vmem:[%s151 + $0x338] sm:$0xf]
                %362 = vst [vmem:[%s152 + $0x1a0] sm:$0xf] %v361
                %v363 = vld [vmem:[%s151 + $0x33c] sm:$0xf]
                %364 = vst [vmem:[%s152 + $0x1a4] sm:$0xf] %v363
                %v365 = vld [vmem:[%s151 + $0x340] sm:$0xf]
                %366 = vst [vmem:[%s152 + $0x1a8] sm:$0xf] %v365
                %v367 = vld [vmem:[%s151 + $0x344] sm:$0xf]
                %368 = vst [vmem:[%s152 + $0x1ac] sm:$0xf] %v367
                %v369 = vld [vmem:[%s151 + $0x348] sm:$0xf]
                %370 = vst [vmem:[%s152 + $0x1b0] sm:$0xf] %v369
                %v371 = vld [vmem:[%s151 + $0x34c] sm:$0xf]
                %372 = vst [vmem:[%s152 + $0x1b4] sm:$0xf] %v371
                %v373 = vld [vmem:[%s151 + $0x350] sm:$0xf]
                %374 = vst [vmem:[%s152 + $0x1b8] sm:$0xf] %v373
                %v375 = vld [vmem:[%s151 + $0x354] sm:$0xf]
                %376 = vst [vmem:[%s152 + $0x1bc] sm:$0xf] %v375
                %v377 = vld [vmem:[%s151 + $0x358] sm:$0xf]
                %378 = vst [vmem:[%s152 + $0x1c0] sm:$0xf] %v377
                %v379 = vld [vmem:[%s151 + $0x35c] sm:$0xf]
                %380 = vst [vmem:[%s152 + $0x1c4] sm:$0xf] %v379
                %v381 = vld [vmem:[%s151 + $0x360] sm:$0xf]
                %382 = vst [vmem:[%s152 + $0x1c8] sm:$0xf] %v381
                %v383 = vld [vmem:[%s151 + $0x364] sm:$0xf]
                %384 = vst [vmem:[%s152 + $0x1cc] sm:$0xf] %v383
                %v385 = vld [vmem:[%s151 + $0x368] sm:$0xf]
                %386 = vst [vmem:[%s152 + $0x1d0] sm:$0xf] %v385
                %v387 = vld [vmem:[%s151 + $0x36c] sm:$0xf]
                %388 = vst [vmem:[%s152 + $0x1d4] sm:$0xf] %v387
                %v389 = vld [vmem:[%s151 + $0x370] sm:$0xf]
                %390 = vst [vmem:[%s152 + $0x1d8] sm:$0xf] %v389
                %v391 = vld [vmem:[%s151 + $0x374] sm:$0xf]
                %392 = vst [vmem:[%s152 + $0x1dc] sm:$0xf] %v391
                %v393 = vld [vmem:[%s151 + $0x378] sm:$0xf]
                %394 = vst [vmem:[%s152 + $0x1e0] sm:$0xf] %v393
                %v395 = vld [vmem:[%s151 + $0x37c] sm:$0xf]
                %396 = vst [vmem:[%s152 + $0x1e4] sm:$0xf] %v395
                %v397 = vld [vmem:[%s151 + $0x380] sm:$0xf]
                %398 = vst [vmem:[%s152 + $0x1e8] sm:$0xf] %v397
                %v399 = vld [vmem:[%s151 + $0x384] sm:$0xf]
                %400 = vst [vmem:[%s152 + $0x1ec] sm:$0xf] %v399
                %v401 = vld [vmem:[%s151 + $0x388] sm:$0xf]
                %402 = vst [vmem:[%s152 + $0x1f0] sm:$0xf] %v401
                %v403 = vld [vmem:[%s151 + $0x38c] sm:$0xf]
                %404 = vst [vmem:[%s152 + $0x1f4] sm:$0xf] %v403
                %v405 = vld [vmem:[%s151 + $0x390] sm:$0xf]
                %406 = vst [vmem:[%s152 + $0x1f8] sm:$0xf] %v405
                %v407 = vld [vmem:[%s151 + $0x394] sm:$0xf]
                %408 = vst [vmem:[%s152 + $0x1fc] sm:$0xf] %v407
                %v409 = vld [vmem:[%s151 + $0x398] sm:$0xf]
                %410 = vst [vmem:[%s152 + $0x200] sm:$0xf] %v409
                %v411 = vld [vmem:[%s151 + $0x39c] sm:$0xf]
                %412 = vst [vmem:[%s152 + $0x204] sm:$0xf] %v411
                %v413 = vld [vmem:[%s151 + $0x3a0] sm:$0xf]
                %414 = vst [vmem:[%s152 + $0x208] sm:$0xf] %v413
                %v415 = vld [vmem:[%s151 + $0x3a4] sm:$0xf]
                %416 = vst [vmem:[%s152 + $0x20c] sm:$0xf] %v415
                %v417 = vld [vmem:[%s151 + $0x3a8] sm:$0xf]
                %418 = vst [vmem:[%s152 + $0x210] sm:$0xf] %v417
                %v419 = vld [vmem:[%s151 + $0x3ac] sm:$0xf]
                %420 = vst [vmem:[%s152 + $0x214] sm:$0xf] %v419
                %v421 = vld [vmem:[%s151 + $0x3b0] sm:$0xf]
                %422 = vst [vmem:[%s152 + $0x218] sm:$0xf] %v421
                %v423 = vld [vmem:[%s151 + $0x3b4] sm:$0xf]
                %424 = vst [vmem:[%s152 + $0x21c] sm:$0xf] %v423
                %v425 = vld [vmem:[%s151 + $0x3b8] sm:$0xf]
                %426 = vst [vmem:[%s152 + $0x220] sm:$0xf] %v425
                %v427 = vld [vmem:[%s151 + $0x3bc] sm:$0xf]
                %428 = vst [vmem:[%s152 + $0x224] sm:$0xf] %v427
                %v429 = vld [vmem:[%s151 + $0x3c0] sm:$0xf]
                %430 = vst [vmem:[%s152 + $0x228] sm:$0xf] %v429
                %v431 = vld [vmem:[%s151 + $0x3c4] sm:$0xf]
                %432 = vst [vmem:[%s152 + $0x22c] sm:$0xf] %v431
                %v433 = vld [vmem:[%s151 + $0x3c8] sm:$0xf]
                %434 = vst [vmem:[%s152 + $0x230] sm:$0xf] %v433
                %v435 = vld [vmem:[%s151 + $0x3cc] sm:$0xf]
                %436 = vst [vmem:[%s152 + $0x234] sm:$0xf] %v435
                %v437 = vld [vmem:[%s151 + $0x3d0] sm:$0xf]
                %438 = vst [vmem:[%s152 + $0x238] sm:$0xf] %v437
                %v439 = vld [vmem:[%s151 + $0x3d4] sm:$0xf]
                %440 = vst [vmem:[%s152 + $0x23c] sm:$0xf] %v439
                %v441 = vld [vmem:[%s151 + $0x3d8] sm:$0xf]
                %442 = vst [vmem:[%s152 + $0x240] sm:$0xf] %v441
                %v443 = vld [vmem:[%s151 + $0x3dc] sm:$0xf]
                %444 = vst [vmem:[%s152 + $0x244] sm:$0xf] %v443
                %v445 = vld [vmem:[%s151 + $0x3e0] sm:$0xf]
                %446 = vst [vmem:[%s152 + $0x248] sm:$0xf] %v445
                %v447 = vld [vmem:[%s151 + $0x3e4] sm:$0xf]
                %448 = vst [vmem:[%s152 + $0x24c] sm:$0xf] %v447
                %v449 = vld [vmem:[%s151 + $0x3e8] sm:$0xf]
                %450 = vst [vmem:[%s152 + $0x250] sm:$0xf] %v449
                %v451 = vld [vmem:[%s151 + $0x3ec] sm:$0xf]
                %452 = vst [vmem:[%s152 + $0x254] sm:$0xf] %v451
                %v453 = vld [vmem:[%s151 + $0x3f0] sm:$0xf]
                %454 = vst [vmem:[%s152 + $0x258] sm:$0xf] %v453
                %v455 = vld [vmem:[%s151 + $0x3f4] sm:$0xf]
                %456 = vst [vmem:[%s152 + $0x25c] sm:$0xf] %v455
                %v457 = vld [vmem:[%s151 + $0x3f8] sm:$0xf]
                %458 = vst [vmem:[%s152 + $0x260] sm:$0xf] %v457
                %v459 = vld [vmem:[%s151 + $0x4c8] sm:$0xf]
                %460 = vst [vmem:[%s152 + $0x264] sm:$0xf] %v459
                %v461 = vld [vmem:[%s151 + $0x4cc] sm:$0xf]
                %462 = vst [vmem:[%s152 + $0x268] sm:$0xf] %v461
                %v463 = vld [vmem:[%s151 + $0x4d0] sm:$0xf]
                %464 = vst [vmem:[%s152 + $0x26c] sm:$0xf] %v463
                %v465 = vld [vmem:[%s151 + $0x4d4] sm:$0xf]
                %466 = vst [vmem:[%s152 + $0x270] sm:$0xf] %v465
                %v467 = vld [vmem:[%s151 + $0x4d8] sm:$0xf]
                %468 = vst [vmem:[%s152 + $0x274] sm:$0xf] %v467
                %v469 = vld [vmem:[%s151 + $0x4dc] sm:$0xf]
                %470 = vst [vmem:[%s152 + $0x278] sm:$0xf] %v469
                %v471 = vld [vmem:[%s151 + $0x4e0] sm:$0xf]
                %472 = vst [vmem:[%s152 + $0x27c] sm:$0xf] %v471
                %v473 = vld [vmem:[%s151 + $0x4e4] sm:$0xf]
                %474 = vst [vmem:[%s152 + $0x280] sm:$0xf] %v473
                %v475 = vld [vmem:[%s151 + $0x4e8] sm:$0xf]
                %476 = vst [vmem:[%s152 + $0x284] sm:$0xf] %v475
                %v477 = vld [vmem:[%s151 + $0x4ec] sm:$0xf]
                %478 = vst [vmem:[%s152 + $0x288] sm:$0xf] %v477
                %v479 = vld [vmem:[%s151 + $0x4f0] sm:$0xf]
                %480 = vst [vmem:[%s152 + $0x28c] sm:$0xf] %v479
                %v481 = vld [vmem:[%s151 + $0x4f4] sm:$0xf]
                %482 = vst [vmem:[%s152 + $0x290] sm:$0xf] %v481
                %v483 = vld [vmem:[%s151 + $0x4f8] sm:$0xf]
                %484 = vst [vmem:[%s152 + $0x294] sm:$0xf] %v483
                %v485 = vld [vmem:[%s151 + $0x4fc] sm:$0xf]
                %486 = vst [vmem:[%s152 + $0x298] sm:$0xf] %v485
                %v487 = vld [vmem:[%s151 + $0x500] sm:$0xf]
                %488 = vst [vmem:[%s152 + $0x29c] sm:$0xf] %v487
                %v489 = vld [vmem:[%s151 + $0x504] sm:$0xf]
                %490 = vst [vmem:[%s152 + $0x2a0] sm:$0xf] %v489
                %v491 = vld [vmem:[%s151 + $0x508] sm:$0xf]
                %492 = vst [vmem:[%s152 + $0x2a4] sm:$0xf] %v491
                %v493 = vld [vmem:[%s151 + $0x50c] sm:$0xf]
                %494 = vst [vmem:[%s152 + $0x2a8] sm:$0xf] %v493
                %v495 = vld [vmem:[%s151 + $0x510] sm:$0xf]
                %496 = vst [vmem:[%s152 + $0x2ac] sm:$0xf] %v495
                %v497 = vld [vmem:[%s151 + $0x514] sm:$0xf]
                %498 = vst [vmem:[%s152 + $0x2b0] sm:$0xf] %v497
                %v499 = vld [vmem:[%s151 + $0x518] sm:$0xf]
                %500 = vst [vmem:[%s152 + $0x2b4] sm:$0xf] %v499
                %v501 = vld [vmem:[%s151 + $0x51c] sm:$0xf]
                %502 = vst [vmem:[%s152 + $0x2b8] sm:$0xf] %v501
                %v503 = vld [vmem:[%s151 + $0x520] sm:$0xf]
                %504 = vst [vmem:[%s152 + $0x2bc] sm:$0xf] %v503
                %v505 = vld [vmem:[%s151 + $0x524] sm:$0xf]
                %506 = vst [vmem:[%s152 + $0x2c0] sm:$0xf] %v505
                %v507 = vld [vmem:[%s151 + $0x528] sm:$0xf]
                %508 = vst [vmem:[%s152 + $0x2c4] sm:$0xf] %v507
                %v509 = vld [vmem:[%s151 + $0x52c] sm:$0xf]
                %510 = vst [vmem:[%s152 + $0x2c8] sm:$0xf] %v509
                %v511 = vld [vmem:[%s151 + $0x530] sm:$0xf]
                %512 = vst [vmem:[%s152 + $0x2cc] sm:$0xf] %v511
                %v513 = vld [vmem:[%s151 + $0x534] sm:$0xf]
                %514 = vst [vmem:[%s152 + $0x2d0] sm:$0xf] %v513
                %v515 = vld [vmem:[%s151 + $0x538] sm:$0xf]
                %516 = vst [vmem:[%s152 + $0x2d4] sm:$0xf] %v515
                %v517 = vld [vmem:[%s151 + $0x53c] sm:$0xf]
                %518 = vst [vmem:[%s152 + $0x2d8] sm:$0xf] %v517
                %v519 = vld [vmem:[%s151 + $0x540] sm:$0xf]
                %520 = vst [vmem:[%s152 + $0x2dc] sm:$0xf] %v519
                %v521 = vld [vmem:[%s151 + $0x544] sm:$0xf]
                %522 = vst [vmem:[%s152 + $0x2e0] sm:$0xf] %v521
                %v523 = vld [vmem:[%s151 + $0x548] sm:$0xf]
                %524 = vst [vmem:[%s152 + $0x2e4] sm:$0xf] %v523
                %v525 = vld [vmem:[%s151 + $0x54c] sm:$0xf]
                %526 = vst [vmem:[%s152 + $0x2e8] sm:$0xf] %v525
                %v527 = vld [vmem:[%s151 + $0x550] sm:$0xf]
                %528 = vst [vmem:[%s152 + $0x2ec] sm:$0xf] %v527
                %v529 = vld [vmem:[%s151 + $0x554] sm:$0xf]
                %530 = vst [vmem:[%s152 + $0x2f0] sm:$0xf] %v529
                %v531 = vld [vmem:[%s151 + $0x558] sm:$0xf]
                %532 = vst [vmem:[%s152 + $0x2f4] sm:$0xf] %v531
                %v533 = vld [vmem:[%s151 + $0x55c] sm:$0xf]
                %534 = vst [vmem:[%s152 + $0x2f8] sm:$0xf] %v533
                %v535 = vld [vmem:[%s151 + $0x560] sm:$0xf]
                %536 = vst [vmem:[%s152 + $0x2fc] sm:$0xf] %v535
                %v537 = vld [vmem:[%s151 + $0x564] sm:$0xf]
                %538 = vst [vmem:[%s152 + $0x300] sm:$0xf] %v537
                %v539 = vld [vmem:[%s151 + $0x568] sm:$0xf]
                %540 = vst [vmem:[%s152 + $0x304] sm:$0xf] %v539
                %v541 = vld [vmem:[%s151 + $0x56c] sm:$0xf]
                %542 = vst [vmem:[%s152 + $0x308] sm:$0xf] %v541
                %v543 = vld [vmem:[%s151 + $0x570] sm:$0xf]
                %544 = vst [vmem:[%s152 + $0x30c] sm:$0xf] %v543
                %v545 = vld [vmem:[%s151 + $0x574] sm:$0xf]
                %546 = vst [vmem:[%s152 + $0x310] sm:$0xf] %v545
                %v547 = vld [vmem:[%s151 + $0x578] sm:$0xf]
                %548 = vst [vmem:[%s152 + $0x314] sm:$0xf] %v547
                %v549 = vld [vmem:[%s151 + $0x57c] sm:$0xf]
                %550 = vst [vmem:[%s152 + $0x318] sm:$0xf] %v549
                %v551 = vld [vmem:[%s151 + $0x580] sm:$0xf]
                %552 = vst [vmem:[%s152 + $0x31c] sm:$0xf] %v551
                %v553 = vld [vmem:[%s151 + $0x584] sm:$0xf]
                %554 = vst [vmem:[%s152 + $0x320] sm:$0xf] %v553
                %v555 = vld [vmem:[%s151 + $0x588] sm:$0xf]
                %556 = vst [vmem:[%s152 + $0x324] sm:$0xf] %v555
                %v557 = vld [vmem:[%s151 + $0x58c] sm:$0xf]
                %558 = vst [vmem:[%s152 + $0x328] sm:$0xf] %v557
                %v559 = vld [vmem:[%s151 + $0x590] sm:$0xf]
                %560 = vst [vmem:[%s152 + $0x32c] sm:$0xf] %v559
              $region45: #{efficientnet_haralick_forward.3} parent=39 // loop_footer
                %s150 = sadd.s32 1, %s146
              $region46: #{efficientnet_haralick_forward.3} parent=39 // loop_footer_branch
                %145 = sbr.rel target = $region42
              $region47: #{efficientnet_haralick_forward.3} parent=39 // loop_exit
                _
            $region40: #{efficientnet_haralick_forward.3} parent=31 // pred_fallthru
              _
          $region32: #{efficientnet_haralick_forward.3} parent=27 // pred_fallthru
            _
          %988 = vnop
        $region28: #{efficientnet_haralick_forward.3} parent=23 // pred_fallthru
          _
      $region24: #{efficientnet_haralick_forward.3} parent=5 // pred_fallthru
        _
      %p989 = scmp.le.s32.totalorder 1, %s9
      %p990 = scmp.lt.s32.totalorder %s9, 3
      %p991 = pnand %p989, %p990
      %p992 = pneg %p991
      // Predicated region
      $region66: #{efficientnet_haralick_forward.3} parent=5 // pred_check
        _
      $region67: #{efficientnet_haralick_forward.3} parent=5 // pred_check_branch
        %994 = sbr.rel (%p991) target = $region69
      $region68: #{efficientnet_haralick_forward.3} parent=5 // pred_region
        %s995 = ssub.s32 %s9, 1
        %s996 = sand.u32 %s22, 1
        %s997 = sand.u32 %s22, 1
        %s998 = smul.addr %s997, 816
        %s999 = scalar_lea.vmem [#allocation3], %s998
        // Predicated region
        $region70: #{efficientnet_haralick_forward.3} parent=68 // pred_check
          %p1000 = pneg %p35
        $region71: #{efficientnet_haralick_forward.3} parent=68 // pred_check_branch
          %1002 = sbr.rel (%p1000) target = $region73
        $region72: #{efficientnet_haralick_forward.3} parent=68 // pred_region
          _
        $region73: #{efficientnet_haralick_forward.3} parent=68 // pred_fallthru
          _
        %s1003 = sand.u32 %s22, 1
        %s1004 = sand.u32 %s22, 1
        %s1005 = smul.addr %s1004, 816
        %s1006 = scalar_lea.vmem [#allocation3], %s1005
        %p1007 = pneg %p35
        %p1008 = pneg %p32
        %p1009 = pneg %p56
        %p1010 = pneg %p53
        %p1011 = pneg %p77
        %p1012 = pneg %p74
        %p1013 = pneg %p103
        %p1014 = pneg %p100
        %p1015 = scmp.lt.s32.totalorder %s14, 1
        %s1016 = scalar_select %p1015, %s14, 1
        %s1017 = smul.addr %s1016, 32
        %s1018 = smul.addr %s1017, 4
        %s1019 = scalar_lea.vmem %s3, %s1018
        %p1020 = scmp.lt.s32.totalorder %s14, 1
        %s1021 = scalar_select %p1020, %s14, 1
        %s1022 = smul.addr %s1021, 32
        %s1023 = smul.addr %s1022, 4
        %s1024 = scalar_lea.vmem %s3, %s1023
        %v1026 = vld [vmem:[%s999] sm:$0xf]
        %v1027 = vld [vmem:[%s999 + $0x4] sm:$0xf]
        %v1028 = vld [vmem:[%s999 + $0xc] sm:$0xf]
        %v1029 = vld [vmem:[%s999 + $0x10] sm:$0xf]
        %v1030 = vld [vmem:[%s999 + $0x18] sm:$0xf]
        %v1031 = vld [vmem:[%s999 + $0x1c] sm:$0xf]
        %v1032 = vld [vmem:[%s999 + $0x24] sm:$0xf]
        %v1033 = vld [vmem:[%s999 + $0x28] sm:$0xf]
        %v1034 = vld [vmem:[%s999 + $0x30] sm:$0xf]
        %v1035 = vld [vmem:[%s999 + $0x34] sm:$0xf]
        %v1036 = vld [vmem:[%s999 + $0x3c] sm:$0xf]
        %v1037 = vld [vmem:[%s999 + $0x40] sm:$0xf]
        %v1038 = vld [vmem:[%s999 + $0x48] sm:$0xf]
        %v1039 = vld [vmem:[%s999 + $0x4c] sm:$0xf]
        %v1040 = vld [vmem:[%s999 + $0x54] sm:$0xf]
        %v1041 = vld [vmem:[%s999 + $0x58] sm:$0xf]
        %v1042 = vld [vmem:[%s999 + $0x60] sm:$0xf]
        %v1043 = vld [vmem:[%s999 + $0x64] sm:$0xf]
        %v1044 = vld [vmem:[%s999 + $0x6c] sm:$0xf]
        %v1045 = vld [vmem:[%s999 + $0x70] sm:$0xf]
        %v1046 = vld [vmem:[%s999 + $0x78] sm:$0xf]
        %v1047 = vld [vmem:[%s999 + $0x7c] sm:$0xf]
        %v1048 = vld [vmem:[%s999 + $0x84] sm:$0xf]
        %v1049 = vld [vmem:[%s999 + $0x88] sm:$0xf]
        %v1050 = vld [vmem:[%s999 + $0x90] sm:$0xf]
        %v1051 = vld [vmem:[%s999 + $0x94] sm:$0xf]
        %v1052 = vld [vmem:[%s999 + $0x9c] sm:$0xf]
        %v1053 = vld [vmem:[%s999 + $0xa0] sm:$0xf]
        %v1054 = vld [vmem:[%s999 + $0xa8] sm:$0xf]
        %v1055 = vld [vmem:[%s999 + $0xac] sm:$0xf]
        %v1056 = vld [vmem:[%s999 + $0xb4] sm:$0xf]
        %v1057 = vld [vmem:[%s999 + $0xb8] sm:$0xf]
        %v1090 = vunpack.c.l.b16 %v1026
        %v1091 = vunpack.c.l.b16 %v1027
        %v1092 = vunpack.c.l.b16 %v1028
        %v1093 = vunpack.c.l.b16 %v1029
        %v1094 = vunpack.c.l.b16 %v1030
        %v1095 = vunpack.c.l.b16 %v1031
        %v1096 = vunpack.c.l.b16 %v1032
        %v1097 = vunpack.c.l.b16 %v1033
        %v1098 = vunpack.c.l.b16 %v1034
        %v1099 = vunpack.c.l.b16 %v1035
        %v1100 = vunpack.c.l.b16 %v1036
        %v1101 = vunpack.c.l.b16 %v1037
        %v1102 = vunpack.c.l.b16 %v1038
        %v1103 = vunpack.c.l.b16 %v1039
        %v1104 = vunpack.c.l.b16 %v1040
        %v1105 = vunpack.c.l.b16 %v1041
        %v1106 = vunpack.c.l.b16 %v1042
        %v1107 = vunpack.c.l.b16 %v1043
        %v1108 = vunpack.c.l.b16 %v1044
        %v1109 = vunpack.c.l.b16 %v1045
        %v1110 = vunpack.c.l.b16 %v1046
        %v1111 = vunpack.c.l.b16 %v1047
        %v1112 = vunpack.c.l.b16 %v1048
        %v1113 = vunpack.c.l.b16 %v1049
        %v1114 = vunpack.c.l.b16 %v1050
        %v1115 = vunpack.c.l.b16 %v1051
        %v1116 = vunpack.c.l.b16 %v1052
        %v1117 = vunpack.c.l.b16 %v1053
        %v1118 = vunpack.c.l.b16 %v1054
        %v1119 = vunpack.c.l.b16 %v1055
        %v1120 = vunpack.c.l.b16 %v1056
        %v1121 = vunpack.c.l.b16 %v1057
        %v1122 = vpack.c.b16 %v1091, %v1090
        %v1123 = vpack.c.b16 %v1093, %v1092
        %v1124 = vpack.c.b16 %v1095, %v1094
        %v1125 = vpack.c.b16 %v1097, %v1096
        %v1126 = vpack.c.b16 %v1099, %v1098
        %v1127 = vpack.c.b16 %v1101, %v1100
        %v1128 = vpack.c.b16 %v1103, %v1102
        %v1129 = vpack.c.b16 %v1105, %v1104
        %v1130 = vpack.c.b16 %v1107, %v1106
        %v1131 = vpack.c.b16 %v1109, %v1108
        %v1132 = vpack.c.b16 %v1111, %v1110
        %v1133 = vpack.c.b16 %v1113, %v1112
        %v1134 = vpack.c.b16 %v1115, %v1114
        %v1135 = vpack.c.b16 %v1117, %v1116
        %v1136 = vpack.c.b16 %v1119, %v1118
        %v1137 = vpack.c.b16 %v1121, %v1120
        %1154 = vst [vmem:[#allocation2] sm:$0xff] %v1122
        %1155 = vst [vmem:[#allocation2 + $0x48] sm:$0xff] %v1123
        %1156 = vst [vmem:[#allocation2 + $0x90] sm:$0xff] %v1124
        %1157 = vst [vmem:[#allocation2 + $0xd8] sm:$0xff] %v1125
        %1158 = vst [vmem:[#allocation2 + $0x120] sm:$0xff] %v1126
        %1159 = vst [vmem:[#allocation2 + $0x168] sm:$0xff] %v1127
        %1160 = vst [vmem:[#allocation2 + $0x1b0] sm:$0xff] %v1128
        %1161 = vst [vmem:[#allocation2 + $0x1f8] sm:$0xff] %v1129
        %1162 = vst [vmem:[#allocation2 + $0x240] sm:$0xff] %v1130
        %1163 = vst [vmem:[#allocation2 + $0x288] sm:$0xff] %v1131
        %1164 = vst [vmem:[#allocation2 + $0x2d0] sm:$0xff] %v1132
        %1165 = vst [vmem:[#allocation2 + $0x318] sm:$0xff] %v1133
        %1166 = vst [vmem:[#allocation2 + $0x360] sm:$0xff] %v1134
        %1167 = vst [vmem:[#allocation2 + $0x3a8] sm:$0xff] %v1135
        %1168 = vst [vmem:[#allocation2 + $0x3f0] sm:$0xff] %v1136
        %1169 = vst [vmem:[#allocation2 + $0x438] sm:$0xff] %v1137
        %s1170 = scalar_lea.vmem %s999, 204 [#allocation3]
        %v1171 = vld [vmem:[%s1170] sm:$0xf]
        %v1172 = vld [vmem:[%s1170 + $0x4] sm:$0xf]
        %v1173 = vld [vmem:[%s1170 + $0xc] sm:$0xf]
        %v1174 = vld [vmem:[%s1170 + $0x10] sm:$0xf]
        %v1175 = vld [vmem:[%s1170 + $0x18] sm:$0xf]
        %v1176 = vld [vmem:[%s1170 + $0x1c] sm:$0xf]
        %v1177 = vld [vmem:[%s1170 + $0x24] sm:$0xf]
        %v1178 = vld [vmem:[%s1170 + $0x28] sm:$0xf]
        %v1179 = vld [vmem:[%s1170 + $0x30] sm:$0xf]
        %v1180 = vld [vmem:[%s1170 + $0x34] sm:$0xf]
        %v1181 = vld [vmem:[%s1170 + $0x3c] sm:$0xf]
        %v1182 = vld [vmem:[%s1170 + $0x40] sm:$0xf]
        %v1183 = vld [vmem:[%s1170 + $0x48] sm:$0xf]
        %v1184 = vld [vmem:[%s1170 + $0x4c] sm:$0xf]
        %v1185 = vld [vmem:[%s1170 + $0x54] sm:$0xf]
        %v1186 = vld [vmem:[%s1170 + $0x58] sm:$0xf]
        %v1187 = vld [vmem:[%s1170 + $0x60] sm:$0xf]
        %v1188 = vld [vmem:[%s1170 + $0x64] sm:$0xf]
        %v1189 = vld [vmem:[%s1170 + $0x6c] sm:$0xf]
        %v1190 = vld [vmem:[%s1170 + $0x70] sm:$0xf]
        %v1191 = vld [vmem:[%s1170 + $0x78] sm:$0xf]
        %v1192 = vld [vmem:[%s1170 + $0x7c] sm:$0xf]
        %v1193 = vld [vmem:[%s1170 + $0x84] sm:$0xf]
        %v1194 = vld [vmem:[%s1170 + $0x88] sm:$0xf]
        %v1195 = vld [vmem:[%s1170 + $0x90] sm:$0xf]
        %v1196 = vld [vmem:[%s1170 + $0x94] sm:$0xf]
        %v1197 = vld [vmem:[%s1170 + $0x9c] sm:$0xf]
        %v1198 = vld [vmem:[%s1170 + $0xa0] sm:$0xf]
        %v1199 = vld [vmem:[%s1170 + $0xa8] sm:$0xf]
        %v1200 = vld [vmem:[%s1170 + $0xac] sm:$0xf]
        %v1201 = vld [vmem:[%s1170 + $0xb4] sm:$0xf]
        %v1202 = vld [vmem:[%s1170 + $0xb8] sm:$0xf]
        %v1235 = vunpack.c.l.b16 %v1171
        %v1236 = vunpack.c.l.b16 %v1172
        %v1237 = vunpack.c.l.b16 %v1173
        %v1238 = vunpack.c.l.b16 %v1174
        %v1239 = vunpack.c.l.b16 %v1175
        %v1240 = vunpack.c.l.b16 %v1176
        %v1241 = vunpack.c.l.b16 %v1177
        %v1242 = vunpack.c.l.b16 %v1178
        %v1243 = vunpack.c.l.b16 %v1179
        %v1244 = vunpack.c.l.b16 %v1180
        %v1245 = vunpack.c.l.b16 %v1181
        %v1246 = vunpack.c.l.b16 %v1182
        %v1247 = vunpack.c.l.b16 %v1183
        %v1248 = vunpack.c.l.b16 %v1184
        %v1249 = vunpack.c.l.b16 %v1185
        %v1250 = vunpack.c.l.b16 %v1186
        %v1251 = vunpack.c.l.b16 %v1187
        %v1252 = vunpack.c.l.b16 %v1188
        %v1253 = vunpack.c.l.b16 %v1189
        %v1254 = vunpack.c.l.b16 %v1190
        %v1255 = vunpack.c.l.b16 %v1191
        %v1256 = vunpack.c.l.b16 %v1192
        %v1257 = vunpack.c.l.b16 %v1193
        %v1258 = vunpack.c.l.b16 %v1194
        %v1259 = vunpack.c.l.b16 %v1195
        %v1260 = vunpack.c.l.b16 %v1196
        %v1261 = vunpack.c.l.b16 %v1197
        %v1262 = vunpack.c.l.b16 %v1198
        %v1263 = vunpack.c.l.b16 %v1199
        %v1264 = vunpack.c.l.b16 %v1200
        %v1265 = vunpack.c.l.b16 %v1201
        %v1266 = vunpack.c.l.b16 %v1202
        %v1267 = vpack.c.b16 %v1236, %v1235
        %v1268 = vpack.c.b16 %v1238, %v1237
        %v1269 = vpack.c.b16 %v1240, %v1239
        %v1270 = vpack.c.b16 %v1242, %v1241
        %v1271 = vpack.c.b16 %v1244, %v1243
        %v1272 = vpack.c.b16 %v1246, %v1245
        %v1273 = vpack.c.b16 %v1248, %v1247
        %v1274 = vpack.c.b16 %v1250, %v1249
        %v1275 = vpack.c.b16 %v1252, %v1251
        %v1276 = vpack.c.b16 %v1254, %v1253
        %v1277 = vpack.c.b16 %v1256, %v1255
        %v1278 = vpack.c.b16 %v1258, %v1257
        %v1279 = vpack.c.b16 %v1260, %v1259
        %v1280 = vpack.c.b16 %v1262, %v1261
        %v1281 = vpack.c.b16 %v1264, %v1263
        %v1282 = vpack.c.b16 %v1266, %v1265
        %1299 = vst [vmem:[#allocation2 + $0x8] sm:$0xff] %v1267
        %1300 = vst [vmem:[#allocation2 + $0x50] sm:$0xff] %v1268
        %1301 = vst [vmem:[#allocation2 + $0x98] sm:$0xff] %v1269
        %1302 = vst [vmem:[#allocation2 + $0xe0] sm:$0xff] %v1270
        %1303 = vst [vmem:[#allocation2 + $0x128] sm:$0xff] %v1271
        %1304 = vst [vmem:[#allocation2 + $0x170] sm:$0xff] %v1272
        %1305 = vst [vmem:[#allocation2 + $0x1b8] sm:$0xff] %v1273
        %1306 = vst [vmem:[#allocation2 + $0x200] sm:$0xff] %v1274
        %1307 = vst [vmem:[#allocation2 + $0x248] sm:$0xff] %v1275
        %1308 = vst [vmem:[#allocation2 + $0x290] sm:$0xff] %v1276
        %1309 = vst [vmem:[#allocation2 + $0x2d8] sm:$0xff] %v1277
        %1310 = vst [vmem:[#allocation2 + $0x320] sm:$0xff] %v1278
        %1311 = vst [vmem:[#allocation2 + $0x368] sm:$0xff] %v1279
        %1312 = vst [vmem:[#allocation2 + $0x3b0] sm:$0xff] %v1280
        %1313 = vst [vmem:[#allocation2 + $0x3f8] sm:$0xff] %v1281
        %1314 = vst [vmem:[#allocation2 + $0x440] sm:$0xff] %v1282
        %v1315 = vld [vmem:[%s999] sm:$0xf]
        %v1316 = vld [vmem:[%s999 + $0x4] sm:$0xf]
        %v1317 = vld [vmem:[%s999 + $0x8] sm:$0x1]
        %v1318 = vld [vmem:[%s999 + $0xc] sm:$0xf]
        %v1319 = vld [vmem:[%s999 + $0x10] sm:$0xf]
        %v1320 = vld [vmem:[%s999 + $0x14] sm:$0x1]
        %v1321 = vld [vmem:[%s999 + $0x18] sm:$0xf]
        %v1322 = vld [vmem:[%s999 + $0x1c] sm:$0xf]
        %v1323 = vld [vmem:[%s999 + $0x20] sm:$0x1]
        %v1324 = vld [vmem:[%s999 + $0x24] sm:$0xf]
        %v1325 = vld [vmem:[%s999 + $0x28] sm:$0xf]
        %v1326 = vld [vmem:[%s999 + $0x2c] sm:$0x1]
        %v1327 = vld [vmem:[%s999 + $0x30] sm:$0xf]
        %v1328 = vld [vmem:[%s999 + $0x34] sm:$0xf]
        %v1329 = vld [vmem:[%s999 + $0x38] sm:$0x1]
        %v1330 = vld [vmem:[%s999 + $0x3c] sm:$0xf]
        %v1331 = vld [vmem:[%s999 + $0x40] sm:$0xf]
        %v1332 = vld [vmem:[%s999 + $0x44] sm:$0x1]
        %v1333 = vld [vmem:[%s999 + $0x48] sm:$0xf]
        %v1334 = vld [vmem:[%s999 + $0x4c] sm:$0xf]
        %v1335 = vld [vmem:[%s999 + $0x50] sm:$0x1]
        %v1336 = vld [vmem:[%s999 + $0x54] sm:$0xf]
        %v1337 = vld [vmem:[%s999 + $0x58] sm:$0xf]
        %v1338 = vld [vmem:[%s999 + $0x5c] sm:$0x1]
        %v1339 = vld [vmem:[%s999 + $0x60] sm:$0xf]
        %v1340 = vld [vmem:[%s999 + $0x64] sm:$0xf]
        %v1341 = vld [vmem:[%s999 + $0x68] sm:$0x1]
        %v1342 = vld [vmem:[%s999 + $0x6c] sm:$0xf]
        %v1343 = vld [vmem:[%s999 + $0x70] sm:$0xf]
        %v1344 = vld [vmem:[%s999 + $0x74] sm:$0x1]
        %v1345 = vld [vmem:[%s999 + $0x78] sm:$0xf]
        %v1346 = vld [vmem:[%s999 + $0x7c] sm:$0xf]
        %v1347 = vld [vmem:[%s999 + $0x80] sm:$0x1]
        %v1348 = vld [vmem:[%s999 + $0x84] sm:$0xf]
        %v1349 = vld [vmem:[%s999 + $0x88] sm:$0xf]
        %v1350 = vld [vmem:[%s999 + $0x8c] sm:$0x1]
        %v1351 = vld [vmem:[%s999 + $0x90] sm:$0xf]
        %v1352 = vld [vmem:[%s999 + $0x94] sm:$0xf]
        %v1353 = vld [vmem:[%s999 + $0x98] sm:$0x1]
        %v1354 = vld [vmem:[%s999 + $0x9c] sm:$0xf]
        %v1355 = vld [vmem:[%s999 + $0xa0] sm:$0xf]
        %v1356 = vld [vmem:[%s999 + $0xa4] sm:$0x1]
        %v1357 = vld [vmem:[%s999 + $0xa8] sm:$0xf]
        %v1358 = vld [vmem:[%s999 + $0xac] sm:$0xf]
        %v1359 = vld [vmem:[%s999 + $0xb0] sm:$0x1]
        %v1360 = vld [vmem:[%s999 + $0xb4] sm:$0xf]
        %v1361 = vld [vmem:[%s999 + $0xb8] sm:$0xf]
        %v1362 = vld [vmem:[%s999 + $0xbc] sm:$0x1]
        %vm1363 = vsmask.f32 3328
        %vm1364 = vsmask.f32 7440
        %vm1365 = vmor %vm1363, %vm1364
        %v1367 = vshrl.u32 %v1315, 16
        %v1369 = vrot.slane %v1367, 4
        %v1370 = vshll.u32 %v1315, 16
        %v1372 = vrot.slane %v1370, 5
        %v1373 = vor.u32 %v1369, %v1372
        %v1374 = vrot.slane %v1373, 4
        %v1376 = vshll.u32 %v1316, 16
        %v1378 = vrot.slane %v1376, 5
        %v1379 = vsel %vm1365, %v1374, %v1378
        %v1380 = vshrl.u32 %v1316, 16
        %v1382 = vrot.slane %v1380, 4
        %v1383 = vor.u32 %v1382, %v1378
        %v1384 = vrot.slane %v1383, 4
        %v1386 = vshll.u32 %v1317, 16
        %v1388 = vrot.slane %v1386, 5
        %v1389 = vsel %vm1365, %v1384, %v1388
        %v1391 = vshrl.u32 %v1318, 16
        %v1393 = vrot.slane %v1391, 4
        %v1394 = vshll.u32 %v1318, 16
        %v1396 = vrot.slane %v1394, 5
        %v1397 = vor.u32 %v1393, %v1396
        %v1398 = vrot.slane %v1397, 4
        %v1400 = vshll.u32 %v1319, 16
        %v1402 = vrot.slane %v1400, 5
        %v1403 = vsel %vm1365, %v1398, %v1402
        %v1404 = vshrl.u32 %v1319, 16
        %v1406 = vrot.slane %v1404, 4
        %v1407 = vor.u32 %v1406, %v1402
        %v1408 = vrot.slane %v1407, 4
        %v1410 = vshll.u32 %v1320, 16
        %v1412 = vrot.slane %v1410, 5
        %v1413 = vsel %vm1365, %v1408, %v1412
        %v1415 = vshrl.u32 %v1321, 16
        %v1417 = vrot.slane %v1415, 4
        %v1418 = vshll.u32 %v1321, 16
        %v1420 = vrot.slane %v1418, 5
        %v1421 = vor.u32 %v1417, %v1420
        %v1422 = vrot.slane %v1421, 4
        %v1424 = vshll.u32 %v1322, 16
        %v1426 = vrot.slane %v1424, 5
        %v1427 = vsel %vm1365, %v1422, %v1426
        %v1428 = vshrl.u32 %v1322, 16
        %v1430 = vrot.slane %v1428, 4
        %v1431 = vor.u32 %v1430, %v1426
        %v1432 = vrot.slane %v1431, 4
        %v1434 = vshll.u32 %v1323, 16
        %v1436 = vrot.slane %v1434, 5
        %v1437 = vsel %vm1365, %v1432, %v1436
        %v1439 = vshrl.u32 %v1324, 16
        %v1441 = vrot.slane %v1439, 4
        %v1442 = vshll.u32 %v1324, 16
        %v1444 = vrot.slane %v1442, 5
        %v1445 = vor.u32 %v1441, %v1444
        %v1446 = vrot.slane %v1445, 4
        %v1448 = vshll.u32 %v1325, 16
        %v1450 = vrot.slane %v1448, 5
        %v1451 = vsel %vm1365, %v1446, %v1450
        %v1452 = vshrl.u32 %v1325, 16
        %v1454 = vrot.slane %v1452, 4
        %v1455 = vor.u32 %v1454, %v1450
        %v1456 = vrot.slane %v1455, 4
        %v1458 = vshll.u32 %v1326, 16
        %v1460 = vrot.slane %v1458, 5
        %v1461 = vsel %vm1365, %v1456, %v1460
        %v1463 = vshrl.u32 %v1327, 16
        %v1465 = vrot.slane %v1463, 4
        %v1466 = vshll.u32 %v1327, 16
        %v1468 = vrot.slane %v1466, 5
        %v1469 = vor.u32 %v1465, %v1468
        %v1470 = vrot.slane %v1469, 4
        %v1472 = vshll.u32 %v1328, 16
        %v1474 = vrot.slane %v1472, 5
        %v1475 = vsel %vm1365, %v1470, %v1474
        %v1476 = vshrl.u32 %v1328, 16
        %v1478 = vrot.slane %v1476, 4
        %v1479 = vor.u32 %v1478, %v1474
        %v1480 = vrot.slane %v1479, 4
        %v1482 = vshll.u32 %v1329, 16
        %v1484 = vrot.slane %v1482, 5
        %v1485 = vsel %vm1365, %v1480, %v1484
        %v1487 = vshrl.u32 %v1330, 16
        %v1489 = vrot.slane %v1487, 4
        %v1490 = vshll.u32 %v1330, 16
        %v1492 = vrot.slane %v1490, 5
        %v1493 = vor.u32 %v1489, %v1492
        %v1494 = vrot.slane %v1493, 4
        %v1496 = vshll.u32 %v1331, 16
        %v1498 = vrot.slane %v1496, 5
        %v1499 = vsel %vm1365, %v1494, %v1498
        %v1500 = vshrl.u32 %v1331, 16
        %v1502 = vrot.slane %v1500, 4
        %v1503 = vor.u32 %v1502, %v1498
        %v1504 = vrot.slane %v1503, 4
        %v1506 = vshll.u32 %v1332, 16
        %v1508 = vrot.slane %v1506, 5
        %v1509 = vsel %vm1365, %v1504, %v1508
        %v1511 = vshrl.u32 %v1333, 16
        %v1513 = vrot.slane %v1511, 4
        %v1514 = vshll.u32 %v1333, 16
        %v1516 = vrot.slane %v1514, 5
        %v1517 = vor.u32 %v1513, %v1516
        %v1518 = vrot.slane %v1517, 4
        %v1520 = vshll.u32 %v1334, 16
        %v1522 = vrot.slane %v1520, 5
        %v1523 = vsel %vm1365, %v1518, %v1522
        %v1524 = vshrl.u32 %v1334, 16
        %v1526 = vrot.slane %v1524, 4
        %v1527 = vor.u32 %v1526, %v1522
        %v1528 = vrot.slane %v1527, 4
        %v1530 = vshll.u32 %v1335, 16
        %v1532 = vrot.slane %v1530, 5
        %v1533 = vsel %vm1365, %v1528, %v1532
        %v1535 = vshrl.u32 %v1336, 16
        %v1537 = vrot.slane %v1535, 4
        %v1538 = vshll.u32 %v1336, 16
        %v1540 = vrot.slane %v1538, 5
        %v1541 = vor.u32 %v1537, %v1540
        %v1542 = vrot.slane %v1541, 4
        %v1544 = vshll.u32 %v1337, 16
        %v1546 = vrot.slane %v1544, 5
        %v1547 = vsel %vm1365, %v1542, %v1546
        %v1548 = vshrl.u32 %v1337, 16
        %v1550 = vrot.slane %v1548, 4
        %v1551 = vor.u32 %v1550, %v1546
        %v1552 = vrot.slane %v1551, 4
        %v1554 = vshll.u32 %v1338, 16
        %v1556 = vrot.slane %v1554, 5
        %v1557 = vsel %vm1365, %v1552, %v1556
        %v1559 = vshrl.u32 %v1339, 16
        %v1561 = vrot.slane %v1559, 4
        %v1562 = vshll.u32 %v1339, 16
        %v1564 = vrot.slane %v1562, 5
        %v1565 = vor.u32 %v1561, %v1564
        %v1566 = vrot.slane %v1565, 4
        %v1568 = vshll.u32 %v1340, 16
        %v1570 = vrot.slane %v1568, 5
        %v1571 = vsel %vm1365, %v1566, %v1570
        %v1572 = vshrl.u32 %v1340, 16
        %v1574 = vrot.slane %v1572, 4
        %v1575 = vor.u32 %v1574, %v1570
        %v1576 = vrot.slane %v1575, 4
        %v1578 = vshll.u32 %v1341, 16
        %v1580 = vrot.slane %v1578, 5
        %v1581 = vsel %vm1365, %v1576, %v1580
        %v1583 = vshrl.u32 %v1342, 16
        %v1585 = vrot.slane %v1583, 4
        %v1586 = vshll.u32 %v1342, 16
        %v1588 = vrot.slane %v1586, 5
        %v1589 = vor.u32 %v1585, %v1588
        %v1590 = vrot.slane %v1589, 4
        %v1592 = vshll.u32 %v1343, 16
        %v1594 = vrot.slane %v1592, 5
        %v1595 = vsel %vm1365, %v1590, %v1594
        %v1596 = vshrl.u32 %v1343, 16
        %v1598 = vrot.slane %v1596, 4
        %v1599 = vor.u32 %v1598, %v1594
        %v1600 = vrot.slane %v1599, 4
        %v1602 = vshll.u32 %v1344, 16
        %v1604 = vrot.slane %v1602, 5
        %v1605 = vsel %vm1365, %v1600, %v1604
        %v1607 = vshrl.u32 %v1345, 16
        %v1609 = vrot.slane %v1607, 4
        %v1610 = vshll.u32 %v1345, 16
        %v1612 = vrot.slane %v1610, 5
        %v1613 = vor.u32 %v1609, %v1612
        %v1614 = vrot.slane %v1613, 4
        %v1616 = vshll.u32 %v1346, 16
        %v1618 = vrot.slane %v1616, 5
        %v1619 = vsel %vm1365, %v1614, %v1618
        %v1620 = vshrl.u32 %v1346, 16
        %v1622 = vrot.slane %v1620, 4
        %v1623 = vor.u32 %v1622, %v1618
        %v1624 = vrot.slane %v1623, 4
        %v1626 = vshll.u32 %v1347, 16
        %v1628 = vrot.slane %v1626, 5
        %v1629 = vsel %vm1365, %v1624, %v1628
        %v1631 = vshrl.u32 %v1348, 16
        %v1633 = vrot.slane %v1631, 4
        %v1634 = vshll.u32 %v1348, 16
        %v1636 = vrot.slane %v1634, 5
        %v1637 = vor.u32 %v1633, %v1636
        %v1638 = vrot.slane %v1637, 4
        %v1640 = vshll.u32 %v1349, 16
        %v1642 = vrot.slane %v1640, 5
        %v1643 = vsel %vm1365, %v1638, %v1642
        %v1644 = vshrl.u32 %v1349, 16
        %v1646 = vrot.slane %v1644, 4
        %v1647 = vor.u32 %v1646, %v1642
        %v1648 = vrot.slane %v1647, 4
        %v1650 = vshll.u32 %v1350, 16
        %v1652 = vrot.slane %v1650, 5
        %v1653 = vsel %vm1365, %v1648, %v1652
        %v1655 = vshrl.u32 %v1351, 16
        %v1657 = vrot.slane %v1655, 4
        %v1658 = vshll.u32 %v1351, 16
        %v1660 = vrot.slane %v1658, 5
        %v1661 = vor.u32 %v1657, %v1660
        %v1662 = vrot.slane %v1661, 4
        %v1664 = vshll.u32 %v1352, 16
        %v1666 = vrot.slane %v1664, 5
        %v1667 = vsel %vm1365, %v1662, %v1666
        %v1668 = vshrl.u32 %v1352, 16
        %v1670 = vrot.slane %v1668, 4
        %v1671 = vor.u32 %v1670, %v1666
        %v1672 = vrot.slane %v1671, 4
        %v1674 = vshll.u32 %v1353, 16
        %v1676 = vrot.slane %v1674, 5
        %v1677 = vsel %vm1365, %v1672, %v1676
        %v1679 = vshrl.u32 %v1354, 16
        %v1681 = vrot.slane %v1679, 4
        %v1682 = vshll.u32 %v1354, 16
        %v1684 = vrot.slane %v1682, 5
        %v1685 = vor.u32 %v1681, %v1684
        %v1686 = vrot.slane %v1685, 4
        %v1688 = vshll.u32 %v1355, 16
        %v1690 = vrot.slane %v1688, 5
        %v1691 = vsel %vm1365, %v1686, %v1690
        %v1692 = vshrl.u32 %v1355, 16
        %v1694 = vrot.slane %v1692, 4
        %v1695 = vor.u32 %v1694, %v1690
        %v1696 = vrot.slane %v1695, 4
        %v1698 = vshll.u32 %v1356, 16
        %v1700 = vrot.slane %v1698, 5
        %v1701 = vsel %vm1365, %v1696, %v1700
        %v1703 = vshrl.u32 %v1357, 16
        %v1705 = vrot.slane %v1703, 4
        %v1706 = vshll.u32 %v1357, 16
        %v1708 = vrot.slane %v1706, 5
        %v1709 = vor.u32 %v1705, %v1708
        %v1710 = vrot.slane %v1709, 4
        %v1712 = vshll.u32 %v1358, 16
        %v1714 = vrot.slane %v1712, 5
        %v1715 = vsel %vm1365, %v1710, %v1714
        %v1716 = vshrl.u32 %v1358, 16
        %v1718 = vrot.slane %v1716, 4
        %v1719 = vor.u32 %v1718, %v1714
        %v1720 = vrot.slane %v1719, 4
        %v1722 = vshll.u32 %v1359, 16
        %v1724 = vrot.slane %v1722, 5
        %v1725 = vsel %vm1365, %v1720, %v1724
        %v1727 = vshrl.u32 %v1360, 16
        %v1729 = vrot.slane %v1727, 4
        %v1730 = vshll.u32 %v1360, 16
        %v1732 = vrot.slane %v1730, 5
        %v1733 = vor.u32 %v1729, %v1732
        %v1734 = vrot.slane %v1733, 4
        %v1736 = vshll.u32 %v1361, 16
        %v1738 = vrot.slane %v1736, 5
        %v1739 = vsel %vm1365, %v1734, %v1738
        %v1740 = vshrl.u32 %v1361, 16
        %v1742 = vrot.slane %v1740, 4
        %v1743 = vor.u32 %v1742, %v1738
        %v1744 = vrot.slane %v1743, 4
        %v1746 = vshll.u32 %v1362, 16
        %v1748 = vrot.slane %v1746, 5
        %v1749 = vsel %vm1365, %v1744, %v1748
        %v1750 = vunpack.c.l.b16 %v1379
        %v1751 = vunpack.c.l.b16 %v1389
        %v1752 = vunpack.c.l.b16 %v1403
        %v1753 = vunpack.c.l.b16 %v1413
        %v1754 = vunpack.c.l.b16 %v1427
        %v1755 = vunpack.c.l.b16 %v1437
        %v1756 = vunpack.c.l.b16 %v1451
        %v1757 = vunpack.c.l.b16 %v1461
        %v1758 = vunpack.c.l.b16 %v1475
        %v1759 = vunpack.c.l.b16 %v1485
        %v1760 = vunpack.c.l.b16 %v1499
        %v1761 = vunpack.c.l.b16 %v1509
        %v1762 = vunpack.c.l.b16 %v1523
        %v1763 = vunpack.c.l.b16 %v1533
        %v1764 = vunpack.c.l.b16 %v1547
        %v1765 = vunpack.c.l.b16 %v1557
        %v1766 = vunpack.c.l.b16 %v1571
        %v1767 = vunpack.c.l.b16 %v1581
        %v1768 = vunpack.c.l.b16 %v1595
        %v1769 = vunpack.c.l.b16 %v1605
        %v1770 = vunpack.c.l.b16 %v1619
        %v1771 = vunpack.c.l.b16 %v1629
        %v1772 = vunpack.c.l.b16 %v1643
        %v1773 = vunpack.c.l.b16 %v1653
        %v1774 = vunpack.c.l.b16 %v1667
        %v1775 = vunpack.c.l.b16 %v1677
        %v1776 = vunpack.c.l.b16 %v1691
        %v1777 = vunpack.c.l.b16 %v1701
        %v1778 = vunpack.c.l.b16 %v1715
        %v1779 = vunpack.c.l.b16 %v1725
        %v1780 = vunpack.c.l.b16 %v1739
        %v1781 = vunpack.c.l.b16 %v1749
        %v1782 = vpack.c.b16 %v1751, %v1750
        %v1783 = vpack.c.b16 %v1753, %v1752
        %v1784 = vpack.c.b16 %v1755, %v1754
        %v1785 = vpack.c.b16 %v1757, %v1756
        %v1786 = vpack.c.b16 %v1759, %v1758
        %v1787 = vpack.c.b16 %v1761, %v1760
        %v1788 = vpack.c.b16 %v1763, %v1762
        %v1789 = vpack.c.b16 %v1765, %v1764
        %v1790 = vpack.c.b16 %v1767, %v1766
        %v1791 = vpack.c.b16 %v1769, %v1768
        %v1792 = vpack.c.b16 %v1771, %v1770
        %v1793 = vpack.c.b16 %v1773, %v1772
        %v1794 = vpack.c.b16 %v1775, %v1774
        %v1795 = vpack.c.b16 %v1777, %v1776
        %v1796 = vpack.c.b16 %v1779, %v1778
        %v1797 = vpack.c.b16 %v1781, %v1780
        %1814 = vst [vmem:[#allocation2 + $0x10] sm:$0xff] %v1782
        %1815 = vst [vmem:[#allocation2 + $0x58] sm:$0xff] %v1783
        %1816 = vst [vmem:[#allocation2 + $0xa0] sm:$0xff] %v1784
        %1817 = vst [vmem:[#allocation2 + $0xe8] sm:$0xff] %v1785
        %1818 = vst [vmem:[#allocation2 + $0x130] sm:$0xff] %v1786
        %1819 = vst [vmem:[#allocation2 + $0x178] sm:$0xff] %v1787
        %1820 = vst [vmem:[#allocation2 + $0x1c0] sm:$0xff] %v1788
        %1821 = vst [vmem:[#allocation2 + $0x208] sm:$0xff] %v1789
        %1822 = vst [vmem:[#allocation2 + $0x250] sm:$0xff] %v1790
        %1823 = vst [vmem:[#allocation2 + $0x298] sm:$0xff] %v1791
        %1824 = vst [vmem:[#allocation2 + $0x2e0] sm:$0xff] %v1792
        %1825 = vst [vmem:[#allocation2 + $0x328] sm:$0xff] %v1793
        %1826 = vst [vmem:[#allocation2 + $0x370] sm:$0xff] %v1794
        %1827 = vst [vmem:[#allocation2 + $0x3b8] sm:$0xff] %v1795
        %1828 = vst [vmem:[#allocation2 + $0x400] sm:$0xff] %v1796
        %1829 = vst [vmem:[#allocation2 + $0x448] sm:$0xff] %v1797
        %s1830 = scalar_lea.vmem %s999, 408 [#allocation3]
        %v1831 = vld [vmem:[%s1830] sm:$0xf]
        %v1832 = vld [vmem:[%s1830 + $0x4] sm:$0xf]
        %v1833 = vld [vmem:[%s1830 + $0xc] sm:$0xf]
        %v1834 = vld [vmem:[%s1830 + $0x10] sm:$0xf]
        %v1835 = vld [vmem:[%s1830 + $0x18] sm:$0xf]
        %v1836 = vld [vmem:[%s1830 + $0x1c] sm:$0xf]
        %v1837 = vld [vmem:[%s1830 + $0x24] sm:$0xf]
        %v1838 = vld [vmem:[%s1830 + $0x28] sm:$0xf]
        %v1839 = vld [vmem:[%s1830 + $0x30] sm:$0xf]
        %v1840 = vld [vmem:[%s1830 + $0x34] sm:$0xf]
        %v1841 = vld [vmem:[%s1830 + $0x3c] sm:$0xf]
        %v1842 = vld [vmem:[%s1830 + $0x40] sm:$0xf]
        %v1843 = vld [vmem:[%s1830 + $0x48] sm:$0xf]
        %v1844 = vld [vmem:[%s1830 + $0x4c] sm:$0xf]
        %v1845 = vld [vmem:[%s1830 + $0x54] sm:$0xf]
        %v1846 = vld [vmem:[%s1830 + $0x58] sm:$0xf]
        %v1847 = vld [vmem:[%s1830 + $0x60] sm:$0xf]
        %v1848 = vld [vmem:[%s1830 + $0x64] sm:$0xf]
        %v1849 = vld [vmem:[%s1830 + $0x6c] sm:$0xf]
        %v1850 = vld [vmem:[%s1830 + $0x70] sm:$0xf]
        %v1851 = vld [vmem:[%s1830 + $0x78] sm:$0xf]
        %v1852 = vld [vmem:[%s1830 + $0x7c] sm:$0xf]
        %v1853 = vld [vmem:[%s1830 + $0x84] sm:$0xf]
        %v1854 = vld [vmem:[%s1830 + $0x88] sm:$0xf]
        %v1855 = vld [vmem:[%s1830 + $0x90] sm:$0xf]
        %v1856 = vld [vmem:[%s1830 + $0x94] sm:$0xf]
        %v1857 = vld [vmem:[%s1830 + $0x9c] sm:$0xf]
        %v1858 = vld [vmem:[%s1830 + $0xa0] sm:$0xf]
        %v1859 = vld [vmem:[%s1830 + $0xa8] sm:$0xf]
        %v1860 = vld [vmem:[%s1830 + $0xac] sm:$0xf]
        %v1861 = vld [vmem:[%s1830 + $0xb4] sm:$0xf]
        %v1862 = vld [vmem:[%s1830 + $0xb8] sm:$0xf]
        %v1895 = vunpack.c.l.b16 %v1831
        %v1896 = vunpack.c.l.b16 %v1832
        %v1897 = vunpack.c.l.b16 %v1833
        %v1898 = vunpack.c.l.b16 %v1834
        %v1899 = vunpack.c.l.b16 %v1835
        %v1900 = vunpack.c.l.b16 %v1836
        %v1901 = vunpack.c.l.b16 %v1837
        %v1902 = vunpack.c.l.b16 %v1838
        %v1903 = vunpack.c.l.b16 %v1839
        %v1904 = vunpack.c.l.b16 %v1840
        %v1905 = vunpack.c.l.b16 %v1841
        %v1906 = vunpack.c.l.b16 %v1842
        %v1907 = vunpack.c.l.b16 %v1843
        %v1908 = vunpack.c.l.b16 %v1844
        %v1909 = vunpack.c.l.b16 %v1845
        %v1910 = vunpack.c.l.b16 %v1846
        %v1911 = vunpack.c.l.b16 %v1847
        %v1912 = vunpack.c.l.b16 %v1848
        %v1913 = vunpack.c.l.b16 %v1849
        %v1914 = vunpack.c.l.b16 %v1850
        %v1915 = vunpack.c.l.b16 %v1851
        %v1916 = vunpack.c.l.b16 %v1852
        %v1917 = vunpack.c.l.b16 %v1853
        %v1918 = vunpack.c.l.b16 %v1854
        %v1919 = vunpack.c.l.b16 %v1855
        %v1920 = vunpack.c.l.b16 %v1856
        %v1921 = vunpack.c.l.b16 %v1857
        %v1922 = vunpack.c.l.b16 %v1858
        %v1923 = vunpack.c.l.b16 %v1859
        %v1924 = vunpack.c.l.b16 %v1860
        %v1925 = vunpack.c.l.b16 %v1861
        %v1926 = vunpack.c.l.b16 %v1862
        %v1927 = vpack.c.b16 %v1896, %v1895
        %v1928 = vpack.c.b16 %v1898, %v1897
        %v1929 = vpack.c.b16 %v1900, %v1899
        %v1930 = vpack.c.b16 %v1902, %v1901
        %v1931 = vpack.c.b16 %v1904, %v1903
        %v1932 = vpack.c.b16 %v1906, %v1905
        %v1933 = vpack.c.b16 %v1908, %v1907
        %v1934 = vpack.c.b16 %v1910, %v1909
        %v1935 = vpack.c.b16 %v1912, %v1911
        %v1936 = vpack.c.b16 %v1914, %v1913
        %v1937 = vpack.c.b16 %v1916, %v1915
        %v1938 = vpack.c.b16 %v1918, %v1917
        %v1939 = vpack.c.b16 %v1920, %v1919
        %v1940 = vpack.c.b16 %v1922, %v1921
        %v1941 = vpack.c.b16 %v1924, %v1923
        %v1942 = vpack.c.b16 %v1926, %v1925
        %1959 = vst [vmem:[#allocation2 + $0x18] sm:$0xff] %v1927
        %1960 = vst [vmem:[#allocation2 + $0x60] sm:$0xff] %v1928
        %1961 = vst [vmem:[#allocation2 + $0xa8] sm:$0xff] %v1929
        %1962 = vst [vmem:[#allocation2 + $0xf0] sm:$0xff] %v1930
        %1963 = vst [vmem:[#allocation2 + $0x138] sm:$0xff] %v1931
        %1964 = vst [vmem:[#allocation2 + $0x180] sm:$0xff] %v1932
        %1965 = vst [vmem:[#allocation2 + $0x1c8] sm:$0xff] %v1933
        %1966 = vst [vmem:[#allocation2 + $0x210] sm:$0xff] %v1934
        %1967 = vst [vmem:[#allocation2 + $0x258] sm:$0xff] %v1935
        %1968 = vst [vmem:[#allocation2 + $0x2a0] sm:$0xff] %v1936
        %1969 = vst [vmem:[#allocation2 + $0x2e8] sm:$0xff] %v1937
        %1970 = vst [vmem:[#allocation2 + $0x330] sm:$0xff] %v1938
        %1971 = vst [vmem:[#allocation2 + $0x378] sm:$0xff] %v1939
        %1972 = vst [vmem:[#allocation2 + $0x3c0] sm:$0xff] %v1940
        %1973 = vst [vmem:[#allocation2 + $0x408] sm:$0xff] %v1941
        %1974 = vst [vmem:[#allocation2 + $0x450] sm:$0xff] %v1942
        %s1975 = scalar_lea.vmem %s999, 612 [#allocation3]
        %v1976 = vld [vmem:[%s1975] sm:$0xf]
        %v1977 = vld [vmem:[%s1975 + $0x4] sm:$0xf]
        %v1978 = vld [vmem:[%s1975 + $0xc] sm:$0xf]
        %v1979 = vld [vmem:[%s1975 + $0x10] sm:$0xf]
        %v1980 = vld [vmem:[%s1975 + $0x18] sm:$0xf]
        %v1981 = vld [vmem:[%s1975 + $0x1c] sm:$0xf]
        %v1982 = vld [vmem:[%s1975 + $0x24] sm:$0xf]
        %v1983 = vld [vmem:[%s1975 + $0x28] sm:$0xf]
        %v1984 = vld [vmem:[%s1975 + $0x30] sm:$0xf]
        %v1985 = vld [vmem:[%s1975 + $0x34] sm:$0xf]
        %v1986 = vld [vmem:[%s1975 + $0x3c] sm:$0xf]
        %v1987 = vld [vmem:[%s1975 + $0x40] sm:$0xf]
        %v1988 = vld [vmem:[%s1975 + $0x48] sm:$0xf]
        %v1989 = vld [vmem:[%s1975 + $0x4c] sm:$0xf]
        %v1990 = vld [vmem:[%s1975 + $0x54] sm:$0xf]
        %v1991 = vld [vmem:[%s1975 + $0x58] sm:$0xf]
        %v1992 = vld [vmem:[%s1975 + $0x60] sm:$0xf]
        %v1993 = vld [vmem:[%s1975 + $0x64] sm:$0xf]
        %v1994 = vld [vmem:[%s1975 + $0x6c] sm:$0xf]
        %v1995 = vld [vmem:[%s1975 + $0x70] sm:$0xf]
        %v1996 = vld [vmem:[%s1975 + $0x78] sm:$0xf]
        %v1997 = vld [vmem:[%s1975 + $0x7c] sm:$0xf]
        %v1998 = vld [vmem:[%s1975 + $0x84] sm:$0xf]
        %v1999 = vld [vmem:[%s1975 + $0x88] sm:$0xf]
        %v2000 = vld [vmem:[%s1975 + $0x90] sm:$0xf]
        %v2001 = vld [vmem:[%s1975 + $0x94] sm:$0xf]
        %v2002 = vld [vmem:[%s1975 + $0x9c] sm:$0xf]
        %v2003 = vld [vmem:[%s1975 + $0xa0] sm:$0xf]
        %v2004 = vld [vmem:[%s1975 + $0xa8] sm:$0xf]
        %v2005 = vld [vmem:[%s1975 + $0xac] sm:$0xf]
        %v2006 = vld [vmem:[%s1975 + $0xb4] sm:$0xf]
        %v2007 = vld [vmem:[%s1975 + $0xb8] sm:$0xf]
        %v2040 = vunpack.c.l.b16 %v1976
        %v2041 = vunpack.c.l.b16 %v1977
        %v2042 = vunpack.c.l.b16 %v1978
        %v2043 = vunpack.c.l.b16 %v1979
        %v2044 = vunpack.c.l.b16 %v1980
        %v2045 = vunpack.c.l.b16 %v1981
        %v2046 = vunpack.c.l.b16 %v1982
        %v2047 = vunpack.c.l.b16 %v1983
        %v2048 = vunpack.c.l.b16 %v1984
        %v2049 = vunpack.c.l.b16 %v1985
        %v2050 = vunpack.c.l.b16 %v1986
        %v2051 = vunpack.c.l.b16 %v1987
        %v2052 = vunpack.c.l.b16 %v1988
        %v2053 = vunpack.c.l.b16 %v1989
        %v2054 = vunpack.c.l.b16 %v1990
        %v2055 = vunpack.c.l.b16 %v1991
        %v2056 = vunpack.c.l.b16 %v1992
        %v2057 = vunpack.c.l.b16 %v1993
        %v2058 = vunpack.c.l.b16 %v1994
        %v2059 = vunpack.c.l.b16 %v1995
        %v2060 = vunpack.c.l.b16 %v1996
        %v2061 = vunpack.c.l.b16 %v1997
        %v2062 = vunpack.c.l.b16 %v1998
        %v2063 = vunpack.c.l.b16 %v1999
        %v2064 = vunpack.c.l.b16 %v2000
        %v2065 = vunpack.c.l.b16 %v2001
        %v2066 = vunpack.c.l.b16 %v2002
        %v2067 = vunpack.c.l.b16 %v2003
        %v2068 = vunpack.c.l.b16 %v2004
        %v2069 = vunpack.c.l.b16 %v2005
        %v2070 = vunpack.c.l.b16 %v2006
        %v2071 = vunpack.c.l.b16 %v2007
        %v2072 = vpack.c.b16 %v2041, %v2040
        %v2073 = vpack.c.b16 %v2043, %v2042
        %v2074 = vpack.c.b16 %v2045, %v2044
        %v2075 = vpack.c.b16 %v2047, %v2046
        %v2076 = vpack.c.b16 %v2049, %v2048
        %v2077 = vpack.c.b16 %v2051, %v2050
        %v2078 = vpack.c.b16 %v2053, %v2052
        %v2079 = vpack.c.b16 %v2055, %v2054
        %v2080 = vpack.c.b16 %v2057, %v2056
        %v2081 = vpack.c.b16 %v2059, %v2058
        %v2082 = vpack.c.b16 %v2061, %v2060
        %v2083 = vpack.c.b16 %v2063, %v2062
        %v2084 = vpack.c.b16 %v2065, %v2064
        %v2085 = vpack.c.b16 %v2067, %v2066
        %v2086 = vpack.c.b16 %v2069, %v2068
        %v2087 = vpack.c.b16 %v2071, %v2070
        %2104 = vst [vmem:[#allocation2 + $0x20] sm:$0xff] %v2072
        %2105 = vst [vmem:[#allocation2 + $0x68] sm:$0xff] %v2073
        %2106 = vst [vmem:[#allocation2 + $0xb0] sm:$0xff] %v2074
        %2107 = vst [vmem:[#allocation2 + $0xf8] sm:$0xff] %v2075
        %2108 = vst [vmem:[#allocation2 + $0x140] sm:$0xff] %v2076
        %2109 = vst [vmem:[#allocation2 + $0x188] sm:$0xff] %v2077
        %2110 = vst [vmem:[#allocation2 + $0x1d0] sm:$0xff] %v2078
        %2111 = vst [vmem:[#allocation2 + $0x218] sm:$0xff] %v2079
        %2112 = vst [vmem:[#allocation2 + $0x260] sm:$0xff] %v2080
        %2113 = vst [vmem:[#allocation2 + $0x2a8] sm:$0xff] %v2081
        %2114 = vst [vmem:[#allocation2 + $0x2f0] sm:$0xff] %v2082
        %2115 = vst [vmem:[#allocation2 + $0x338] sm:$0xff] %v2083
        %2116 = vst [vmem:[#allocation2 + $0x380] sm:$0xff] %v2084
        %2117 = vst [vmem:[#allocation2 + $0x3c8] sm:$0xff] %v2085
        %2118 = vst [vmem:[#allocation2 + $0x410] sm:$0xff] %v2086
        %2119 = vst [vmem:[#allocation2 + $0x458] sm:$0xff] %v2087
        %v2120 = vld [vmem:[%s1830] sm:$0xf]
        %v2121 = vld [vmem:[%s1830 + $0x4] sm:$0xf]
        %v2122 = vld [vmem:[%s1830 + $0x8] sm:$0x1]
        %v2123 = vld [vmem:[%s1830 + $0xc] sm:$0xf]
        %v2124 = vld [vmem:[%s1830 + $0x10] sm:$0xf]
        %v2125 = vld [vmem:[%s1830 + $0x14] sm:$0x1]
        %v2126 = vld [vmem:[%s1830 + $0x18] sm:$0xf]
        %v2127 = vld [vmem:[%s1830 + $0x1c] sm:$0xf]
        %v2128 = vld [vmem:[%s1830 + $0x20] sm:$0x1]
        %v2129 = vld [vmem:[%s1830 + $0x24] sm:$0xf]
        %v2130 = vld [vmem:[%s1830 + $0x28] sm:$0xf]
        %v2131 = vld [vmem:[%s1830 + $0x2c] sm:$0x1]
        %v2132 = vld [vmem:[%s1830 + $0x30] sm:$0xf]
        %v2133 = vld [vmem:[%s1830 + $0x34] sm:$0xf]
        %v2134 = vld [vmem:[%s1830 + $0x38] sm:$0x1]
        %v2135 = vld [vmem:[%s1830 + $0x3c] sm:$0xf]
        %v2136 = vld [vmem:[%s1830 + $0x40] sm:$0xf]
        %v2137 = vld [vmem:[%s1830 + $0x44] sm:$0x1]
        %v2138 = vld [vmem:[%s1830 + $0x48] sm:$0xf]
        %v2139 = vld [vmem:[%s1830 + $0x4c] sm:$0xf]
        %v2140 = vld [vmem:[%s1830 + $0x50] sm:$0x1]
        %v2141 = vld [vmem:[%s1830 + $0x54] sm:$0xf]
        %v2142 = vld [vmem:[%s1830 + $0x58] sm:$0xf]
        %v2143 = vld [vmem:[%s1830 + $0x5c] sm:$0x1]
        %v2144 = vld [vmem:[%s1830 + $0x60] sm:$0xf]
        %v2145 = vld [vmem:[%s1830 + $0x64] sm:$0xf]
        %v2146 = vld [vmem:[%s1830 + $0x68] sm:$0x1]
        %v2147 = vld [vmem:[%s1830 + $0x6c] sm:$0xf]
        %v2148 = vld [vmem:[%s1830 + $0x70] sm:$0xf]
        %v2149 = vld [vmem:[%s1830 + $0x74] sm:$0x1]
        %v2150 = vld [vmem:[%s1830 + $0x78] sm:$0xf]
        %v2151 = vld [vmem:[%s1830 + $0x7c] sm:$0xf]
        %v2152 = vld [vmem:[%s1830 + $0x80] sm:$0x1]
        %v2153 = vld [vmem:[%s1830 + $0x84] sm:$0xf]
        %v2154 = vld [vmem:[%s1830 + $0x88] sm:$0xf]
        %v2155 = vld [vmem:[%s1830 + $0x8c] sm:$0x1]
        %v2156 = vld [vmem:[%s1830 + $0x90] sm:$0xf]
        %v2157 = vld [vmem:[%s1830 + $0x94] sm:$0xf]
        %v2158 = vld [vmem:[%s1830 + $0x98] sm:$0x1]
        %v2159 = vld [vmem:[%s1830 + $0x9c] sm:$0xf]
        %v2160 = vld [vmem:[%s1830 + $0xa0] sm:$0xf]
        %v2161 = vld [vmem:[%s1830 + $0xa4] sm:$0x1]
        %v2162 = vld [vmem:[%s1830 + $0xa8] sm:$0xf]
        %v2163 = vld [vmem:[%s1830 + $0xac] sm:$0xf]
        %v2164 = vld [vmem:[%s1830 + $0xb0] sm:$0x1]
        %v2165 = vld [vmem:[%s1830 + $0xb4] sm:$0xf]
        %v2166 = vld [vmem:[%s1830 + $0xb8] sm:$0xf]
        %v2167 = vld [vmem:[%s1830 + $0xbc] sm:$0x1]
        %v2169 = vshrl.u32 %v2120, 16
        %v2171 = vrot.slane %v2169, 4
        %v2172 = vshll.u32 %v2120, 16
        %v2174 = vrot.slane %v2172, 5
        %v2175 = vor.u32 %v2171, %v2174
        %v2176 = vrot.slane %v2175, 4
        %v2178 = vshll.u32 %v2121, 16
        %v2180 = vrot.slane %v2178, 5
        %v2181 = vsel %vm1365, %v2176, %v2180
        %v2182 = vshrl.u32 %v2121, 16
        %v2184 = vrot.slane %v2182, 4
        %v2185 = vor.u32 %v2184, %v2180
        %v2186 = vrot.slane %v2185, 4
        %v2188 = vshll.u32 %v2122, 16
        %v2190 = vrot.slane %v2188, 5
        %v2191 = vsel %vm1365, %v2186, %v2190
        %v2193 = vshrl.u32 %v2123, 16
        %v2195 = vrot.slane %v2193, 4
        %v2196 = vshll.u32 %v2123, 16
        %v2198 = vrot.slane %v2196, 5
        %v2199 = vor.u32 %v2195, %v2198
        %v2200 = vrot.slane %v2199, 4
        %v2202 = vshll.u32 %v2124, 16
        %v2204 = vrot.slane %v2202, 5
        %v2205 = vsel %vm1365, %v2200, %v2204
        %v2206 = vshrl.u32 %v2124, 16
        %v2208 = vrot.slane %v2206, 4
        %v2209 = vor.u32 %v2208, %v2204
        %v2210 = vrot.slane %v2209, 4
        %v2212 = vshll.u32 %v2125, 16
        %v2214 = vrot.slane %v2212, 5
        %v2215 = vsel %vm1365, %v2210, %v2214
        %v2217 = vshrl.u32 %v2126, 16
        %v2219 = vrot.slane %v2217, 4
        %v2220 = vshll.u32 %v2126, 16
        %v2222 = vrot.slane %v2220, 5
        %v2223 = vor.u32 %v2219, %v2222
        %v2224 = vrot.slane %v2223, 4
        %v2226 = vshll.u32 %v2127, 16
        %v2228 = vrot.slane %v2226, 5
        %v2229 = vsel %vm1365, %v2224, %v2228
        %v2230 = vshrl.u32 %v2127, 16
        %v2232 = vrot.slane %v2230, 4
        %v2233 = vor.u32 %v2232, %v2228
        %v2234 = vrot.slane %v2233, 4
        %v2236 = vshll.u32 %v2128, 16
        %v2238 = vrot.slane %v2236, 5
        %v2239 = vsel %vm1365, %v2234, %v2238
        %v2241 = vshrl.u32 %v2129, 16
        %v2243 = vrot.slane %v2241, 4
        %v2244 = vshll.u32 %v2129, 16
        %v2246 = vrot.slane %v2244, 5
        %v2247 = vor.u32 %v2243, %v2246
        %v2248 = vrot.slane %v2247, 4
        %v2250 = vshll.u32 %v2130, 16
        %v2252 = vrot.slane %v2250, 5
        %v2253 = vsel %vm1365, %v2248, %v2252
        %v2254 = vshrl.u32 %v2130, 16
        %v2256 = vrot.slane %v2254, 4
        %v2257 = vor.u32 %v2256, %v2252
        %v2258 = vrot.slane %v2257, 4
        %v2260 = vshll.u32 %v2131, 16
        %v2262 = vrot.slane %v2260, 5
        %v2263 = vsel %vm1365, %v2258, %v2262
        %v2265 = vshrl.u32 %v2132, 16
        %v2267 = vrot.slane %v2265, 4
        %v2268 = vshll.u32 %v2132, 16
        %v2270 = vrot.slane %v2268, 5
        %v2271 = vor.u32 %v2267, %v2270
        %v2272 = vrot.slane %v2271, 4
        %v2274 = vshll.u32 %v2133, 16
        %v2276 = vrot.slane %v2274, 5
        %v2277 = vsel %vm1365, %v2272, %v2276
        %v2278 = vshrl.u32 %v2133, 16
        %v2280 = vrot.slane %v2278, 4
        %v2281 = vor.u32 %v2280, %v2276
        %v2282 = vrot.slane %v2281, 4
        %v2284 = vshll.u32 %v2134, 16
        %v2286 = vrot.slane %v2284, 5
        %v2287 = vsel %vm1365, %v2282, %v2286
        %v2289 = vshrl.u32 %v2135, 16
        %v2291 = vrot.slane %v2289, 4
        %v2292 = vshll.u32 %v2135, 16
        %v2294 = vrot.slane %v2292, 5
        %v2295 = vor.u32 %v2291, %v2294
        %v2296 = vrot.slane %v2295, 4
        %v2298 = vshll.u32 %v2136, 16
        %v2300 = vrot.slane %v2298, 5
        %v2301 = vsel %vm1365, %v2296, %v2300
        %v2302 = vshrl.u32 %v2136, 16
        %v2304 = vrot.slane %v2302, 4
        %v2305 = vor.u32 %v2304, %v2300
        %v2306 = vrot.slane %v2305, 4
        %v2308 = vshll.u32 %v2137, 16
        %v2310 = vrot.slane %v2308, 5
        %v2311 = vsel %vm1365, %v2306, %v2310
        %v2313 = vshrl.u32 %v2138, 16
        %v2315 = vrot.slane %v2313, 4
        %v2316 = vshll.u32 %v2138, 16
        %v2318 = vrot.slane %v2316, 5
        %v2319 = vor.u32 %v2315, %v2318
        %v2320 = vrot.slane %v2319, 4
        %v2322 = vshll.u32 %v2139, 16
        %v2324 = vrot.slane %v2322, 5
        %v2325 = vsel %vm1365, %v2320, %v2324
        %v2326 = vshrl.u32 %v2139, 16
        %v2328 = vrot.slane %v2326, 4
        %v2329 = vor.u32 %v2328, %v2324
        %v2330 = vrot.slane %v2329, 4
        %v2332 = vshll.u32 %v2140, 16
        %v2334 = vrot.slane %v2332, 5
        %v2335 = vsel %vm1365, %v2330, %v2334
        %v2337 = vshrl.u32 %v2141, 16
        %v2339 = vrot.slane %v2337, 4
        %v2340 = vshll.u32 %v2141, 16
        %v2342 = vrot.slane %v2340, 5
        %v2343 = vor.u32 %v2339, %v2342
        %v2344 = vrot.slane %v2343, 4
        %v2346 = vshll.u32 %v2142, 16
        %v2348 = vrot.slane %v2346, 5
        %v2349 = vsel %vm1365, %v2344, %v2348
        %v2350 = vshrl.u32 %v2142, 16
        %v2352 = vrot.slane %v2350, 4
        %v2353 = vor.u32 %v2352, %v2348
        %v2354 = vrot.slane %v2353, 4
        %v2356 = vshll.u32 %v2143, 16
        %v2358 = vrot.slane %v2356, 5
        %v2359 = vsel %vm1365, %v2354, %v2358
        %v2361 = vshrl.u32 %v2144, 16
        %v2363 = vrot.slane %v2361, 4
        %v2364 = vshll.u32 %v2144, 16
        %v2366 = vrot.slane %v2364, 5
        %v2367 = vor.u32 %v2363, %v2366
        %v2368 = vrot.slane %v2367, 4
        %v2370 = vshll.u32 %v2145, 16
        %v2372 = vrot.slane %v2370, 5
        %v2373 = vsel %vm1365, %v2368, %v2372
        %v2374 = vshrl.u32 %v2145, 16
        %v2376 = vrot.slane %v2374, 4
        %v2377 = vor.u32 %v2376, %v2372
        %v2378 = vrot.slane %v2377, 4
        %v2380 = vshll.u32 %v2146, 16
        %v2382 = vrot.slane %v2380, 5
        %v2383 = vsel %vm1365, %v2378, %v2382
        %v2385 = vshrl.u32 %v2147, 16
        %v2387 = vrot.slane %v2385, 4
        %v2388 = vshll.u32 %v2147, 16
        %v2390 = vrot.slane %v2388, 5
        %v2391 = vor.u32 %v2387, %v2390
        %v2392 = vrot.slane %v2391, 4
        %v2394 = vshll.u32 %v2148, 16
        %v2396 = vrot.slane %v2394, 5
        %v2397 = vsel %vm1365, %v2392, %v2396
        %v2398 = vshrl.u32 %v2148, 16
        %v2400 = vrot.slane %v2398, 4
        %v2401 = vor.u32 %v2400, %v2396
        %v2402 = vrot.slane %v2401, 4
        %v2404 = vshll.u32 %v2149, 16
        %v2406 = vrot.slane %v2404, 5
        %v2407 = vsel %vm1365, %v2402, %v2406
        %v2409 = vshrl.u32 %v2150, 16
        %v2411 = vrot.slane %v2409, 4
        %v2412 = vshll.u32 %v2150, 16
        %v2414 = vrot.slane %v2412, 5
        %v2415 = vor.u32 %v2411, %v2414
        %v2416 = vrot.slane %v2415, 4
        %v2418 = vshll.u32 %v2151, 16
        %v2420 = vrot.slane %v2418, 5
        %v2421 = vsel %vm1365, %v2416, %v2420
        %v2422 = vshrl.u32 %v2151, 16
        %v2424 = vrot.slane %v2422, 4
        %v2425 = vor.u32 %v2424, %v2420
        %v2426 = vrot.slane %v2425, 4
        %v2428 = vshll.u32 %v2152, 16
        %v2430 = vrot.slane %v2428, 5
        %v2431 = vsel %vm1365, %v2426, %v2430
        %v2433 = vshrl.u32 %v2153, 16
        %v2435 = vrot.slane %v2433, 4
        %v2436 = vshll.u32 %v2153, 16
        %v2438 = vrot.slane %v2436, 5
        %v2439 = vor.u32 %v2435, %v2438
        %v2440 = vrot.slane %v2439, 4
        %v2442 = vshll.u32 %v2154, 16
        %v2444 = vrot.slane %v2442, 5
        %v2445 = vsel %vm1365, %v2440, %v2444
        %v2446 = vshrl.u32 %v2154, 16
        %v2448 = vrot.slane %v2446, 4
        %v2449 = vor.u32 %v2448, %v2444
        %v2450 = vrot.slane %v2449, 4
        %v2452 = vshll.u32 %v2155, 16
        %v2454 = vrot.slane %v2452, 5
        %v2455 = vsel %vm1365, %v2450, %v2454
        %v2457 = vshrl.u32 %v2156, 16
        %v2459 = vrot.slane %v2457, 4
        %v2460 = vshll.u32 %v2156, 16
        %v2462 = vrot.slane %v2460, 5
        %v2463 = vor.u32 %v2459, %v2462
        %v2464 = vrot.slane %v2463, 4
        %v2466 = vshll.u32 %v2157, 16
        %v2468 = vrot.slane %v2466, 5
        %v2469 = vsel %vm1365, %v2464, %v2468
        %v2470 = vshrl.u32 %v2157, 16
        %v2472 = vrot.slane %v2470, 4
        %v2473 = vor.u32 %v2472, %v2468
        %v2474 = vrot.slane %v2473, 4
        %v2476 = vshll.u32 %v2158, 16
        %v2478 = vrot.slane %v2476, 5
        %v2479 = vsel %vm1365, %v2474, %v2478
        %v2481 = vshrl.u32 %v2159, 16
        %v2483 = vrot.slane %v2481, 4
        %v2484 = vshll.u32 %v2159, 16
        %v2486 = vrot.slane %v2484, 5
        %v2487 = vor.u32 %v2483, %v2486
        %v2488 = vrot.slane %v2487, 4
        %v2490 = vshll.u32 %v2160, 16
        %v2492 = vrot.slane %v2490, 5
        %v2493 = vsel %vm1365, %v2488, %v2492
        %v2494 = vshrl.u32 %v2160, 16
        %v2496 = vrot.slane %v2494, 4
        %v2497 = vor.u32 %v2496, %v2492
        %v2498 = vrot.slane %v2497, 4
        %v2500 = vshll.u32 %v2161, 16
        %v2502 = vrot.slane %v2500, 5
        %v2503 = vsel %vm1365, %v2498, %v2502
        %v2505 = vshrl.u32 %v2162, 16
        %v2507 = vrot.slane %v2505, 4
        %v2508 = vshll.u32 %v2162, 16
        %v2510 = vrot.slane %v2508, 5
        %v2511 = vor.u32 %v2507, %v2510
        %v2512 = vrot.slane %v2511, 4
        %v2514 = vshll.u32 %v2163, 16
        %v2516 = vrot.slane %v2514, 5
        %v2517 = vsel %vm1365, %v2512, %v2516
        %v2518 = vshrl.u32 %v2163, 16
        %v2520 = vrot.slane %v2518, 4
        %v2521 = vor.u32 %v2520, %v2516
        %v2522 = vrot.slane %v2521, 4
        %v2524 = vshll.u32 %v2164, 16
        %v2526 = vrot.slane %v2524, 5
        %v2527 = vsel %vm1365, %v2522, %v2526
        %v2529 = vshrl.u32 %v2165, 16
        %v2531 = vrot.slane %v2529, 4
        %v2532 = vshll.u32 %v2165, 16
        %v2534 = vrot.slane %v2532, 5
        %v2535 = vor.u32 %v2531, %v2534
        %v2536 = vrot.slane %v2535, 4
        %v2538 = vshll.u32 %v2166, 16
        %v2540 = vrot.slane %v2538, 5
        %v2541 = vsel %vm1365, %v2536, %v2540
        %v2542 = vshrl.u32 %v2166, 16
        %v2544 = vrot.slane %v2542, 4
        %v2545 = vor.u32 %v2544, %v2540
        %v2546 = vrot.slane %v2545, 4
        %v2548 = vshll.u32 %v2167, 16
        %v2550 = vrot.slane %v2548, 5
        %v2551 = vsel %vm1365, %v2546, %v2550
        %v2552 = vunpack.c.l.b16 %v2181
        %v2553 = vunpack.c.l.b16 %v2191
        %v2554 = vunpack.c.l.b16 %v2205
        %v2555 = vunpack.c.l.b16 %v2215
        %v2556 = vunpack.c.l.b16 %v2229
        %v2557 = vunpack.c.l.b16 %v2239
        %v2558 = vunpack.c.l.b16 %v2253
        %v2559 = vunpack.c.l.b16 %v2263
        %v2560 = vunpack.c.l.b16 %v2277
        %v2561 = vunpack.c.l.b16 %v2287
        %v2562 = vunpack.c.l.b16 %v2301
        %v2563 = vunpack.c.l.b16 %v2311
        %v2564 = vunpack.c.l.b16 %v2325
        %v2565 = vunpack.c.l.b16 %v2335
        %v2566 = vunpack.c.l.b16 %v2349
        %v2567 = vunpack.c.l.b16 %v2359
        %v2568 = vunpack.c.l.b16 %v2373
        %v2569 = vunpack.c.l.b16 %v2383
        %v2570 = vunpack.c.l.b16 %v2397
        %v2571 = vunpack.c.l.b16 %v2407
        %v2572 = vunpack.c.l.b16 %v2421
        %v2573 = vunpack.c.l.b16 %v2431
        %v2574 = vunpack.c.l.b16 %v2445
        %v2575 = vunpack.c.l.b16 %v2455
        %v2576 = vunpack.c.l.b16 %v2469
        %v2577 = vunpack.c.l.b16 %v2479
        %v2578 = vunpack.c.l.b16 %v2493
        %v2579 = vunpack.c.l.b16 %v2503
        %v2580 = vunpack.c.l.b16 %v2517
        %v2581 = vunpack.c.l.b16 %v2527
        %v2582 = vunpack.c.l.b16 %v2541
        %v2583 = vunpack.c.l.b16 %v2551
        %v2584 = vpack.c.b16 %v2553, %v2552
        %v2585 = vpack.c.b16 %v2555, %v2554
        %v2586 = vpack.c.b16 %v2557, %v2556
        %v2587 = vpack.c.b16 %v2559, %v2558
        %v2588 = vpack.c.b16 %v2561, %v2560
        %v2589 = vpack.c.b16 %v2563, %v2562
        %v2590 = vpack.c.b16 %v2565, %v2564
        %v2591 = vpack.c.b16 %v2567, %v2566
        %v2592 = vpack.c.b16 %v2569, %v2568
        %v2593 = vpack.c.b16 %v2571, %v2570
        %v2594 = vpack.c.b16 %v2573, %v2572
        %v2595 = vpack.c.b16 %v2575, %v2574
        %v2596 = vpack.c.b16 %v2577, %v2576
        %v2597 = vpack.c.b16 %v2579, %v2578
        %v2598 = vpack.c.b16 %v2581, %v2580
        %v2599 = vpack.c.b16 %v2583, %v2582
        %2616 = vst [vmem:[#allocation2 + $0x28] sm:$0xff] %v2584
        %2617 = vst [vmem:[#allocation2 + $0x70] sm:$0xff] %v2585
        %2618 = vst [vmem:[#allocation2 + $0xb8] sm:$0xff] %v2586
        %2619 = vst [vmem:[#allocation2 + $0x100] sm:$0xff] %v2587
        %2620 = vst [vmem:[#allocation2 + $0x148] sm:$0xff] %v2588
        %2621 = vst [vmem:[#allocation2 + $0x190] sm:$0xff] %v2589
        %2622 = vst [vmem:[#allocation2 + $0x1d8] sm:$0xff] %v2590
        %2623 = vst [vmem:[#allocation2 + $0x220] sm:$0xff] %v2591
        %2624 = vst [vmem:[#allocation2 + $0x268] sm:$0xff] %v2592
        %2625 = vst [vmem:[#allocation2 + $0x2b0] sm:$0xff] %v2593
        %2626 = vst [vmem:[#allocation2 + $0x2f8] sm:$0xff] %v2594
        %2627 = vst [vmem:[#allocation2 + $0x340] sm:$0xff] %v2595
        %2628 = vst [vmem:[#allocation2 + $0x388] sm:$0xff] %v2596
        %2629 = vst [vmem:[#allocation2 + $0x3d0] sm:$0xff] %v2597
        %2630 = vst [vmem:[#allocation2 + $0x418] sm:$0xff] %v2598
        %2631 = vst [vmem:[#allocation2 + $0x460] sm:$0xff] %v2599
        %s2632 = scalar_lea.vmem %s999, 12 [#allocation3]
        %v2633 = vld [vmem:[%s2632] sm:$0xf]
        %v2634 = vld [vmem:[%s2632 + $0x4] sm:$0xf]
        %v2635 = vld [vmem:[%s2632 + $0xc] sm:$0xf]
        %v2636 = vld [vmem:[%s2632 + $0x10] sm:$0xf]
        %v2637 = vld [vmem:[%s2632 + $0x18] sm:$0xf]
        %v2638 = vld [vmem:[%s2632 + $0x1c] sm:$0xf]
        %v2639 = vld [vmem:[%s2632 + $0x24] sm:$0xf]
        %v2640 = vld [vmem:[%s2632 + $0x28] sm:$0xf]
        %v2641 = vld [vmem:[%s2632 + $0x30] sm:$0xf]
        %v2642 = vld [vmem:[%s2632 + $0x34] sm:$0xf]
        %v2643 = vld [vmem:[%s2632 + $0x3c] sm:$0xf]
        %v2644 = vld [vmem:[%s2632 + $0x40] sm:$0xf]
        %v2645 = vld [vmem:[%s2632 + $0x48] sm:$0xf]
        %v2646 = vld [vmem:[%s2632 + $0x4c] sm:$0xf]
        %v2647 = vld [vmem:[%s2632 + $0x54] sm:$0xf]
        %v2648 = vld [vmem:[%s2632 + $0x58] sm:$0xf]
        %v2649 = vld [vmem:[%s2632 + $0x60] sm:$0xf]
        %v2650 = vld [vmem:[%s2632 + $0x64] sm:$0xf]
        %v2651 = vld [vmem:[%s2632 + $0x6c] sm:$0xf]
        %v2652 = vld [vmem:[%s2632 + $0x70] sm:$0xf]
        %v2653 = vld [vmem:[%s2632 + $0x78] sm:$0xf]
        %v2654 = vld [vmem:[%s2632 + $0x7c] sm:$0xf]
        %v2655 = vld [vmem:[%s2632 + $0x84] sm:$0xf]
        %v2656 = vld [vmem:[%s2632 + $0x88] sm:$0xf]
        %v2657 = vld [vmem:[%s2632 + $0x90] sm:$0xf]
        %v2658 = vld [vmem:[%s2632 + $0x94] sm:$0xf]
        %v2659 = vld [vmem:[%s2632 + $0x9c] sm:$0xf]
        %v2660 = vld [vmem:[%s2632 + $0xa0] sm:$0xf]
        %v2661 = vld [vmem:[%s2632 + $0xa8] sm:$0xf]
        %v2662 = vld [vmem:[%s2632 + $0xac] sm:$0xf]
        %v2663 = vld [vmem:[%s2632 + $0xb4] sm:$0xf]
        %v2664 = vld [vmem:[%s2632 + $0xb8] sm:$0xf]
        %v2697 = vunpack.c.l.b16 %v2633
        %v2698 = vunpack.c.l.b16 %v2634
        %v2699 = vunpack.c.l.b16 %v2635
        %v2700 = vunpack.c.l.b16 %v2636
        %v2701 = vunpack.c.l.b16 %v2637
        %v2702 = vunpack.c.l.b16 %v2638
        %v2703 = vunpack.c.l.b16 %v2639
        %v2704 = vunpack.c.l.b16 %v2640
        %v2705 = vunpack.c.l.b16 %v2641
        %v2706 = vunpack.c.l.b16 %v2642
        %v2707 = vunpack.c.l.b16 %v2643
        %v2708 = vunpack.c.l.b16 %v2644
        %v2709 = vunpack.c.l.b16 %v2645
        %v2710 = vunpack.c.l.b16 %v2646
        %v2711 = vunpack.c.l.b16 %v2647
        %v2712 = vunpack.c.l.b16 %v2648
        %v2713 = vunpack.c.l.b16 %v2649
        %v2714 = vunpack.c.l.b16 %v2650
        %v2715 = vunpack.c.l.b16 %v2651
        %v2716 = vunpack.c.l.b16 %v2652
        %v2717 = vunpack.c.l.b16 %v2653
        %v2718 = vunpack.c.l.b16 %v2654
        %v2719 = vunpack.c.l.b16 %v2655
        %v2720 = vunpack.c.l.b16 %v2656
        %v2721 = vunpack.c.l.b16 %v2657
        %v2722 = vunpack.c.l.b16 %v2658
        %v2723 = vunpack.c.l.b16 %v2659
        %v2724 = vunpack.c.l.b16 %v2660
        %v2725 = vunpack.c.l.b16 %v2661
        %v2726 = vunpack.c.l.b16 %v2662
        %v2727 = vunpack.c.l.b16 %v2663
        %v2728 = vunpack.c.l.b16 %v2664
        %v2729 = vpack.c.b16 %v2698, %v2697
        %v2730 = vpack.c.b16 %v2700, %v2699
        %v2731 = vpack.c.b16 %v2702, %v2701
        %v2732 = vpack.c.b16 %v2704, %v2703
        %v2733 = vpack.c.b16 %v2706, %v2705
        %v2734 = vpack.c.b16 %v2708, %v2707
        %v2735 = vpack.c.b16 %v2710, %v2709
        %v2736 = vpack.c.b16 %v2712, %v2711
        %v2737 = vpack.c.b16 %v2714, %v2713
        %v2738 = vpack.c.b16 %v2716, %v2715
        %v2739 = vpack.c.b16 %v2718, %v2717
        %v2740 = vpack.c.b16 %v2720, %v2719
        %v2741 = vpack.c.b16 %v2722, %v2721
        %v2742 = vpack.c.b16 %v2724, %v2723
        %v2743 = vpack.c.b16 %v2726, %v2725
        %v2744 = vpack.c.b16 %v2728, %v2727
        %2761 = vst [vmem:[#allocation2 + $0x30] sm:$0xff] %v2729
        %2762 = vst [vmem:[#allocation2 + $0x78] sm:$0xff] %v2730
        %2763 = vst [vmem:[#allocation2 + $0xc0] sm:$0xff] %v2731
        %2764 = vst [vmem:[#allocation2 + $0x108] sm:$0xff] %v2732
        %2765 = vst [vmem:[#allocation2 + $0x150] sm:$0xff] %v2733
        %2766 = vst [vmem:[#allocation2 + $0x198] sm:$0xff] %v2734
        %2767 = vst [vmem:[#allocation2 + $0x1e0] sm:$0xff] %v2735
        %2768 = vst [vmem:[#allocation2 + $0x228] sm:$0xff] %v2736
        %2769 = vst [vmem:[#allocation2 + $0x270] sm:$0xff] %v2737
        %2770 = vst [vmem:[#allocation2 + $0x2b8] sm:$0xff] %v2738
        %2771 = vst [vmem:[#allocation2 + $0x300] sm:$0xff] %v2739
        %2772 = vst [vmem:[#allocation2 + $0x348] sm:$0xff] %v2740
        %2773 = vst [vmem:[#allocation2 + $0x390] sm:$0xff] %v2741
        %2774 = vst [vmem:[#allocation2 + $0x3d8] sm:$0xff] %v2742
        %2775 = vst [vmem:[#allocation2 + $0x420] sm:$0xff] %v2743
        %2776 = vst [vmem:[#allocation2 + $0x468] sm:$0xff] %v2744
        %s2777 = scalar_lea.vmem %s999, 216 [#allocation3]
        %v2778 = vld [vmem:[%s2777] sm:$0xf]
        %v2779 = vld [vmem:[%s2777 + $0x4] sm:$0xf]
        %v2780 = vld [vmem:[%s2777 + $0xc] sm:$0xf]
        %v2781 = vld [vmem:[%s2777 + $0x10] sm:$0xf]
        %v2782 = vld [vmem:[%s2777 + $0x18] sm:$0xf]
        %v2783 = vld [vmem:[%s2777 + $0x1c] sm:$0xf]
        %v2784 = vld [vmem:[%s2777 + $0x24] sm:$0xf]
        %v2785 = vld [vmem:[%s2777 + $0x28] sm:$0xf]
        %v2786 = vld [vmem:[%s2777 + $0x30] sm:$0xf]
        %v2787 = vld [vmem:[%s2777 + $0x34] sm:$0xf]
        %v2788 = vld [vmem:[%s2777 + $0x3c] sm:$0xf]
        %v2789 = vld [vmem:[%s2777 + $0x40] sm:$0xf]
        %v2790 = vld [vmem:[%s2777 + $0x48] sm:$0xf]
        %v2791 = vld [vmem:[%s2777 + $0x4c] sm:$0xf]
        %v2792 = vld [vmem:[%s2777 + $0x54] sm:$0xf]
        %v2793 = vld [vmem:[%s2777 + $0x58] sm:$0xf]
        %v2794 = vld [vmem:[%s2777 + $0x60] sm:$0xf]
        %v2795 = vld [vmem:[%s2777 + $0x64] sm:$0xf]
        %v2796 = vld [vmem:[%s2777 + $0x6c] sm:$0xf]
        %v2797 = vld [vmem:[%s2777 + $0x70] sm:$0xf]
        %v2798 = vld [vmem:[%s2777 + $0x78] sm:$0xf]
        %v2799 = vld [vmem:[%s2777 + $0x7c] sm:$0xf]
        %v2800 = vld [vmem:[%s2777 + $0x84] sm:$0xf]
        %v2801 = vld [vmem:[%s2777 + $0x88] sm:$0xf]
        %v2802 = vld [vmem:[%s2777 + $0x90] sm:$0xf]
        %v2803 = vld [vmem:[%s2777 + $0x94] sm:$0xf]
        %v2804 = vld [vmem:[%s2777 + $0x9c] sm:$0xf]
        %v2805 = vld [vmem:[%s2777 + $0xa0] sm:$0xf]
        %v2806 = vld [vmem:[%s2777 + $0xa8] sm:$0xf]
        %v2807 = vld [vmem:[%s2777 + $0xac] sm:$0xf]
        %v2808 = vld [vmem:[%s2777 + $0xb4] sm:$0xf]
        %v2809 = vld [vmem:[%s2777 + $0xb8] sm:$0xf]
        %v2842 = vunpack.c.l.b16 %v2778
        %v2843 = vunpack.c.l.b16 %v2779
        %v2844 = vunpack.c.l.b16 %v2780
        %v2845 = vunpack.c.l.b16 %v2781
        %v2846 = vunpack.c.l.b16 %v2782
        %v2847 = vunpack.c.l.b16 %v2783
        %v2848 = vunpack.c.l.b16 %v2784
        %v2849 = vunpack.c.l.b16 %v2785
        %v2850 = vunpack.c.l.b16 %v2786
        %v2851 = vunpack.c.l.b16 %v2787
        %v2852 = vunpack.c.l.b16 %v2788
        %v2853 = vunpack.c.l.b16 %v2789
        %v2854 = vunpack.c.l.b16 %v2790
        %v2855 = vunpack.c.l.b16 %v2791
        %v2856 = vunpack.c.l.b16 %v2792
        %v2857 = vunpack.c.l.b16 %v2793
        %v2858 = vunpack.c.l.b16 %v2794
        %v2859 = vunpack.c.l.b16 %v2795
        %v2860 = vunpack.c.l.b16 %v2796
        %v2861 = vunpack.c.l.b16 %v2797
        %v2862 = vunpack.c.l.b16 %v2798
        %v2863 = vunpack.c.l.b16 %v2799
        %v2864 = vunpack.c.l.b16 %v2800
        %v2865 = vunpack.c.l.b16 %v2801
        %v2866 = vunpack.c.l.b16 %v2802
        %v2867 = vunpack.c.l.b16 %v2803
        %v2868 = vunpack.c.l.b16 %v2804
        %v2869 = vunpack.c.l.b16 %v2805
        %v2870 = vunpack.c.l.b16 %v2806
        %v2871 = vunpack.c.l.b16 %v2807
        %v2872 = vunpack.c.l.b16 %v2808
        %v2873 = vunpack.c.l.b16 %v2809
        %v2874 = vpack.c.b16 %v2843, %v2842
        %v2875 = vpack.c.b16 %v2845, %v2844
        %v2876 = vpack.c.b16 %v2847, %v2846
        %v2877 = vpack.c.b16 %v2849, %v2848
        %v2878 = vpack.c.b16 %v2851, %v2850
        %v2879 = vpack.c.b16 %v2853, %v2852
        %v2880 = vpack.c.b16 %v2855, %v2854
        %v2881 = vpack.c.b16 %v2857, %v2856
        %v2882 = vpack.c.b16 %v2859, %v2858
        %v2883 = vpack.c.b16 %v2861, %v2860
        %v2884 = vpack.c.b16 %v2863, %v2862
        %v2885 = vpack.c.b16 %v2865, %v2864
        %v2886 = vpack.c.b16 %v2867, %v2866
        %v2887 = vpack.c.b16 %v2869, %v2868
        %v2888 = vpack.c.b16 %v2871, %v2870
        %v2889 = vpack.c.b16 %v2873, %v2872
        %2906 = vst [vmem:[#allocation2 + $0x38] sm:$0xff] %v2874
        %2907 = vst [vmem:[#allocation2 + $0x80] sm:$0xff] %v2875
        %2908 = vst [vmem:[#allocation2 + $0xc8] sm:$0xff] %v2876
        %2909 = vst [vmem:[#allocation2 + $0x110] sm:$0xff] %v2877
        %2910 = vst [vmem:[#allocation2 + $0x158] sm:$0xff] %v2878
        %2911 = vst [vmem:[#allocation2 + $0x1a0] sm:$0xff] %v2879
        %2912 = vst [vmem:[#allocation2 + $0x1e8] sm:$0xff] %v2880
        %2913 = vst [vmem:[#allocation2 + $0x230] sm:$0xff] %v2881
        %2914 = vst [vmem:[#allocation2 + $0x278] sm:$0xff] %v2882
        %2915 = vst [vmem:[#allocation2 + $0x2c0] sm:$0xff] %v2883
        %2916 = vst [vmem:[#allocation2 + $0x308] sm:$0xff] %v2884
        %2917 = vst [vmem:[#allocation2 + $0x350] sm:$0xff] %v2885
        %2918 = vst [vmem:[#allocation2 + $0x398] sm:$0xff] %v2886
        %2919 = vst [vmem:[#allocation2 + $0x3e0] sm:$0xff] %v2887
        %2920 = vst [vmem:[#allocation2 + $0x428] sm:$0xff] %v2888
        %2921 = vst [vmem:[#allocation2 + $0x470] sm:$0xff] %v2889
        %v2922 = vld [vmem:[%s2632] sm:$0xf]
        %v2923 = vld [vmem:[%s2632 + $0x4] sm:$0xf]
        %v2924 = vld [vmem:[%s2632 + $0x8] sm:$0x1]
        %v2925 = vld [vmem:[%s2632 + $0xc] sm:$0xf]
        %v2926 = vld [vmem:[%s2632 + $0x10] sm:$0xf]
        %v2927 = vld [vmem:[%s2632 + $0x14] sm:$0x1]
        %v2928 = vld [vmem:[%s2632 + $0x18] sm:$0xf]
        %v2929 = vld [vmem:[%s2632 + $0x1c] sm:$0xf]
        %v2930 = vld [vmem:[%s2632 + $0x20] sm:$0x1]
        %v2931 = vld [vmem:[%s2632 + $0x24] sm:$0xf]
        %v2932 = vld [vmem:[%s2632 + $0x28] sm:$0xf]
        %v2933 = vld [vmem:[%s2632 + $0x2c] sm:$0x1]
        %v2934 = vld [vmem:[%s2632 + $0x30] sm:$0xf]
        %v2935 = vld [vmem:[%s2632 + $0x34] sm:$0xf]
        %v2936 = vld [vmem:[%s2632 + $0x38] sm:$0x1]
        %v2937 = vld [vmem:[%s2632 + $0x3c] sm:$0xf]
        %v2938 = vld [vmem:[%s2632 + $0x40] sm:$0xf]
        %v2939 = vld [vmem:[%s2632 + $0x44] sm:$0x1]
        %v2940 = vld [vmem:[%s2632 + $0x48] sm:$0xf]
        %v2941 = vld [vmem:[%s2632 + $0x4c] sm:$0xf]
        %v2942 = vld [vmem:[%s2632 + $0x50] sm:$0x1]
        %v2943 = vld [vmem:[%s2632 + $0x54] sm:$0xf]
        %v2944 = vld [vmem:[%s2632 + $0x58] sm:$0xf]
        %v2945 = vld [vmem:[%s2632 + $0x5c] sm:$0x1]
        %v2946 = vld [vmem:[%s2632 + $0x60] sm:$0xf]
        %v2947 = vld [vmem:[%s2632 + $0x64] sm:$0xf]
        %v2948 = vld [vmem:[%s2632 + $0x68] sm:$0x1]
        %v2949 = vld [vmem:[%s2632 + $0x6c] sm:$0xf]
        %v2950 = vld [vmem:[%s2632 + $0x70] sm:$0xf]
        %v2951 = vld [vmem:[%s2632 + $0x74] sm:$0x1]
        %v2952 = vld [vmem:[%s2632 + $0x78] sm:$0xf]
        %v2953 = vld [vmem:[%s2632 + $0x7c] sm:$0xf]
        %v2954 = vld [vmem:[%s2632 + $0x80] sm:$0x1]
        %v2955 = vld [vmem:[%s2632 + $0x84] sm:$0xf]
        %v2956 = vld [vmem:[%s2632 + $0x88] sm:$0xf]
        %v2957 = vld [vmem:[%s2632 + $0x8c] sm:$0x1]
        %v2958 = vld [vmem:[%s2632 + $0x90] sm:$0xf]
        %v2959 = vld [vmem:[%s2632 + $0x94] sm:$0xf]
        %v2960 = vld [vmem:[%s2632 + $0x98] sm:$0x1]
        %v2961 = vld [vmem:[%s2632 + $0x9c] sm:$0xf]
        %v2962 = vld [vmem:[%s2632 + $0xa0] sm:$0xf]
        %v2963 = vld [vmem:[%s2632 + $0xa4] sm:$0x1]
        %v2964 = vld [vmem:[%s2632 + $0xa8] sm:$0xf]
        %v2965 = vld [vmem:[%s2632 + $0xac] sm:$0xf]
        %v2966 = vld [vmem:[%s2632 + $0xb0] sm:$0x1]
        %v2967 = vld [vmem:[%s2632 + $0xb4] sm:$0xf]
        %v2968 = vld [vmem:[%s2632 + $0xb8] sm:$0xf]
        %v2969 = vld [vmem:[%s2632 + $0xbc] sm:$0x1]
        %v2971 = vshrl.u32 %v2922, 16
        %v2973 = vrot.slane %v2971, 4
        %v2974 = vshll.u32 %v2922, 16
        %v2976 = vrot.slane %v2974, 5
        %v2977 = vor.u32 %v2973, %v2976
        %v2978 = vrot.slane %v2977, 4
        %v2980 = vshll.u32 %v2923, 16
        %v2982 = vrot.slane %v2980, 5
        %v2983 = vsel %vm1365, %v2978, %v2982
        %v2984 = vshrl.u32 %v2923, 16
        %v2986 = vrot.slane %v2984, 4
        %v2987 = vor.u32 %v2986, %v2982
        %v2988 = vrot.slane %v2987, 4
        %v2990 = vshll.u32 %v2924, 16
        %v2992 = vrot.slane %v2990, 5
        %v2993 = vsel %vm1365, %v2988, %v2992
        %v2995 = vshrl.u32 %v2925, 16
        %v2997 = vrot.slane %v2995, 4
        %v2998 = vshll.u32 %v2925, 16
        %v3000 = vrot.slane %v2998, 5
        %v3001 = vor.u32 %v2997, %v3000
        %v3002 = vrot.slane %v3001, 4
        %v3004 = vshll.u32 %v2926, 16
        %v3006 = vrot.slane %v3004, 5
        %v3007 = vsel %vm1365, %v3002, %v3006
        %v3008 = vshrl.u32 %v2926, 16
        %v3010 = vrot.slane %v3008, 4
        %v3011 = vor.u32 %v3010, %v3006
        %v3012 = vrot.slane %v3011, 4
        %v3014 = vshll.u32 %v2927, 16
        %v3016 = vrot.slane %v3014, 5
        %v3017 = vsel %vm1365, %v3012, %v3016
        %v3019 = vshrl.u32 %v2928, 16
        %v3021 = vrot.slane %v3019, 4
        %v3022 = vshll.u32 %v2928, 16
        %v3024 = vrot.slane %v3022, 5
        %v3025 = vor.u32 %v3021, %v3024
        %v3026 = vrot.slane %v3025, 4
        %v3028 = vshll.u32 %v2929, 16
        %v3030 = vrot.slane %v3028, 5
        %v3031 = vsel %vm1365, %v3026, %v3030
        %v3032 = vshrl.u32 %v2929, 16
        %v3034 = vrot.slane %v3032, 4
        %v3035 = vor.u32 %v3034, %v3030
        %v3036 = vrot.slane %v3035, 4
        %v3038 = vshll.u32 %v2930, 16
        %v3040 = vrot.slane %v3038, 5
        %v3041 = vsel %vm1365, %v3036, %v3040
        %v3043 = vshrl.u32 %v2931, 16
        %v3045 = vrot.slane %v3043, 4
        %v3046 = vshll.u32 %v2931, 16
        %v3048 = vrot.slane %v3046, 5
        %v3049 = vor.u32 %v3045, %v3048
        %v3050 = vrot.slane %v3049, 4
        %v3052 = vshll.u32 %v2932, 16
        %v3054 = vrot.slane %v3052, 5
        %v3055 = vsel %vm1365, %v3050, %v3054
        %v3056 = vshrl.u32 %v2932, 16
        %v3058 = vrot.slane %v3056, 4
        %v3059 = vor.u32 %v3058, %v3054
        %v3060 = vrot.slane %v3059, 4
        %v3062 = vshll.u32 %v2933, 16
        %v3064 = vrot.slane %v3062, 5
        %v3065 = vsel %vm1365, %v3060, %v3064
        %v3067 = vshrl.u32 %v2934, 16
        %v3069 = vrot.slane %v3067, 4
        %v3070 = vshll.u32 %v2934, 16
        %v3072 = vrot.slane %v3070, 5
        %v3073 = vor.u32 %v3069, %v3072
        %v3074 = vrot.slane %v3073, 4
        %v3076 = vshll.u32 %v2935, 16
        %v3078 = vrot.slane %v3076, 5
        %v3079 = vsel %vm1365, %v3074, %v3078
        %v3080 = vshrl.u32 %v2935, 16
        %v3082 = vrot.slane %v3080, 4
        %v3083 = vor.u32 %v3082, %v3078
        %v3084 = vrot.slane %v3083, 4
        %v3086 = vshll.u32 %v2936, 16
        %v3088 = vrot.slane %v3086, 5
        %v3089 = vsel %vm1365, %v3084, %v3088
        %v3091 = vshrl.u32 %v2937, 16
        %v3093 = vrot.slane %v3091, 4
        %v3094 = vshll.u32 %v2937, 16
        %v3096 = vrot.slane %v3094, 5
        %v3097 = vor.u32 %v3093, %v3096
        %v3098 = vrot.slane %v3097, 4
        %v3100 = vshll.u32 %v2938, 16
        %v3102 = vrot.slane %v3100, 5
        %v3103 = vsel %vm1365, %v3098, %v3102
        %v3104 = vshrl.u32 %v2938, 16
        %v3106 = vrot.slane %v3104, 4
        %v3107 = vor.u32 %v3106, %v3102
        %v3108 = vrot.slane %v3107, 4
        %v3110 = vshll.u32 %v2939, 16
        %v3112 = vrot.slane %v3110, 5
        %v3113 = vsel %vm1365, %v3108, %v3112
        %v3115 = vshrl.u32 %v2940, 16
        %v3117 = vrot.slane %v3115, 4
        %v3118 = vshll.u32 %v2940, 16
        %v3120 = vrot.slane %v3118, 5
        %v3121 = vor.u32 %v3117, %v3120
        %v3122 = vrot.slane %v3121, 4
        %v3124 = vshll.u32 %v2941, 16
        %v3126 = vrot.slane %v3124, 5
        %v3127 = vsel %vm1365, %v3122, %v3126
        %v3128 = vshrl.u32 %v2941, 16
        %v3130 = vrot.slane %v3128, 4
        %v3131 = vor.u32 %v3130, %v3126
        %v3132 = vrot.slane %v3131, 4
        %v3134 = vshll.u32 %v2942, 16
        %v3136 = vrot.slane %v3134, 5
        %v3137 = vsel %vm1365, %v3132, %v3136
        %v3139 = vshrl.u32 %v2943, 16
        %v3141 = vrot.slane %v3139, 4
        %v3142 = vshll.u32 %v2943, 16
        %v3144 = vrot.slane %v3142, 5
        %v3145 = vor.u32 %v3141, %v3144
        %v3146 = vrot.slane %v3145, 4
        %v3148 = vshll.u32 %v2944, 16
        %v3150 = vrot.slane %v3148, 5
        %v3151 = vsel %vm1365, %v3146, %v3150
        %v3152 = vshrl.u32 %v2944, 16
        %v3154 = vrot.slane %v3152, 4
        %v3155 = vor.u32 %v3154, %v3150
        %v3156 = vrot.slane %v3155, 4
        %v3158 = vshll.u32 %v2945, 16
        %v3160 = vrot.slane %v3158, 5
        %v3161 = vsel %vm1365, %v3156, %v3160
        %v3163 = vshrl.u32 %v2946, 16
        %v3165 = vrot.slane %v3163, 4
        %v3166 = vshll.u32 %v2946, 16
        %v3168 = vrot.slane %v3166, 5
        %v3169 = vor.u32 %v3165, %v3168
        %v3170 = vrot.slane %v3169, 4
        %v3172 = vshll.u32 %v2947, 16
        %v3174 = vrot.slane %v3172, 5
        %v3175 = vsel %vm1365, %v3170, %v3174
        %v3176 = vshrl.u32 %v2947, 16
        %v3178 = vrot.slane %v3176, 4
        %v3179 = vor.u32 %v3178, %v3174
        %v3180 = vrot.slane %v3179, 4
        %v3182 = vshll.u32 %v2948, 16
        %v3184 = vrot.slane %v3182, 5
        %v3185 = vsel %vm1365, %v3180, %v3184
        %v3187 = vshrl.u32 %v2949, 16
        %v3189 = vrot.slane %v3187, 4
        %v3190 = vshll.u32 %v2949, 16
        %v3192 = vrot.slane %v3190, 5
        %v3193 = vor.u32 %v3189, %v3192
        %v3194 = vrot.slane %v3193, 4
        %v3196 = vshll.u32 %v2950, 16
        %v3198 = vrot.slane %v3196, 5
        %v3199 = vsel %vm1365, %v3194, %v3198
        %v3200 = vshrl.u32 %v2950, 16
        %v3202 = vrot.slane %v3200, 4
        %v3203 = vor.u32 %v3202, %v3198
        %v3204 = vrot.slane %v3203, 4
        %v3206 = vshll.u32 %v2951, 16
        %v3208 = vrot.slane %v3206, 5
        %v3209 = vsel %vm1365, %v3204, %v3208
        %v3211 = vshrl.u32 %v2952, 16
        %v3213 = vrot.slane %v3211, 4
        %v3214 = vshll.u32 %v2952, 16
        %v3216 = vrot.slane %v3214, 5
        %v3217 = vor.u32 %v3213, %v3216
        %v3218 = vrot.slane %v3217, 4
        %v3220 = vshll.u32 %v2953, 16
        %v3222 = vrot.slane %v3220, 5
        %v3223 = vsel %vm1365, %v3218, %v3222
        %v3224 = vshrl.u32 %v2953, 16
        %v3226 = vrot.slane %v3224, 4
        %v3227 = vor.u32 %v3226, %v3222
        %v3228 = vrot.slane %v3227, 4
        %v3230 = vshll.u32 %v2954, 16
        %v3232 = vrot.slane %v3230, 5
        %v3233 = vsel %vm1365, %v3228, %v3232
        %v3235 = vshrl.u32 %v2955, 16
        %v3237 = vrot.slane %v3235, 4
        %v3238 = vshll.u32 %v2955, 16
        %v3240 = vrot.slane %v3238, 5
        %v3241 = vor.u32 %v3237, %v3240
        %v3242 = vrot.slane %v3241, 4
        %v3244 = vshll.u32 %v2956, 16
        %v3246 = vrot.slane %v3244, 5
        %v3247 = vsel %vm1365, %v3242, %v3246
        %v3248 = vshrl.u32 %v2956, 16
        %v3250 = vrot.slane %v3248, 4
        %v3251 = vor.u32 %v3250, %v3246
        %v3252 = vrot.slane %v3251, 4
        %v3254 = vshll.u32 %v2957, 16
        %v3256 = vrot.slane %v3254, 5
        %v3257 = vsel %vm1365, %v3252, %v3256
        %v3259 = vshrl.u32 %v2958, 16
        %v3261 = vrot.slane %v3259, 4
        %v3262 = vshll.u32 %v2958, 16
        %v3264 = vrot.slane %v3262, 5
        %v3265 = vor.u32 %v3261, %v3264
        %v3266 = vrot.slane %v3265, 4
        %v3268 = vshll.u32 %v2959, 16
        %v3270 = vrot.slane %v3268, 5
        %v3271 = vsel %vm1365, %v3266, %v3270
        %v3272 = vshrl.u32 %v2959, 16
        %v3274 = vrot.slane %v3272, 4
        %v3275 = vor.u32 %v3274, %v3270
        %v3276 = vrot.slane %v3275, 4
        %v3278 = vshll.u32 %v2960, 16
        %v3280 = vrot.slane %v3278, 5
        %v3281 = vsel %vm1365, %v3276, %v3280
        %v3283 = vshrl.u32 %v2961, 16
        %v3285 = vrot.slane %v3283, 4
        %v3286 = vshll.u32 %v2961, 16
        %v3288 = vrot.slane %v3286, 5
        %v3289 = vor.u32 %v3285, %v3288
        %v3290 = vrot.slane %v3289, 4
        %v3292 = vshll.u32 %v2962, 16
        %v3294 = vrot.slane %v3292, 5
        %v3295 = vsel %vm1365, %v3290, %v3294
        %v3296 = vshrl.u32 %v2962, 16
        %v3298 = vrot.slane %v3296, 4
        %v3299 = vor.u32 %v3298, %v3294
        %v3300 = vrot.slane %v3299, 4
        %v3302 = vshll.u32 %v2963, 16
        %v3304 = vrot.slane %v3302, 5
        %v3305 = vsel %vm1365, %v3300, %v3304
        %v3307 = vshrl.u32 %v2964, 16
        %v3309 = vrot.slane %v3307, 4
        %v3310 = vshll.u32 %v2964, 16
        %v3312 = vrot.slane %v3310, 5
        %v3313 = vor.u32 %v3309, %v3312
        %v3314 = vrot.slane %v3313, 4
        %v3316 = vshll.u32 %v2965, 16
        %v3318 = vrot.slane %v3316, 5
        %v3319 = vsel %vm1365, %v3314, %v3318
        %v3320 = vshrl.u32 %v2965, 16
        %v3322 = vrot.slane %v3320, 4
        %v3323 = vor.u32 %v3322, %v3318
        %v3324 = vrot.slane %v3323, 4
        %v3326 = vshll.u32 %v2966, 16
        %v3328 = vrot.slane %v3326, 5
        %v3329 = vsel %vm1365, %v3324, %v3328
        %v3331 = vshrl.u32 %v2967, 16
        %v3333 = vrot.slane %v3331, 4
        %v3334 = vshll.u32 %v2967, 16
        %v3336 = vrot.slane %v3334, 5
        %v3337 = vor.u32 %v3333, %v3336
        %v3338 = vrot.slane %v3337, 4
        %v3340 = vshll.u32 %v2968, 16
        %v3342 = vrot.slane %v3340, 5
        %v3343 = vsel %vm1365, %v3338, %v3342
        %v3344 = vshrl.u32 %v2968, 16
        %v3346 = vrot.slane %v3344, 4
        %v3347 = vor.u32 %v3346, %v3342
        %v3348 = vrot.slane %v3347, 4
        %v3350 = vshll.u32 %v2969, 16
        %v3352 = vrot.slane %v3350, 5
        %v3353 = vsel %vm1365, %v3348, %v3352
        %v3354 = vunpack.c.l.b16 %v2983
        %v3355 = vunpack.c.l.b16 %v2993
        %v3356 = vunpack.c.l.b16 %v3007
        %v3357 = vunpack.c.l.b16 %v3017
        %v3358 = vunpack.c.l.b16 %v3031
        %v3359 = vunpack.c.l.b16 %v3041
        %v3360 = vunpack.c.l.b16 %v3055
        %v3361 = vunpack.c.l.b16 %v3065
        %v3362 = vunpack.c.l.b16 %v3079
        %v3363 = vunpack.c.l.b16 %v3089
        %v3364 = vunpack.c.l.b16 %v3103
        %v3365 = vunpack.c.l.b16 %v3113
        %v3366 = vunpack.c.l.b16 %v3127
        %v3367 = vunpack.c.l.b16 %v3137
        %v3368 = vunpack.c.l.b16 %v3151
        %v3369 = vunpack.c.l.b16 %v3161
        %v3370 = vunpack.c.l.b16 %v3175
        %v3371 = vunpack.c.l.b16 %v3185
        %v3372 = vunpack.c.l.b16 %v3199
        %v3373 = vunpack.c.l.b16 %v3209
        %v3374 = vunpack.c.l.b16 %v3223
        %v3375 = vunpack.c.l.b16 %v3233
        %v3376 = vunpack.c.l.b16 %v3247
        %v3377 = vunpack.c.l.b16 %v3257
        %v3378 = vunpack.c.l.b16 %v3271
        %v3379 = vunpack.c.l.b16 %v3281
        %v3380 = vunpack.c.l.b16 %v3295
        %v3381 = vunpack.c.l.b16 %v3305
        %v3382 = vunpack.c.l.b16 %v3319
        %v3383 = vunpack.c.l.b16 %v3329
        %v3384 = vunpack.c.l.b16 %v3343
        %v3385 = vunpack.c.l.b16 %v3353
        %v3386 = vpack.c.b16 %v3355, %v3354
        %v3387 = vpack.c.b16 %v3357, %v3356
        %v3388 = vpack.c.b16 %v3359, %v3358
        %v3389 = vpack.c.b16 %v3361, %v3360
        %v3390 = vpack.c.b16 %v3363, %v3362
        %v3391 = vpack.c.b16 %v3365, %v3364
        %v3392 = vpack.c.b16 %v3367, %v3366
        %v3393 = vpack.c.b16 %v3369, %v3368
        %v3394 = vpack.c.b16 %v3371, %v3370
        %v3395 = vpack.c.b16 %v3373, %v3372
        %v3396 = vpack.c.b16 %v3375, %v3374
        %v3397 = vpack.c.b16 %v3377, %v3376
        %v3398 = vpack.c.b16 %v3379, %v3378
        %v3399 = vpack.c.b16 %v3381, %v3380
        %v3400 = vpack.c.b16 %v3383, %v3382
        %v3401 = vpack.c.b16 %v3385, %v3384
        %3418 = vst [vmem:[#allocation2 + $0x40] sm:$0xff] %v3386
        %3419 = vst [vmem:[#allocation2 + $0x88] sm:$0xff] %v3387
        %3420 = vst [vmem:[#allocation2 + $0xd0] sm:$0xff] %v3388
        %3421 = vst [vmem:[#allocation2 + $0x118] sm:$0xff] %v3389
        %3422 = vst [vmem:[#allocation2 + $0x160] sm:$0xff] %v3390
        %3423 = vst [vmem:[#allocation2 + $0x1a8] sm:$0xff] %v3391
        %3424 = vst [vmem:[#allocation2 + $0x1f0] sm:$0xff] %v3392
        %3425 = vst [vmem:[#allocation2 + $0x238] sm:$0xff] %v3393
        %3426 = vst [vmem:[#allocation2 + $0x280] sm:$0xff] %v3394
        %3427 = vst [vmem:[#allocation2 + $0x2c8] sm:$0xff] %v3395
        %3428 = vst [vmem:[#allocation2 + $0x310] sm:$0xff] %v3396
        %3429 = vst [vmem:[#allocation2 + $0x358] sm:$0xff] %v3397
        %3430 = vst [vmem:[#allocation2 + $0x3a0] sm:$0xff] %v3398
        %3431 = vst [vmem:[#allocation2 + $0x3e8] sm:$0xff] %v3399
        %3432 = vst [vmem:[#allocation2 + $0x430] sm:$0xff] %v3400
        %3433 = vst [vmem:[#allocation2 + $0x478] sm:$0xff] %v3401
        %v3434 = vld [vmem:[#allocation2] sm:$0xff]
        %v3435 = vld [vmem:[#allocation2 + $0x8] sm:$0xff]
        %v3436 = vld [vmem:[#allocation2 + $0x10] sm:$0xff]
        %v3437 = vld [vmem:[#allocation2 + $0x18] sm:$0xff]
        %v3438 = vld [vmem:[#allocation2 + $0x20] sm:$0xff]
        %v3439 = vld [vmem:[#allocation2 + $0x28] sm:$0xff]
        %v3440 = vld [vmem:[#allocation2 + $0x30] sm:$0xff]
        %v3441 = vld [vmem:[#allocation2 + $0x38] sm:$0xff]
        %v3442 = vld [vmem:[#allocation2 + $0x40] sm:$0xff]
        %v3443 = vld [vmem:[#allocation2 + $0x48] sm:$0xff]
        %v3444 = vld [vmem:[#allocation2 + $0x50] sm:$0xff]
        %v3445 = vld [vmem:[#allocation2 + $0x58] sm:$0xff]
        %v3446 = vld [vmem:[#allocation2 + $0x60] sm:$0xff]
        %v3447 = vld [vmem:[#allocation2 + $0x68] sm:$0xff]
        %v3448 = vld [vmem:[#allocation2 + $0x70] sm:$0xff]
        %v3449 = vld [vmem:[#allocation2 + $0x78] sm:$0xff]
        %v3450 = vld [vmem:[#allocation2 + $0x80] sm:$0xff]
        %v3451 = vld [vmem:[#allocation2 + $0x88] sm:$0xff]
        %v3452 = vld [vmem:[#allocation2 + $0x90] sm:$0xff]
        %v3453 = vld [vmem:[#allocation2 + $0x98] sm:$0xff]
        %v3454 = vld [vmem:[#allocation2 + $0xa0] sm:$0xff]
        %v3455 = vld [vmem:[#allocation2 + $0xa8] sm:$0xff]
        %v3456 = vld [vmem:[#allocation2 + $0xb0] sm:$0xff]
        %v3457 = vld [vmem:[#allocation2 + $0xb8] sm:$0xff]
        %v3458 = vld [vmem:[#allocation2 + $0xc0] sm:$0xff]
        %v3459 = vld [vmem:[#allocation2 + $0xc8] sm:$0xff]
        %v3460 = vld [vmem:[#allocation2 + $0xd0] sm:$0xff]
        %v3461 = vld [vmem:[#allocation2 + $0xd8] sm:$0xff]
        %v3462 = vld [vmem:[#allocation2 + $0xe0] sm:$0xff]
        %v3463 = vld [vmem:[#allocation2 + $0xe8] sm:$0xff]
        %v3464 = vld [vmem:[#allocation2 + $0xf0] sm:$0xff]
        %v3465 = vld [vmem:[#allocation2 + $0xf8] sm:$0xff]
        %v3466 = vld [vmem:[#allocation2 + $0x100] sm:$0xff]
        %v3467 = vld [vmem:[#allocation2 + $0x108] sm:$0xff]
        %v3468 = vld [vmem:[#allocation2 + $0x110] sm:$0xff]
        %v3469 = vld [vmem:[#allocation2 + $0x118] sm:$0xff]
        %v3470 = vld [vmem:[#allocation2 + $0x120] sm:$0xff]
        %v3471 = vld [vmem:[#allocation2 + $0x128] sm:$0xff]
        %v3472 = vld [vmem:[#allocation2 + $0x130] sm:$0xff]
        %v3473 = vld [vmem:[#allocation2 + $0x138] sm:$0xff]
        %v3474 = vld [vmem:[#allocation2 + $0x140] sm:$0xff]
        %v3475 = vld [vmem:[#allocation2 + $0x148] sm:$0xff]
        %v3476 = vld [vmem:[#allocation2 + $0x150] sm:$0xff]
        %v3477 = vld [vmem:[#allocation2 + $0x158] sm:$0xff]
        %v3478 = vld [vmem:[#allocation2 + $0x160] sm:$0xff]
        %v3479 = vld [vmem:[#allocation2 + $0x168] sm:$0xff]
        %v3480 = vld [vmem:[#allocation2 + $0x170] sm:$0xff]
        %v3481 = vld [vmem:[#allocation2 + $0x178] sm:$0xff]
        %v3482 = vld [vmem:[#allocation2 + $0x180] sm:$0xff]
        %v3483 = vld [vmem:[#allocation2 + $0x188] sm:$0xff]
        %v3484 = vld [vmem:[#allocation2 + $0x190] sm:$0xff]
        %v3485 = vld [vmem:[#allocation2 + $0x198] sm:$0xff]
        %v3486 = vld [vmem:[#allocation2 + $0x1a0] sm:$0xff]
        %v3487 = vld [vmem:[#allocation2 + $0x1a8] sm:$0xff]
        %v3488 = vld [vmem:[#allocation2 + $0x1b0] sm:$0xff]
        %v3489 = vld [vmem:[#allocation2 + $0x1b8] sm:$0xff]
        %v3490 = vld [vmem:[#allocation2 + $0x1c0] sm:$0xff]
        %v3491 = vld [vmem:[#allocation2 + $0x1c8] sm:$0xff]
        %v3492 = vld [vmem:[#allocation2 + $0x1d0] sm:$0xff]
        %v3493 = vld [vmem:[#allocation2 + $0x1d8] sm:$0xff]
        %v3494 = vld [vmem:[#allocation2 + $0x1e0] sm:$0xff]
        %v3495 = vld [vmem:[#allocation2 + $0x1e8] sm:$0xff]
        %v3496 = vld [vmem:[#allocation2 + $0x1f0] sm:$0xff]
        %v3497 = vld [vmem:[#allocation2 + $0x1f8] sm:$0xff]
        %v3498 = vld [vmem:[#allocation2 + $0x200] sm:$0xff]
        %v3499 = vld [vmem:[#allocation2 + $0x208] sm:$0xff]
        %v3500 = vld [vmem:[#allocation2 + $0x210] sm:$0xff]
        %v3501 = vld [vmem:[#allocation2 + $0x218] sm:$0xff]
        %v3502 = vld [vmem:[#allocation2 + $0x220] sm:$0xff]
        %v3503 = vld [vmem:[#allocation2 + $0x228] sm:$0xff]
        %v3504 = vld [vmem:[#allocation2 + $0x230] sm:$0xff]
        %v3505 = vld [vmem:[#allocation2 + $0x238] sm:$0xff]
        %v3506 = vld [vmem:[#allocation2 + $0x240] sm:$0xff]
        %v3507 = vld [vmem:[#allocation2 + $0x248] sm:$0xff]
        %v3508 = vld [vmem:[#allocation2 + $0x250] sm:$0xff]
        %v3509 = vld [vmem:[#allocation2 + $0x258] sm:$0xff]
        %v3510 = vld [vmem:[#allocation2 + $0x260] sm:$0xff]
        %v3511 = vld [vmem:[#allocation2 + $0x268] sm:$0xff]
        %v3512 = vld [vmem:[#allocation2 + $0x270] sm:$0xff]
        %v3513 = vld [vmem:[#allocation2 + $0x278] sm:$0xff]
        %v3514 = vld [vmem:[#allocation2 + $0x280] sm:$0xff]
        %v3515 = vld [vmem:[#allocation2 + $0x288] sm:$0xff]
        %v3516 = vld [vmem:[#allocation2 + $0x290] sm:$0xff]
        %v3517 = vld [vmem:[#allocation2 + $0x298] sm:$0xff]
        %v3518 = vld [vmem:[#allocation2 + $0x2a0] sm:$0xff]
        %v3519 = vld [vmem:[#allocation2 + $0x2a8] sm:$0xff]
        %v3520 = vld [vmem:[#allocation2 + $0x2b0] sm:$0xff]
        %v3521 = vld [vmem:[#allocation2 + $0x2b8] sm:$0xff]
        %v3522 = vld [vmem:[#allocation2 + $0x2c0] sm:$0xff]
        %v3523 = vld [vmem:[#allocation2 + $0x2c8] sm:$0xff]
        %v3524 = vld [vmem:[#allocation2 + $0x2d0] sm:$0xff]
        %v3525 = vld [vmem:[#allocation2 + $0x2d8] sm:$0xff]
        %v3526 = vld [vmem:[#allocation2 + $0x2e0] sm:$0xff]
        %v3527 = vld [vmem:[#allocation2 + $0x2e8] sm:$0xff]
        %v3528 = vld [vmem:[#allocation2 + $0x2f0] sm:$0xff]
        %v3529 = vld [vmem:[#allocation2 + $0x2f8] sm:$0xff]
        %v3530 = vld [vmem:[#allocation2 + $0x300] sm:$0xff]
        %v3531 = vld [vmem:[#allocation2 + $0x308] sm:$0xff]
        %v3532 = vld [vmem:[#allocation2 + $0x310] sm:$0xff]
        %v3533 = vld [vmem:[#allocation2 + $0x318] sm:$0xff]
        %v3534 = vld [vmem:[#allocation2 + $0x320] sm:$0xff]
        %v3535 = vld [vmem:[#allocation2 + $0x328] sm:$0xff]
        %v3536 = vld [vmem:[#allocation2 + $0x330] sm:$0xff]
        %v3537 = vld [vmem:[#allocation2 + $0x338] sm:$0xff]
        %v3538 = vld [vmem:[#allocation2 + $0x340] sm:$0xff]
        %v3539 = vld [vmem:[#allocation2 + $0x348] sm:$0xff]
        %v3540 = vld [vmem:[#allocation2 + $0x350] sm:$0xff]
        %v3541 = vld [vmem:[#allocation2 + $0x358] sm:$0xff]
        %v3542 = vld [vmem:[#allocation2 + $0x360] sm:$0xff]
        %v3543 = vld [vmem:[#allocation2 + $0x368] sm:$0xff]
        %v3544 = vld [vmem:[#allocation2 + $0x370] sm:$0xff]
        %v3545 = vld [vmem:[#allocation2 + $0x378] sm:$0xff]
        %v3546 = vld [vmem:[#allocation2 + $0x380] sm:$0xff]
        %v3547 = vld [vmem:[#allocation2 + $0x388] sm:$0xff]
        %v3548 = vld [vmem:[#allocation2 + $0x390] sm:$0xff]
        %v3549 = vld [vmem:[#allocation2 + $0x398] sm:$0xff]
        %v3550 = vld [vmem:[#allocation2 + $0x3a0] sm:$0xff]
        %v3551 = vld [vmem:[#allocation2 + $0x3a8] sm:$0xff]
        %v3552 = vld [vmem:[#allocation2 + $0x3b0] sm:$0xff]
        %v3553 = vld [vmem:[#allocation2 + $0x3b8] sm:$0xff]
        %v3554 = vld [vmem:[#allocation2 + $0x3c0] sm:$0xff]
        %v3555 = vld [vmem:[#allocation2 + $0x3c8] sm:$0xff]
        %v3556 = vld [vmem:[#allocation2 + $0x3d0] sm:$0xff]
        %v3557 = vld [vmem:[#allocation2 + $0x3d8] sm:$0xff]
        %v3558 = vld [vmem:[#allocation2 + $0x3e0] sm:$0xff]
        %v3559 = vld [vmem:[#allocation2 + $0x3e8] sm:$0xff]
        %v3560 = vld [vmem:[#allocation2 + $0x3f0] sm:$0xff]
        %v3561 = vld [vmem:[#allocation2 + $0x3f8] sm:$0xff]
        %v3562 = vld [vmem:[#allocation2 + $0x400] sm:$0xff]
        %v3563 = vld [vmem:[#allocation2 + $0x408] sm:$0xff]
        %v3564 = vld [vmem:[#allocation2 + $0x410] sm:$0xff]
        %v3565 = vld [vmem:[#allocation2 + $0x418] sm:$0xff]
        %v3566 = vld [vmem:[#allocation2 + $0x420] sm:$0xff]
        %v3567 = vld [vmem:[#allocation2 + $0x428] sm:$0xff]
        %v3568 = vld [vmem:[#allocation2 + $0x430] sm:$0xff]
        %v3569 = vld [vmem:[#allocation2 + $0x438] sm:$0xff]
        %v3570 = vld [vmem:[#allocation2 + $0x440] sm:$0xff]
        %v3571 = vld [vmem:[#allocation2 + $0x448] sm:$0xff]
        %v3572 = vld [vmem:[#allocation2 + $0x450] sm:$0xff]
        %v3573 = vld [vmem:[#allocation2 + $0x458] sm:$0xff]
        %v3574 = vld [vmem:[#allocation2 + $0x460] sm:$0xff]
        %v3575 = vld [vmem:[#allocation2 + $0x468] sm:$0xff]
        %v3576 = vld [vmem:[#allocation2 + $0x470] sm:$0xff]
        %v3577 = vld [vmem:[#allocation2 + $0x478] sm:$0xff]
        %v3578 = vld [vmem:[%s1] sm:$0xf]
        %v3579 = vld [vmem:[%s1 + $0x4] sm:$0xf]
        %v3580 = vld [vmem:[%s1 + $0x8] sm:$0xf]
        %v3581 = vld [vmem:[%s1 + $0xc] sm:$0xf]
        %v3582 = vld [vmem:[%s1 + $0x10] sm:$0xf]
        %v3583 = vld [vmem:[%s1 + $0x14] sm:$0xf]
        %v3584 = vld [vmem:[%s1 + $0x18] sm:$0xf]
        %v3585 = vld [vmem:[%s1 + $0x1c] sm:$0xf]
        %v3586 = vld [vmem:[%s1 + $0x20] sm:$0xf]
        %v3587 = vld [vmem:[%s1 + $0x24] sm:$0xf]
        %v3588 = vld [vmem:[%s1 + $0x28] sm:$0xf]
        %v3589 = vld [vmem:[%s1 + $0x2c] sm:$0xf]
        %v3590 = vld [vmem:[%s1 + $0x30] sm:$0xf]
        %v3591 = vld [vmem:[%s1 + $0x34] sm:$0xf]
        %v3592 = vld [vmem:[%s1 + $0x38] sm:$0xf]
        %v3593 = vld [vmem:[%s1 + $0x3c] sm:$0xf]
        %v3594 = vld [vmem:[%s1 + $0x40] sm:$0xf]
        %v3595 = vld [vmem:[%s1 + $0x44] sm:$0xf]
        %v3596 = vld [vmem:[%s1 + $0x48] sm:$0xf]
        %v3597 = vld [vmem:[%s1 + $0x4c] sm:$0xf]
        %v3598 = vld [vmem:[%s1 + $0x50] sm:$0xf]
        %v3599 = vld [vmem:[%s1 + $0x54] sm:$0xf]
        %v3600 = vld [vmem:[%s1 + $0x58] sm:$0xf]
        %v3601 = vld [vmem:[%s1 + $0x5c] sm:$0xf]
        %v3602 = vld [vmem:[%s1 + $0x60] sm:$0xf]
        %v3603 = vld [vmem:[%s1 + $0x64] sm:$0xf]
        %v3604 = vld [vmem:[%s1 + $0x68] sm:$0xf]
        %v3605 = vld [vmem:[%s1 + $0x6c] sm:$0xf]
        %v3606 = vld [vmem:[%s1 + $0x70] sm:$0xf]
        %v3607 = vld [vmem:[%s1 + $0x74] sm:$0xf]
        %v3608 = vld [vmem:[%s1 + $0x78] sm:$0xf]
        %v3609 = vld [vmem:[%s1 + $0x7c] sm:$0xf]
        %v3610 = vld [vmem:[%s1 + $0x80] sm:$0xf]
        %v3611 = vld [vmem:[%s1 + $0x84] sm:$0xf]
        %v3612 = vld [vmem:[%s1 + $0x88] sm:$0xf]
        %v3613 = vld [vmem:[%s1 + $0x8c] sm:$0xf]
        %v3614 = vld [vmem:[%s1 + $0x90] sm:$0xf]
        %v3615 = vld [vmem:[%s1 + $0x94] sm:$0xf]
        %v3616 = vld [vmem:[%s1 + $0x98] sm:$0xf]
        %v3617 = vld [vmem:[%s1 + $0x9c] sm:$0xf]
        %v3618 = vld [vmem:[%s1 + $0xa0] sm:$0xf]
        %v3619 = vld [vmem:[%s1 + $0xa4] sm:$0xf]
        %v3620 = vld [vmem:[%s1 + $0xa8] sm:$0xf]
        %v3621 = vld [vmem:[%s1 + $0xac] sm:$0xf]
        %v3622 = vld [vmem:[%s1 + $0xb0] sm:$0xf]
        %v3623 = vld [vmem:[%s1 + $0xb4] sm:$0xf]
        %v3624 = vld [vmem:[%s1 + $0xb8] sm:$0xf]
        %v3625 = vld [vmem:[%s1 + $0xbc] sm:$0xf]
        %v3626 = vld [vmem:[%s1 + $0xc0] sm:$0xf]
        %v3627 = vld [vmem:[%s1 + $0xc4] sm:$0xf]
        %v3628 = vld [vmem:[%s1 + $0xc8] sm:$0xf]
        %v3629 = vld [vmem:[%s1 + $0xcc] sm:$0xf]
        %v3630 = vld [vmem:[%s1 + $0xd0] sm:$0xf]
        %v3631 = vld [vmem:[%s1 + $0xd4] sm:$0xf]
        %v3632 = vld [vmem:[%s1 + $0xd8] sm:$0xf]
        %v3633 = vld [vmem:[%s1 + $0xdc] sm:$0xf]
        %v3634 = vld [vmem:[%s1 + $0xe0] sm:$0xf]
        %v3635 = vld [vmem:[%s1 + $0xe4] sm:$0xf]
        %v3636 = vld [vmem:[%s1 + $0xe8] sm:$0xf]
        %v3637 = vld [vmem:[%s1 + $0xec] sm:$0xf]
        %v3638 = vld [vmem:[%s1 + $0xf0] sm:$0xf]
        %v3639 = vld [vmem:[%s1 + $0xf4] sm:$0xf]
        %v3640 = vld [vmem:[%s1 + $0xf8] sm:$0xf]
        %v3641 = vld [vmem:[%s1 + $0xfc] sm:$0xf]
        %v3642 = vld [vmem:[%s1 + $0x100] sm:$0xf]
        %v3643 = vld [vmem:[%s1 + $0x104] sm:$0xf]
        %v3644 = vld [vmem:[%s1 + $0x108] sm:$0xf]
        %v3645 = vld [vmem:[%s1 + $0x10c] sm:$0xf]
        %v3646 = vld [vmem:[%s1 + $0x110] sm:$0xf]
        %v3647 = vld [vmem:[%s1 + $0x114] sm:$0xf]
        %v3648 = vld [vmem:[%s1 + $0x118] sm:$0xf]
        %v3649 = vld [vmem:[%s1 + $0x11c] sm:$0xf]
        %v3650 = vld [vmem:[%s1 + $0x120] sm:$0xf]
        %v3651 = vld [vmem:[%s1 + $0x124] sm:$0xf]
        %v3652 = vld [vmem:[%s1 + $0x128] sm:$0xf]
        %v3653 = vld [vmem:[%s1 + $0x12c] sm:$0xf]
        %v3654 = vld [vmem:[%s1 + $0x130] sm:$0xf]
        %v3655 = vld [vmem:[%s1 + $0x134] sm:$0xf]
        %v3656 = vld [vmem:[%s1 + $0x138] sm:$0xf]
        %v3657 = vld [vmem:[%s1 + $0x13c] sm:$0xf]
        %v3658 = vld [vmem:[%s1 + $0x140] sm:$0xf]
        %v3659 = vld [vmem:[%s1 + $0x144] sm:$0xf]
        %v3660 = vld [vmem:[%s1 + $0x148] sm:$0xf]
        %v3661 = vld [vmem:[%s1 + $0x14c] sm:$0xf]
        %v3662 = vld [vmem:[%s1 + $0x150] sm:$0xf]
        %v3663 = vld [vmem:[%s1 + $0x154] sm:$0xf]
        %v3664 = vld [vmem:[%s1 + $0x158] sm:$0xf]
        %v3665 = vld [vmem:[%s1 + $0x15c] sm:$0xf]
        %v3666 = vld [vmem:[%s1 + $0x160] sm:$0xf]
        %v3667 = vld [vmem:[%s1 + $0x164] sm:$0xf]
        %v3668 = vld [vmem:[%s1 + $0x168] sm:$0xf]
        %v3669 = vld [vmem:[%s1 + $0x16c] sm:$0xf]
        %v3670 = vld [vmem:[%s1 + $0x170] sm:$0xf]
        %v3671 = vld [vmem:[%s1 + $0x174] sm:$0xf]
        %v3672 = vld [vmem:[%s1 + $0x178] sm:$0xf]
        %v3673 = vld [vmem:[%s1 + $0x17c] sm:$0xf]
        %v3674 = vld [vmem:[%s1 + $0x180] sm:$0xf]
        %v3675 = vld [vmem:[%s1 + $0x184] sm:$0xf]
        %v3676 = vld [vmem:[%s1 + $0x188] sm:$0xf]
        %v3677 = vld [vmem:[%s1 + $0x18c] sm:$0xf]
        %v3678 = vld [vmem:[%s1 + $0x190] sm:$0xf]
        %v3679 = vld [vmem:[%s1 + $0x194] sm:$0xf]
        %v3680 = vld [vmem:[%s1 + $0x198] sm:$0xf]
        %v3681 = vld [vmem:[%s1 + $0x19c] sm:$0xf]
        %v3682 = vld [vmem:[%s1 + $0x1a0] sm:$0xf]
        %v3683 = vld [vmem:[%s1 + $0x1a4] sm:$0xf]
        %v3684 = vld [vmem:[%s1 + $0x1a8] sm:$0xf]
        %v3685 = vld [vmem:[%s1 + $0x1ac] sm:$0xf]
        %v3686 = vld [vmem:[%s1 + $0x1b0] sm:$0xf]
        %v3687 = vld [vmem:[%s1 + $0x1b4] sm:$0xf]
        %v3688 = vld [vmem:[%s1 + $0x1b8] sm:$0xf]
        %v3689 = vld [vmem:[%s1 + $0x1bc] sm:$0xf]
        %v3690 = vld [vmem:[%s1 + $0x1c0] sm:$0xf]
        %v3691 = vld [vmem:[%s1 + $0x1c4] sm:$0xf]
        %v3692 = vld [vmem:[%s1 + $0x1c8] sm:$0xf]
        %v3693 = vld [vmem:[%s1 + $0x1cc] sm:$0xf]
        %v3694 = vld [vmem:[%s1 + $0x1d0] sm:$0xf]
        %v3695 = vld [vmem:[%s1 + $0x1d4] sm:$0xf]
        %v3696 = vld [vmem:[%s1 + $0x1d8] sm:$0xf]
        %v3697 = vld [vmem:[%s1 + $0x1dc] sm:$0xf]
        %v3698 = vld [vmem:[%s1 + $0x1e0] sm:$0xf]
        %v3699 = vld [vmem:[%s1 + $0x1e4] sm:$0xf]
        %v3700 = vld [vmem:[%s1 + $0x1e8] sm:$0xf]
        %v3701 = vld [vmem:[%s1 + $0x1ec] sm:$0xf]
        %v3702 = vld [vmem:[%s1 + $0x1f0] sm:$0xf]
        %v3703 = vld [vmem:[%s1 + $0x1f4] sm:$0xf]
        %v3704 = vld [vmem:[%s1 + $0x1f8] sm:$0xf]
        %v3705 = vld [vmem:[%s1 + $0x1fc] sm:$0xf]
        %v3706 = vld [vmem:[%s1 + $0x200] sm:$0xf]
        %v3707 = vld [vmem:[%s1 + $0x204] sm:$0xf]
        %v3708 = vld [vmem:[%s1 + $0x208] sm:$0xf]
        %v3709 = vld [vmem:[%s1 + $0x20c] sm:$0xf]
        %v3710 = vld [vmem:[%s1 + $0x210] sm:$0xf]
        %v3711 = vld [vmem:[%s1 + $0x214] sm:$0xf]
        %v3712 = vld [vmem:[%s1 + $0x218] sm:$0xf]
        %v3713 = vld [vmem:[%s1 + $0x21c] sm:$0xf]
        %v3714 = vld [vmem:[%s1 + $0x220] sm:$0xf]
        %v3715 = vld [vmem:[%s1 + $0x224] sm:$0xf]
        %v3716 = vld [vmem:[%s1 + $0x228] sm:$0xf]
        %v3717 = vld [vmem:[%s1 + $0x22c] sm:$0xf]
        %v3718 = vld [vmem:[%s1 + $0x230] sm:$0xf]
        %v3719 = vld [vmem:[%s1 + $0x234] sm:$0xf]
        %v3720 = vld [vmem:[%s1 + $0x238] sm:$0xf]
        %v3721 = vld [vmem:[%s1 + $0x23c] sm:$0xf]
        %v3722 = vld [vmem:[%s2] sm:$0x1]
        %v3724 = vlaneseq
        %v3725 = vshrl.u32 %v3724, 7
        %v3726 = vsub.s32 0, %v3725
        %v3727 = vrot.slane %v3722, %v3726
        %v3873 = vunpack.c.l.b16 %v3578
        %v3874 = vunpack.c.l.b16 %v3579
        %v3875 = vunpack.c.l.b16 %v3580
        %v3876 = vunpack.c.l.b16 %v3581
        %v3877 = vunpack.c.l.b16 %v3582
        %v3878 = vunpack.c.l.b16 %v3583
        %v3879 = vunpack.c.l.b16 %v3584
        %v3880 = vunpack.c.l.b16 %v3585
        %v3881 = vunpack.c.l.b16 %v3586
        %v3882 = vunpack.c.l.b16 %v3587
        %v3883 = vunpack.c.l.b16 %v3588
        %v3884 = vunpack.c.l.b16 %v3589
        %v3885 = vunpack.c.l.b16 %v3590
        %v3886 = vunpack.c.l.b16 %v3591
        %v3887 = vunpack.c.l.b16 %v3592
        %v3888 = vunpack.c.l.b16 %v3593
        %v3889 = vunpack.c.l.b16 %v3594
        %v3890 = vunpack.c.l.b16 %v3595
        %v3891 = vunpack.c.l.b16 %v3596
        %v3892 = vunpack.c.l.b16 %v3597
        %v3893 = vunpack.c.l.b16 %v3598
        %v3894 = vunpack.c.l.b16 %v3599
        %v3895 = vunpack.c.l.b16 %v3600
        %v3896 = vunpack.c.l.b16 %v3601
        %v3897 = vunpack.c.l.b16 %v3602
        %v3898 = vunpack.c.l.b16 %v3603
        %v3899 = vunpack.c.l.b16 %v3604
        %v3900 = vunpack.c.l.b16 %v3605
        %v3901 = vunpack.c.l.b16 %v3606
        %v3902 = vunpack.c.l.b16 %v3607
        %v3903 = vunpack.c.l.b16 %v3608
        %v3904 = vunpack.c.l.b16 %v3609
        %v3905 = vunpack.c.l.b16 %v3610
        %v3906 = vunpack.c.l.b16 %v3611
        %v3907 = vunpack.c.l.b16 %v3612
        %v3908 = vunpack.c.l.b16 %v3613
        %v3909 = vunpack.c.l.b16 %v3614
        %v3910 = vunpack.c.l.b16 %v3615
        %v3911 = vunpack.c.l.b16 %v3616
        %v3912 = vunpack.c.l.b16 %v3617
        %v3913 = vunpack.c.l.b16 %v3618
        %v3914 = vunpack.c.l.b16 %v3619
        %v3915 = vunpack.c.l.b16 %v3620
        %v3916 = vunpack.c.l.b16 %v3621
        %v3917 = vunpack.c.l.b16 %v3622
        %v3918 = vunpack.c.l.b16 %v3623
        %v3919 = vunpack.c.l.b16 %v3624
        %v3920 = vunpack.c.l.b16 %v3625
        %v3921 = vunpack.c.l.b16 %v3626
        %v3922 = vunpack.c.l.b16 %v3627
        %v3923 = vunpack.c.l.b16 %v3628
        %v3924 = vunpack.c.l.b16 %v3629
        %v3925 = vunpack.c.l.b16 %v3630
        %v3926 = vunpack.c.l.b16 %v3631
        %v3927 = vunpack.c.l.b16 %v3632
        %v3928 = vunpack.c.l.b16 %v3633
        %v3929 = vunpack.c.l.b16 %v3634
        %v3930 = vunpack.c.l.b16 %v3635
        %v3931 = vunpack.c.l.b16 %v3636
        %v3932 = vunpack.c.l.b16 %v3637
        %v3933 = vunpack.c.l.b16 %v3638
        %v3934 = vunpack.c.l.b16 %v3639
        %v3935 = vunpack.c.l.b16 %v3640
        %v3936 = vunpack.c.l.b16 %v3641
        %v3937 = vunpack.c.l.b16 %v3642
        %v3938 = vunpack.c.l.b16 %v3643
        %v3939 = vunpack.c.l.b16 %v3644
        %v3940 = vunpack.c.l.b16 %v3645
        %v3941 = vunpack.c.l.b16 %v3646
        %v3942 = vunpack.c.l.b16 %v3647
        %v3943 = vunpack.c.l.b16 %v3648
        %v3944 = vunpack.c.l.b16 %v3649
        %v3945 = vunpack.c.l.b16 %v3650
        %v3946 = vunpack.c.l.b16 %v3651
        %v3947 = vunpack.c.l.b16 %v3652
        %v3948 = vunpack.c.l.b16 %v3653
        %v3949 = vunpack.c.l.b16 %v3654
        %v3950 = vunpack.c.l.b16 %v3655
        %v3951 = vunpack.c.l.b16 %v3656
        %v3952 = vunpack.c.l.b16 %v3657
        %v3953 = vunpack.c.l.b16 %v3658
        %v3954 = vunpack.c.l.b16 %v3659
        %v3955 = vunpack.c.l.b16 %v3660
        %v3956 = vunpack.c.l.b16 %v3661
        %v3957 = vunpack.c.l.b16 %v3662
        %v3958 = vunpack.c.l.b16 %v3663
        %v3959 = vunpack.c.l.b16 %v3664
        %v3960 = vunpack.c.l.b16 %v3665
        %v3961 = vunpack.c.l.b16 %v3666
        %v3962 = vunpack.c.l.b16 %v3667
        %v3963 = vunpack.c.l.b16 %v3668
        %v3964 = vunpack.c.l.b16 %v3669
        %v3965 = vunpack.c.l.b16 %v3670
        %v3966 = vunpack.c.l.b16 %v3671
        %v3967 = vunpack.c.l.b16 %v3672
        %v3968 = vunpack.c.l.b16 %v3673
        %v3969 = vunpack.c.l.b16 %v3674
        %v3970 = vunpack.c.l.b16 %v3675
        %v3971 = vunpack.c.l.b16 %v3676
        %v3972 = vunpack.c.l.b16 %v3677
        %v3973 = vunpack.c.l.b16 %v3678
        %v3974 = vunpack.c.l.b16 %v3679
        %v3975 = vunpack.c.l.b16 %v3680
        %v3976 = vunpack.c.l.b16 %v3681
        %v3977 = vunpack.c.l.b16 %v3682
        %v3978 = vunpack.c.l.b16 %v3683
        %v3979 = vunpack.c.l.b16 %v3684
        %v3980 = vunpack.c.l.b16 %v3685
        %v3981 = vunpack.c.l.b16 %v3686
        %v3982 = vunpack.c.l.b16 %v3687
        %v3983 = vunpack.c.l.b16 %v3688
        %v3984 = vunpack.c.l.b16 %v3689
        %v3985 = vunpack.c.l.b16 %v3690
        %v3986 = vunpack.c.l.b16 %v3691
        %v3987 = vunpack.c.l.b16 %v3692
        %v3988 = vunpack.c.l.b16 %v3693
        %v3989 = vunpack.c.l.b16 %v3694
        %v3990 = vunpack.c.l.b16 %v3695
        %v3991 = vunpack.c.l.b16 %v3696
        %v3992 = vunpack.c.l.b16 %v3697
        %v3993 = vunpack.c.l.b16 %v3698
        %v3994 = vunpack.c.l.b16 %v3699
        %v3995 = vunpack.c.l.b16 %v3700
        %v3996 = vunpack.c.l.b16 %v3701
        %v3997 = vunpack.c.l.b16 %v3702
        %v3998 = vunpack.c.l.b16 %v3703
        %v3999 = vunpack.c.l.b16 %v3704
        %v4000 = vunpack.c.l.b16 %v3705
        %v4001 = vunpack.c.l.b16 %v3706
        %v4002 = vunpack.c.l.b16 %v3707
        %v4003 = vunpack.c.l.b16 %v3708
        %v4004 = vunpack.c.l.b16 %v3709
        %v4005 = vunpack.c.l.b16 %v3710
        %v4006 = vunpack.c.l.b16 %v3711
        %v4007 = vunpack.c.l.b16 %v3712
        %v4008 = vunpack.c.l.b16 %v3713
        %v4009 = vunpack.c.l.b16 %v3714
        %v4010 = vunpack.c.l.b16 %v3715
        %v4011 = vunpack.c.l.b16 %v3716
        %v4012 = vunpack.c.l.b16 %v3717
        %v4013 = vunpack.c.l.b16 %v3718
        %v4014 = vunpack.c.l.b16 %v3719
        %v4015 = vunpack.c.l.b16 %v3720
        %v4016 = vunpack.c.l.b16 %v3721
        %v4017 = vpack.c.b16 %v3874, %v3873
        %v4018 = vpack.c.b16 %v3876, %v3875
        %v4019 = vpack.c.b16 %v3878, %v3877
        %v4020 = vpack.c.b16 %v3880, %v3879
        %v4021 = vpack.c.b16 %v3882, %v3881
        %v4022 = vpack.c.b16 %v3884, %v3883
        %v4023 = vpack.c.b16 %v3886, %v3885
        %v4024 = vpack.c.b16 %v3888, %v3887
        %v4025 = vpack.c.b16 %v3890, %v3889
        %v4026 = vpack.c.b16 %v3892, %v3891
        %v4027 = vpack.c.b16 %v3894, %v3893
        %v4028 = vpack.c.b16 %v3896, %v3895
        %v4029 = vpack.c.b16 %v3898, %v3897
        %v4030 = vpack.c.b16 %v3900, %v3899
        %v4031 = vpack.c.b16 %v3902, %v3901
        %v4032 = vpack.c.b16 %v3904, %v3903
        %v4033 = vpack.c.b16 %v3906, %v3905
        %v4034 = vpack.c.b16 %v3908, %v3907
        %v4035 = vpack.c.b16 %v3910, %v3909
        %v4036 = vpack.c.b16 %v3912, %v3911
        %v4037 = vpack.c.b16 %v3914, %v3913
        %v4038 = vpack.c.b16 %v3916, %v3915
        %v4039 = vpack.c.b16 %v3918, %v3917
        %v4040 = vpack.c.b16 %v3920, %v3919
        %v4041 = vpack.c.b16 %v3922, %v3921
        %v4042 = vpack.c.b16 %v3924, %v3923
        %v4043 = vpack.c.b16 %v3926, %v3925
        %v4044 = vpack.c.b16 %v3928, %v3927
        %v4045 = vpack.c.b16 %v3930, %v3929
        %v4046 = vpack.c.b16 %v3932, %v3931
        %v4047 = vpack.c.b16 %v3934, %v3933
        %v4048 = vpack.c.b16 %v3936, %v3935
        %v4049 = vpack.c.b16 %v3938, %v3937
        %v4050 = vpack.c.b16 %v3940, %v3939
        %v4051 = vpack.c.b16 %v3942, %v3941
        %v4052 = vpack.c.b16 %v3944, %v3943
        %v4053 = vpack.c.b16 %v3946, %v3945
        %v4054 = vpack.c.b16 %v3948, %v3947
        %v4055 = vpack.c.b16 %v3950, %v3949
        %v4056 = vpack.c.b16 %v3952, %v3951
        %v4057 = vpack.c.b16 %v3954, %v3953
        %v4058 = vpack.c.b16 %v3956, %v3955
        %v4059 = vpack.c.b16 %v3958, %v3957
        %v4060 = vpack.c.b16 %v3960, %v3959
        %v4061 = vpack.c.b16 %v3962, %v3961
        %v4062 = vpack.c.b16 %v3964, %v3963
        %v4063 = vpack.c.b16 %v3966, %v3965
        %v4064 = vpack.c.b16 %v3968, %v3967
        %v4065 = vpack.c.b16 %v3970, %v3969
        %v4066 = vpack.c.b16 %v3972, %v3971
        %v4067 = vpack.c.b16 %v3974, %v3973
        %v4068 = vpack.c.b16 %v3976, %v3975
        %v4069 = vpack.c.b16 %v3978, %v3977
        %v4070 = vpack.c.b16 %v3980, %v3979
        %v4071 = vpack.c.b16 %v3982, %v3981
        %v4072 = vpack.c.b16 %v3984, %v3983
        %v4073 = vpack.c.b16 %v3986, %v3985
        %v4074 = vpack.c.b16 %v3988, %v3987
        %v4075 = vpack.c.b16 %v3990, %v3989
        %v4076 = vpack.c.b16 %v3992, %v3991
        %v4077 = vpack.c.b16 %v3994, %v3993
        %v4078 = vpack.c.b16 %v3996, %v3995
        %v4079 = vpack.c.b16 %v3998, %v3997
        %v4080 = vpack.c.b16 %v4000, %v3999
        %v4081 = vpack.c.b16 %v4002, %v4001
        %v4082 = vpack.c.b16 %v4004, %v4003
        %v4083 = vpack.c.b16 %v4006, %v4005
        %v4084 = vpack.c.b16 %v4008, %v4007
        %v4085 = vpack.c.b16 %v4010, %v4009
        %v4086 = vpack.c.b16 %v4012, %v4011
        %v4087 = vpack.c.b16 %v4014, %v4013
        %v4088 = vpack.c.b16 %v4016, %v4015
        %4161 = vmatprep.subr.bf16.mxu0 0
        %4162 = vmatpush1.bf16.msra.mxu0 %v4017
        %4163 = vmatprep.subr.bf16.mxu0 0
        %4164 = vmatpush1.bf16.msra.mxu0 %v4018
        %4165 = vmatprep.subr.bf16.mxu0 0
        %4166 = vmatpush1.bf16.msra.mxu0 %v4019
        %4167 = vmatprep.subr.bf16.mxu0 0
        %4168 = vmatpush1.bf16.msra.mxu0 %v4020
        %4169 = vmatprep.subr.bf16.mxu0 0
        %4170 = vmatpush1.bf16.msra.mxu0 %v4021
        %4171 = vmatprep.subr.bf16.mxu0 0
        %4172 = vmatpush1.bf16.msra.mxu0 %v4022
        %4173 = vmatprep.subr.bf16.mxu0 0
        %4174 = vmatpush1.bf16.msra.mxu0 %v4023
        %4175 = vmatprep.subr.bf16.mxu0 0
        %4176 = vmatpush1.bf16.msra.mxu0 %v4024
        %4177 = vmatprep.subr.bf16.mxu0 0
        %4178 = vmatpush1.bf16.msra.mxu0 %v4025
        %4179 = vmatprep.subr.bf16.mxu0 0
        %4180 = vmatpush1.bf16.msra.mxu0 %v4026
        %4181 = vmatprep.subr.bf16.mxu0 0
        %4182 = vmatpush1.bf16.msra.mxu0 %v4027
        %4183 = vmatprep.subr.bf16.mxu0 0
        %4184 = vmatpush1.bf16.msra.mxu0 %v4028
        %4185 = vmatprep.subr.bf16.mxu0 0
        %4186 = vmatpush1.bf16.msra.mxu0 %v4029
        %4187 = vmatprep.subr.bf16.mxu0 0
        %4188 = vmatpush1.bf16.msra.mxu0 %v4030
        %4189 = vmatprep.subr.bf16.mxu0 0
        %4190 = vmatpush1.bf16.msra.mxu0 %v4031
        %4191 = vmatprep.subr.bf16.mxu0 0
        %4192 = vmatpush1.bf16.msra.mxu0 %v4032
        %4193 = vmatprep.mubr.bf16.mxu0 %v3435
        %4194 = vmatmul.mubr.bf16.gmra.mrb[0].mxu0 %v3434
        %v4195 = vpop.f32.mrb[0].mxu0
        %v4196 = vadd.f32 %v3727, %v4195
        %v4197 = vpop.f32.mrb[0].mxu0
        %v4198 = vpop.f32.mrb[0].mxu0
        %v4199 = vadd.f32 %v3727, %v4198
        %v4200 = vpop.f32.mrb[0].mxu0
        %4201 = vmatprep.mubr.bf16.mxu0 %v3444
        %4202 = vmatmul.mubr.bf16.gmra.mrb[0].mxu0 %v3443
        %v4203 = vpop.f32.mrb[0].mxu0
        %v4204 = vadd.f32 %v3727, %v4203
        %v4205 = vpop.f32.mrb[0].mxu0
        %v4206 = vpop.f32.mrb[0].mxu0
        %v4207 = vadd.f32 %v3727, %v4206
        %v4208 = vpop.f32.mrb[0].mxu0
        %4209 = vmatprep.mubr.bf16.mxu0 %v3453
        %4210 = vmatmul.mubr.bf16.gmra.mrb[0].mxu0 %v3452
        %v4211 = vpop.f32.mrb[0].mxu0
        %v4212 = vadd.f32 %v3727, %v4211
        %v4213 = vpop.f32.mrb[0].mxu0
        %v4214 = vpop.f32.mrb[0].mxu0
        %v4215 = vadd.f32 %v3727, %v4214
        %v4216 = vpop.f32.mrb[0].mxu0
        %4217 = vmatprep.mubr.bf16.mxu0 %v3462
        %4218 = vmatmul.mubr.bf16.gmra.mrb[0].mxu0 %v3461
        %v4219 = vpop.f32.mrb[0].mxu0
        %v4220 = vadd.f32 %v3727, %v4219
        %v4221 = vpop.f32.mrb[0].mxu0
        %v4222 = vpop.f32.mrb[0].mxu0
        %v4223 = vadd.f32 %v3727, %v4222
        %v4224 = vpop.f32.mrb[0].mxu0
        %4225 = vmatprep.mubr.bf16.mxu0 %v3471
        %4226 = vmatmul.mubr.bf16.gmra.mrb[0].mxu0 %v3470
        %v4227 = vpop.f32.mrb[0].mxu0
        %v4228 = vadd.f32 %v3727, %v4227
        %v4229 = vpop.f32.mrb[0].mxu0
        %v4230 = vpop.f32.mrb[0].mxu0
        %v4231 = vadd.f32 %v3727, %v4230
        %v4232 = vpop.f32.mrb[0].mxu0
        %4233 = vmatprep.mubr.bf16.mxu0 %v3480
        %4234 = vmatmul.mubr.bf16.gmra.mrb[0].mxu0 %v3479
        %v4235 = vpop.f32.mrb[0].mxu0
        %v4236 = vadd.f32 %v3727, %v4235
        %v4237 = vpop.f32.mrb[0].mxu0
        %v4238 = vpop.f32.mrb[0].mxu0
        %v4239 = vadd.f32 %v3727, %v4238
        %v4240 = vpop.f32.mrb[0].mxu0
        %4241 = vmatprep.mubr.bf16.mxu0 %v3489
        %4242 = vmatmul.mubr.bf16.gmra.mrb[0].mxu0 %v3488
        %v4243 = vpop.f32.mrb[0].mxu0
        %v4244 = vadd.f32 %v3727, %v4243
        %v4245 = vpop.f32.mrb[0].mxu0
        %v4246 = vpop.f32.mrb[0].mxu0
        %v4247 = vadd.f32 %v3727, %v4246
        %v4248 = vpop.f32.mrb[0].mxu0
        %4249 = vmatprep.mubr.bf16.mxu0 %v3498
        %4250 = vmatmul.mubr.bf16.gmra.mrb[0].mxu0 %v3497
        %v4251 = vpop.f32.mrb[0].mxu0
        %v4252 = vadd.f32 %v3727, %v4251
        %v4253 = vpop.f32.mrb[0].mxu0
        %v4254 = vpop.f32.mrb[0].mxu0
        %v4255 = vadd.f32 %v3727, %v4254
        %v4256 = vpop.f32.mrb[0].mxu0
        %4257 = vmatprep.mubr.bf16.mxu0 %v3507
        %4258 = vmatmul.mubr.bf16.gmra.mrb[0].mxu0 %v3506
        %v4259 = vpop.f32.mrb[0].mxu0
        %v4260 = vadd.f32 %v3727, %v4259
        %v4261 = vpop.f32.mrb[0].mxu0
        %v4262 = vpop.f32.mrb[0].mxu0
        %v4263 = vadd.f32 %v3727, %v4262
        %v4264 = vpop.f32.mrb[0].mxu0
        %4265 = vmatprep.mubr.bf16.mxu0 %v3516
        %4266 = vmatmul.mubr.bf16.gmra.mrb[0].mxu0 %v3515
        %v4267 = vpop.f32.mrb[0].mxu0
        %v4268 = vadd.f32 %v3727, %v4267
        %v4269 = vpop.f32.mrb[0].mxu0
        %v4270 = vpop.f32.mrb[0].mxu0
        %v4271 = vadd.f32 %v3727, %v4270
        %v4272 = vpop.f32.mrb[0].mxu0
        %4273 = vmatprep.mubr.bf16.mxu0 %v3525
        %4274 = vmatmul.mubr.bf16.gmra.mrb[0].mxu0 %v3524
        %v4275 = vpop.f32.mrb[0].mxu0
        %v4276 = vadd.f32 %v3727, %v4275
        %v4277 = vpop.f32.mrb[0].mxu0
        %v4278 = vpop.f32.mrb[0].mxu0
        %v4279 = vadd.f32 %v3727, %v4278
        %v4280 = vpop.f32.mrb[0].mxu0
        %4281 = vmatprep.mubr.bf16.mxu0 %v3534
        %4282 = vmatmul.mubr.bf16.gmra.mrb[0].mxu0 %v3533
        %v4283 = vpop.f32.mrb[0].mxu0
        %v4284 = vadd.f32 %v3727, %v4283
        %v4285 = vpop.f32.mrb[0].mxu0
        %v4286 = vpop.f32.mrb[0].mxu0
        %v4287 = vadd.f32 %v3727, %v4286
        %v4288 = vpop.f32.mrb[0].mxu0
        %4289 = vmatprep.mubr.bf16.mxu0 %v3543
        %4290 = vmatmul.mubr.bf16.gmra.mrb[0].mxu0 %v3542
        %v4291 = vpop.f32.mrb[0].mxu0
        %v4292 = vadd.f32 %v3727, %v4291
        %v4293 = vpop.f32.mrb[0].mxu0
        %v4294 = vpop.f32.mrb[0].mxu0
        %v4295 = vadd.f32 %v3727, %v4294
        %v4296 = vpop.f32.mrb[0].mxu0
        %4297 = vmatprep.mubr.bf16.mxu0 %v3552
        %4298 = vmatmul.mubr.bf16.gmra.mrb[0].mxu0 %v3551
        %v4299 = vpop.f32.mrb[0].mxu0
        %v4300 = vadd.f32 %v3727, %v4299
        %v4301 = vpop.f32.mrb[0].mxu0
        %v4302 = vpop.f32.mrb[0].mxu0
        %v4303 = vadd.f32 %v3727, %v4302
        %v4304 = vpop.f32.mrb[0].mxu0
        %4305 = vmatprep.mubr.bf16.mxu0 %v3561
        %4306 = vmatmul.mubr.bf16.gmra.mrb[0].mxu0 %v3560
        %v4307 = vpop.f32.mrb[0].mxu0
        %v4308 = vadd.f32 %v3727, %v4307
        %v4309 = vpop.f32.mrb[0].mxu0
        %v4310 = vpop.f32.mrb[0].mxu0
        %v4311 = vadd.f32 %v3727, %v4310
        %v4312 = vpop.f32.mrb[0].mxu0
        %4313 = vmatprep.mubr.bf16.mxu0 %v3570
        %4314 = vmatmul.mubr.bf16.gmra.mrb[0].mxu0 %v3569
        %v4315 = vpop.f32.mrb[0].mxu0
        %v4316 = vadd.f32 %v3727, %v4315
        %v4317 = vpop.f32.mrb[0].mxu0
        %v4318 = vpop.f32.mrb[0].mxu0
        %v4319 = vadd.f32 %v3727, %v4318
        %v4320 = vpop.f32.mrb[0].mxu0
        %4321 = vdwg.mxu0
        %4322 = vmatprep.subr.bf16.mxu0 0
        %4323 = vmatpush1.bf16.msra.mxu0 %v4033
        %4324 = vmatprep.subr.bf16.mxu0 0
        %4325 = vmatpush1.bf16.msra.mxu0 %v4034
        %4326 = vmatprep.subr.bf16.mxu0 0
        %4327 = vmatpush1.bf16.msra.mxu0 %v4035
        %4328 = vmatprep.subr.bf16.mxu0 0
        %4329 = vmatpush1.bf16.msra.mxu0 %v4036
        %4330 = vmatprep.subr.bf16.mxu0 0
        %4331 = vmatpush1.bf16.msra.mxu0 %v4037
        %4332 = vmatprep.subr.bf16.mxu0 0
        %4333 = vmatpush1.bf16.msra.mxu0 %v4038
        %4334 = vmatprep.subr.bf16.mxu0 0
        %4335 = vmatpush1.bf16.msra.mxu0 %v4039
        %4336 = vmatprep.subr.bf16.mxu0 0
        %4337 = vmatpush1.bf16.msra.mxu0 %v4040
        %4338 = vmatprep.subr.bf16.mxu0 0
        %4339 = vmatpush1.bf16.msra.mxu0 %v4041
        %4340 = vmatprep.subr.bf16.mxu0 0
        %4341 = vmatpush1.bf16.msra.mxu0 %v4042
        %4342 = vmatprep.subr.bf16.mxu0 0
        %4343 = vmatpush1.bf16.msra.mxu0 %v4043
        %4344 = vmatprep.subr.bf16.mxu0 0
        %4345 = vmatpush1.bf16.msra.mxu0 %v4044
        %4346 = vmatprep.subr.bf16.mxu0 0
        %4347 = vmatpush1.bf16.msra.mxu0 %v4045
        %4348 = vmatprep.subr.bf16.mxu0 0
        %4349 = vmatpush1.bf16.msra.mxu0 %v4046
        %4350 = vmatprep.subr.bf16.mxu0 0
        %4351 = vmatpush1.bf16.msra.mxu0 %v4047
        %4352 = vmatprep.subr.bf16.mxu0 0
        %4353 = vmatpush1.bf16.msra.mxu0 %v4048
        %4354 = vmatprep.mubr.bf16.mxu0 %v3437
        %4355 = vmatmul.mubr.bf16.gmra.mrb[0].mxu0 %v3436
        %v4356 = vpop.f32.mrb[0].mxu0
        %v4357 = vadd.f32 %v4196, %v4356
        %v4358 = vpop.f32.mrb[0].mxu0
        %v4359 = vpop.f32.mrb[0].mxu0
        %v4360 = vadd.f32 %v4199, %v4359
        %v4361 = vpop.f32.mrb[0].mxu0
        %4362 = vmatprep.mubr.bf16.mxu0 %v3446
        %4363 = vmatmul.mubr.bf16.gmra.mrb[0].mxu0 %v3445
        %v4364 = vpop.f32.mrb[0].mxu0
        %v4365 = vadd.f32 %v4204, %v4364
        %v4366 = vpop.f32.mrb[0].mxu0
        %v4367 = vpop.f32.mrb[0].mxu0
        %v4368 = vadd.f32 %v4207, %v4367
        %v4369 = vpop.f32.mrb[0].mxu0
        %4370 = vmatprep.mubr.bf16.mxu0 %v3455
        %4371 = vmatmul.mubr.bf16.gmra.mrb[0].mxu0 %v3454
        %v4372 = vpop.f32.mrb[0].mxu0
        %v4373 = vadd.f32 %v4212, %v4372
        %v4374 = vpop.f32.mrb[0].mxu0
        %v4375 = vpop.f32.mrb[0].mxu0
        %v4376 = vadd.f32 %v4215, %v4375
        %v4377 = vpop.f32.mrb[0].mxu0
        %4378 = vmatprep.mubr.bf16.mxu0 %v3464
        %4379 = vmatmul.mubr.bf16.gmra.mrb[0].mxu0 %v3463
        %v4380 = vpop.f32.mrb[0].mxu0
        %v4381 = vadd.f32 %v4220, %v4380
        %v4382 = vpop.f32.mrb[0].mxu0
        %v4383 = vpop.f32.mrb[0].mxu0
        %v4384 = vadd.f32 %v4223, %v4383
        %v4385 = vpop.f32.mrb[0].mxu0
        %4386 = vmatprep.mubr.bf16.mxu0 %v3473
        %4387 = vmatmul.mubr.bf16.gmra.mrb[0].mxu0 %v3472
        %v4388 = vpop.f32.mrb[0].mxu0
        %v4389 = vadd.f32 %v4228, %v4388
        %v4390 = vpop.f32.mrb[0].mxu0
        %v4391 = vpop.f32.mrb[0].mxu0
        %v4392 = vadd.f32 %v4231, %v4391
        %v4393 = vpop.f32.mrb[0].mxu0
        %4394 = vmatprep.mubr.bf16.mxu0 %v3482
        %4395 = vmatmul.mubr.bf16.gmra.mrb[0].mxu0 %v3481
        %v4396 = vpop.f32.mrb[0].mxu0
        %v4397 = vadd.f32 %v4236, %v4396
        %v4398 = vpop.f32.mrb[0].mxu0
        %v4399 = vpop.f32.mrb[0].mxu0
        %v4400 = vadd.f32 %v4239, %v4399
        %v4401 = vpop.f32.mrb[0].mxu0
        %4402 = vmatprep.mubr.bf16.mxu0 %v3491
        %4403 = vmatmul.mubr.bf16.gmra.mrb[0].mxu0 %v3490
        %v4404 = vpop.f32.mrb[0].mxu0
        %v4405 = vadd.f32 %v4244, %v4404
        %v4406 = vpop.f32.mrb[0].mxu0
        %v4407 = vpop.f32.mrb[0].mxu0
        %v4408 = vadd.f32 %v4247, %v4407
        %v4409 = vpop.f32.mrb[0].mxu0
        %4410 = vmatprep.mubr.bf16.mxu0 %v3500
        %4411 = vmatmul.mubr.bf16.gmra.mrb[0].mxu0 %v3499
        %v4412 = vpop.f32.mrb[0].mxu0
        %v4413 = vadd.f32 %v4252, %v4412
        %v4414 = vpop.f32.mrb[0].mxu0
        %v4415 = vpop.f32.mrb[0].mxu0
        %v4416 = vadd.f32 %v4255, %v4415
        %v4417 = vpop.f32.mrb[0].mxu0
        %4418 = vmatprep.mubr.bf16.mxu0 %v3509
        %4419 = vmatmul.mubr.bf16.gmra.mrb[0].mxu0 %v3508
        %v4420 = vpop.f32.mrb[0].mxu0
        %v4421 = vadd.f32 %v4260, %v4420
        %v4422 = vpop.f32.mrb[0].mxu0
        %v4423 = vpop.f32.mrb[0].mxu0
        %v4424 = vadd.f32 %v4263, %v4423
        %v4425 = vpop.f32.mrb[0].mxu0
        %4426 = vmatprep.mubr.bf16.mxu0 %v3518
        %4427 = vmatmul.mubr.bf16.gmra.mrb[0].mxu0 %v3517
        %v4428 = vpop.f32.mrb[0].mxu0
        %v4429 = vadd.f32 %v4268, %v4428
        %v4430 = vpop.f32.mrb[0].mxu0
        %v4431 = vpop.f32.mrb[0].mxu0
        %v4432 = vadd.f32 %v4271, %v4431
        %v4433 = vpop.f32.mrb[0].mxu0
        %4434 = vmatprep.mubr.bf16.mxu0 %v3527
        %4435 = vmatmul.mubr.bf16.gmra.mrb[0].mxu0 %v3526
        %v4436 = vpop.f32.mrb[0].mxu0
        %v4437 = vadd.f32 %v4276, %v4436
        %v4438 = vpop.f32.mrb[0].mxu0
        %v4439 = vpop.f32.mrb[0].mxu0
        %v4440 = vadd.f32 %v4279, %v4439
        %v4441 = vpop.f32.mrb[0].mxu0
        %4442 = vmatprep.mubr.bf16.mxu0 %v3536
        %4443 = vmatmul.mubr.bf16.gmra.mrb[0].mxu0 %v3535
        %v4444 = vpop.f32.mrb[0].mxu0
        %v4445 = vadd.f32 %v4284, %v4444
        %v4446 = vpop.f32.mrb[0].mxu0
        %v4447 = vpop.f32.mrb[0].mxu0
        %v4448 = vadd.f32 %v4287, %v4447
        %v4449 = vpop.f32.mrb[0].mxu0
        %4450 = vmatprep.mubr.bf16.mxu0 %v3545
        %4451 = vmatmul.mubr.bf16.gmra.mrb[0].mxu0 %v3544
        %v4452 = vpop.f32.mrb[0].mxu0
        %v4453 = vadd.f32 %v4292, %v4452
        %v4454 = vpop.f32.mrb[0].mxu0
        %v4455 = vpop.f32.mrb[0].mxu0
        %v4456 = vadd.f32 %v4295, %v4455
        %v4457 = vpop.f32.mrb[0].mxu0
        %4458 = vmatprep.mubr.bf16.mxu0 %v3554
        %4459 = vmatmul.mubr.bf16.gmra.mrb[0].mxu0 %v3553
        %v4460 = vpop.f32.mrb[0].mxu0
        %v4461 = vadd.f32 %v4300, %v4460
        %v4462 = vpop.f32.mrb[0].mxu0
        %v4463 = vpop.f32.mrb[0].mxu0
        %v4464 = vadd.f32 %v4303, %v4463
        %v4465 = vpop.f32.mrb[0].mxu0
        %4466 = vmatprep.mubr.bf16.mxu0 %v3563
        %4467 = vmatmul.mubr.bf16.gmra.mrb[0].mxu0 %v3562
        %v4468 = vpop.f32.mrb[0].mxu0
        %v4469 = vadd.f32 %v4308, %v4468
        %v4470 = vpop.f32.mrb[0].mxu0
        %v4471 = vpop.f32.mrb[0].mxu0
        %v4472 = vadd.f32 %v4311, %v4471
        %v4473 = vpop.f32.mrb[0].mxu0
        %4474 = vmatprep.mubr.bf16.mxu0 %v3572
        %4475 = vmatmul.mubr.bf16.gmra.mrb[0].mxu0 %v3571
        %v4476 = vpop.f32.mrb[0].mxu0
        %v4477 = vadd.f32 %v4316, %v4476
        %v4478 = vpop.f32.mrb[0].mxu0
        %v4479 = vpop.f32.mrb[0].mxu0
        %v4480 = vadd.f32 %v4319, %v4479
        %v4481 = vpop.f32.mrb[0].mxu0
        %4482 = vdwg.mxu0
        %4483 = vmatprep.subr.bf16.mxu0 0
        %4484 = vmatpush1.bf16.msra.mxu0 %v4049
        %4485 = vmatprep.subr.bf16.mxu0 0
        %4486 = vmatpush1.bf16.msra.mxu0 %v4050
        %4487 = vmatprep.subr.bf16.mxu0 0
        %4488 = vmatpush1.bf16.msra.mxu0 %v4051
        %4489 = vmatprep.subr.bf16.mxu0 0
        %4490 = vmatpush1.bf16.msra.mxu0 %v4052
        %4491 = vmatprep.subr.bf16.mxu0 0
        %4492 = vmatpush1.bf16.msra.mxu0 %v4053
        %4493 = vmatprep.subr.bf16.mxu0 0
        %4494 = vmatpush1.bf16.msra.mxu0 %v4054
        %4495 = vmatprep.subr.bf16.mxu0 0
        %4496 = vmatpush1.bf16.msra.mxu0 %v4055
        %4497 = vmatprep.subr.bf16.mxu0 0
        %4498 = vmatpush1.bf16.msra.mxu0 %v4056
        %4499 = vmatprep.subr.bf16.mxu0 0
        %4500 = vmatpush1.bf16.msra.mxu0 %v4057
        %4501 = vmatprep.subr.bf16.mxu0 0
        %4502 = vmatpush1.bf16.msra.mxu0 %v4058
        %4503 = vmatprep.subr.bf16.mxu0 0
        %4504 = vmatpush1.bf16.msra.mxu0 %v4059
        %4505 = vmatprep.subr.bf16.mxu0 0
        %4506 = vmatpush1.bf16.msra.mxu0 %v4060
        %4507 = vmatprep.subr.bf16.mxu0 0
        %4508 = vmatpush1.bf16.msra.mxu0 %v4061
        %4509 = vmatprep.subr.bf16.mxu0 0
        %4510 = vmatpush1.bf16.msra.mxu0 %v4062
        %4511 = vmatprep.subr.bf16.mxu0 0
        %4512 = vmatpush1.bf16.msra.mxu0 %v4063
        %4513 = vmatprep.subr.bf16.mxu0 0
        %4514 = vmatpush1.bf16.msra.mxu0 %v4064
        %4515 = vmatprep.mubr.bf16.mxu0 %v3439
        %4516 = vmatmul.mubr.bf16.gmra.mrb[0].mxu0 %v3438
        %v4517 = vpop.f32.mrb[0].mxu0
        %v4518 = vadd.f32 %v4357, %v4517
        %v4519 = vpop.f32.mrb[0].mxu0
        %v4520 = vpop.f32.mrb[0].mxu0
        %v4521 = vadd.f32 %v4360, %v4520
        %v4522 = vpop.f32.mrb[0].mxu0
        %4523 = vmatprep.mubr.bf16.mxu0 %v3448
        %4524 = vmatmul.mubr.bf16.gmra.mrb[0].mxu0 %v3447
        %v4525 = vpop.f32.mrb[0].mxu0
        %v4526 = vadd.f32 %v4365, %v4525
        %v4527 = vpop.f32.mrb[0].mxu0
        %v4528 = vpop.f32.mrb[0].mxu0
        %v4529 = vadd.f32 %v4368, %v4528
        %v4530 = vpop.f32.mrb[0].mxu0
        %4531 = vmatprep.mubr.bf16.mxu0 %v3457
        %4532 = vmatmul.mubr.bf16.gmra.mrb[0].mxu0 %v3456
        %v4533 = vpop.f32.mrb[0].mxu0
        %v4534 = vadd.f32 %v4373, %v4533
        %v4535 = vpop.f32.mrb[0].mxu0
        %v4536 = vpop.f32.mrb[0].mxu0
        %v4537 = vadd.f32 %v4376, %v4536
        %v4538 = vpop.f32.mrb[0].mxu0
        %4539 = vmatprep.mubr.bf16.mxu0 %v3466
        %4540 = vmatmul.mubr.bf16.gmra.mrb[0].mxu0 %v3465
        %v4541 = vpop.f32.mrb[0].mxu0
        %v4542 = vadd.f32 %v4381, %v4541
        %v4543 = vpop.f32.mrb[0].mxu0
        %v4544 = vpop.f32.mrb[0].mxu0
        %v4545 = vadd.f32 %v4384, %v4544
        %v4546 = vpop.f32.mrb[0].mxu0
        %4547 = vmatprep.mubr.bf16.mxu0 %v3475
        %4548 = vmatmul.mubr.bf16.gmra.mrb[0].mxu0 %v3474
        %v4549 = vpop.f32.mrb[0].mxu0
        %v4550 = vadd.f32 %v4389, %v4549
        %v4551 = vpop.f32.mrb[0].mxu0
        %v4552 = vpop.f32.mrb[0].mxu0
        %v4553 = vadd.f32 %v4392, %v4552
        %v4554 = vpop.f32.mrb[0].mxu0
        %4555 = vmatprep.mubr.bf16.mxu0 %v3484
        %4556 = vmatmul.mubr.bf16.gmra.mrb[0].mxu0 %v3483
        %v4557 = vpop.f32.mrb[0].mxu0
        %v4558 = vadd.f32 %v4397, %v4557
        %v4559 = vpop.f32.mrb[0].mxu0
        %v4560 = vpop.f32.mrb[0].mxu0
        %v4561 = vadd.f32 %v4400, %v4560
        %v4562 = vpop.f32.mrb[0].mxu0
        %4563 = vmatprep.mubr.bf16.mxu0 %v3493
        %4564 = vmatmul.mubr.bf16.gmra.mrb[0].mxu0 %v3492
        %v4565 = vpop.f32.mrb[0].mxu0
        %v4566 = vadd.f32 %v4405, %v4565
        %v4567 = vpop.f32.mrb[0].mxu0
        %v4568 = vpop.f32.mrb[0].mxu0
        %v4569 = vadd.f32 %v4408, %v4568
        %v4570 = vpop.f32.mrb[0].mxu0
        %4571 = vmatprep.mubr.bf16.mxu0 %v3502
        %4572 = vmatmul.mubr.bf16.gmra.mrb[0].mxu0 %v3501
        %v4573 = vpop.f32.mrb[0].mxu0
        %v4574 = vadd.f32 %v4413, %v4573
        %v4575 = vpop.f32.mrb[0].mxu0
        %v4576 = vpop.f32.mrb[0].mxu0
        %v4577 = vadd.f32 %v4416, %v4576
        %v4578 = vpop.f32.mrb[0].mxu0
        %4579 = vmatprep.mubr.bf16.mxu0 %v3511
        %4580 = vmatmul.mubr.bf16.gmra.mrb[0].mxu0 %v3510
        %v4581 = vpop.f32.mrb[0].mxu0
        %v4582 = vadd.f32 %v4421, %v4581
        %v4583 = vpop.f32.mrb[0].mxu0
        %v4584 = vpop.f32.mrb[0].mxu0
        %v4585 = vadd.f32 %v4424, %v4584
        %v4586 = vpop.f32.mrb[0].mxu0
        %4587 = vmatprep.mubr.bf16.mxu0 %v3520
        %4588 = vmatmul.mubr.bf16.gmra.mrb[0].mxu0 %v3519
        %v4589 = vpop.f32.mrb[0].mxu0
        %v4590 = vadd.f32 %v4429, %v4589
        %v4591 = vpop.f32.mrb[0].mxu0
        %v4592 = vpop.f32.mrb[0].mxu0
        %v4593 = vadd.f32 %v4432, %v4592
        %v4594 = vpop.f32.mrb[0].mxu0
        %4595 = vmatprep.mubr.bf16.mxu0 %v3529
        %4596 = vmatmul.mubr.bf16.gmra.mrb[0].mxu0 %v3528
        %v4597 = vpop.f32.mrb[0].mxu0
        %v4598 = vadd.f32 %v4437, %v4597
        %v4599 = vpop.f32.mrb[0].mxu0
        %v4600 = vpop.f32.mrb[0].mxu0
        %v4601 = vadd.f32 %v4440, %v4600
        %v4602 = vpop.f32.mrb[0].mxu0
        %4603 = vmatprep.mubr.bf16.mxu0 %v3538
        %4604 = vmatmul.mubr.bf16.gmra.mrb[0].mxu0 %v3537
        %v4605 = vpop.f32.mrb[0].mxu0
        %v4606 = vadd.f32 %v4445, %v4605
        %v4607 = vpop.f32.mrb[0].mxu0
        %v4608 = vpop.f32.mrb[0].mxu0
        %v4609 = vadd.f32 %v4448, %v4608
        %v4610 = vpop.f32.mrb[0].mxu0
        %4611 = vmatprep.mubr.bf16.mxu0 %v3547
        %4612 = vmatmul.mubr.bf16.gmra.mrb[0].mxu0 %v3546
        %v4613 = vpop.f32.mrb[0].mxu0
        %v4614 = vadd.f32 %v4453, %v4613
        %v4615 = vpop.f32.mrb[0].mxu0
        %v4616 = vpop.f32.mrb[0].mxu0
        %v4617 = vadd.f32 %v4456, %v4616
        %v4618 = vpop.f32.mrb[0].mxu0
        %4619 = vmatprep.mubr.bf16.mxu0 %v3556
        %4620 = vmatmul.mubr.bf16.gmra.mrb[0].mxu0 %v3555
        %v4621 = vpop.f32.mrb[0].mxu0
        %v4622 = vadd.f32 %v4461, %v4621
        %v4623 = vpop.f32.mrb[0].mxu0
        %v4624 = vpop.f32.mrb[0].mxu0
        %v4625 = vadd.f32 %v4464, %v4624
        %v4626 = vpop.f32.mrb[0].mxu0
        %4627 = vmatprep.mubr.bf16.mxu0 %v3565
        %4628 = vmatmul.mubr.bf16.gmra.mrb[0].mxu0 %v3564
        %v4629 = vpop.f32.mrb[0].mxu0
        %v4630 = vadd.f32 %v4469, %v4629
        %v4631 = vpop.f32.mrb[0].mxu0
        %v4632 = vpop.f32.mrb[0].mxu0
        %v4633 = vadd.f32 %v4472, %v4632
        %v4634 = vpop.f32.mrb[0].mxu0
        %4635 = vmatprep.mubr.bf16.mxu0 %v3574
        %4636 = vmatmul.mubr.bf16.gmra.mrb[0].mxu0 %v3573
        %v4637 = vpop.f32.mrb[0].mxu0
        %v4638 = vadd.f32 %v4477, %v4637
        %v4639 = vpop.f32.mrb[0].mxu0
        %v4640 = vpop.f32.mrb[0].mxu0
        %v4641 = vadd.f32 %v4480, %v4640
        %v4642 = vpop.f32.mrb[0].mxu0
        %4643 = vdwg.mxu0
        %4644 = vmatprep.subr.bf16.mxu0 0
        %4645 = vmatpush1.bf16.msra.mxu0 %v4065
        %4646 = vmatprep.subr.bf16.mxu0 0
        %4647 = vmatpush1.bf16.msra.mxu0 %v4066
        %4648 = vmatprep.subr.bf16.mxu0 0
        %4649 = vmatpush1.bf16.msra.mxu0 %v4067
        %4650 = vmatprep.subr.bf16.mxu0 0
        %4651 = vmatpush1.bf16.msra.mxu0 %v4068
        %4652 = vmatprep.subr.bf16.mxu0 0
        %4653 = vmatpush1.bf16.msra.mxu0 %v4069
        %4654 = vmatprep.subr.bf16.mxu0 0
        %4655 = vmatpush1.bf16.msra.mxu0 %v4070
        %4656 = vmatprep.subr.bf16.mxu0 0
        %4657 = vmatpush1.bf16.msra.mxu0 %v4071
        %4658 = vmatprep.subr.bf16.mxu0 0
        %4659 = vmatpush1.bf16.msra.mxu0 %v4072
        %4660 = vmatprep.subr.bf16.mxu0 0
        %4661 = vmatpush1.bf16.msra.mxu0 %v4073
        %4662 = vmatprep.subr.bf16.mxu0 0
        %4663 = vmatpush1.bf16.msra.mxu0 %v4074
        %4664 = vmatprep.subr.bf16.mxu0 0
        %4665 = vmatpush1.bf16.msra.mxu0 %v4075
        %4666 = vmatprep.subr.bf16.mxu0 0
        %4667 = vmatpush1.bf16.msra.mxu0 %v4076
        %4668 = vmatprep.subr.bf16.mxu0 0
        %4669 = vmatpush1.bf16.msra.mxu0 %v4077
        %4670 = vmatprep.subr.bf16.mxu0 0
        %4671 = vmatpush1.bf16.msra.mxu0 %v4078
        %4672 = vmatprep.subr.bf16.mxu0 0
        %4673 = vmatpush1.bf16.msra.mxu0 %v4079
        %4674 = vmatprep.subr.bf16.mxu0 0
        %4675 = vmatpush1.bf16.msra.mxu0 %v4080
        %4676 = vmatprep.mubr.bf16.mxu0 %v3441
        %4677 = vmatmul.mubr.bf16.gmra.mrb[0].mxu0 %v3440
        %v4678 = vpop.f32.mrb[0].mxu0
        %v4679 = vadd.f32 %v4518, %v4678
        %v4680 = vpop.f32.mrb[0].mxu0
        %v4681 = vpop.f32.mrb[0].mxu0
        %v4682 = vadd.f32 %v4521, %v4681
        %v4683 = vpop.f32.mrb[0].mxu0
        %4684 = vmatprep.mubr.bf16.mxu0 %v3450
        %4685 = vmatmul.mubr.bf16.gmra.mrb[0].mxu0 %v3449
        %v4686 = vpop.f32.mrb[0].mxu0
        %v4687 = vadd.f32 %v4526, %v4686
        %v4688 = vpop.f32.mrb[0].mxu0
        %v4689 = vpop.f32.mrb[0].mxu0
        %v4690 = vadd.f32 %v4529, %v4689
        %v4691 = vpop.f32.mrb[0].mxu0
        %4692 = vmatprep.mubr.bf16.mxu0 %v3459
        %4693 = vmatmul.mubr.bf16.gmra.mrb[0].mxu0 %v3458
        %v4694 = vpop.f32.mrb[0].mxu0
        %v4695 = vadd.f32 %v4534, %v4694
        %v4696 = vpop.f32.mrb[0].mxu0
        %v4697 = vpop.f32.mrb[0].mxu0
        %v4698 = vadd.f32 %v4537, %v4697
        %v4699 = vpop.f32.mrb[0].mxu0
        %4700 = vmatprep.mubr.bf16.mxu0 %v3468
        %4701 = vmatmul.mubr.bf16.gmra.mrb[0].mxu0 %v3467
        %v4702 = vpop.f32.mrb[0].mxu0
        %v4703 = vadd.f32 %v4542, %v4702
        %v4704 = vpop.f32.mrb[0].mxu0
        %v4705 = vpop.f32.mrb[0].mxu0
        %v4706 = vadd.f32 %v4545, %v4705
        %v4707 = vpop.f32.mrb[0].mxu0
        %4708 = vmatprep.mubr.bf16.mxu0 %v3477
        %4709 = vmatmul.mubr.bf16.gmra.mrb[0].mxu0 %v3476
        %v4710 = vpop.f32.mrb[0].mxu0
        %v4711 = vadd.f32 %v4550, %v4710
        %v4712 = vpop.f32.mrb[0].mxu0
        %v4713 = vpop.f32.mrb[0].mxu0
        %v4714 = vadd.f32 %v4553, %v4713
        %v4715 = vpop.f32.mrb[0].mxu0
        %4716 = vmatprep.mubr.bf16.mxu0 %v3486
        %4717 = vmatmul.mubr.bf16.gmra.mrb[0].mxu0 %v3485
        %v4718 = vpop.f32.mrb[0].mxu0
        %v4719 = vadd.f32 %v4558, %v4718
        %v4720 = vpop.f32.mrb[0].mxu0
        %v4721 = vpop.f32.mrb[0].mxu0
        %v4722 = vadd.f32 %v4561, %v4721
        %v4723 = vpop.f32.mrb[0].mxu0
        %4724 = vmatprep.mubr.bf16.mxu0 %v3495
        %4725 = vmatmul.mubr.bf16.gmra.mrb[0].mxu0 %v3494
        %v4726 = vpop.f32.mrb[0].mxu0
        %v4727 = vadd.f32 %v4566, %v4726
        %v4728 = vpop.f32.mrb[0].mxu0
        %v4729 = vpop.f32.mrb[0].mxu0
        %v4730 = vadd.f32 %v4569, %v4729
        %v4731 = vpop.f32.mrb[0].mxu0
        %4732 = vmatprep.mubr.bf16.mxu0 %v3504
        %4733 = vmatmul.mubr.bf16.gmra.mrb[0].mxu0 %v3503
        %v4734 = vpop.f32.mrb[0].mxu0
        %v4735 = vadd.f32 %v4574, %v4734
        %v4736 = vpop.f32.mrb[0].mxu0
        %v4737 = vpop.f32.mrb[0].mxu0
        %v4738 = vadd.f32 %v4577, %v4737
        %v4739 = vpop.f32.mrb[0].mxu0
        %4740 = vmatprep.mubr.bf16.mxu0 %v3513
        %4741 = vmatmul.mubr.bf16.gmra.mrb[0].mxu0 %v3512
        %v4742 = vpop.f32.mrb[0].mxu0
        %v4743 = vadd.f32 %v4582, %v4742
        %v4744 = vpop.f32.mrb[0].mxu0
        %v4745 = vpop.f32.mrb[0].mxu0
        %v4746 = vadd.f32 %v4585, %v4745
        %v4747 = vpop.f32.mrb[0].mxu0
        %4748 = vmatprep.mubr.bf16.mxu0 %v3522
        %4749 = vmatmul.mubr.bf16.gmra.mrb[0].mxu0 %v3521
        %v4750 = vpop.f32.mrb[0].mxu0
        %v4751 = vadd.f32 %v4590, %v4750
        %v4752 = vpop.f32.mrb[0].mxu0
        %v4753 = vpop.f32.mrb[0].mxu0
        %v4754 = vadd.f32 %v4593, %v4753
        %v4755 = vpop.f32.mrb[0].mxu0
        %4756 = vmatprep.mubr.bf16.mxu0 %v3531
        %4757 = vmatmul.mubr.bf16.gmra.mrb[0].mxu0 %v3530
        %v4758 = vpop.f32.mrb[0].mxu0
        %v4759 = vadd.f32 %v4598, %v4758
        %v4760 = vpop.f32.mrb[0].mxu0
        %v4761 = vpop.f32.mrb[0].mxu0
        %v4762 = vadd.f32 %v4601, %v4761
        %v4763 = vpop.f32.mrb[0].mxu0
        %4764 = vmatprep.mubr.bf16.mxu0 %v3540
        %4765 = vmatmul.mubr.bf16.gmra.mrb[0].mxu0 %v3539
        %v4766 = vpop.f32.mrb[0].mxu0
        %v4767 = vadd.f32 %v4606, %v4766
        %v4768 = vpop.f32.mrb[0].mxu0
        %v4769 = vpop.f32.mrb[0].mxu0
        %v4770 = vadd.f32 %v4609, %v4769
        %v4771 = vpop.f32.mrb[0].mxu0
        %4772 = vmatprep.mubr.bf16.mxu0 %v3549
        %4773 = vmatmul.mubr.bf16.gmra.mrb[0].mxu0 %v3548
        %v4774 = vpop.f32.mrb[0].mxu0
        %v4775 = vadd.f32 %v4614, %v4774
        %v4776 = vpop.f32.mrb[0].mxu0
        %v4777 = vpop.f32.mrb[0].mxu0
        %v4778 = vadd.f32 %v4617, %v4777
        %v4779 = vpop.f32.mrb[0].mxu0
        %4780 = vmatprep.mubr.bf16.mxu0 %v3558
        %4781 = vmatmul.mubr.bf16.gmra.mrb[0].mxu0 %v3557
        %v4782 = vpop.f32.mrb[0].mxu0
        %v4783 = vadd.f32 %v4622, %v4782
        %v4784 = vpop.f32.mrb[0].mxu0
        %v4785 = vpop.f32.mrb[0].mxu0
        %v4786 = vadd.f32 %v4625, %v4785
        %v4787 = vpop.f32.mrb[0].mxu0
        %4788 = vmatprep.mubr.bf16.mxu0 %v3567
        %4789 = vmatmul.mubr.bf16.gmra.mrb[0].mxu0 %v3566
        %v4790 = vpop.f32.mrb[0].mxu0
        %v4791 = vadd.f32 %v4630, %v4790
        %v4792 = vpop.f32.mrb[0].mxu0
        %v4793 = vpop.f32.mrb[0].mxu0
        %v4794 = vadd.f32 %v4633, %v4793
        %v4795 = vpop.f32.mrb[0].mxu0
        %4796 = vmatprep.mubr.bf16.mxu0 %v3576
        %4797 = vmatmul.mubr.bf16.gmra.mrb[0].mxu0 %v3575
        %v4798 = vpop.f32.mrb[0].mxu0
        %v4799 = vadd.f32 %v4638, %v4798
        %v4800 = vpop.f32.mrb[0].mxu0
        %v4801 = vpop.f32.mrb[0].mxu0
        %v4802 = vadd.f32 %v4641, %v4801
        %v4803 = vpop.f32.mrb[0].mxu0
        %4804 = vdwg.mxu0
        %4805 = vmatprep.subr.bf16.mxu0 0
        %4806 = vmatpush1.bf16.msra.mxu0 %v4081
        %4807 = vmatprep.subr.bf16.mxu0 0
        %4808 = vmatpush1.bf16.msra.mxu0 %v4082
        %4809 = vmatprep.subr.bf16.mxu0 0
        %4810 = vmatpush1.bf16.msra.mxu0 %v4083
        %4811 = vmatprep.subr.bf16.mxu0 0
        %4812 = vmatpush1.bf16.msra.mxu0 %v4084
        %4813 = vmatprep.subr.bf16.mxu0 0
        %4814 = vmatpush1.bf16.msra.mxu0 %v4085
        %4815 = vmatprep.subr.bf16.mxu0 0
        %4816 = vmatpush1.bf16.msra.mxu0 %v4086
        %4817 = vmatprep.subr.bf16.mxu0 0
        %4818 = vmatpush1.bf16.msra.mxu0 %v4087
        %4819 = vmatprep.subr.bf16.mxu0 0
        %4820 = vmatpush1.bf16.msra.mxu0 %v4088
        %4821 = vmatprep.subr.bf16.mxu0 0
        %4822 = vmatpush1.bf16.msra.mxu0 0
        %4823 = vmatprep.subr.bf16.mxu0 0
        %4824 = vmatpush1.bf16.msra.mxu0 0
        %4825 = vmatprep.subr.bf16.mxu0 0
        %4826 = vmatpush1.bf16.msra.mxu0 0
        %4827 = vmatprep.subr.bf16.mxu0 0
        %4828 = vmatpush1.bf16.msra.mxu0 0
        %4829 = vmatprep.subr.bf16.mxu0 0
        %4830 = vmatpush1.bf16.msra.mxu0 0
        %4831 = vmatprep.subr.bf16.mxu0 0
        %4832 = vmatpush1.bf16.msra.mxu0 0
        %4833 = vmatprep.subr.bf16.mxu0 0
        %4834 = vmatpush1.bf16.msra.mxu0 0
        %4835 = vmatprep.subr.bf16.mxu0 0
        %4836 = vmatpush1.bf16.msra.mxu0 0
        %4837 = vmatprep.mubr.bf16.mxu0 0
        %4838 = vmatmul.mubr.bf16.gmra.mrb[0].mxu0 %v3442
        %v4839 = vpop.f32.mrb[0].mxu0
        %v4840 = vadd.f32 %v4679, %v4839
        %v4841 = vpop.f32.mrb[0].mxu0
        %v4842 = vpop.f32.mrb[0].mxu0
        %v4843 = vadd.f32 %v4682, %v4842
        %v4844 = vpop.f32.mrb[0].mxu0
        %4845 = vmatprep.mubr.bf16.mxu0 0
        %4846 = vmatmul.mubr.bf16.gmra.mrb[0].mxu0 %v3451
        %v4847 = vpop.f32.mrb[0].mxu0
        %v4848 = vadd.f32 %v4687, %v4847
        %v4849 = vpop.f32.mrb[0].mxu0
        %v4850 = vpop.f32.mrb[0].mxu0
        %v4851 = vadd.f32 %v4690, %v4850
        %v4852 = vpop.f32.mrb[0].mxu0
        %4853 = vmatprep.mubr.bf16.mxu0 0
        %4854 = vmatmul.mubr.bf16.gmra.mrb[0].mxu0 %v3460
        %v4855 = vpop.f32.mrb[0].mxu0
        %v4856 = vadd.f32 %v4695, %v4855
        %v4857 = vpop.f32.mrb[0].mxu0
        %v4858 = vpop.f32.mrb[0].mxu0
        %v4859 = vadd.f32 %v4698, %v4858
        %v4860 = vpop.f32.mrb[0].mxu0
        %4861 = vmatprep.mubr.bf16.mxu0 0
        %4862 = vmatmul.mubr.bf16.gmra.mrb[0].mxu0 %v3469
        %v4863 = vpop.f32.mrb[0].mxu0
        %v4864 = vadd.f32 %v4703, %v4863
        %v4865 = vpop.f32.mrb[0].mxu0
        %v4866 = vpop.f32.mrb[0].mxu0
        %v4867 = vadd.f32 %v4706, %v4866
        %v4868 = vpop.f32.mrb[0].mxu0
        %4869 = vmatprep.mubr.bf16.mxu0 0
        %4870 = vmatmul.mubr.bf16.gmra.mrb[0].mxu0 %v3478
        %v4871 = vpop.f32.mrb[0].mxu0
        %v4872 = vadd.f32 %v4711, %v4871
        %v4873 = vpop.f32.mrb[0].mxu0
        %v4874 = vpop.f32.mrb[0].mxu0
        %v4875 = vadd.f32 %v4714, %v4874
        %v4876 = vpop.f32.mrb[0].mxu0
        %4877 = vmatprep.mubr.bf16.mxu0 0
        %4878 = vmatmul.mubr.bf16.gmra.mrb[0].mxu0 %v3487
        %v4879 = vpop.f32.mrb[0].mxu0
        %v4880 = vadd.f32 %v4719, %v4879
        %v4881 = vpop.f32.mrb[0].mxu0
        %v4882 = vpop.f32.mrb[0].mxu0
        %v4883 = vadd.f32 %v4722, %v4882
        %v4884 = vpop.f32.mrb[0].mxu0
        %4885 = vmatprep.mubr.bf16.mxu0 0
        %4886 = vmatmul.mubr.bf16.gmra.mrb[0].mxu0 %v3496
        %v4887 = vpop.f32.mrb[0].mxu0
        %v4888 = vadd.f32 %v4727, %v4887
        %v4889 = vpop.f32.mrb[0].mxu0
        %v4890 = vpop.f32.mrb[0].mxu0
        %v4891 = vadd.f32 %v4730, %v4890
        %v4892 = vpop.f32.mrb[0].mxu0
        %4893 = vmatprep.mubr.bf16.mxu0 0
        %4894 = vmatmul.mubr.bf16.gmra.mrb[0].mxu0 %v3505
        %v4895 = vpop.f32.mrb[0].mxu0
        %v4896 = vadd.f32 %v4735, %v4895
        %v4897 = vpop.f32.mrb[0].mxu0
        %v4898 = vpop.f32.mrb[0].mxu0
        %v4899 = vadd.f32 %v4738, %v4898
        %v4900 = vpop.f32.mrb[0].mxu0
        %4901 = vmatprep.mubr.bf16.mxu0 0
        %4902 = vmatmul.mubr.bf16.gmra.mrb[0].mxu0 %v3514
        %v4903 = vpop.f32.mrb[0].mxu0
        %v4904 = vadd.f32 %v4743, %v4903
        %v4905 = vpop.f32.mrb[0].mxu0
        %v4906 = vpop.f32.mrb[0].mxu0
        %v4907 = vadd.f32 %v4746, %v4906
        %v4908 = vpop.f32.mrb[0].mxu0
        %4909 = vmatprep.mubr.bf16.mxu0 0
        %4910 = vmatmul.mubr.bf16.gmra.mrb[0].mxu0 %v3523
        %v4911 = vpop.f32.mrb[0].mxu0
        %v4912 = vadd.f32 %v4751, %v4911
        %v4913 = vpop.f32.mrb[0].mxu0
        %v4914 = vpop.f32.mrb[0].mxu0
        %v4915 = vadd.f32 %v4754, %v4914
        %v4916 = vpop.f32.mrb[0].mxu0
        %4917 = vmatprep.mubr.bf16.mxu0 0
        %4918 = vmatmul.mubr.bf16.gmra.mrb[0].mxu0 %v3532
        %v4919 = vpop.f32.mrb[0].mxu0
        %v4920 = vadd.f32 %v4759, %v4919
        %v4921 = vpop.f32.mrb[0].mxu0
        %v4922 = vpop.f32.mrb[0].mxu0
        %v4923 = vadd.f32 %v4762, %v4922
        %v4924 = vpop.f32.mrb[0].mxu0
        %4925 = vmatprep.mubr.bf16.mxu0 0
        %4926 = vmatmul.mubr.bf16.gmra.mrb[0].mxu0 %v3541
        %v4927 = vpop.f32.mrb[0].mxu0
        %v4928 = vadd.f32 %v4767, %v4927
        %v4929 = vpop.f32.mrb[0].mxu0
        %v4930 = vpop.f32.mrb[0].mxu0
        %v4931 = vadd.f32 %v4770, %v4930
        %v4932 = vpop.f32.mrb[0].mxu0
        %4933 = vmatprep.mubr.bf16.mxu0 0
        %4934 = vmatmul.mubr.bf16.gmra.mrb[0].mxu0 %v3550
        %v4935 = vpop.f32.mrb[0].mxu0
        %v4936 = vadd.f32 %v4775, %v4935
        %v4937 = vpop.f32.mrb[0].mxu0
        %v4938 = vpop.f32.mrb[0].mxu0
        %v4939 = vadd.f32 %v4778, %v4938
        %v4940 = vpop.f32.mrb[0].mxu0
        %4941 = vmatprep.mubr.bf16.mxu0 0
        %4942 = vmatmul.mubr.bf16.gmra.mrb[0].mxu0 %v3559
        %v4943 = vpop.f32.mrb[0].mxu0
        %v4944 = vadd.f32 %v4783, %v4943
        %v4945 = vpop.f32.mrb[0].mxu0
        %v4946 = vpop.f32.mrb[0].mxu0
        %v4947 = vadd.f32 %v4786, %v4946
        %v4948 = vpop.f32.mrb[0].mxu0
        %4949 = vmatprep.mubr.bf16.mxu0 0
        %4950 = vmatmul.mubr.bf16.gmra.mrb[0].mxu0 %v3568
        %v4951 = vpop.f32.mrb[0].mxu0
        %v4952 = vadd.f32 %v4791, %v4951
        %v4953 = vpop.f32.mrb[0].mxu0
        %v4954 = vpop.f32.mrb[0].mxu0
        %v4955 = vadd.f32 %v4794, %v4954
        %v4956 = vpop.f32.mrb[0].mxu0
        %4957 = vmatprep.mubr.bf16.mxu0 0
        %4958 = vmatmul.mubr.bf16.gmra.mrb[0].mxu0 %v3577
        %v4959 = vpop.f32.mrb[0].mxu0
        %v4960 = vadd.f32 %v4799, %v4959
        %v4961 = vpop.f32.mrb[0].mxu0
        %v4962 = vpop.f32.mrb[0].mxu0
        %v4963 = vadd.f32 %v4802, %v4962
        %v4964 = vpop.f32.mrb[0].mxu0
        %4965 = vdwg.mxu0
        %v4966 = vxor.u32 %v4840, 2147483648
        %v4967 = vxor.u32 %v4843, 2147483648
        %v4968 = vxor.u32 %v4848, 2147483648
        %v4969 = vxor.u32 %v4851, 2147483648
        %v4970 = vxor.u32 %v4856, 2147483648
        %v4971 = vxor.u32 %v4859, 2147483648
        %v4972 = vxor.u32 %v4864, 2147483648
        %v4973 = vxor.u32 %v4867, 2147483648
        %v4974 = vxor.u32 %v4872, 2147483648
        %v4975 = vxor.u32 %v4875, 2147483648
        %v4976 = vxor.u32 %v4880, 2147483648
        %v4977 = vxor.u32 %v4883, 2147483648
        %v4978 = vxor.u32 %v4888, 2147483648
        %v4979 = vxor.u32 %v4891, 2147483648
        %v4980 = vxor.u32 %v4896, 2147483648
        %v4981 = vxor.u32 %v4899, 2147483648
        %v4982 = vxor.u32 %v4904, 2147483648
        %v4983 = vxor.u32 %v4907, 2147483648
        %v4984 = vxor.u32 %v4912, 2147483648
        %v4985 = vxor.u32 %v4915, 2147483648
        %v4986 = vxor.u32 %v4920, 2147483648
        %v4987 = vxor.u32 %v4923, 2147483648
        %v4988 = vxor.u32 %v4928, 2147483648
        %v4989 = vxor.u32 %v4931, 2147483648
        %v4990 = vxor.u32 %v4936, 2147483648
        %v4991 = vxor.u32 %v4939, 2147483648
        %v4992 = vxor.u32 %v4944, 2147483648
        %v4993 = vxor.u32 %v4947, 2147483648
        %v4994 = vxor.u32 %v4952, 2147483648
        %v4995 = vxor.u32 %v4955, 2147483648
        %v4996 = vxor.u32 %v4960, 2147483648
        %v4997 = vxor.u32 %v4963, 2147483648
        %v4998 = vmul.f32 %v4966, 1.442695
        %v4999 = vpow.pop %v4998
        %v5000 = vmul.f32 %v4967, 1.442695
        %v5001 = vpow.pop %v5000
        %v5002 = vmul.f32 %v4968, 1.442695
        %v5003 = vpow.pop %v5002
        %v5004 = vmul.f32 %v4969, 1.442695
        %v5005 = vpow.pop %v5004
        %v5006 = vmul.f32 %v4970, 1.442695
        %v5007 = vpow.pop %v5006
        %v5008 = vmul.f32 %v4971, 1.442695
        %v5009 = vpow.pop %v5008
        %v5010 = vmul.f32 %v4972, 1.442695
        %v5011 = vpow.pop %v5010
        %v5012 = vmul.f32 %v4973, 1.442695
        %v5013 = vpow.pop %v5012
        %v5014 = vmul.f32 %v4974, 1.442695
        %v5015 = vpow.pop %v5014
        %v5016 = vmul.f32 %v4975, 1.442695
        %v5017 = vpow.pop %v5016
        %v5018 = vmul.f32 %v4976, 1.442695
        %v5019 = vpow.pop %v5018
        %v5020 = vmul.f32 %v4977, 1.442695
        %v5021 = vpow.pop %v5020
        %v5022 = vmul.f32 %v4978, 1.442695
        %v5023 = vpow.pop %v5022
        %v5024 = vmul.f32 %v4979, 1.442695
        %v5025 = vpow.pop %v5024
        %v5026 = vmul.f32 %v4980, 1.442695
        %v5027 = vpow.pop %v5026
        %v5028 = vmul.f32 %v4981, 1.442695
        %v5029 = vpow.pop %v5028
        %v5030 = vmul.f32 %v4982, 1.442695
        %v5031 = vpow.pop %v5030
        %v5032 = vmul.f32 %v4983, 1.442695
        %v5033 = vpow.pop %v5032
        %v5034 = vmul.f32 %v4984, 1.442695
        %v5035 = vpow.pop %v5034
        %v5036 = vmul.f32 %v4985, 1.442695
        %v5037 = vpow.pop %v5036
        %v5038 = vmul.f32 %v4986, 1.442695
        %v5039 = vpow.pop %v5038
        %v5040 = vmul.f32 %v4987, 1.442695
        %v5041 = vpow.pop %v5040
        %v5042 = vmul.f32 %v4988, 1.442695
        %v5043 = vpow.pop %v5042
        %v5044 = vmul.f32 %v4989, 1.442695
        %v5045 = vpow.pop %v5044
        %v5046 = vmul.f32 %v4990, 1.442695
        %v5047 = vpow.pop %v5046
        %v5048 = vmul.f32 %v4991, 1.442695
        %v5049 = vpow.pop %v5048
        %v5050 = vmul.f32 %v4992, 1.442695
        %v5051 = vpow.pop %v5050
        %v5052 = vmul.f32 %v4993, 1.442695
        %v5053 = vpow.pop %v5052
        %v5054 = vmul.f32 %v4994, 1.442695
        %v5055 = vpow.pop %v5054
        %v5056 = vmul.f32 %v4995, 1.442695
        %v5057 = vpow.pop %v5056
        %v5058 = vmul.f32 %v4996, 1.442695
        %v5059 = vpow.pop %v5058
        %v5060 = vmul.f32 %v4997, 1.442695
        %v5061 = vpow.pop %v5060
        %v5062 = vadd.f32 %v4999, 1.0
        %v5063 = vadd.f32 %v5001, 1.0
        %v5064 = vadd.f32 %v5003, 1.0
        %v5065 = vadd.f32 %v5005, 1.0
        %v5066 = vadd.f32 %v5007, 1.0
        %v5067 = vadd.f32 %v5009, 1.0
        %v5068 = vadd.f32 %v5011, 1.0
        %v5069 = vadd.f32 %v5013, 1.0
        %v5070 = vadd.f32 %v5015, 1.0
        %v5071 = vadd.f32 %v5017, 1.0
        %v5072 = vadd.f32 %v5019, 1.0
        %v5073 = vadd.f32 %v5021, 1.0
        %v5074 = vadd.f32 %v5023, 1.0
        %v5075 = vadd.f32 %v5025, 1.0
        %v5076 = vadd.f32 %v5027, 1.0
        %v5077 = vadd.f32 %v5029, 1.0
        %v5078 = vadd.f32 %v5031, 1.0
        %v5079 = vadd.f32 %v5033, 1.0
        %v5080 = vadd.f32 %v5035, 1.0
        %v5081 = vadd.f32 %v5037, 1.0
        %v5082 = vadd.f32 %v5039, 1.0
        %v5083 = vadd.f32 %v5041, 1.0
        %v5084 = vadd.f32 %v5043, 1.0
        %v5085 = vadd.f32 %v5045, 1.0
        %v5086 = vadd.f32 %v5047, 1.0
        %v5087 = vadd.f32 %v5049, 1.0
        %v5088 = vadd.f32 %v5051, 1.0
        %v5089 = vadd.f32 %v5053, 1.0
        %v5090 = vadd.f32 %v5055, 1.0
        %v5091 = vadd.f32 %v5057, 1.0
        %v5092 = vadd.f32 %v5059, 1.0
        %v5093 = vadd.f32 %v5061, 1.0
        %v5094 = vrcp.pop %v5062
        %v5095 = vmul.f32 1.0, %v5094
        %v5096 = vrcp.pop %v5063
        %v5097 = vmul.f32 1.0, %v5096
        %v5098 = vrcp.pop %v5064
        %v5099 = vmul.f32 1.0, %v5098
        %v5100 = vrcp.pop %v5065
        %v5101 = vmul.f32 1.0, %v5100
        %v5102 = vrcp.pop %v5066
        %v5103 = vmul.f32 1.0, %v5102
        %v5104 = vrcp.pop %v5067
        %v5105 = vmul.f32 1.0, %v5104
        %v5106 = vrcp.pop %v5068
        %v5107 = vmul.f32 1.0, %v5106
        %v5108 = vrcp.pop %v5069
        %v5109 = vmul.f32 1.0, %v5108
        %v5110 = vrcp.pop %v5070
        %v5111 = vmul.f32 1.0, %v5110
        %v5112 = vrcp.pop %v5071
        %v5113 = vmul.f32 1.0, %v5112
        %v5114 = vrcp.pop %v5072
        %v5115 = vmul.f32 1.0, %v5114
        %v5116 = vrcp.pop %v5073
        %v5117 = vmul.f32 1.0, %v5116
        %v5118 = vrcp.pop %v5074
        %v5119 = vmul.f32 1.0, %v5118
        %v5120 = vrcp.pop %v5075
        %v5121 = vmul.f32 1.0, %v5120
        %v5122 = vrcp.pop %v5076
        %v5123 = vmul.f32 1.0, %v5122
        %v5124 = vrcp.pop %v5077
        %v5125 = vmul.f32 1.0, %v5124
        %v5126 = vrcp.pop %v5078
        %v5127 = vmul.f32 1.0, %v5126
        %v5128 = vrcp.pop %v5079
        %v5129 = vmul.f32 1.0, %v5128
        %v5130 = vrcp.pop %v5080
        %v5131 = vmul.f32 1.0, %v5130
        %v5132 = vrcp.pop %v5081
        %v5133 = vmul.f32 1.0, %v5132
        %v5134 = vrcp.pop %v5082
        %v5135 = vmul.f32 1.0, %v5134
        %v5136 = vrcp.pop %v5083
        %v5137 = vmul.f32 1.0, %v5136
        %v5138 = vrcp.pop %v5084
        %v5139 = vmul.f32 1.0, %v5138
        %v5140 = vrcp.pop %v5085
        %v5141 = vmul.f32 1.0, %v5140
        %v5142 = vrcp.pop %v5086
        %v5143 = vmul.f32 1.0, %v5142
        %v5144 = vrcp.pop %v5087
        %v5145 = vmul.f32 1.0, %v5144
        %v5146 = vrcp.pop %v5088
        %v5147 = vmul.f32 1.0, %v5146
        %v5148 = vrcp.pop %v5089
        %v5149 = vmul.f32 1.0, %v5148
        %v5150 = vrcp.pop %v5090
        %v5151 = vmul.f32 1.0, %v5150
        %v5152 = vrcp.pop %v5091
        %v5153 = vmul.f32 1.0, %v5152
        %v5154 = vrcp.pop %v5092
        %v5155 = vmul.f32 1.0, %v5154
        %v5156 = vrcp.pop %v5093
        %v5157 = vmul.f32 1.0, %v5156
        %v5158 = vmul.f32 %v4840, %v5095
        %v5159 = vmul.f32 %v4843, %v5097
        %v5160 = vmul.f32 %v4848, %v5099
        %v5161 = vmul.f32 %v4851, %v5101
        %v5162 = vmul.f32 %v4856, %v5103
        %v5163 = vmul.f32 %v4859, %v5105
        %v5164 = vmul.f32 %v4864, %v5107
        %v5165 = vmul.f32 %v4867, %v5109
        %v5166 = vmul.f32 %v4872, %v5111
        %v5167 = vmul.f32 %v4875, %v5113
        %v5168 = vmul.f32 %v4880, %v5115
        %v5169 = vmul.f32 %v4883, %v5117
        %v5170 = vmul.f32 %v4888, %v5119
        %v5171 = vmul.f32 %v4891, %v5121
        %v5172 = vmul.f32 %v4896, %v5123
        %v5173 = vmul.f32 %v4899, %v5125
        %v5174 = vmul.f32 %v4904, %v5127
        %v5175 = vmul.f32 %v4907, %v5129
        %v5176 = vmul.f32 %v4912, %v5131
        %v5177 = vmul.f32 %v4915, %v5133
        %v5178 = vmul.f32 %v4920, %v5135
        %v5179 = vmul.f32 %v4923, %v5137
        %v5180 = vmul.f32 %v4928, %v5139
        %v5181 = vmul.f32 %v4931, %v5141
        %v5182 = vmul.f32 %v4936, %v5143
        %v5183 = vmul.f32 %v4939, %v5145
        %v5184 = vmul.f32 %v4944, %v5147
        %v5185 = vmul.f32 %v4947, %v5149
        %v5186 = vmul.f32 %v4952, %v5151
        %v5187 = vmul.f32 %v4955, %v5153
        %v5188 = vmul.f32 %v4960, %v5155
        %v5189 = vmul.f32 %v4963, %v5157
        %v5190 = vpack.c.bf16 %v5159, %v5158
        %v5191 = vpack.c.bf16 %v5161, %v5160
        %v5192 = vpack.c.bf16 %v5163, %v5162
        %v5193 = vpack.c.bf16 %v5165, %v5164
        %v5194 = vpack.c.bf16 %v5167, %v5166
        %v5195 = vpack.c.bf16 %v5169, %v5168
        %v5196 = vpack.c.bf16 %v5171, %v5170
        %v5197 = vpack.c.bf16 %v5173, %v5172
        %v5198 = vpack.c.bf16 %v5175, %v5174
        %v5199 = vpack.c.bf16 %v5177, %v5176
        %v5200 = vpack.c.bf16 %v5179, %v5178
        %v5201 = vpack.c.bf16 %v5181, %v5180
        %v5202 = vpack.c.bf16 %v5183, %v5182
        %v5203 = vpack.c.bf16 %v5185, %v5184
        %v5204 = vpack.c.bf16 %v5187, %v5186
        %v5205 = vpack.c.bf16 %v5189, %v5188
        %v5222 = vunpack.c.l.b16 %v5190
        %v5223 = vunpack.c.h.b16 %v5190
        %v5224 = vunpack.c.l.b16 %v5191
        %v5225 = vunpack.c.h.b16 %v5191
        %v5226 = vunpack.c.l.b16 %v5192
        %v5227 = vunpack.c.h.b16 %v5192
        %v5228 = vunpack.c.l.b16 %v5193
        %v5229 = vunpack.c.h.b16 %v5193
        %v5230 = vunpack.c.l.b16 %v5194
        %v5231 = vunpack.c.h.b16 %v5194
        %v5232 = vunpack.c.l.b16 %v5195
        %v5233 = vunpack.c.h.b16 %v5195
        %v5234 = vunpack.c.l.b16 %v5196
        %v5235 = vunpack.c.h.b16 %v5196
        %v5236 = vunpack.c.l.b16 %v5197
        %v5237 = vunpack.c.h.b16 %v5197
        %v5238 = vunpack.c.l.b16 %v5198
        %v5239 = vunpack.c.h.b16 %v5198
        %v5240 = vunpack.c.l.b16 %v5199
        %v5241 = vunpack.c.h.b16 %v5199
        %v5242 = vunpack.c.l.b16 %v5200
        %v5243 = vunpack.c.h.b16 %v5200
        %v5244 = vunpack.c.l.b16 %v5201
        %v5245 = vunpack.c.h.b16 %v5201
        %v5246 = vunpack.c.l.b16 %v5202
        %v5247 = vunpack.c.h.b16 %v5202
        %v5248 = vunpack.c.l.b16 %v5203
        %v5249 = vunpack.c.h.b16 %v5203
        %v5250 = vunpack.c.l.b16 %v5204
        %v5251 = vunpack.c.h.b16 %v5204
        %v5252 = vunpack.c.l.b16 %v5205
        %v5253 = vunpack.c.h.b16 %v5205
        %v5254 = vpack.c.b16 %v5222, %v5222
        %v5255 = vpack.c.b16 %v5223, %v5223
        %v5256 = vpack.c.b16 %v5224, %v5224
        %v5257 = vpack.c.b16 %v5225, %v5225
        %v5258 = vpack.c.b16 %v5226, %v5226
        %v5259 = vpack.c.b16 %v5227, %v5227
        %v5260 = vpack.c.b16 %v5228, %v5228
        %v5261 = vpack.c.b16 %v5229, %v5229
        %v5262 = vpack.c.b16 %v5230, %v5230
        %v5263 = vpack.c.b16 %v5231, %v5231
        %v5264 = vpack.c.b16 %v5232, %v5232
        %v5265 = vpack.c.b16 %v5233, %v5233
        %v5266 = vpack.c.b16 %v5234, %v5234
        %v5267 = vpack.c.b16 %v5235, %v5235
        %v5268 = vpack.c.b16 %v5236, %v5236
        %v5269 = vpack.c.b16 %v5237, %v5237
        %v5270 = vpack.c.b16 %v5238, %v5238
        %v5271 = vpack.c.b16 %v5239, %v5239
        %v5272 = vpack.c.b16 %v5240, %v5240
        %v5273 = vpack.c.b16 %v5241, %v5241
        %v5274 = vpack.c.b16 %v5242, %v5242
        %v5275 = vpack.c.b16 %v5243, %v5243
        %v5276 = vpack.c.b16 %v5244, %v5244
        %v5277 = vpack.c.b16 %v5245, %v5245
        %v5278 = vpack.c.b16 %v5246, %v5246
        %v5279 = vpack.c.b16 %v5247, %v5247
        %v5280 = vpack.c.b16 %v5248, %v5248
        %v5281 = vpack.c.b16 %v5249, %v5249
        %v5282 = vpack.c.b16 %v5250, %v5250
        %v5283 = vpack.c.b16 %v5251, %v5251
        %v5284 = vpack.c.b16 %v5252, %v5252
        %v5285 = vpack.c.b16 %v5253, %v5253
        %5318 = vst [vmem:[%s1024] sm:$0xf] %v5254
        %5319 = vst [vmem:[%s1024 + $0x4] sm:$0xf] %v5255
        %5320 = vst [vmem:[%s1024 + $0x8] sm:$0xf] %v5256
        %5321 = vst [vmem:[%s1024 + $0xc] sm:$0xf] %v5257
        %5322 = vst [vmem:[%s1024 + $0x10] sm:$0xf] %v5258
        %5323 = vst [vmem:[%s1024 + $0x14] sm:$0xf] %v5259
        %5324 = vst [vmem:[%s1024 + $0x18] sm:$0xf] %v5260
        %5325 = vst [vmem:[%s1024 + $0x1c] sm:$0xf] %v5261
        %5326 = vst [vmem:[%s1024 + $0x20] sm:$0xf] %v5262
        %5327 = vst [vmem:[%s1024 + $0x24] sm:$0xf] %v5263
        %5328 = vst [vmem:[%s1024 + $0x28] sm:$0xf] %v5264
        %5329 = vst [vmem:[%s1024 + $0x2c] sm:$0xf] %v5265
        %5330 = vst [vmem:[%s1024 + $0x30] sm:$0xf] %v5266
        %5331 = vst [vmem:[%s1024 + $0x34] sm:$0xf] %v5267
        %5332 = vst [vmem:[%s1024 + $0x38] sm:$0xf] %v5268
        %5333 = vst [vmem:[%s1024 + $0x3c] sm:$0xf] %v5269
        %5334 = vst [vmem:[%s1024 + $0x40] sm:$0xf] %v5270
        %5335 = vst [vmem:[%s1024 + $0x44] sm:$0xf] %v5271
        %5336 = vst [vmem:[%s1024 + $0x48] sm:$0xf] %v5272
        %5337 = vst [vmem:[%s1024 + $0x4c] sm:$0xf] %v5273
        %5338 = vst [vmem:[%s1024 + $0x50] sm:$0xf] %v5274
        %5339 = vst [vmem:[%s1024 + $0x54] sm:$0xf] %v5275
        %5340 = vst [vmem:[%s1024 + $0x58] sm:$0xf] %v5276
        %5341 = vst [vmem:[%s1024 + $0x5c] sm:$0xf] %v5277
        %5342 = vst [vmem:[%s1024 + $0x60] sm:$0xf] %v5278
        %5343 = vst [vmem:[%s1024 + $0x64] sm:$0xf] %v5279
        %5344 = vst [vmem:[%s1024 + $0x68] sm:$0xf] %v5280
        %5345 = vst [vmem:[%s1024 + $0x6c] sm:$0xf] %v5281
        %5346 = vst [vmem:[%s1024 + $0x70] sm:$0xf] %v5282
        %5347 = vst [vmem:[%s1024 + $0x74] sm:$0xf] %v5283
        %5348 = vst [vmem:[%s1024 + $0x78] sm:$0xf] %v5284
        %5349 = vst [vmem:[%s1024 + $0x7c] sm:$0xf] %v5285
        %p5350 = scmp.lt.s32.totalorder %s14, 1
        %s5351 = scalar_select %p5350, %s14, 1
        %s5352 = smul.addr %s5351, 32
        %s5353 = smul.addr %s5352, 4
        %s5354 = scalar_lea.vmem %s3, %s5353
        // Predicated region
        $region74: #{efficientnet_haralick_forward.3} parent=68 // pred_check
          %p5355 = pneg %p100
        $region75: #{efficientnet_haralick_forward.3} parent=68 // pred_check_branch
          %5357 = sbr.rel (%p5355) target = $region77
        $region76: #{efficientnet_haralick_forward.3} parent=68 // pred_region
          _
        $region77: #{efficientnet_haralick_forward.3} parent=68 // pred_fallthru
          _
      $region69: #{efficientnet_haralick_forward.3} parent=5 // pred_fallthru
        _
      %p5358 = scmp.le.s32.totalorder 2, %s9
      // Predicated region
      $region78: #{efficientnet_haralick_forward.3} parent=5 // pred_check
        %p5359 = pneg %p5358
      $region79: #{efficientnet_haralick_forward.3} parent=5 // pred_check_branch
        %5361 = sbr.rel (%p5359) target = $region81
      $region80: #{efficientnet_haralick_forward.3} parent=5 // pred_region
        %s5362 = ssub.s32 %s9, 2
        // Predicated region
        $region82: #{efficientnet_haralick_forward.3} parent=80 // pred_check
          %p5363 = pneg %p106
        $region83: #{efficientnet_haralick_forward.3} parent=80 // pred_check_branch
          %5365 = sbr.rel (%p5363) target = $region85
        $region84: #{efficientnet_haralick_forward.3} parent=80 // pred_region
          %p5366 = scmp.lt.s32.totalorder %s15, 1
          %s5367 = scalar_select %p5366, %s15, 1
          %s5368 = smul.addr %s5367, 32
          %s5369 = smul.addr %s5368, 4
          %s5370 = scalar_lea.vmem %s3, %s5369
        $region85: #{efficientnet_haralick_forward.3} parent=80 // pred_fallthru
          _
      $region81: #{efficientnet_haralick_forward.3} parent=5 // pred_fallthru
        _
    $region6: #{efficientnet_haralick_forward.3} parent=1 // loop_footer
      %s13 = sadd.s32 1, %s9
    $region7: #{efficientnet_haralick_forward.3} parent=1 // loop_footer_branch
      %8 = sbr.rel target = $region3
    $region8: #{efficientnet_haralick_forward.3} parent=1 // loop_exit
      _

// kernel: efficientnet_haralick_forward.5
$region0: #{efficientnet_haralick_forward.5}
  #allocation0 [shape = 'u32[]', space=smem, size = 0x4, offset = 0x4, fixed_abs, tag = 'smem constant byte address 0x4 - core index']
  #allocation1 [shape = 'u32[144,128]{1,0:T(1,128)}', space=vmem, size = 0x12000, scoped, tag = 'internal scratch']
  %s0 = inlined_call_operand.vmem [shape: bf16[2,64,128], index: 0, kind: input, shape index: {}]
  %s1 = inlined_call_operand.vmem [shape: f32[2,1,18], index: 1, kind: input, shape index: {}]
  %s2 = inlined_call_operand.vmem [shape: bf16[128,1280], index: 2, kind: input, shape index: {}]
  %s3 = inlined_call_operand.vmem [shape: f32[1,1280], index: 3, kind: input, shape index: {}]
  %s4 = inlined_call_operand.vmem [shape: bf16[1280,128], index: 4, kind: input, shape index: {}]
  %s5 = inlined_call_operand.vmem [shape: f32[1,128], index: 5, kind: input, shape index: {}]
  %s6 = inlined_call_operand.vmem [shape: bf16[128,64], index: 6, kind: input, shape index: {}]
  %s7 = inlined_call_operand.vmem [shape: bf16[18,64], index: 7, kind: input, shape index: {}]
  %s8 = inlined_call_operand.vmem [shape: f32[1,64], index: 8, kind: input, shape index: {}]
  %s9 = inlined_call_operand.vmem [shape: bf16[64,2], index: 9, kind: input, shape index: {}]
  %s10 = inlined_call_operand.vmem [shape: f32[1,2], index: 10, kind: input, shape index: {}]
  %s11 = inlined_call_operand.hbm [shape: f32[2,1,2], index: 11, kind: output, shape index: {}]
  %s12 = sld [smem:[#allocation0]]
  $region77: #{efficientnet_haralick_forward.5} parent=0
    _
  %s14 = ssub.s32 1, %s12
  %s15 = scalar_select 0, %s14, %s12
  $region1: #{efficientnet_haralick_forward.5} parent=0
    #allocation2 [shape = 'u8[1024]{0}', space=vmem, size = 0x400, scoped, tag = 'output window, operand 0']
    #allocation3 [shape = 's32[2]{0}', space=sflag, size = 0x8, scoped, tag = 'scoped memory for efficientnet_haralick_forward.5']
    %16 = vsyncpa [#allocation3], 0
    %s17 = scalar_lea.sflag [#allocation3], 1
    %18 = vsyncpa %s17, 0
    loop: start=0, step=1, limit=4
    $region2: #{efficientnet_haralick_forward.5} parent=1 // loop_pre_header
      _
    $region3: #{efficientnet_haralick_forward.5} parent=1 // loop_header
      %s20 = sphi 0, %s24
      %p21 = scmp.ge.s32.totalorder %s20, 4
      %s30 = sphi 0, %s32
      %s33 = sphi 0, %s30
      %s34 = sphi 0, %s33
      %s50 = sphi 0, %s34
      %s56 = sphi 0, %s58
      %s59 = sphi 0, %s56
      %s60 = sphi 0, %s59
      %s76 = sphi 0, %s60
      %s80 = sphi 0, %s80
      %s82 = sphi 0, %s80
      %s83 = sphi 0, %s82
      %s97 = sphi 0, %s83
      %s101 = sphi 0, %s101
      %s103 = sphi 0, %s101
      %s104 = sphi 0, %s103
      %s118 = sphi 0, %s104
      %s122 = sphi 0, %s122
      %s124 = sphi 0, %s122
      %s125 = sphi 0, %s124
      %s139 = sphi 0, %s125
      %s143 = sphi 0, %s143
      %s145 = sphi 0, %s143
      %s146 = sphi 0, %s145
      %s160 = sphi 0, %s146
      %s164 = sphi 0, %s164
      %s166 = sphi 0, %s164
      %s167 = sphi 0, %s166
      %s181 = sphi 0, %s167
      %s185 = sphi 0, %s185
      %s187 = sphi 0, %s185
      %s188 = sphi 0, %s187
      %s202 = sphi 0, %s188
      %s206 = sphi 0, %s206
      %s208 = sphi 0, %s206
      %s209 = sphi 0, %s208
      %s223 = sphi 0, %s209
      %s227 = sphi 0, %s227
      %s229 = sphi 0, %s227
      %s230 = sphi 0, %s229
      %s244 = sphi 0, %s230
      %s248 = sphi 0, %s248
      %s250 = sphi 0, %s248
      %s251 = sphi 0, %s250
      %s265 = sphi 0, %s251
      %s271 = sphi 0, %s273
      %s274 = sphi 0, %s271
      %s275 = sphi 0, %s274
      %s291 = sphi 0, %s275
    $region4: #{efficientnet_haralick_forward.5} parent=1 // loop_header_branch
      %23 = sbr.rel (%p21) target = $region8
    $region5: #{efficientnet_haralick_forward.5} parent=1 // loop_body
      %s25 = ssub.s32 %s20, 1
      %s26 = ssub.s32 %s20, 2
      %s27 = sadd.s32 %s20, 1
      %s28 = ssub.s32 %s20, %s27
      %p29 = scmp.eq.s32.totalorder %s28, 0
      %s31 = sadd.s32 %s30, 1
      %s32 = scalar_select %p29, %s30, %s31
      %p35 = pneg %p29
      %p36 = scmp.eq.s32.totalorder %s20, 1
      %p37 = por %p35, %p36
      %p38 = scmp.ne.s32.totalorder %s30, %s33
      %p39 = scmp.eq.s32.totalorder %s20, 0
      %p40 = por %p38, %p39
      %p41 = scmp.ne.s32.totalorder %s30, %s33
      %p42 = scmp.eq.s32.totalorder %s25, 1
      %p43 = por %p41, %p42
      %p44 = scmp.ne.s32.totalorder %s33, %s34
      %p45 = scmp.eq.s32.totalorder %s25, 0
      %p46 = por %p44, %p45
      %p47 = scmp.ne.s32.totalorder %s33, %s34
      %p48 = scmp.eq.s32.totalorder %s26, 1
      %p49 = por %p47, %p48
      %p51 = scmp.ne.s32.totalorder %s34, %s50
      %p52 = scmp.eq.s32.totalorder %s26, 0
      %p53 = por %p51, %p52
      %s54 = ssub.s32 %s20, %s27
      %p55 = scmp.eq.s32.totalorder %s54, 0
      %s57 = sadd.s32 %s56, 1
      %s58 = scalar_select %p55, %s56, %s57
      %p61 = pneg %p55
      %p62 = scmp.eq.s32.totalorder %s20, 1
      %p63 = por %p61, %p62
      %p64 = scmp.ne.s32.totalorder %s56, %s59
      %p65 = scmp.eq.s32.totalorder %s20, 0
      %p66 = por %p64, %p65
      %p67 = scmp.ne.s32.totalorder %s56, %s59
      %p68 = scmp.eq.s32.totalorder %s25, 1
      %p69 = por %p67, %p68
      %p70 = scmp.ne.s32.totalorder %s59, %s60
      %p71 = scmp.eq.s32.totalorder %s25, 0
      %p72 = por %p70, %p71
      %p73 = scmp.ne.s32.totalorder %s59, %s60
      %p74 = scmp.eq.s32.totalorder %s26, 1
      %p75 = por %p73, %p74
      %p77 = scmp.ne.s32.totalorder %s60, %s76
      %p78 = scmp.eq.s32.totalorder %s26, 0
      %p79 = por %p77, %p78
      %s81 = sadd.s32 %s80, 1
      %p84 = scmp.eq.s32.totalorder %s20, 1
      %p85 = scmp.ne.s32.totalorder %s80, %s82
      %p86 = scmp.eq.s32.totalorder %s20, 0
      %p87 = por %p85, %p86
      %p88 = scmp.ne.s32.totalorder %s80, %s82
      %p89 = scmp.eq.s32.totalorder %s25, 1
      %p90 = por %p88, %p89
      %p91 = scmp.ne.s32.totalorder %s82, %s83
      %p92 = scmp.eq.s32.totalorder %s25, 0
      %p93 = por %p91, %p92
      %p94 = scmp.ne.s32.totalorder %s82, %s83
      %p95 = scmp.eq.s32.totalorder %s26, 1
      %p96 = por %p94, %p95
      %p98 = scmp.ne.s32.totalorder %s83, %s97
      %p99 = scmp.eq.s32.totalorder %s26, 0
      %p100 = por %p98, %p99
      %s102 = sadd.s32 %s101, 1
      %p105 = scmp.eq.s32.totalorder %s20, 1
      %p106 = scmp.ne.s32.totalorder %s101, %s103
      %p107 = scmp.eq.s32.totalorder %s20, 0
      %p108 = por %p106, %p107
      %p109 = scmp.ne.s32.totalorder %s101, %s103
      %p110 = scmp.eq.s32.totalorder %s25, 1
      %p111 = por %p109, %p110
      %p112 = scmp.ne.s32.totalorder %s103, %s104
      %p113 = scmp.eq.s32.totalorder %s25, 0
      %p114 = por %p112, %p113
      %p115 = scmp.ne.s32.totalorder %s103, %s104
      %p116 = scmp.eq.s32.totalorder %s26, 1
      %p117 = por %p115, %p116
      %p119 = scmp.ne.s32.totalorder %s104, %s118
      %p120 = scmp.eq.s32.totalorder %s26, 0
      %p121 = por %p119, %p120
      %s123 = sadd.s32 %s122, 1
      %p126 = scmp.eq.s32.totalorder %s20, 1
      %p127 = scmp.ne.s32.totalorder %s122, %s124
      %p128 = scmp.eq.s32.totalorder %s20, 0
      %p129 = por %p127, %p128
      %p130 = scmp.ne.s32.totalorder %s122, %s124
      %p131 = scmp.eq.s32.totalorder %s25, 1
      %p132 = por %p130, %p131
      %p133 = scmp.ne.s32.totalorder %s124, %s125
      %p134 = scmp.eq.s32.totalorder %s25, 0
      %p135 = por %p133, %p134
      %p136 = scmp.ne.s32.totalorder %s124, %s125
      %p137 = scmp.eq.s32.totalorder %s26, 1
      %p138 = por %p136, %p137
      %p140 = scmp.ne.s32.totalorder %s125, %s139
      %p141 = scmp.eq.s32.totalorder %s26, 0
      %p142 = por %p140, %p141
      %s144 = sadd.s32 %s143, 1
      %p147 = scmp.eq.s32.totalorder %s20, 1
      %p148 = scmp.ne.s32.totalorder %s143, %s145
      %p149 = scmp.eq.s32.totalorder %s20, 0
      %p150 = por %p148, %p149
      %p151 = scmp.ne.s32.totalorder %s143, %s145
      %p152 = scmp.eq.s32.totalorder %s25, 1
      %p153 = por %p151, %p152
      %p154 = scmp.ne.s32.totalorder %s145, %s146
      %p155 = scmp.eq.s32.totalorder %s25, 0
      %p156 = por %p154, %p155
      %p157 = scmp.ne.s32.totalorder %s145, %s146
      %p158 = scmp.eq.s32.totalorder %s26, 1
      %p159 = por %p157, %p158
      %p161 = scmp.ne.s32.totalorder %s146, %s160
      %p162 = scmp.eq.s32.totalorder %s26, 0
      %p163 = por %p161, %p162
      %s165 = sadd.s32 %s164, 1
      %p168 = scmp.eq.s32.totalorder %s20, 1
      %p169 = scmp.ne.s32.totalorder %s164, %s166
      %p170 = scmp.eq.s32.totalorder %s20, 0
      %p171 = por %p169, %p170
      %p172 = scmp.ne.s32.totalorder %s164, %s166
      %p173 = scmp.eq.s32.totalorder %s25, 1
      %p174 = por %p172, %p173
      %p175 = scmp.ne.s32.totalorder %s166, %s167
      %p176 = scmp.eq.s32.totalorder %s25, 0
      %p177 = por %p175, %p176
      %p178 = scmp.ne.s32.totalorder %s166, %s167
      %p179 = scmp.eq.s32.totalorder %s26, 1
      %p180 = por %p178, %p179
      %p182 = scmp.ne.s32.totalorder %s167, %s181
      %p183 = scmp.eq.s32.totalorder %s26, 0
      %p184 = por %p182, %p183
      %s186 = sadd.s32 %s185, 1
      %p189 = scmp.eq.s32.totalorder %s20, 1
      %p190 = scmp.ne.s32.totalorder %s185, %s187
      %p191 = scmp.eq.s32.totalorder %s20, 0
      %p192 = por %p190, %p191
      %p193 = scmp.ne.s32.totalorder %s185, %s187
      %p194 = scmp.eq.s32.totalorder %s25, 1
      %p195 = por %p193, %p194
      %p196 = scmp.ne.s32.totalorder %s187, %s188
      %p197 = scmp.eq.s32.totalorder %s25, 0
      %p198 = por %p196, %p197
      %p199 = scmp.ne.s32.totalorder %s187, %s188
      %p200 = scmp.eq.s32.totalorder %s26, 1
      %p201 = por %p199, %p200
      %p203 = scmp.ne.s32.totalorder %s188, %s202
      %p204 = scmp.eq.s32.totalorder %s26, 0
      %p205 = por %p203, %p204
      %s207 = sadd.s32 %s206, 1
      %p210 = scmp.eq.s32.totalorder %s20, 1
      %p211 = scmp.ne.s32.totalorder %s206, %s208
      %p212 = scmp.eq.s32.totalorder %s20, 0
      %p213 = por %p211, %p212
      %p214 = scmp.ne.s32.totalorder %s206, %s208
      %p215 = scmp.eq.s32.totalorder %s25, 1
      %p216 = por %p214, %p215
      %p217 = scmp.ne.s32.totalorder %s208, %s209
      %p218 = scmp.eq.s32.totalorder %s25, 0
      %p219 = por %p217, %p218
      %p220 = scmp.ne.s32.totalorder %s208, %s209
      %p221 = scmp.eq.s32.totalorder %s26, 1
      %p222 = por %p220, %p221
      %p224 = scmp.ne.s32.totalorder %s209, %s223
      %p225 = scmp.eq.s32.totalorder %s26, 0
      %p226 = por %p224, %p225
      %s228 = sadd.s32 %s227, 1
      %p231 = scmp.eq.s32.totalorder %s20, 1
      %p232 = scmp.ne.s32.totalorder %s227, %s229
      %p233 = scmp.eq.s32.totalorder %s20, 0
      %p234 = por %p232, %p233
      %p235 = scmp.ne.s32.totalorder %s227, %s229
      %p236 = scmp.eq.s32.totalorder %s25, 1
      %p237 = por %p235, %p236
      %p238 = scmp.ne.s32.totalorder %s229, %s230
      %p239 = scmp.eq.s32.totalorder %s25, 0
      %p240 = por %p238, %p239
      %p241 = scmp.ne.s32.totalorder %s229, %s230
      %p242 = scmp.eq.s32.totalorder %s26, 1
      %p243 = por %p241, %p242
      %p245 = scmp.ne.s32.totalorder %s230, %s244
      %p246 = scmp.eq.s32.totalorder %s26, 0
      %p247 = por %p245, %p246
      %s249 = sadd.s32 %s248, 1
      %p252 = scmp.eq.s32.totalorder %s20, 1
      %p253 = scmp.ne.s32.totalorder %s248, %s250
      %p254 = scmp.eq.s32.totalorder %s20, 0
      %p255 = por %p253, %p254
      %p256 = scmp.ne.s32.totalorder %s248, %s250
      %p257 = scmp.eq.s32.totalorder %s25, 1
      %p258 = por %p256, %p257
      %p259 = scmp.ne.s32.totalorder %s250, %s251
      %p260 = scmp.eq.s32.totalorder %s25, 0
      %p261 = por %p259, %p260
      %p262 = scmp.ne.s32.totalorder %s250, %s251
      %p263 = scmp.eq.s32.totalorder %s26, 1
      %p264 = por %p262, %p263
      %p266 = scmp.ne.s32.totalorder %s251, %s265
      %p267 = scmp.eq.s32.totalorder %s26, 0
      %p268 = por %p266, %p267
      %s269 = ssub.s32 %s20, %s27
      %p270 = scmp.eq.s32.totalorder %s269, 0
      %s272 = sadd.s32 %s271, 1
      %s273 = scalar_select %p270, %s271, %s272
      %p276 = pneg %p270
      %p277 = scmp.eq.s32.totalorder %s20, 1
      %p278 = por %p276, %p277
      %p279 = scmp.ne.s32.totalorder %s271, %s274
      %p280 = scmp.eq.s32.totalorder %s20, 0
      %p281 = por %p279, %p280
      %p282 = scmp.ne.s32.totalorder %s271, %s274
      %p283 = scmp.eq.s32.totalorder %s25, 1
      %p284 = por %p282, %p283
      %p285 = scmp.ne.s32.totalorder %s274, %s275
      %p286 = scmp.eq.s32.totalorder %s25, 0
      %p287 = por %p285, %p286
      %p288 = scmp.ne.s32.totalorder %s274, %s275
      %p289 = scmp.eq.s32.totalorder %s26, 1
      %p290 = por %p288, %p289
      %p292 = scmp.ne.s32.totalorder %s275, %s291
      %p293 = scmp.eq.s32.totalorder %s26, 0
      %p294 = por %p292, %p293
      %p295 = scmp.le.s32.totalorder 1, %s20
      %p296 = scmp.lt.s32.totalorder %s20, 3
      %p297 = pnand %p295, %p296
      %p298 = pneg %p297
      // Predicated region
      $region9: #{efficientnet_haralick_forward.5} parent=5 // pred_check
        _
      $region10: #{efficientnet_haralick_forward.5} parent=5 // pred_check_branch
        %300 = sbr.rel (%p297) target = $region12
      $region11: #{efficientnet_haralick_forward.5} parent=5 // pred_region
        %s301 = ssub.s32 %s20, 1
        // Predicated region
        $region13: #{efficientnet_haralick_forward.5} parent=11 // pred_check
          %p302 = pneg %p93
        $region14: #{efficientnet_haralick_forward.5} parent=11 // pred_check_branch
          %304 = sbr.rel (%p302) target = $region16
        $region15: #{efficientnet_haralick_forward.5} parent=11 // pred_region
          _
        $region16: #{efficientnet_haralick_forward.5} parent=11 // pred_fallthru
          _
        // Predicated region
        $region17: #{efficientnet_haralick_forward.5} parent=11 // pred_check
          %p305 = pneg %p114
        $region18: #{efficientnet_haralick_forward.5} parent=11 // pred_check_branch
          %307 = sbr.rel (%p305) target = $region20
        $region19: #{efficientnet_haralick_forward.5} parent=11 // pred_region
          _
        $region20: #{efficientnet_haralick_forward.5} parent=11 // pred_fallthru
          _
        // Predicated region
        $region21: #{efficientnet_haralick_forward.5} parent=11 // pred_check
          %p308 = pneg %p135
        $region22: #{efficientnet_haralick_forward.5} parent=11 // pred_check_branch
          %310 = sbr.rel (%p308) target = $region24
        $region23: #{efficientnet_haralick_forward.5} parent=11 // pred_region
          _
        $region24: #{efficientnet_haralick_forward.5} parent=11 // pred_fallthru
          _
        // Predicated region
        $region25: #{efficientnet_haralick_forward.5} parent=11 // pred_check
          %p311 = pneg %p156
        $region26: #{efficientnet_haralick_forward.5} parent=11 // pred_check_branch
          %313 = sbr.rel (%p311) target = $region28
        $region27: #{efficientnet_haralick_forward.5} parent=11 // pred_region
          _
        $region28: #{efficientnet_haralick_forward.5} parent=11 // pred_fallthru
          _
        // Predicated region
        $region29: #{efficientnet_haralick_forward.5} parent=11 // pred_check
          %p314 = pneg %p177
        $region30: #{efficientnet_haralick_forward.5} parent=11 // pred_check_branch
          %316 = sbr.rel (%p314) target = $region32
        $region31: #{efficientnet_haralick_forward.5} parent=11 // pred_region
          _
        $region32: #{efficientnet_haralick_forward.5} parent=11 // pred_fallthru
          _
        // Predicated region
        $region33: #{efficientnet_haralick_forward.5} parent=11 // pred_check
          %p317 = pneg %p198
        $region34: #{efficientnet_haralick_forward.5} parent=11 // pred_check_branch
          %319 = sbr.rel (%p317) target = $region36
        $region35: #{efficientnet_haralick_forward.5} parent=11 // pred_region
          _
        $region36: #{efficientnet_haralick_forward.5} parent=11 // pred_fallthru
          _
        // Predicated region
        $region37: #{efficientnet_haralick_forward.5} parent=11 // pred_check
          %p320 = pneg %p219
        $region38: #{efficientnet_haralick_forward.5} parent=11 // pred_check_branch
          %322 = sbr.rel (%p320) target = $region40
        $region39: #{efficientnet_haralick_forward.5} parent=11 // pred_region
          _
        $region40: #{efficientnet_haralick_forward.5} parent=11 // pred_fallthru
          _
        // Predicated region
        $region41: #{efficientnet_haralick_forward.5} parent=11 // pred_check
          %p323 = pneg %p240
        $region42: #{efficientnet_haralick_forward.5} parent=11 // pred_check_branch
          %325 = sbr.rel (%p323) target = $region44
        $region43: #{efficientnet_haralick_forward.5} parent=11 // pred_region
          _
        $region44: #{efficientnet_haralick_forward.5} parent=11 // pred_fallthru
          _
        // Predicated region
        $region45: #{efficientnet_haralick_forward.5} parent=11 // pred_check
          %p326 = pneg %p261
        $region46: #{efficientnet_haralick_forward.5} parent=11 // pred_check_branch
          %328 = sbr.rel (%p326) target = $region48
        $region47: #{efficientnet_haralick_forward.5} parent=11 // pred_region
          _
        $region48: #{efficientnet_haralick_forward.5} parent=11 // pred_fallthru
          _
      $region12: #{efficientnet_haralick_forward.5} parent=5 // pred_fallthru
        _
      %p329 = scmp.lt.s32.totalorder %s20, 2
      // Predicated region
      $region49: #{efficientnet_haralick_forward.5} parent=5 // pred_check
        %p330 = pneg %p329
      $region50: #{efficientnet_haralick_forward.5} parent=5 // pred_check_branch
        %332 = sbr.rel (%p330) target = $region52
      $region51: #{efficientnet_haralick_forward.5} parent=5 // pred_region
        // Predicated region
        $region53: #{efficientnet_haralick_forward.5} parent=51 // pred_check
          %p333 = pneg %p40
        $region54: #{efficientnet_haralick_forward.5} parent=51 // pred_check_branch
          %335 = sbr.rel (%p333) target = $region56
        $region55: #{efficientnet_haralick_forward.5} parent=51 // pred_region
          %p336 = scmp.lt.s32.totalorder %s20, 1
          %s337 = scalar_select %p336, %s20, 1
          %s338 = smul.addr %s337, 8
          %s339 = smul.addr %s338, 4
          %s340 = scalar_lea.vmem %s0, %s339
        $region56: #{efficientnet_haralick_forward.5} parent=51 // pred_fallthru
          _
        // Predicated region
        $region57: #{efficientnet_haralick_forward.5} parent=51 // pred_check
          %p341 = pneg %p66
        $region58: #{efficientnet_haralick_forward.5} parent=51 // pred_check_branch
          %343 = sbr.rel (%p341) target = $region60
        $region59: #{efficientnet_haralick_forward.5} parent=51 // pred_region
          %p344 = scmp.lt.s32.totalorder %s20, 1
          %s345 = scalar_select %p344, %s20, 1
          %s346 = scalar_lea.vmem %s1, %s345
        $region60: #{efficientnet_haralick_forward.5} parent=51 // pred_fallthru
          _
      $region52: #{efficientnet_haralick_forward.5} parent=5 // pred_fallthru
        _
      %p347 = scmp.le.s32.totalorder 1, %s20
      %p348 = scmp.lt.s32.totalorder %s20, 3
      %p349 = pnand %p347, %p348
      %p350 = pneg %p349
      // Predicated region
      $region61: #{efficientnet_haralick_forward.5} parent=5 // pred_check
        _
      $region62: #{efficientnet_haralick_forward.5} parent=5 // pred_check_branch
        %352 = sbr.rel (%p349) target = $region64
      $region63: #{efficientnet_haralick_forward.5} parent=5 // pred_region
        %s353 = ssub.s32 %s20, 1
        %p354 = scmp.lt.s32.totalorder %s25, 1
        %s355 = scalar_select %p354, %s25, 1
        %s356 = smul.addr %s355, 8
        %s357 = smul.addr %s356, 4
        %s358 = scalar_lea.vmem %s0, %s357
        %p359 = pneg %p46
        %p360 = pneg %p43
        %p361 = scmp.lt.s32.totalorder %s25, 1
        %s362 = scalar_select %p361, %s25, 1
        %s363 = scalar_lea.vmem %s1, %s362
        %p364 = pneg %p72
        %p365 = pneg %p69
        %p366 = pneg %p93
        %p367 = pneg %p90
        %p368 = pneg %p114
        %p369 = pneg %p111
        %p370 = pneg %p135
        %p371 = pneg %p132
        %p372 = pneg %p156
        %p373 = pneg %p153
        %p374 = pneg %p177
        %p375 = pneg %p174
        %p376 = pneg %p198
        %p377 = pneg %p195
        %p378 = pneg %p219
        %p379 = pneg %p216
        %p380 = pneg %p240
        %p381 = pneg %p237
        %p382 = pneg %p261
        %p383 = pneg %p258
        %p384 = pneg %p287
        %p385 = pneg %p284
        %s386 = sand.u32 %s274, 1
        %s387 = scalar_lea.sflag [#allocation3], %s386
        %s388 = sand.u32 %s274, 1
        %s389 = scalar_lea.vmem [#allocation2], %s388
        %p390 = scmp.lt.s32.totalorder %s25, 1
        %s391 = scalar_select %p390, %s25, 1
        %s392 = smul.addr %s391, 8
        %s393 = smul.addr %s392, 4
        %s394 = scalar_lea.vmem %s0, %s393
        %p395 = scmp.lt.s32.totalorder %s25, 1
        %s396 = scalar_select %p395, %s25, 1
        %s397 = scalar_lea.vmem %s1, %s396
        %v399 = vld [vmem:[%s394] sm:$0xf]
        %v400 = vld [vmem:[%s394 + $0x4] sm:$0xf]
        %v401 = vld [vmem:[%s394 + $0x8] sm:$0xf]
        %v402 = vld [vmem:[%s394 + $0xc] sm:$0xf]
        %v403 = vld [vmem:[%s394 + $0x10] sm:$0xf]
        %v404 = vld [vmem:[%s394 + $0x14] sm:$0xf]
        %v405 = vld [vmem:[%s394 + $0x18] sm:$0xf]
        %v406 = vld [vmem:[%s394 + $0x1c] sm:$0xf]
        %v407 = vld [vmem:[%s2] sm:$0xff]
        %v408 = vld [vmem:[%s2 + $0x8] sm:$0xff]
        %v409 = vld [vmem:[%s2 + $0x10] sm:$0xff]
        %v410 = vld [vmem:[%s2 + $0x18] sm:$0xff]
        %v411 = vld [vmem:[%s2 + $0x20] sm:$0xff]
        %v412 = vld [vmem:[%s2 + $0x28] sm:$0xff]
        %v413 = vld [vmem:[%s2 + $0x30] sm:$0xff]
        %v414 = vld [vmem:[%s2 + $0x38] sm:$0xff]
        %v415 = vld [vmem:[%s2 + $0x40] sm:$0xff]
        %v416 = vld [vmem:[%s2 + $0x48] sm:$0xff]
        %v417 = vld [vmem:[%s2 + $0x50] sm:$0xff]
        %v418 = vld [vmem:[%s2 + $0x58] sm:$0xff]
        %v419 = vld [vmem:[%s2 + $0x60] sm:$0xff]
        %v420 = vld [vmem:[%s2 + $0x68] sm:$0xff]
        %v421 = vld [vmem:[%s2 + $0x70] sm:$0xff]
        %v422 = vld [vmem:[%s2 + $0x78] sm:$0xff]
        %v423 = vld [vmem:[%s2 + $0x80] sm:$0xff]
        %v424 = vld [vmem:[%s2 + $0x88] sm:$0xff]
        %v425 = vld [vmem:[%s2 + $0x90] sm:$0xff]
        %v426 = vld [vmem:[%s2 + $0x98] sm:$0xff]
        %v427 = vld [vmem:[%s2 + $0xa0] sm:$0xff]
        %v428 = vld [vmem:[%s2 + $0xa8] sm:$0xff]
        %v429 = vld [vmem:[%s2 + $0xb0] sm:$0xff]
        %v430 = vld [vmem:[%s2 + $0xb8] sm:$0xff]
        %v431 = vld [vmem:[%s2 + $0xc0] sm:$0xff]
        %v432 = vld [vmem:[%s2 + $0xc8] sm:$0xff]
        %v433 = vld [vmem:[%s2 + $0xd0] sm:$0xff]
        %v434 = vld [vmem:[%s2 + $0xd8] sm:$0xff]
        %v435 = vld [vmem:[%s2 + $0xe0] sm:$0xff]
        %v436 = vld [vmem:[%s2 + $0xe8] sm:$0xff]
        %v437 = vld [vmem:[%s2 + $0xf0] sm:$0xff]
        %v438 = vld [vmem:[%s2 + $0xf8] sm:$0xff]
        %v439 = vld [vmem:[%s2 + $0x100] sm:$0xff]
        %v440 = vld [vmem:[%s2 + $0x108] sm:$0xff]
        %v441 = vld [vmem:[%s2 + $0x110] sm:$0xff]
        %v442 = vld [vmem:[%s2 + $0x118] sm:$0xff]
        %v443 = vld [vmem:[%s2 + $0x120] sm:$0xff]
        %v444 = vld [vmem:[%s2 + $0x128] sm:$0xff]
        %v445 = vld [vmem:[%s2 + $0x130] sm:$0xff]
        %v446 = vld [vmem:[%s2 + $0x138] sm:$0xff]
        %v447 = vld [vmem:[%s2 + $0x140] sm:$0xff]
        %v448 = vld [vmem:[%s2 + $0x148] sm:$0xff]
        %v449 = vld [vmem:[%s2 + $0x150] sm:$0xff]
        %v450 = vld [vmem:[%s2 + $0x158] sm:$0xff]
        %v451 = vld [vmem:[%s2 + $0x160] sm:$0xff]
        %v452 = vld [vmem:[%s2 + $0x168] sm:$0xff]
        %v453 = vld [vmem:[%s2 + $0x170] sm:$0xff]
        %v454 = vld [vmem:[%s2 + $0x178] sm:$0xff]
        %v455 = vld [vmem:[%s2 + $0x180] sm:$0xff]
        %v456 = vld [vmem:[%s2 + $0x188] sm:$0xff]
        %v457 = vld [vmem:[%s2 + $0x190] sm:$0xff]
        %v458 = vld [vmem:[%s2 + $0x198] sm:$0xff]
        %v459 = vld [vmem:[%s2 + $0x1a0] sm:$0xff]
        %v460 = vld [vmem:[%s2 + $0x1a8] sm:$0xff]
        %v461 = vld [vmem:[%s2 + $0x1b0] sm:$0xff]
        %v462 = vld [vmem:[%s2 + $0x1b8] sm:$0xff]
        %v463 = vld [vmem:[%s2 + $0x1c0] sm:$0xff]
        %v464 = vld [vmem:[%s2 + $0x1c8] sm:$0xff]
        %v465 = vld [vmem:[%s2 + $0x1d0] sm:$0xff]
        %v466 = vld [vmem:[%s2 + $0x1d8] sm:$0xff]
        %v467 = vld [vmem:[%s2 + $0x1e0] sm:$0xff]
        %v468 = vld [vmem:[%s2 + $0x1e8] sm:$0xff]
        %v469 = vld [vmem:[%s2 + $0x1f0] sm:$0xff]
        %v470 = vld [vmem:[%s2 + $0x1f8] sm:$0xff]
        %v471 = vld [vmem:[%s2 + $0x200] sm:$0xff]
        %v472 = vld [vmem:[%s2 + $0x208] sm:$0xff]
        %v473 = vld [vmem:[%s2 + $0x210] sm:$0xff]
        %v474 = vld [vmem:[%s2 + $0x218] sm:$0xff]
        %v475 = vld [vmem:[%s2 + $0x220] sm:$0xff]
        %v476 = vld [vmem:[%s2 + $0x228] sm:$0xff]
        %v477 = vld [vmem:[%s2 + $0x230] sm:$0xff]
        %v478 = vld [vmem:[%s2 + $0x238] sm:$0xff]
        %v479 = vld [vmem:[%s2 + $0x240] sm:$0xff]
        %v480 = vld [vmem:[%s2 + $0x248] sm:$0xff]
        %v481 = vld [vmem:[%s2 + $0x250] sm:$0xff]
        %v482 = vld [vmem:[%s2 + $0x258] sm:$0xff]
        %v483 = vld [vmem:[%s2 + $0x260] sm:$0xff]
        %v484 = vld [vmem:[%s2 + $0x268] sm:$0xff]
        %v485 = vld [vmem:[%s2 + $0x270] sm:$0xff]
        %v486 = vld [vmem:[%s2 + $0x278] sm:$0xff]
        %v487 = vld [vmem:[%s3] sm:$0xff]
        %v488 = vld [vmem:[%s3 + $0x8] sm:$0x3]
        %v491 = vlaneseq
        %v492 = vshrl.u32 %v491, 7
        %v493 = vsub.s32 0, %v492
        %v494 = vrot.slane %v487, %v493
        %v495 = vlaneseq
        %v496 = vshrl.u32 %v495, 7
        %v497 = vsub.s32 1, %v496
        %v498 = vrot.slane %v487, %v497
        %v499 = vlaneseq
        %v500 = vshrl.u32 %v499, 7
        %v501 = vsub.s32 2, %v500
        %v502 = vrot.slane %v487, %v501
        %v503 = vlaneseq
        %v504 = vshrl.u32 %v503, 7
        %v505 = vsub.s32 3, %v504
        %v506 = vrot.slane %v487, %v505
        %v507 = vlaneseq
        %v508 = vshrl.u32 %v507, 7
        %v509 = vsub.s32 4, %v508
        %v510 = vrot.slane %v487, %v509
        %v511 = vlaneseq
        %v512 = vshrl.u32 %v511, 7
        %v513 = vsub.s32 5, %v512
        %v514 = vrot.slane %v487, %v513
        %v515 = vlaneseq
        %v516 = vshrl.u32 %v515, 7
        %v517 = vsub.s32 6, %v516
        %v518 = vrot.slane %v487, %v517
        %v519 = vlaneseq
        %v520 = vshrl.u32 %v519, 7
        %v521 = vsub.s32 7, %v520
        %v522 = vrot.slane %v487, %v521
        %v523 = vlaneseq
        %v524 = vshrl.u32 %v523, 7
        %v525 = vsub.s32 0, %v524
        %v526 = vrot.slane %v488, %v525
        %v527 = vlaneseq
        %v528 = vshrl.u32 %v527, 7
        %v529 = vsub.s32 1, %v528
        %v530 = vrot.slane %v488, %v529
        %v549 = vunpack.c.l.b16 %v399
        %v550 = vunpack.c.l.b16 %v400
        %v551 = vunpack.c.l.b16 %v401
        %v552 = vunpack.c.l.b16 %v402
        %v553 = vunpack.c.l.b16 %v403
        %v554 = vunpack.c.l.b16 %v404
        %v555 = vunpack.c.l.b16 %v405
        %v556 = vunpack.c.l.b16 %v406
        %v557 = vpack.c.b16 %v550, %v549
        %v558 = vpack.c.b16 %v552, %v551
        %v559 = vpack.c.b16 %v554, %v553
        %v560 = vpack.c.b16 %v556, %v555
        %v645 = vunpack.c.l.b16 %v407
        %v646 = vunpack.c.h.b16 %v407
        %v647 = vunpack.c.l.b16 %v408
        %v648 = vunpack.c.h.b16 %v408
        %v649 = vunpack.c.l.b16 %v409
        %v650 = vunpack.c.h.b16 %v409
        %v651 = vunpack.c.l.b16 %v410
        %v652 = vunpack.c.h.b16 %v410
        %v653 = vunpack.c.l.b16 %v411
        %v654 = vunpack.c.h.b16 %v411
        %v655 = vunpack.c.l.b16 %v412
        %v656 = vunpack.c.h.b16 %v412
        %v657 = vunpack.c.l.b16 %v413
        %v658 = vunpack.c.h.b16 %v413
        %v659 = vunpack.c.l.b16 %v414
        %v660 = vunpack.c.h.b16 %v414
        %v661 = vunpack.c.l.b16 %v415
        %v662 = vunpack.c.h.b16 %v415
        %v663 = vunpack.c.l.b16 %v416
        %v664 = vunpack.c.h.b16 %v416
        %v665 = vunpack.c.l.b16 %v417
        %v666 = vunpack.c.h.b16 %v417
        %v667 = vunpack.c.l.b16 %v418
        %v668 = vunpack.c.h.b16 %v418
        %v669 = vunpack.c.l.b16 %v419
        %v670 = vunpack.c.h.b16 %v419
        %v671 = vunpack.c.l.b16 %v420
        %v672 = vunpack.c.h.b16 %v420
        %v673 = vunpack.c.l.b16 %v421
        %v674 = vunpack.c.h.b16 %v421
        %v675 = vunpack.c.l.b16 %v422
        %v676 = vunpack.c.h.b16 %v422
        %v677 = vunpack.c.l.b16 %v423
        %v678 = vunpack.c.h.b16 %v423
        %v679 = vunpack.c.l.b16 %v424
        %v680 = vunpack.c.h.b16 %v424
        %v681 = vunpack.c.l.b16 %v425
        %v682 = vunpack.c.h.b16 %v425
        %v683 = vunpack.c.l.b16 %v426
        %v684 = vunpack.c.h.b16 %v426
        %v685 = vunpack.c.l.b16 %v427
        %v686 = vunpack.c.h.b16 %v427
        %v687 = vunpack.c.l.b16 %v428
        %v688 = vunpack.c.h.b16 %v428
        %v689 = vunpack.c.l.b16 %v429
        %v690 = vunpack.c.h.b16 %v429
        %v691 = vunpack.c.l.b16 %v430
        %v692 = vunpack.c.h.b16 %v430
        %v693 = vunpack.c.l.b16 %v431
        %v694 = vunpack.c.h.b16 %v431
        %v695 = vunpack.c.l.b16 %v432
        %v696 = vunpack.c.h.b16 %v432
        %v697 = vunpack.c.l.b16 %v433
        %v698 = vunpack.c.h.b16 %v433
        %v699 = vunpack.c.l.b16 %v434
        %v700 = vunpack.c.h.b16 %v434
        %v701 = vunpack.c.l.b16 %v435
        %v702 = vunpack.c.h.b16 %v435
        %v703 = vunpack.c.l.b16 %v436
        %v704 = vunpack.c.h.b16 %v436
        %v705 = vunpack.c.l.b16 %v437
        %v706 = vunpack.c.h.b16 %v437
        %v707 = vunpack.c.l.b16 %v438
        %v708 = vunpack.c.h.b16 %v438
        %v709 = vunpack.c.l.b16 %v439
        %v710 = vunpack.c.h.b16 %v439
        %v711 = vunpack.c.l.b16 %v440
        %v712 = vunpack.c.h.b16 %v440
        %v713 = vunpack.c.l.b16 %v441
        %v714 = vunpack.c.h.b16 %v441
        %v715 = vunpack.c.l.b16 %v442
        %v716 = vunpack.c.h.b16 %v442
        %v717 = vunpack.c.l.b16 %v443
        %v718 = vunpack.c.h.b16 %v443
        %v719 = vunpack.c.l.b16 %v444
        %v720 = vunpack.c.h.b16 %v444
        %v721 = vunpack.c.l.b16 %v445
        %v722 = vunpack.c.h.b16 %v445
        %v723 = vunpack.c.l.b16 %v446
        %v724 = vunpack.c.h.b16 %v446
        %v725 = vunpack.c.l.b16 %v447
        %v726 = vunpack.c.h.b16 %v447
        %v727 = vunpack.c.l.b16 %v448
        %v728 = vunpack.c.h.b16 %v448
        %v729 = vunpack.c.l.b16 %v449
        %v730 = vunpack.c.h.b16 %v449
        %v731 = vunpack.c.l.b16 %v450
        %v732 = vunpack.c.h.b16 %v450
        %v733 = vunpack.c.l.b16 %v451
        %v734 = vunpack.c.h.b16 %v451
        %v735 = vunpack.c.l.b16 %v452
        %v736 = vunpack.c.h.b16 %v452
        %v737 = vunpack.c.l.b16 %v453
        %v738 = vunpack.c.h.b16 %v453
        %v739 = vunpack.c.l.b16 %v454
        %v740 = vunpack.c.h.b16 %v454
        %v741 = vunpack.c.l.b16 %v455
        %v742 = vunpack.c.h.b16 %v455
        %v743 = vunpack.c.l.b16 %v456
        %v744 = vunpack.c.h.b16 %v456
        %v745 = vunpack.c.l.b16 %v457
        %v746 = vunpack.c.h.b16 %v457
        %v747 = vunpack.c.l.b16 %v458
        %v748 = vunpack.c.h.b16 %v458
        %v749 = vunpack.c.l.b16 %v459
        %v750 = vunpack.c.h.b16 %v459
        %v751 = vunpack.c.l.b16 %v460
        %v752 = vunpack.c.h.b16 %v460
        %v753 = vunpack.c.l.b16 %v461
        %v754 = vunpack.c.h.b16 %v461
        %v755 = vunpack.c.l.b16 %v462
        %v756 = vunpack.c.h.b16 %v462
        %v757 = vunpack.c.l.b16 %v463
        %v758 = vunpack.c.h.b16 %v463
        %v759 = vunpack.c.l.b16 %v464
        %v760 = vunpack.c.h.b16 %v464
        %v761 = vunpack.c.l.b16 %v465
        %v762 = vunpack.c.h.b16 %v465
        %v763 = vunpack.c.l.b16 %v466
        %v764 = vunpack.c.h.b16 %v466
        %v765 = vunpack.c.l.b16 %v467
        %v766 = vunpack.c.h.b16 %v467
        %v767 = vunpack.c.l.b16 %v468
        %v768 = vunpack.c.h.b16 %v468
        %v769 = vunpack.c.l.b16 %v469
        %v770 = vunpack.c.h.b16 %v469
        %v771 = vunpack.c.l.b16 %v470
        %v772 = vunpack.c.h.b16 %v470
        %v773 = vunpack.c.l.b16 %v471
        %v774 = vunpack.c.h.b16 %v471
        %v775 = vunpack.c.l.b16 %v472
        %v776 = vunpack.c.h.b16 %v472
        %v777 = vunpack.c.l.b16 %v473
        %v778 = vunpack.c.h.b16 %v473
        %v779 = vunpack.c.l.b16 %v474
        %v780 = vunpack.c.h.b16 %v474
        %v781 = vunpack.c.l.b16 %v475
        %v782 = vunpack.c.h.b16 %v475
        %v783 = vunpack.c.l.b16 %v476
        %v784 = vunpack.c.h.b16 %v476
        %v785 = vunpack.c.l.b16 %v477
        %v786 = vunpack.c.h.b16 %v477
        %v787 = vunpack.c.l.b16 %v478
        %v788 = vunpack.c.h.b16 %v478
        %v789 = vunpack.c.l.b16 %v479
        %v790 = vunpack.c.h.b16 %v479
        %v791 = vunpack.c.l.b16 %v480
        %v792 = vunpack.c.h.b16 %v480
        %v793 = vunpack.c.l.b16 %v481
        %v794 = vunpack.c.h.b16 %v481
        %v795 = vunpack.c.l.b16 %v482
        %v796 = vunpack.c.h.b16 %v482
        %v797 = vunpack.c.l.b16 %v483
        %v798 = vunpack.c.h.b16 %v483
        %v799 = vunpack.c.l.b16 %v484
        %v800 = vunpack.c.h.b16 %v484
        %v801 = vunpack.c.l.b16 %v485
        %v802 = vunpack.c.h.b16 %v485
        %v803 = vunpack.c.l.b16 %v486
        %v804 = vunpack.c.h.b16 %v486
        %v805 = vpack.c.b16 %v655, %v645
        %v806 = vpack.c.b16 %v656, %v646
        %v807 = vpack.c.b16 %v657, %v647
        %v808 = vpack.c.b16 %v658, %v648
        %v809 = vpack.c.b16 %v659, %v649
        %v810 = vpack.c.b16 %v660, %v650
        %v811 = vpack.c.b16 %v661, %v651
        %v812 = vpack.c.b16 %v662, %v652
        %v813 = vpack.c.b16 %v663, %v653
        %v814 = vpack.c.b16 %v664, %v654
        %v815 = vpack.c.b16 %v675, %v665
        %v816 = vpack.c.b16 %v676, %v666
        %v817 = vpack.c.b16 %v677, %v667
        %v818 = vpack.c.b16 %v678, %v668
        %v819 = vpack.c.b16 %v679, %v669
        %v820 = vpack.c.b16 %v680, %v670
        %v821 = vpack.c.b16 %v681, %v671
        %v822 = vpack.c.b16 %v682, %v672
        %v823 = vpack.c.b16 %v683, %v673
        %v824 = vpack.c.b16 %v684, %v674
        %v825 = vpack.c.b16 %v695, %v685
        %v826 = vpack.c.b16 %v696, %v686
        %v827 = vpack.c.b16 %v697, %v687
        %v828 = vpack.c.b16 %v698, %v688
        %v829 = vpack.c.b16 %v699, %v689
        %v830 = vpack.c.b16 %v700, %v690
        %v831 = vpack.c.b16 %v701, %v691
        %v832 = vpack.c.b16 %v702, %v692
        %v833 = vpack.c.b16 %v703, %v693
        %v834 = vpack.c.b16 %v704, %v694
        %v835 = vpack.c.b16 %v715, %v705
        %v836 = vpack.c.b16 %v716, %v706
        %v837 = vpack.c.b16 %v717, %v707
        %v838 = vpack.c.b16 %v718, %v708
        %v839 = vpack.c.b16 %v719, %v709
        %v840 = vpack.c.b16 %v720, %v710
        %v841 = vpack.c.b16 %v721, %v711
        %v842 = vpack.c.b16 %v722, %v712
        %v843 = vpack.c.b16 %v723, %v713
        %v844 = vpack.c.b16 %v724, %v714
        %v845 = vpack.c.b16 %v735, %v725
        %v846 = vpack.c.b16 %v736, %v726
        %v847 = vpack.c.b16 %v737, %v727
        %v848 = vpack.c.b16 %v738, %v728
        %v849 = vpack.c.b16 %v739, %v729
        %v850 = vpack.c.b16 %v740, %v730
        %v851 = vpack.c.b16 %v741, %v731
        %v852 = vpack.c.b16 %v742, %v732
        %v853 = vpack.c.b16 %v743, %v733
        %v854 = vpack.c.b16 %v744, %v734
        %v855 = vpack.c.b16 %v755, %v745
        %v856 = vpack.c.b16 %v756, %v746
        %v857 = vpack.c.b16 %v757, %v747
        %v858 = vpack.c.b16 %v758, %v748
        %v859 = vpack.c.b16 %v759, %v749
        %v860 = vpack.c.b16 %v760, %v750
        %v861 = vpack.c.b16 %v761, %v751
        %v862 = vpack.c.b16 %v762, %v752
        %v863 = vpack.c.b16 %v763, %v753
        %v864 = vpack.c.b16 %v764, %v754
        %v865 = vpack.c.b16 %v775, %v765
        %v866 = vpack.c.b16 %v776, %v766
        %v867 = vpack.c.b16 %v777, %v767
        %v868 = vpack.c.b16 %v778, %v768
        %v869 = vpack.c.b16 %v779, %v769
        %v870 = vpack.c.b16 %v780, %v770
        %v871 = vpack.c.b16 %v781, %v771
        %v872 = vpack.c.b16 %v782, %v772
        %v873 = vpack.c.b16 %v783, %v773
        %v874 = vpack.c.b16 %v784, %v774
        %v875 = vpack.c.b16 %v795, %v785
        %v876 = vpack.c.b16 %v796, %v786
        %v877 = vpack.c.b16 %v797, %v787
        %v878 = vpack.c.b16 %v798, %v788
        %v879 = vpack.c.b16 %v799, %v789
        %v880 = vpack.c.b16 %v800, %v790
        %v881 = vpack.c.b16 %v801, %v791
        %v882 = vpack.c.b16 %v802, %v792
        %v883 = vpack.c.b16 %v803, %v793
        %v884 = vpack.c.b16 %v804, %v794
        %965 = vmatprep.subr.bf16.mxu0 %v806
        %966 = vmatpush1.bf16.msra.mxu0 %v805
        %967 = vmatprep.subr.bf16.mxu0 %v816
        %968 = vmatpush1.bf16.msra.mxu0 %v815
        %969 = vmatprep.subr.bf16.mxu0 %v826
        %970 = vmatpush1.bf16.msra.mxu0 %v825
        %971 = vmatprep.subr.bf16.mxu0 %v836
        %972 = vmatpush1.bf16.msra.mxu0 %v835
        %973 = vmatprep.subr.bf16.mxu0 %v846
        %974 = vmatpush1.bf16.msra.mxu0 %v845
        %975 = vmatprep.subr.bf16.mxu0 %v856
        %976 = vmatpush1.bf16.msra.mxu0 %v855
        %977 = vmatprep.subr.bf16.mxu0 %v866
        %978 = vmatpush1.bf16.msra.mxu0 %v865
        %979 = vmatprep.subr.bf16.mxu0 %v876
        %980 = vmatpush1.bf16.msra.mxu0 %v875
        %981 = vmatprep.subr.bf16.mxu0 0
        %982 = vmatpush1.bf16.msra.mxu0 0
        %983 = vmatprep.subr.bf16.mxu0 0
        %984 = vmatpush1.bf16.msra.mxu0 0
        %985 = vmatprep.subr.bf16.mxu0 0
        %986 = vmatpush1.bf16.msra.mxu0 0
        %987 = vmatprep.subr.bf16.mxu0 0
        %988 = vmatpush1.bf16.msra.mxu0 0
        %989 = vmatprep.subr.bf16.mxu0 0
        %990 = vmatpush1.bf16.msra.mxu0 0
        %991 = vmatprep.subr.bf16.mxu0 0
        %992 = vmatpush1.bf16.msra.mxu0 0
        %993 = vmatprep.subr.bf16.mxu0 0
        %994 = vmatpush1.bf16.msra.mxu0 0
        %995 = vmatprep.subr.bf16.mxu0 0
        %996 = vmatpush1.bf16.msra.mxu0 0
        %997 = vmatprep.mubr.bf16.mxu0 0
        %998 = vmatmul.mubr.bf16.gmra.mrb[0].mxu0 %v557
        %v999 = vpop.f32.mrb[0].mxu0
        %v1000 = vadd.f32 %v494, %v999
        %v1001 = vpop.f32.mrb[0].mxu0
        %v1002 = vadd.f32 %v498, %v1001
        %v1003 = vpop.f32.mrb[0].mxu0
        %v1004 = vadd.f32 %v494, %v1003
        %v1005 = vpop.f32.mrb[0].mxu0
        %v1006 = vadd.f32 %v498, %v1005
        %1007 = vmatprep.mubr.bf16.mxu0 0
        %1008 = vmatmul.mubr.bf16.gmra.mrb[0].mxu0 %v558
        %v1009 = vpop.f32.mrb[0].mxu0
        %v1010 = vadd.f32 %v494, %v1009
        %v1011 = vpop.f32.mrb[0].mxu0
        %v1012 = vadd.f32 %v498, %v1011
        %v1013 = vpop.f32.mrb[0].mxu0
        %v1014 = vadd.f32 %v494, %v1013
        %v1015 = vpop.f32.mrb[0].mxu0
        %v1016 = vadd.f32 %v498, %v1015
        %1017 = vmatprep.mubr.bf16.mxu0 0
        %1018 = vmatmul.mubr.bf16.gmra.mrb[0].mxu0 %v559
        %v1019 = vpop.f32.mrb[0].mxu0
        %v1020 = vadd.f32 %v494, %v1019
        %v1021 = vpop.f32.mrb[0].mxu0
        %v1022 = vadd.f32 %v498, %v1021
        %v1023 = vpop.f32.mrb[0].mxu0
        %v1024 = vadd.f32 %v494, %v1023
        %v1025 = vpop.f32.mrb[0].mxu0
        %v1026 = vadd.f32 %v498, %v1025
        %1027 = vmatprep.mubr.bf16.mxu0 0
        %1028 = vmatmul.mubr.bf16.gmra.mrb[0].mxu0 %v560
        %v1029 = vpop.f32.mrb[0].mxu0
        %v1030 = vadd.f32 %v494, %v1029
        %v1031 = vpop.f32.mrb[0].mxu0
        %v1032 = vadd.f32 %v498, %v1031
        %v1033 = vpop.f32.mrb[0].mxu0
        %v1034 = vadd.f32 %v494, %v1033
        %v1035 = vpop.f32.mrb[0].mxu0
        %v1036 = vadd.f32 %v498, %v1035
        %1037 = vdwg.mxu0
        %1038 = vmatprep.subr.bf16.mxu0 %v808
        %1039 = vmatpush1.bf16.msra.mxu0 %v807
        %1040 = vmatprep.subr.bf16.mxu0 %v818
        %1041 = vmatpush1.bf16.msra.mxu0 %v817
        %1042 = vmatprep.subr.bf16.mxu0 %v828
        %1043 = vmatpush1.bf16.msra.mxu0 %v827
        %1044 = vmatprep.subr.bf16.mxu0 %v838
        %1045 = vmatpush1.bf16.msra.mxu0 %v837
        %1046 = vmatprep.subr.bf16.mxu0 %v848
        %1047 = vmatpush1.bf16.msra.mxu0 %v847
        %1048 = vmatprep.subr.bf16.mxu0 %v858
        %1049 = vmatpush1.bf16.msra.mxu0 %v857
        %1050 = vmatprep.subr.bf16.mxu0 %v868
        %1051 = vmatpush1.bf16.msra.mxu0 %v867
        %1052 = vmatprep.subr.bf16.mxu0 %v878
        %1053 = vmatpush1.bf16.msra.mxu0 %v877
        %1054 = vmatprep.subr.bf16.mxu0 0
        %1055 = vmatpush1.bf16.msra.mxu0 0
        %1056 = vmatprep.subr.bf16.mxu0 0
        %1057 = vmatpush1.bf16.msra.mxu0 0
        %1058 = vmatprep.subr.bf16.mxu0 0
        %1059 = vmatpush1.bf16.msra.mxu0 0
        %1060 = vmatprep.subr.bf16.mxu0 0
        %1061 = vmatpush1.bf16.msra.mxu0 0
        %1062 = vmatprep.subr.bf16.mxu0 0
        %1063 = vmatpush1.bf16.msra.mxu0 0
        %1064 = vmatprep.subr.bf16.mxu0 0
        %1065 = vmatpush1.bf16.msra.mxu0 0
        %1066 = vmatprep.subr.bf16.mxu0 0
        %1067 = vmatpush1.bf16.msra.mxu0 0
        %1068 = vmatprep.subr.bf16.mxu0 0
        %1069 = vmatpush1.bf16.msra.mxu0 0
        %1070 = vmatprep.mubr.bf16.mxu0 0
        %1071 = vmatmul.mubr.bf16.gmra.mrb[0].mxu0 %v557
        %v1072 = vpop.f32.mrb[0].mxu0
        %v1073 = vadd.f32 %v502, %v1072
        %v1074 = vpop.f32.mrb[0].mxu0
        %v1075 = vadd.f32 %v506, %v1074
        %v1076 = vpop.f32.mrb[0].mxu0
        %v1077 = vadd.f32 %v502, %v1076
        %v1078 = vpop.f32.mrb[0].mxu0
        %v1079 = vadd.f32 %v506, %v1078
        %1080 = vmatprep.mubr.bf16.mxu0 0
        %1081 = vmatmul.mubr.bf16.gmra.mrb[0].mxu0 %v558
        %v1082 = vpop.f32.mrb[0].mxu0
        %v1083 = vadd.f32 %v502, %v1082
        %v1084 = vpop.f32.mrb[0].mxu0
        %v1085 = vadd.f32 %v506, %v1084
        %v1086 = vpop.f32.mrb[0].mxu0
        %v1087 = vadd.f32 %v502, %v1086
        %v1088 = vpop.f32.mrb[0].mxu0
        %v1089 = vadd.f32 %v506, %v1088
        %1090 = vmatprep.mubr.bf16.mxu0 0
        %1091 = vmatmul.mubr.bf16.gmra.mrb[0].mxu0 %v559
        %v1092 = vpop.f32.mrb[0].mxu0
        %v1093 = vadd.f32 %v502, %v1092
        %v1094 = vpop.f32.mrb[0].mxu0
        %v1095 = vadd.f32 %v506, %v1094
        %v1096 = vpop.f32.mrb[0].mxu0
        %v1097 = vadd.f32 %v502, %v1096
        %v1098 = vpop.f32.mrb[0].mxu0
        %v1099 = vadd.f32 %v506, %v1098
        %1100 = vmatprep.mubr.bf16.mxu0 0
        %1101 = vmatmul.mubr.bf16.gmra.mrb[0].mxu0 %v560
        %v1102 = vpop.f32.mrb[0].mxu0
        %v1103 = vadd.f32 %v502, %v1102
        %v1104 = vpop.f32.mrb[0].mxu0
        %v1105 = vadd.f32 %v506, %v1104
        %v1106 = vpop.f32.mrb[0].mxu0
        %v1107 = vadd.f32 %v502, %v1106
        %v1108 = vpop.f32.mrb[0].mxu0
        %v1109 = vadd.f32 %v506, %v1108
        %1110 = vdwg.mxu0
        %1111 = vmatprep.subr.bf16.mxu0 %v810
        %1112 = vmatpush1.bf16.msra.mxu0 %v809
        %1113 = vmatprep.subr.bf16.mxu0 %v820
        %1114 = vmatpush1.bf16.msra.mxu0 %v819
        %1115 = vmatprep.subr.bf16.mxu0 %v830
        %1116 = vmatpush1.bf16.msra.mxu0 %v829
        %1117 = vmatprep.subr.bf16.mxu0 %v840
        %1118 = vmatpush1.bf16.msra.mxu0 %v839
        %1119 = vmatprep.subr.bf16.mxu0 %v850
        %1120 = vmatpush1.bf16.msra.mxu0 %v849
        %1121 = vmatprep.subr.bf16.mxu0 %v860
        %1122 = vmatpush1.bf16.msra.mxu0 %v859
        %1123 = vmatprep.subr.bf16.mxu0 %v870
        %1124 = vmatpush1.bf16.msra.mxu0 %v869
        %1125 = vmatprep.subr.bf16.mxu0 %v880
        %1126 = vmatpush1.bf16.msra.mxu0 %v879
        %1127 = vmatprep.subr.bf16.mxu0 0
        %1128 = vmatpush1.bf16.msra.mxu0 0
        %1129 = vmatprep.subr.bf16.mxu0 0
        %1130 = vmatpush1.bf16.msra.mxu0 0
        %1131 = vmatprep.subr.bf16.mxu0 0
        %1132 = vmatpush1.bf16.msra.mxu0 0
        %1133 = vmatprep.subr.bf16.mxu0 0
        %1134 = vmatpush1.bf16.msra.mxu0 0
        %1135 = vmatprep.subr.bf16.mxu0 0
        %1136 = vmatpush1.bf16.msra.mxu0 0
        %1137 = vmatprep.subr.bf16.mxu0 0
        %1138 = vmatpush1.bf16.msra.mxu0 0
        %1139 = vmatprep.subr.bf16.mxu0 0
        %1140 = vmatpush1.bf16.msra.mxu0 0
        %1141 = vmatprep.subr.bf16.mxu0 0
        %1142 = vmatpush1.bf16.msra.mxu0 0
        %1143 = vmatprep.mubr.bf16.mxu0 0
        %1144 = vmatmul.mubr.bf16.gmra.mrb[0].mxu0 %v557
        %v1145 = vpop.f32.mrb[0].mxu0
        %v1146 = vadd.f32 %v510, %v1145
        %v1147 = vpop.f32.mrb[0].mxu0
        %v1148 = vadd.f32 %v514, %v1147
        %v1149 = vpop.f32.mrb[0].mxu0
        %v1150 = vadd.f32 %v510, %v1149
        %v1151 = vpop.f32.mrb[0].mxu0
        %v1152 = vadd.f32 %v514, %v1151
        %1153 = vmatprep.mubr.bf16.mxu0 0
        %1154 = vmatmul.mubr.bf16.gmra.mrb[0].mxu0 %v558
        %v1155 = vpop.f32.mrb[0].mxu0
        %v1156 = vadd.f32 %v510, %v1155
        %v1157 = vpop.f32.mrb[0].mxu0
        %v1158 = vadd.f32 %v514, %v1157
        %v1159 = vpop.f32.mrb[0].mxu0
        %v1160 = vadd.f32 %v510, %v1159
        %v1161 = vpop.f32.mrb[0].mxu0
        %v1162 = vadd.f32 %v514, %v1161
        %1163 = vmatprep.mubr.bf16.mxu0 0
        %1164 = vmatmul.mubr.bf16.gmra.mrb[0].mxu0 %v559
        %v1165 = vpop.f32.mrb[0].mxu0
        %v1166 = vadd.f32 %v510, %v1165
        %v1167 = vpop.f32.mrb[0].mxu0
        %v1168 = vadd.f32 %v514, %v1167
        %v1169 = vpop.f32.mrb[0].mxu0
        %v1170 = vadd.f32 %v510, %v1169
        %v1171 = vpop.f32.mrb[0].mxu0
        %v1172 = vadd.f32 %v514, %v1171
        %1173 = vmatprep.mubr.bf16.mxu0 0
        %1174 = vmatmul.mubr.bf16.gmra.mrb[0].mxu0 %v560
        %v1175 = vpop.f32.mrb[0].mxu0
        %v1176 = vadd.f32 %v510, %v1175
        %v1177 = vpop.f32.mrb[0].mxu0
        %v1178 = vadd.f32 %v514, %v1177
        %v1179 = vpop.f32.mrb[0].mxu0
        %v1180 = vadd.f32 %v510, %v1179
        %v1181 = vpop.f32.mrb[0].mxu0
        %v1182 = vadd.f32 %v514, %v1181
        %1183 = vdwg.mxu0
        %1184 = vmatprep.subr.bf16.mxu0 %v812
        %1185 = vmatpush1.bf16.msra.mxu0 %v811
        %1186 = vmatprep.subr.bf16.mxu0 %v822
        %1187 = vmatpush1.bf16.msra.mxu0 %v821
        %1188 = vmatprep.subr.bf16.mxu0 %v832
        %1189 = vmatpush1.bf16.msra.mxu0 %v831
        %1190 = vmatprep.subr.bf16.mxu0 %v842
        %1191 = vmatpush1.bf16.msra.mxu0 %v841
        %1192 = vmatprep.subr.bf16.mxu0 %v852
        %1193 = vmatpush1.bf16.msra.mxu0 %v851
        %1194 = vmatprep.subr.bf16.mxu0 %v862
        %1195 = vmatpush1.bf16.msra.mxu0 %v861
        %1196 = vmatprep.subr.bf16.mxu0 %v872
        %1197 = vmatpush1.bf16.msra.mxu0 %v871
        %1198 = vmatprep.subr.bf16.mxu0 %v882
        %1199 = vmatpush1.bf16.msra.mxu0 %v881
        %1200 = vmatprep.subr.bf16.mxu0 0
        %1201 = vmatpush1.bf16.msra.mxu0 0
        %1202 = vmatprep.subr.bf16.mxu0 0
        %1203 = vmatpush1.bf16.msra.mxu0 0
        %1204 = vmatprep.subr.bf16.mxu0 0
        %1205 = vmatpush1.bf16.msra.mxu0 0
        %1206 = vmatprep.subr.bf16.mxu0 0
        %1207 = vmatpush1.bf16.msra.mxu0 0
        %1208 = vmatprep.subr.bf16.mxu0 0
        %1209 = vmatpush1.bf16.msra.mxu0 0
        %1210 = vmatprep.subr.bf16.mxu0 0
        %1211 = vmatpush1.bf16.msra.mxu0 0
        %1212 = vmatprep.subr.bf16.mxu0 0
        %1213 = vmatpush1.bf16.msra.mxu0 0
        %1214 = vmatprep.subr.bf16.mxu0 0
        %1215 = vmatpush1.bf16.msra.mxu0 0
        %1216 = vmatprep.mubr.bf16.mxu0 0
        %1217 = vmatmul.mubr.bf16.gmra.mrb[0].mxu0 %v557
        %v1218 = vpop.f32.mrb[0].mxu0
        %v1219 = vadd.f32 %v518, %v1218
        %v1220 = vpop.f32.mrb[0].mxu0
        %v1221 = vadd.f32 %v522, %v1220
        %v1222 = vpop.f32.mrb[0].mxu0
        %v1223 = vadd.f32 %v518, %v1222
        %v1224 = vpop.f32.mrb[0].mxu0
        %v1225 = vadd.f32 %v522, %v1224
        %1226 = vmatprep.mubr.bf16.mxu0 0
        %1227 = vmatmul.mubr.bf16.gmra.mrb[0].mxu0 %v558
        %v1228 = vpop.f32.mrb[0].mxu0
        %v1229 = vadd.f32 %v518, %v1228
        %v1230 = vpop.f32.mrb[0].mxu0
        %v1231 = vadd.f32 %v522, %v1230
        %v1232 = vpop.f32.mrb[0].mxu0
        %v1233 = vadd.f32 %v518, %v1232
        %v1234 = vpop.f32.mrb[0].mxu0
        %v1235 = vadd.f32 %v522, %v1234
        %1236 = vmatprep.mubr.bf16.mxu0 0
        %1237 = vmatmul.mubr.bf16.gmra.mrb[0].mxu0 %v559
        %v1238 = vpop.f32.mrb[0].mxu0
        %v1239 = vadd.f32 %v518, %v1238
        %v1240 = vpop.f32.mrb[0].mxu0
        %v1241 = vadd.f32 %v522, %v1240
        %v1242 = vpop.f32.mrb[0].mxu0
        %v1243 = vadd.f32 %v518, %v1242
        %v1244 = vpop.f32.mrb[0].mxu0
        %v1245 = vadd.f32 %v522, %v1244
        %1246 = vmatprep.mubr.bf16.mxu0 0
        %1247 = vmatmul.mubr.bf16.gmra.mrb[0].mxu0 %v560
        %v1248 = vpop.f32.mrb[0].mxu0
        %v1249 = vadd.f32 %v518, %v1248
        %v1250 = vpop.f32.mrb[0].mxu0
        %v1251 = vadd.f32 %v522, %v1250
        %v1252 = vpop.f32.mrb[0].mxu0
        %v1253 = vadd.f32 %v518, %v1252
        %v1254 = vpop.f32.mrb[0].mxu0
        %v1255 = vadd.f32 %v522, %v1254
        %1256 = vdwg.mxu0
        %1257 = vmatprep.subr.bf16.mxu0 %v814
        %1258 = vmatpush1.bf16.msra.mxu0 %v813
        %1259 = vmatprep.subr.bf16.mxu0 %v824
        %1260 = vmatpush1.bf16.msra.mxu0 %v823
        %1261 = vmatprep.subr.bf16.mxu0 %v834
        %1262 = vmatpush1.bf16.msra.mxu0 %v833
        %1263 = vmatprep.subr.bf16.mxu0 %v844
        %1264 = vmatpush1.bf16.msra.mxu0 %v843
        %1265 = vmatprep.subr.bf16.mxu0 %v854
        %1266 = vmatpush1.bf16.msra.mxu0 %v853
        %1267 = vmatprep.subr.bf16.mxu0 %v864
        %1268 = vmatpush1.bf16.msra.mxu0 %v863
        %1269 = vmatprep.subr.bf16.mxu0 %v874
        %1270 = vmatpush1.bf16.msra.mxu0 %v873
        %1271 = vmatprep.subr.bf16.mxu0 %v884
        %1272 = vmatpush1.bf16.msra.mxu0 %v883
        %1273 = vmatprep.subr.bf16.mxu0 0
        %1274 = vmatpush1.bf16.msra.mxu0 0
        %1275 = vmatprep.subr.bf16.mxu0 0
        %1276 = vmatpush1.bf16.msra.mxu0 0
        %1277 = vmatprep.subr.bf16.mxu0 0
        %1278 = vmatpush1.bf16.msra.mxu0 0
        %1279 = vmatprep.subr.bf16.mxu0 0
        %1280 = vmatpush1.bf16.msra.mxu0 0
        %1281 = vmatprep.subr.bf16.mxu0 0
        %1282 = vmatpush1.bf16.msra.mxu0 0
        %1283 = vmatprep.subr.bf16.mxu0 0
        %1284 = vmatpush1.bf16.msra.mxu0 0
        %1285 = vmatprep.subr.bf16.mxu0 0
        %1286 = vmatpush1.bf16.msra.mxu0 0
        %1287 = vmatprep.subr.bf16.mxu0 0
        %1288 = vmatpush1.bf16.msra.mxu0 0
        %1289 = vmatprep.mubr.bf16.mxu0 0
        %1290 = vmatmul.mubr.bf16.gmra.mrb[0].mxu0 %v557
        %v1291 = vpop.f32.mrb[0].mxu0
        %v1292 = vadd.f32 %v526, %v1291
        %v1293 = vpop.f32.mrb[0].mxu0
        %v1294 = vadd.f32 %v530, %v1293
        %v1295 = vpop.f32.mrb[0].mxu0
        %v1296 = vadd.f32 %v526, %v1295
        %v1297 = vpop.f32.mrb[0].mxu0
        %v1298 = vadd.f32 %v530, %v1297
        %1299 = vmatprep.mubr.bf16.mxu0 0
        %1300 = vmatmul.mubr.bf16.gmra.mrb[0].mxu0 %v558
        %v1301 = vpop.f32.mrb[0].mxu0
        %v1302 = vadd.f32 %v526, %v1301
        %v1303 = vpop.f32.mrb[0].mxu0
        %v1304 = vadd.f32 %v530, %v1303
        %v1305 = vpop.f32.mrb[0].mxu0
        %v1306 = vadd.f32 %v526, %v1305
        %v1307 = vpop.f32.mrb[0].mxu0
        %v1308 = vadd.f32 %v530, %v1307
        %1309 = vmatprep.mubr.bf16.mxu0 0
        %1310 = vmatmul.mubr.bf16.gmra.mrb[0].mxu0 %v559
        %v1311 = vpop.f32.mrb[0].mxu0
        %v1312 = vadd.f32 %v526, %v1311
        %v1313 = vpop.f32.mrb[0].mxu0
        %v1314 = vadd.f32 %v530, %v1313
        %v1315 = vpop.f32.mrb[0].mxu0
        %v1316 = vadd.f32 %v526, %v1315
        %v1317 = vpop.f32.mrb[0].mxu0
        %v1318 = vadd.f32 %v530, %v1317
        %1319 = vmatprep.mubr.bf16.mxu0 0
        %1320 = vmatmul.mubr.bf16.gmra.mrb[0].mxu0 %v560
        %v1321 = vpop.f32.mrb[0].mxu0
        %v1322 = vadd.f32 %v526, %v1321
        %v1323 = vpop.f32.mrb[0].mxu0
        %v1324 = vadd.f32 %v530, %v1323
        %v1325 = vpop.f32.mrb[0].mxu0
        %v1326 = vadd.f32 %v526, %v1325
        %v1327 = vpop.f32.mrb[0].mxu0
        %v1328 = vadd.f32 %v530, %v1327
        %1329 = vdwg.mxu0
        %v1330 = vxor.u32 %v1000, 2147483648
        %v1331 = vxor.u32 %v1002, 2147483648
        %v1332 = vxor.u32 %v1073, 2147483648
        %v1333 = vxor.u32 %v1075, 2147483648
        %v1334 = vxor.u32 %v1146, 2147483648
        %v1335 = vxor.u32 %v1148, 2147483648
        %v1336 = vxor.u32 %v1219, 2147483648
        %v1337 = vxor.u32 %v1221, 2147483648
        %v1338 = vxor.u32 %v1292, 2147483648
        %v1339 = vxor.u32 %v1294, 2147483648
        %v1340 = vxor.u32 %v1004, 2147483648
        %v1341 = vxor.u32 %v1006, 2147483648
        %v1342 = vxor.u32 %v1077, 2147483648
        %v1343 = vxor.u32 %v1079, 2147483648
        %v1344 = vxor.u32 %v1150, 2147483648
        %v1345 = vxor.u32 %v1152, 2147483648
        %v1346 = vxor.u32 %v1223, 2147483648
        %v1347 = vxor.u32 %v1225, 2147483648
        %v1348 = vxor.u32 %v1296, 2147483648
        %v1349 = vxor.u32 %v1298, 2147483648
        %v1350 = vxor.u32 %v1010, 2147483648
        %v1351 = vxor.u32 %v1012, 2147483648
        %v1352 = vxor.u32 %v1083, 2147483648
        %v1353 = vxor.u32 %v1085, 2147483648
        %v1354 = vxor.u32 %v1156, 2147483648
        %v1355 = vxor.u32 %v1158, 2147483648
        %v1356 = vxor.u32 %v1229, 2147483648
        %v1357 = vxor.u32 %v1231, 2147483648
        %v1358 = vxor.u32 %v1302, 2147483648
        %v1359 = vxor.u32 %v1304, 2147483648
        %v1360 = vxor.u32 %v1014, 2147483648
        %v1361 = vxor.u32 %v1016, 2147483648
        %v1362 = vxor.u32 %v1087, 2147483648
        %v1363 = vxor.u32 %v1089, 2147483648
        %v1364 = vxor.u32 %v1160, 2147483648
        %v1365 = vxor.u32 %v1162, 2147483648
        %v1366 = vxor.u32 %v1233, 2147483648
        %v1367 = vxor.u32 %v1235, 2147483648
        %v1368 = vxor.u32 %v1306, 2147483648
        %v1369 = vxor.u32 %v1308, 2147483648
        %v1370 = vxor.u32 %v1020, 2147483648
        %v1371 = vxor.u32 %v1022, 2147483648
        %v1372 = vxor.u32 %v1093, 2147483648
        %v1373 = vxor.u32 %v1095, 2147483648
        %v1374 = vxor.u32 %v1166, 2147483648
        %v1375 = vxor.u32 %v1168, 2147483648
        %v1376 = vxor.u32 %v1239, 2147483648
        %v1377 = vxor.u32 %v1241, 2147483648
        %v1378 = vxor.u32 %v1312, 2147483648
        %v1379 = vxor.u32 %v1314, 2147483648
        %v1380 = vxor.u32 %v1024, 2147483648
        %v1381 = vxor.u32 %v1026, 2147483648
        %v1382 = vxor.u32 %v1097, 2147483648
        %v1383 = vxor.u32 %v1099, 2147483648
        %v1384 = vxor.u32 %v1170, 2147483648
        %v1385 = vxor.u32 %v1172, 2147483648
        %v1386 = vxor.u32 %v1243, 2147483648
        %v1387 = vxor.u32 %v1245, 2147483648
        %v1388 = vxor.u32 %v1316, 2147483648
        %v1389 = vxor.u32 %v1318, 2147483648
        %v1390 = vxor.u32 %v1030, 2147483648
        %v1391 = vxor.u32 %v1032, 2147483648
        %v1392 = vxor.u32 %v1103, 2147483648
        %v1393 = vxor.u32 %v1105, 2147483648
        %v1394 = vxor.u32 %v1176, 2147483648
        %v1395 = vxor.u32 %v1178, 2147483648
        %v1396 = vxor.u32 %v1249, 2147483648
        %v1397 = vxor.u32 %v1251, 2147483648
        %v1398 = vxor.u32 %v1322, 2147483648
        %v1399 = vxor.u32 %v1324, 2147483648
        %v1400 = vxor.u32 %v1034, 2147483648
        %v1401 = vxor.u32 %v1036, 2147483648
        %v1402 = vxor.u32 %v1107, 2147483648
        %v1403 = vxor.u32 %v1109, 2147483648
        %v1404 = vxor.u32 %v1180, 2147483648
        %v1405 = vxor.u32 %v1182, 2147483648
        %v1406 = vxor.u32 %v1253, 2147483648
        %v1407 = vxor.u32 %v1255, 2147483648
        %v1408 = vxor.u32 %v1326, 2147483648
        %v1409 = vxor.u32 %v1328, 2147483648
        %v1410 = vmul.f32 %v1330, 1.442695
        %v1411 = vpow.pop %v1410
        %v1412 = vmul.f32 %v1331, 1.442695
        %v1413 = vpow.pop %v1412
        %v1414 = vmul.f32 %v1332, 1.442695
        %v1415 = vpow.pop %v1414
        %v1416 = vmul.f32 %v1333, 1.442695
        %v1417 = vpow.pop %v1416
        %v1418 = vmul.f32 %v1334, 1.442695
        %v1419 = vpow.pop %v1418
        %v1420 = vmul.f32 %v1335, 1.442695
        %v1421 = vpow.pop %v1420
        %v1422 = vmul.f32 %v1336, 1.442695
        %v1423 = vpow.pop %v1422
        %v1424 = vmul.f32 %v1337, 1.442695
        %v1425 = vpow.pop %v1424
        %v1426 = vmul.f32 %v1338, 1.442695
        %v1427 = vpow.pop %v1426
        %v1428 = vmul.f32 %v1339, 1.442695
        %v1429 = vpow.pop %v1428
        %v1430 = vmul.f32 %v1340, 1.442695
        %v1431 = vpow.pop %v1430
        %v1432 = vmul.f32 %v1341, 1.442695
        %v1433 = vpow.pop %v1432
        %v1434 = vmul.f32 %v1342, 1.442695
        %v1435 = vpow.pop %v1434
        %v1436 = vmul.f32 %v1343, 1.442695
        %v1437 = vpow.pop %v1436
        %v1438 = vmul.f32 %v1344, 1.442695
        %v1439 = vpow.pop %v1438
        %v1440 = vmul.f32 %v1345, 1.442695
        %v1441 = vpow.pop %v1440
        %v1442 = vmul.f32 %v1346, 1.442695
        %v1443 = vpow.pop %v1442
        %v1444 = vmul.f32 %v1347, 1.442695
        %v1445 = vpow.pop %v1444
        %v1446 = vmul.f32 %v1348, 1.442695
        %v1447 = vpow.pop %v1446
        %v1448 = vmul.f32 %v1349, 1.442695
        %v1449 = vpow.pop %v1448
        %v1450 = vmul.f32 %v1350, 1.442695
        %v1451 = vpow.pop %v1450
        %v1452 = vmul.f32 %v1351, 1.442695
        %v1453 = vpow.pop %v1452
        %v1454 = vmul.f32 %v1352, 1.442695
        %v1455 = vpow.pop %v1454
        %v1456 = vmul.f32 %v1353, 1.442695
        %v1457 = vpow.pop %v1456
        %v1458 = vmul.f32 %v1354, 1.442695
        %v1459 = vpow.pop %v1458
        %v1460 = vmul.f32 %v1355, 1.442695
        %v1461 = vpow.pop %v1460
        %v1462 = vmul.f32 %v1356, 1.442695
        %v1463 = vpow.pop %v1462
        %v1464 = vmul.f32 %v1357, 1.442695
        %v1465 = vpow.pop %v1464
        %v1466 = vmul.f32 %v1358, 1.442695
        %v1467 = vpow.pop %v1466
        %v1468 = vmul.f32 %v1359, 1.442695
        %v1469 = vpow.pop %v1468
        %v1470 = vmul.f32 %v1360, 1.442695
        %v1471 = vpow.pop %v1470
        %v1472 = vmul.f32 %v1361, 1.442695
        %v1473 = vpow.pop %v1472
        %v1474 = vmul.f32 %v1362, 1.442695
        %v1475 = vpow.pop %v1474
        %v1476 = vmul.f32 %v1363, 1.442695
        %v1477 = vpow.pop %v1476
        %v1478 = vmul.f32 %v1364, 1.442695
        %v1479 = vpow.pop %v1478
        %v1480 = vmul.f32 %v1365, 1.442695
        %v1481 = vpow.pop %v1480
        %v1482 = vmul.f32 %v1366, 1.442695
        %v1483 = vpow.pop %v1482
        %v1484 = vmul.f32 %v1367, 1.442695
        %v1485 = vpow.pop %v1484
        %v1486 = vmul.f32 %v1368, 1.442695
        %v1487 = vpow.pop %v1486
        %v1488 = vmul.f32 %v1369, 1.442695
        %v1489 = vpow.pop %v1488
        %v1490 = vmul.f32 %v1370, 1.442695
        %v1491 = vpow.pop %v1490
        %v1492 = vmul.f32 %v1371, 1.442695
        %v1493 = vpow.pop %v1492
        %v1494 = vmul.f32 %v1372, 1.442695
        %v1495 = vpow.pop %v1494
        %v1496 = vmul.f32 %v1373, 1.442695
        %v1497 = vpow.pop %v1496
        %v1498 = vmul.f32 %v1374, 1.442695
        %v1499 = vpow.pop %v1498
        %v1500 = vmul.f32 %v1375, 1.442695
        %v1501 = vpow.pop %v1500
        %v1502 = vmul.f32 %v1376, 1.442695
        %v1503 = vpow.pop %v1502
        %v1504 = vmul.f32 %v1377, 1.442695
        %v1505 = vpow.pop %v1504
        %v1506 = vmul.f32 %v1378, 1.442695
        %v1507 = vpow.pop %v1506
        %v1508 = vmul.f32 %v1379, 1.442695
        %v1509 = vpow.pop %v1508
        %v1510 = vmul.f32 %v1380, 1.442695
        %v1511 = vpow.pop %v1510
        %v1512 = vmul.f32 %v1381, 1.442695
        %v1513 = vpow.pop %v1512
        %v1514 = vmul.f32 %v1382, 1.442695
        %v1515 = vpow.pop %v1514
        %v1516 = vmul.f32 %v1383, 1.442695
        %v1517 = vpow.pop %v1516
        %v1518 = vmul.f32 %v1384, 1.442695
        %v1519 = vpow.pop %v1518
        %v1520 = vmul.f32 %v1385, 1.442695
        %v1521 = vpow.pop %v1520
        %v1522 = vmul.f32 %v1386, 1.442695
        %v1523 = vpow.pop %v1522
        %v1524 = vmul.f32 %v1387, 1.442695
        %v1525 = vpow.pop %v1524
        %v1526 = vmul.f32 %v1388, 1.442695
        %v1527 = vpow.pop %v1526
        %v1528 = vmul.f32 %v1389, 1.442695
        %v1529 = vpow.pop %v1528
        %v1530 = vmul.f32 %v1390, 1.442695
        %v1531 = vpow.pop %v1530
        %v1532 = vmul.f32 %v1391, 1.442695
        %v1533 = vpow.pop %v1532
        %v1534 = vmul.f32 %v1392, 1.442695
        %v1535 = vpow.pop %v1534
        %v1536 = vmul.f32 %v1393, 1.442695
        %v1537 = vpow.pop %v1536
        %v1538 = vmul.f32 %v1394, 1.442695
        %v1539 = vpow.pop %v1538
        %v1540 = vmul.f32 %v1395, 1.442695
        %v1541 = vpow.pop %v1540
        %v1542 = vmul.f32 %v1396, 1.442695
        %v1543 = vpow.pop %v1542
        %v1544 = vmul.f32 %v1397, 1.442695
        %v1545 = vpow.pop %v1544
        %v1546 = vmul.f32 %v1398, 1.442695
        %v1547 = vpow.pop %v1546
        %v1548 = vmul.f32 %v1399, 1.442695
        %v1549 = vpow.pop %v1548
        %v1550 = vmul.f32 %v1400, 1.442695
        %v1551 = vpow.pop %v1550
        %v1552 = vmul.f32 %v1401, 1.442695
        %v1553 = vpow.pop %v1552
        %v1554 = vmul.f32 %v1402, 1.442695
        %v1555 = vpow.pop %v1554
        %v1556 = vmul.f32 %v1403, 1.442695
        %v1557 = vpow.pop %v1556
        %v1558 = vmul.f32 %v1404, 1.442695
        %v1559 = vpow.pop %v1558
        %v1560 = vmul.f32 %v1405, 1.442695
        %v1561 = vpow.pop %v1560
        %v1562 = vmul.f32 %v1406, 1.442695
        %v1563 = vpow.pop %v1562
        %v1564 = vmul.f32 %v1407, 1.442695
        %v1565 = vpow.pop %v1564
        %v1566 = vmul.f32 %v1408, 1.442695
        %v1567 = vpow.pop %v1566
        %v1568 = vmul.f32 %v1409, 1.442695
        %v1569 = vpow.pop %v1568
        %v1570 = vadd.f32 %v1411, 1.0
        %v1571 = vadd.f32 %v1413, 1.0
        %v1572 = vadd.f32 %v1415, 1.0
        %v1573 = vadd.f32 %v1417, 1.0
        %v1574 = vadd.f32 %v1419, 1.0
        %v1575 = vadd.f32 %v1421, 1.0
        %v1576 = vadd.f32 %v1423, 1.0
        %v1577 = vadd.f32 %v1425, 1.0
        %v1578 = vadd.f32 %v1427, 1.0
        %v1579 = vadd.f32 %v1429, 1.0
        %v1580 = vadd.f32 %v1431, 1.0
        %v1581 = vadd.f32 %v1433, 1.0
        %v1582 = vadd.f32 %v1435, 1.0
        %v1583 = vadd.f32 %v1437, 1.0
        %v1584 = vadd.f32 %v1439, 1.0
        %v1585 = vadd.f32 %v1441, 1.0
        %v1586 = vadd.f32 %v1443, 1.0
        %v1587 = vadd.f32 %v1445, 1.0
        %v1588 = vadd.f32 %v1447, 1.0
        %v1589 = vadd.f32 %v1449, 1.0
        %v1590 = vadd.f32 %v1451, 1.0
        %v1591 = vadd.f32 %v1453, 1.0
        %v1592 = vadd.f32 %v1455, 1.0
        %v1593 = vadd.f32 %v1457, 1.0
        %v1594 = vadd.f32 %v1459, 1.0
        %v1595 = vadd.f32 %v1461, 1.0
        %v1596 = vadd.f32 %v1463, 1.0
        %v1597 = vadd.f32 %v1465, 1.0
        %v1598 = vadd.f32 %v1467, 1.0
        %v1599 = vadd.f32 %v1469, 1.0
        %v1600 = vadd.f32 %v1471, 1.0
        %v1601 = vadd.f32 %v1473, 1.0
        %v1602 = vadd.f32 %v1475, 1.0
        %v1603 = vadd.f32 %v1477, 1.0
        %v1604 = vadd.f32 %v1479, 1.0
        %v1605 = vadd.f32 %v1481, 1.0
        %v1606 = vadd.f32 %v1483, 1.0
        %v1607 = vadd.f32 %v1485, 1.0
        %v1608 = vadd.f32 %v1487, 1.0
        %v1609 = vadd.f32 %v1489, 1.0
        %v1610 = vadd.f32 %v1491, 1.0
        %v1611 = vadd.f32 %v1493, 1.0
        %v1612 = vadd.f32 %v1495, 1.0
        %v1613 = vadd.f32 %v1497, 1.0
        %v1614 = vadd.f32 %v1499, 1.0
        %v1615 = vadd.f32 %v1501, 1.0
        %v1616 = vadd.f32 %v1503, 1.0
        %v1617 = vadd.f32 %v1505, 1.0
        %v1618 = vadd.f32 %v1507, 1.0
        %v1619 = vadd.f32 %v1509, 1.0
        %v1620 = vadd.f32 %v1511, 1.0
        %v1621 = vadd.f32 %v1513, 1.0
        %v1622 = vadd.f32 %v1515, 1.0
        %v1623 = vadd.f32 %v1517, 1.0
        %v1624 = vadd.f32 %v1519, 1.0
        %v1625 = vadd.f32 %v1521, 1.0
        %v1626 = vadd.f32 %v1523, 1.0
        %v1627 = vadd.f32 %v1525, 1.0
        %v1628 = vadd.f32 %v1527, 1.0
        %v1629 = vadd.f32 %v1529, 1.0
        %v1630 = vadd.f32 %v1531, 1.0
        %v1631 = vadd.f32 %v1533, 1.0
        %v1632 = vadd.f32 %v1535, 1.0
        %v1633 = vadd.f32 %v1537, 1.0
        %v1634 = vadd.f32 %v1539, 1.0
        %v1635 = vadd.f32 %v1541, 1.0
        %v1636 = vadd.f32 %v1543, 1.0
        %v1637 = vadd.f32 %v1545, 1.0
        %v1638 = vadd.f32 %v1547, 1.0
        %v1639 = vadd.f32 %v1549, 1.0
        %v1640 = vadd.f32 %v1551, 1.0
        %v1641 = vadd.f32 %v1553, 1.0
        %v1642 = vadd.f32 %v1555, 1.0
        %v1643 = vadd.f32 %v1557, 1.0
        %v1644 = vadd.f32 %v1559, 1.0
        %v1645 = vadd.f32 %v1561, 1.0
        %v1646 = vadd.f32 %v1563, 1.0
        %v1647 = vadd.f32 %v1565, 1.0
        %v1648 = vadd.f32 %v1567, 1.0
        %v1649 = vadd.f32 %v1569, 1.0
        %v1650 = vrcp.pop %v1570
        %v1651 = vmul.f32 1.0, %v1650
        %v1652 = vrcp.pop %v1571
        %v1653 = vmul.f32 1.0, %v1652
        %v1654 = vrcp.pop %v1572
        %v1655 = vmul.f32 1.0, %v1654
        %v1656 = vrcp.pop %v1573
        %v1657 = vmul.f32 1.0, %v1656
        %v1658 = vrcp.pop %v1574
        %v1659 = vmul.f32 1.0, %v1658
        %v1660 = vrcp.pop %v1575
        %v1661 = vmul.f32 1.0, %v1660
        %v1662 = vrcp.pop %v1576
        %v1663 = vmul.f32 1.0, %v1662
        %v1664 = vrcp.pop %v1577
        %v1665 = vmul.f32 1.0, %v1664
        %v1666 = vrcp.pop %v1578
        %v1667 = vmul.f32 1.0, %v1666
        %v1668 = vrcp.pop %v1579
        %v1669 = vmul.f32 1.0, %v1668
        %v1670 = vrcp.pop %v1580
        %v1671 = vmul.f32 1.0, %v1670
        %v1672 = vrcp.pop %v1581
        %v1673 = vmul.f32 1.0, %v1672
        %v1674 = vrcp.pop %v1582
        %v1675 = vmul.f32 1.0, %v1674
        %v1676 = vrcp.pop %v1583
        %v1677 = vmul.f32 1.0, %v1676
        %v1678 = vrcp.pop %v1584
        %v1679 = vmul.f32 1.0, %v1678
        %v1680 = vrcp.pop %v1585
        %v1681 = vmul.f32 1.0, %v1680
        %v1682 = vrcp.pop %v1586
        %v1683 = vmul.f32 1.0, %v1682
        %v1684 = vrcp.pop %v1587
        %v1685 = vmul.f32 1.0, %v1684
        %v1686 = vrcp.pop %v1588
        %v1687 = vmul.f32 1.0, %v1686
        %v1688 = vrcp.pop %v1589
        %v1689 = vmul.f32 1.0, %v1688
        %v1690 = vrcp.pop %v1590
        %v1691 = vmul.f32 1.0, %v1690
        %v1692 = vrcp.pop %v1591
        %v1693 = vmul.f32 1.0, %v1692
        %v1694 = vrcp.pop %v1592
        %v1695 = vmul.f32 1.0, %v1694
        %v1696 = vrcp.pop %v1593
        %v1697 = vmul.f32 1.0, %v1696
        %v1698 = vrcp.pop %v1594
        %v1699 = vmul.f32 1.0, %v1698
        %v1700 = vrcp.pop %v1595
        %v1701 = vmul.f32 1.0, %v1700
        %v1702 = vrcp.pop %v1596
        %v1703 = vmul.f32 1.0, %v1702
        %v1704 = vrcp.pop %v1597
        %v1705 = vmul.f32 1.0, %v1704
        %v1706 = vrcp.pop %v1598
        %v1707 = vmul.f32 1.0, %v1706
        %v1708 = vrcp.pop %v1599
        %v1709 = vmul.f32 1.0, %v1708
        %v1710 = vrcp.pop %v1600
        %v1711 = vmul.f32 1.0, %v1710
        %v1712 = vrcp.pop %v1601
        %v1713 = vmul.f32 1.0, %v1712
        %v1714 = vrcp.pop %v1602
        %v1715 = vmul.f32 1.0, %v1714
        %v1716 = vrcp.pop %v1603
        %v1717 = vmul.f32 1.0, %v1716
        %v1718 = vrcp.pop %v1604
        %v1719 = vmul.f32 1.0, %v1718
        %v1720 = vrcp.pop %v1605
        %v1721 = vmul.f32 1.0, %v1720
        %v1722 = vrcp.pop %v1606
        %v1723 = vmul.f32 1.0, %v1722
        %v1724 = vrcp.pop %v1607
        %v1725 = vmul.f32 1.0, %v1724
        %v1726 = vrcp.pop %v1608
        %v1727 = vmul.f32 1.0, %v1726
        %v1728 = vrcp.pop %v1609
        %v1729 = vmul.f32 1.0, %v1728
        %v1730 = vrcp.pop %v1610
        %v1731 = vmul.f32 1.0, %v1730
        %v1732 = vrcp.pop %v1611
        %v1733 = vmul.f32 1.0, %v1732
        %v1734 = vrcp.pop %v1612
        %v1735 = vmul.f32 1.0, %v1734
        %v1736 = vrcp.pop %v1613
        %v1737 = vmul.f32 1.0, %v1736
        %v1738 = vrcp.pop %v1614
        %v1739 = vmul.f32 1.0, %v1738
        %v1740 = vrcp.pop %v1615
        %v1741 = vmul.f32 1.0, %v1740
        %v1742 = vrcp.pop %v1616
        %v1743 = vmul.f32 1.0, %v1742
        %v1744 = vrcp.pop %v1617
        %v1745 = vmul.f32 1.0, %v1744
        %v1746 = vrcp.pop %v1618
        %v1747 = vmul.f32 1.0, %v1746
        %v1748 = vrcp.pop %v1619
        %v1749 = vmul.f32 1.0, %v1748
        %v1750 = vrcp.pop %v1620
        %v1751 = vmul.f32 1.0, %v1750
        %v1752 = vrcp.pop %v1621
        %v1753 = vmul.f32 1.0, %v1752
        %v1754 = vrcp.pop %v1622
        %v1755 = vmul.f32 1.0, %v1754
        %v1756 = vrcp.pop %v1623
        %v1757 = vmul.f32 1.0, %v1756
        %v1758 = vrcp.pop %v1624
        %v1759 = vmul.f32 1.0, %v1758
        %v1760 = vrcp.pop %v1625
        %v1761 = vmul.f32 1.0, %v1760
        %v1762 = vrcp.pop %v1626
        %v1763 = vmul.f32 1.0, %v1762
        %v1764 = vrcp.pop %v1627
        %v1765 = vmul.f32 1.0, %v1764
        %v1766 = vrcp.pop %v1628
        %v1767 = vmul.f32 1.0, %v1766
        %v1768 = vrcp.pop %v1629
        %v1769 = vmul.f32 1.0, %v1768
        %v1770 = vrcp.pop %v1630
        %v1771 = vmul.f32 1.0, %v1770
        %v1772 = vrcp.pop %v1631
        %v1773 = vmul.f32 1.0, %v1772
        %v1774 = vrcp.pop %v1632
        %v1775 = vmul.f32 1.0, %v1774
        %v1776 = vrcp.pop %v1633
        %v1777 = vmul.f32 1.0, %v1776
        %v1778 = vrcp.pop %v1634
        %v1779 = vmul.f32 1.0, %v1778
        %v1780 = vrcp.pop %v1635
        %v1781 = vmul.f32 1.0, %v1780
        %v1782 = vrcp.pop %v1636
        %v1783 = vmul.f32 1.0, %v1782
        %v1784 = vrcp.pop %v1637
        %v1785 = vmul.f32 1.0, %v1784
        %v1786 = vrcp.pop %v1638
        %v1787 = vmul.f32 1.0, %v1786
        %v1788 = vrcp.pop %v1639
        %v1789 = vmul.f32 1.0, %v1788
        %v1790 = vrcp.pop %v1640
        %v1791 = vmul.f32 1.0, %v1790
        %v1792 = vrcp.pop %v1641
        %v1793 = vmul.f32 1.0, %v1792
        %v1794 = vrcp.pop %v1642
        %v1795 = vmul.f32 1.0, %v1794
        %v1796 = vrcp.pop %v1643
        %v1797 = vmul.f32 1.0, %v1796
        %v1798 = vrcp.pop %v1644
        %v1799 = vmul.f32 1.0, %v1798
        %v1800 = vrcp.pop %v1645
        %v1801 = vmul.f32 1.0, %v1800
        %v1802 = vrcp.pop %v1646
        %v1803 = vmul.f32 1.0, %v1802
        %v1804 = vrcp.pop %v1647
        %v1805 = vmul.f32 1.0, %v1804
        %v1806 = vrcp.pop %v1648
        %v1807 = vmul.f32 1.0, %v1806
        %v1808 = vrcp.pop %v1649
        %v1809 = vmul.f32 1.0, %v1808
        %v1810 = vmul.f32 %v1000, %v1651
        %v1811 = vmul.f32 %v1002, %v1653
        %v1812 = vmul.f32 %v1073, %v1655
        %v1813 = vmul.f32 %v1075, %v1657
        %v1814 = vmul.f32 %v1146, %v1659
        %v1815 = vmul.f32 %v1148, %v1661
        %v1816 = vmul.f32 %v1219, %v1663
        %v1817 = vmul.f32 %v1221, %v1665
        %v1818 = vmul.f32 %v1292, %v1667
        %v1819 = vmul.f32 %v1294, %v1669
        %v1820 = vmul.f32 %v1004, %v1671
        %v1821 = vmul.f32 %v1006, %v1673
        %v1822 = vmul.f32 %v1077, %v1675
        %v1823 = vmul.f32 %v1079, %v1677
        %v1824 = vmul.f32 %v1150, %v1679
        %v1825 = vmul.f32 %v1152, %v1681
        %v1826 = vmul.f32 %v1223, %v1683
        %v1827 = vmul.f32 %v1225, %v1685
        %v1828 = vmul.f32 %v1296, %v1687
        %v1829 = vmul.f32 %v1298, %v1689
        %v1830 = vmul.f32 %v1010, %v1691
        %v1831 = vmul.f32 %v1012, %v1693
        %v1832 = vmul.f32 %v1083, %v1695
        %v1833 = vmul.f32 %v1085, %v1697
        %v1834 = vmul.f32 %v1156, %v1699
        %v1835 = vmul.f32 %v1158, %v1701
        %v1836 = vmul.f32 %v1229, %v1703
        %v1837 = vmul.f32 %v1231, %v1705
        %v1838 = vmul.f32 %v1302, %v1707
        %v1839 = vmul.f32 %v1304, %v1709
        %v1840 = vmul.f32 %v1014, %v1711
        %v1841 = vmul.f32 %v1016, %v1713
        %v1842 = vmul.f32 %v1087, %v1715
        %v1843 = vmul.f32 %v1089, %v1717
        %v1844 = vmul.f32 %v1160, %v1719
        %v1845 = vmul.f32 %v1162, %v1721
        %v1846 = vmul.f32 %v1233, %v1723
        %v1847 = vmul.f32 %v1235, %v1725
        %v1848 = vmul.f32 %v1306, %v1727
        %v1849 = vmul.f32 %v1308, %v1729
        %v1850 = vmul.f32 %v1020, %v1731
        %v1851 = vmul.f32 %v1022, %v1733
        %v1852 = vmul.f32 %v1093, %v1735
        %v1853 = vmul.f32 %v1095, %v1737
        %v1854 = vmul.f32 %v1166, %v1739
        %v1855 = vmul.f32 %v1168, %v1741
        %v1856 = vmul.f32 %v1239, %v1743
        %v1857 = vmul.f32 %v1241, %v1745
        %v1858 = vmul.f32 %v1312, %v1747
        %v1859 = vmul.f32 %v1314, %v1749
        %v1860 = vmul.f32 %v1024, %v1751
        %v1861 = vmul.f32 %v1026, %v1753
        %v1862 = vmul.f32 %v1097, %v1755
        %v1863 = vmul.f32 %v1099, %v1757
        %v1864 = vmul.f32 %v1170, %v1759
        %v1865 = vmul.f32 %v1172, %v1761
        %v1866 = vmul.f32 %v1243, %v1763
        %v1867 = vmul.f32 %v1245, %v1765
        %v1868 = vmul.f32 %v1316, %v1767
        %v1869 = vmul.f32 %v1318, %v1769
        %v1870 = vmul.f32 %v1030, %v1771
        %v1871 = vmul.f32 %v1032, %v1773
        %v1872 = vmul.f32 %v1103, %v1775
        %v1873 = vmul.f32 %v1105, %v1777
        %v1874 = vmul.f32 %v1176, %v1779
        %v1875 = vmul.f32 %v1178, %v1781
        %v1876 = vmul.f32 %v1249, %v1783
        %v1877 = vmul.f32 %v1251, %v1785
        %v1878 = vmul.f32 %v1322, %v1787
        %v1879 = vmul.f32 %v1324, %v1789
        %v1880 = vmul.f32 %v1034, %v1791
        %v1881 = vmul.f32 %v1036, %v1793
        %v1882 = vmul.f32 %v1107, %v1795
        %v1883 = vmul.f32 %v1109, %v1797
        %v1884 = vmul.f32 %v1180, %v1799
        %v1885 = vmul.f32 %v1182, %v1801
        %v1886 = vmul.f32 %v1253, %v1803
        %v1887 = vmul.f32 %v1255, %v1805
        %v1888 = vmul.f32 %v1326, %v1807
        %v1889 = vmul.f32 %v1328, %v1809
        %v1890 = vadd.f32 %v1810, %v1820
        %v1891 = vadd.f32 %v1890, %v1830
        %v1892 = vadd.f32 %v1891, %v1840
        %v1893 = vadd.f32 %v1892, %v1850
        %v1894 = vadd.f32 %v1893, %v1860
        %v1895 = vadd.f32 %v1894, %v1870
        %v1896 = vadd.f32 %v1895, %v1880
        %v1897 = vrot.slane %v1896, 4
        %v1898 = vadd.f32 %v1896, %v1897
        %v1899 = vrot.slane %v1898, 2
        %v1900 = vadd.f32 %v1898, %v1899
        %v1901 = vrot.slane %v1900, 1
        %v1902 = vadd.f32 %v1900, %v1901
        %v1903 = vadd.f32 %v1811, %v1821
        %v1904 = vadd.f32 %v1903, %v1831
        %v1905 = vadd.f32 %v1904, %v1841
        %v1906 = vadd.f32 %v1905, %v1851
        %v1907 = vadd.f32 %v1906, %v1861
        %v1908 = vadd.f32 %v1907, %v1871
        %v1909 = vadd.f32 %v1908, %v1881
        %v1910 = vrot.slane %v1909, 4
        %v1911 = vadd.f32 %v1909, %v1910
        %v1912 = vrot.slane %v1911, 2
        %v1913 = vadd.f32 %v1911, %v1912
        %v1914 = vrot.slane %v1913, 1
        %v1915 = vadd.f32 %v1913, %v1914
        %v1916 = vadd.f32 %v1812, %v1822
        %v1917 = vadd.f32 %v1916, %v1832
        %v1918 = vadd.f32 %v1917, %v1842
        %v1919 = vadd.f32 %v1918, %v1852
        %v1920 = vadd.f32 %v1919, %v1862
        %v1921 = vadd.f32 %v1920, %v1872
        %v1922 = vadd.f32 %v1921, %v1882
        %v1923 = vrot.slane %v1922, 4
        %v1924 = vadd.f32 %v1922, %v1923
        %v1925 = vrot.slane %v1924, 2
        %v1926 = vadd.f32 %v1924, %v1925
        %v1927 = vrot.slane %v1926, 1
        %v1928 = vadd.f32 %v1926, %v1927
        %v1929 = vadd.f32 %v1813, %v1823
        %v1930 = vadd.f32 %v1929, %v1833
        %v1931 = vadd.f32 %v1930, %v1843
        %v1932 = vadd.f32 %v1931, %v1853
        %v1933 = vadd.f32 %v1932, %v1863
        %v1934 = vadd.f32 %v1933, %v1873
        %v1935 = vadd.f32 %v1934, %v1883
        %v1936 = vrot.slane %v1935, 4
        %v1937 = vadd.f32 %v1935, %v1936
        %v1938 = vrot.slane %v1937, 2
        %v1939 = vadd.f32 %v1937, %v1938
        %v1940 = vrot.slane %v1939, 1
        %v1941 = vadd.f32 %v1939, %v1940
        %v1942 = vadd.f32 %v1814, %v1824
        %v1943 = vadd.f32 %v1942, %v1834
        %v1944 = vadd.f32 %v1943, %v1844
        %v1945 = vadd.f32 %v1944, %v1854
        %v1946 = vadd.f32 %v1945, %v1864
        %v1947 = vadd.f32 %v1946, %v1874
        %v1948 = vadd.f32 %v1947, %v1884
        %v1949 = vrot.slane %v1948, 4
        %v1950 = vadd.f32 %v1948, %v1949
        %v1951 = vrot.slane %v1950, 2
        %v1952 = vadd.f32 %v1950, %v1951
        %v1953 = vrot.slane %v1952, 1
        %v1954 = vadd.f32 %v1952, %v1953
        %v1955 = vadd.f32 %v1815, %v1825
        %v1956 = vadd.f32 %v1955, %v1835
        %v1957 = vadd.f32 %v1956, %v1845
        %v1958 = vadd.f32 %v1957, %v1855
        %v1959 = vadd.f32 %v1958, %v1865
        %v1960 = vadd.f32 %v1959, %v1875
        %v1961 = vadd.f32 %v1960, %v1885
        %v1962 = vrot.slane %v1961, 4
        %v1963 = vadd.f32 %v1961, %v1962
        %v1964 = vrot.slane %v1963, 2
        %v1965 = vadd.f32 %v1963, %v1964
        %v1966 = vrot.slane %v1965, 1
        %v1967 = vadd.f32 %v1965, %v1966
        %v1968 = vadd.f32 %v1816, %v1826
        %v1969 = vadd.f32 %v1968, %v1836
        %v1970 = vadd.f32 %v1969, %v1846
        %v1971 = vadd.f32 %v1970, %v1856
        %v1972 = vadd.f32 %v1971, %v1866
        %v1973 = vadd.f32 %v1972, %v1876
        %v1974 = vadd.f32 %v1973, %v1886
        %v1975 = vrot.slane %v1974, 4
        %v1976 = vadd.f32 %v1974, %v1975
        %v1977 = vrot.slane %v1976, 2
        %v1978 = vadd.f32 %v1976, %v1977
        %v1979 = vrot.slane %v1978, 1
        %v1980 = vadd.f32 %v1978, %v1979
        %v1981 = vadd.f32 %v1817, %v1827
        %v1982 = vadd.f32 %v1981, %v1837
        %v1983 = vadd.f32 %v1982, %v1847
        %v1984 = vadd.f32 %v1983, %v1857
        %v1985 = vadd.f32 %v1984, %v1867
        %v1986 = vadd.f32 %v1985, %v1877
        %v1987 = vadd.f32 %v1986, %v1887
        %v1988 = vrot.slane %v1987, 4
        %v1989 = vadd.f32 %v1987, %v1988
        %v1990 = vrot.slane %v1989, 2
        %v1991 = vadd.f32 %v1989, %v1990
        %v1992 = vrot.slane %v1991, 1
        %v1993 = vadd.f32 %v1991, %v1992
        %v1994 = vadd.f32 %v1818, %v1828
        %v1995 = vadd.f32 %v1994, %v1838
        %v1996 = vadd.f32 %v1995, %v1848
        %v1997 = vadd.f32 %v1996, %v1858
        %v1998 = vadd.f32 %v1997, %v1868
        %v1999 = vadd.f32 %v1998, %v1878
        %v2000 = vadd.f32 %v1999, %v1888
        %v2001 = vrot.slane %v2000, 4
        %v2002 = vadd.f32 %v2000, %v2001
        %v2003 = vrot.slane %v2002, 2
        %v2004 = vadd.f32 %v2002, %v2003
        %v2005 = vrot.slane %v2004, 1
        %v2006 = vadd.f32 %v2004, %v2005
        %v2007 = vadd.f32 %v1819, %v1829
        %v2008 = vadd.f32 %v2007, %v1839
        %v2009 = vadd.f32 %v2008, %v1849
        %v2010 = vadd.f32 %v2009, %v1859
        %v2011 = vadd.f32 %v2010, %v1869
        %v2012 = vadd.f32 %v2011, %v1879
        %v2013 = vadd.f32 %v2012, %v1889
        %v2014 = vrot.slane %v2013, 4
        %v2015 = vadd.f32 %v2013, %v2014
        %v2016 = vrot.slane %v2015, 2
        %v2017 = vadd.f32 %v2015, %v2016
        %v2018 = vrot.slane %v2017, 1
        %v2019 = vadd.f32 %v2017, %v2018
        %v2020 = vrcp.pop 64.0
        %v2021 = vmul.f32 %v1902, %v2020
        %v2022 = vmul.f32 %v1915, %v2020
        %v2023 = vmul.f32 %v1928, %v2020
        %v2024 = vmul.f32 %v1941, %v2020
        %v2025 = vmul.f32 %v1954, %v2020
        %v2026 = vmul.f32 %v1967, %v2020
        %v2027 = vmul.f32 %v1980, %v2020
        %v2028 = vmul.f32 %v1993, %v2020
        %v2029 = vmul.f32 %v2006, %v2020
        %v2030 = vmul.f32 %v2019, %v2020
        %v2031 = vpack.c.bf16 %v2021, %v2021
        %v2032 = vpack.c.bf16 %v2022, %v2022
        %v2033 = vpack.c.bf16 %v2023, %v2023
        %v2034 = vpack.c.bf16 %v2024, %v2024
        %v2035 = vpack.c.bf16 %v2025, %v2025
        %v2036 = vpack.c.bf16 %v2026, %v2026
        %v2037 = vpack.c.bf16 %v2027, %v2027
        %v2038 = vpack.c.bf16 %v2028, %v2028
        %v2039 = vpack.c.bf16 %v2029, %v2029
        %v2040 = vpack.c.bf16 %v2030, %v2030
        %v2041 = vld [vmem:[%s4] sm:$0xf]
        %v2042 = vld [vmem:[%s4 + $0x4] sm:$0xf]
        %v2043 = vld [vmem:[%s4 + $0x8] sm:$0xf]
        %v2044 = vld [vmem:[%s4 + $0xc] sm:$0xf]
        %v2045 = vld [vmem:[%s4 + $0x10] sm:$0xf]
        %v2046 = vld [vmem:[%s4 + $0x14] sm:$0xf]
        %v2047 = vld [vmem:[%s4 + $0x18] sm:$0xf]
        %v2048 = vld [vmem:[%s4 + $0x1c] sm:$0xf]
        %v2049 = vld [vmem:[%s4 + $0x20] sm:$0xf]
        %v2050 = vld [vmem:[%s4 + $0x24] sm:$0xf]
        %v2051 = vld [vmem:[%s4 + $0x28] sm:$0xf]
        %v2052 = vld [vmem:[%s4 + $0x2c] sm:$0xf]
        %v2053 = vld [vmem:[%s4 + $0x30] sm:$0xf]
        %v2054 = vld [vmem:[%s4 + $0x34] sm:$0xf]
        %v2055 = vld [vmem:[%s4 + $0x38] sm:$0xf]
        %v2056 = vld [vmem:[%s4 + $0x3c] sm:$0xf]
        %v2057 = vld [vmem:[%s4 + $0x40] sm:$0xf]
        %v2058 = vld [vmem:[%s4 + $0x44] sm:$0xf]
        %v2059 = vld [vmem:[%s4 + $0x48] sm:$0xf]
        %v2060 = vld [vmem:[%s4 + $0x4c] sm:$0xf]
        %v2061 = vld [vmem:[%s4 + $0x50] sm:$0xf]
        %v2062 = vld [vmem:[%s4 + $0x54] sm:$0xf]
        %v2063 = vld [vmem:[%s4 + $0x58] sm:$0xf]
        %v2064 = vld [vmem:[%s4 + $0x5c] sm:$0xf]
        %v2065 = vld [vmem:[%s4 + $0x60] sm:$0xf]
        %v2066 = vld [vmem:[%s4 + $0x64] sm:$0xf]
        %v2067 = vld [vmem:[%s4 + $0x68] sm:$0xf]
        %v2068 = vld [vmem:[%s4 + $0x6c] sm:$0xf]
        %v2069 = vld [vmem:[%s4 + $0x70] sm:$0xf]
        %v2070 = vld [vmem:[%s4 + $0x74] sm:$0xf]
        %v2071 = vld [vmem:[%s4 + $0x78] sm:$0xf]
        %v2072 = vld [vmem:[%s4 + $0x7c] sm:$0xf]
        %v2073 = vld [vmem:[%s4 + $0x80] sm:$0xf]
        %v2074 = vld [vmem:[%s4 + $0x84] sm:$0xf]
        %v2075 = vld [vmem:[%s4 + $0x88] sm:$0xf]
        %v2076 = vld [vmem:[%s4 + $0x8c] sm:$0xf]
        %v2077 = vld [vmem:[%s4 + $0x90] sm:$0xf]
        %v2078 = vld [vmem:[%s4 + $0x94] sm:$0xf]
        %v2079 = vld [vmem:[%s4 + $0x98] sm:$0xf]
        %v2080 = vld [vmem:[%s4 + $0x9c] sm:$0xf]
        %v2081 = vld [vmem:[%s4 + $0xa0] sm:$0xf]
        %v2082 = vld [vmem:[%s4 + $0xa4] sm:$0xf]
        %v2083 = vld [vmem:[%s4 + $0xa8] sm:$0xf]
        %v2084 = vld [vmem:[%s4 + $0xac] sm:$0xf]
        %v2085 = vld [vmem:[%s4 + $0xb0] sm:$0xf]
        %v2086 = vld [vmem:[%s4 + $0xb4] sm:$0xf]
        %v2087 = vld [vmem:[%s4 + $0xb8] sm:$0xf]
        %v2088 = vld [vmem:[%s4 + $0xbc] sm:$0xf]
        %v2089 = vld [vmem:[%s4 + $0xc0] sm:$0xf]
        %v2090 = vld [vmem:[%s4 + $0xc4] sm:$0xf]
        %v2091 = vld [vmem:[%s4 + $0xc8] sm:$0xf]
        %v2092 = vld [vmem:[%s4 + $0xcc] sm:$0xf]
        %v2093 = vld [vmem:[%s4 + $0xd0] sm:$0xf]
        %v2094 = vld [vmem:[%s4 + $0xd4] sm:$0xf]
        %v2095 = vld [vmem:[%s4 + $0xd8] sm:$0xf]
        %v2096 = vld [vmem:[%s4 + $0xdc] sm:$0xf]
        %v2097 = vld [vmem:[%s4 + $0xe0] sm:$0xf]
        %v2098 = vld [vmem:[%s4 + $0xe4] sm:$0xf]
        %v2099 = vld [vmem:[%s4 + $0xe8] sm:$0xf]
        %v2100 = vld [vmem:[%s4 + $0xec] sm:$0xf]
        %v2101 = vld [vmem:[%s4 + $0xf0] sm:$0xf]
        %v2102 = vld [vmem:[%s4 + $0xf4] sm:$0xf]
        %v2103 = vld [vmem:[%s4 + $0xf8] sm:$0xf]
        %v2104 = vld [vmem:[%s4 + $0xfc] sm:$0xf]
        %v2105 = vld [vmem:[%s4 + $0x100] sm:$0xf]
        %v2106 = vld [vmem:[%s4 + $0x104] sm:$0xf]
        %v2107 = vld [vmem:[%s4 + $0x108] sm:$0xf]
        %v2108 = vld [vmem:[%s4 + $0x10c] sm:$0xf]
        %v2109 = vld [vmem:[%s4 + $0x110] sm:$0xf]
        %v2110 = vld [vmem:[%s4 + $0x114] sm:$0xf]
        %v2111 = vld [vmem:[%s4 + $0x118] sm:$0xf]
        %v2112 = vld [vmem:[%s4 + $0x11c] sm:$0xf]
        %v2113 = vld [vmem:[%s4 + $0x120] sm:$0xf]
        %v2114 = vld [vmem:[%s4 + $0x124] sm:$0xf]
        %v2115 = vld [vmem:[%s4 + $0x128] sm:$0xf]
        %v2116 = vld [vmem:[%s4 + $0x12c] sm:$0xf]
        %v2117 = vld [vmem:[%s4 + $0x130] sm:$0xf]
        %v2118 = vld [vmem:[%s4 + $0x134] sm:$0xf]
        %v2119 = vld [vmem:[%s4 + $0x138] sm:$0xf]
        %v2120 = vld [vmem:[%s4 + $0x13c] sm:$0xf]
        %v2121 = vld [vmem:[%s4 + $0x140] sm:$0xf]
        %v2122 = vld [vmem:[%s4 + $0x144] sm:$0xf]
        %v2123 = vld [vmem:[%s4 + $0x148] sm:$0xf]
        %v2124 = vld [vmem:[%s4 + $0x14c] sm:$0xf]
        %v2125 = vld [vmem:[%s4 + $0x150] sm:$0xf]
        %v2126 = vld [vmem:[%s4 + $0x154] sm:$0xf]
        %v2127 = vld [vmem:[%s4 + $0x158] sm:$0xf]
        %v2128 = vld [vmem:[%s4 + $0x15c] sm:$0xf]
        %v2129 = vld [vmem:[%s4 + $0x160] sm:$0xf]
        %v2130 = vld [vmem:[%s4 + $0x164] sm:$0xf]
        %v2131 = vld [vmem:[%s4 + $0x168] sm:$0xf]
        %v2132 = vld [vmem:[%s4 + $0x16c] sm:$0xf]
        %v2133 = vld [vmem:[%s4 + $0x170] sm:$0xf]
        %v2134 = vld [vmem:[%s4 + $0x174] sm:$0xf]
        %v2135 = vld [vmem:[%s4 + $0x178] sm:$0xf]
        %v2136 = vld [vmem:[%s4 + $0x17c] sm:$0xf]
        %v2137 = vld [vmem:[%s4 + $0x180] sm:$0xf]
        %v2138 = vld [vmem:[%s4 + $0x184] sm:$0xf]
        %v2139 = vld [vmem:[%s4 + $0x188] sm:$0xf]
        %v2140 = vld [vmem:[%s4 + $0x18c] sm:$0xf]
        %v2141 = vld [vmem:[%s4 + $0x190] sm:$0xf]
        %v2142 = vld [vmem:[%s4 + $0x194] sm:$0xf]
        %v2143 = vld [vmem:[%s4 + $0x198] sm:$0xf]
        %v2144 = vld [vmem:[%s4 + $0x19c] sm:$0xf]
        %v2145 = vld [vmem:[%s4 + $0x1a0] sm:$0xf]
        %v2146 = vld [vmem:[%s4 + $0x1a4] sm:$0xf]
        %v2147 = vld [vmem:[%s4 + $0x1a8] sm:$0xf]
        %v2148 = vld [vmem:[%s4 + $0x1ac] sm:$0xf]
        %v2149 = vld [vmem:[%s4 + $0x1b0] sm:$0xf]
        %v2150 = vld [vmem:[%s4 + $0x1b4] sm:$0xf]
        %v2151 = vld [vmem:[%s4 + $0x1b8] sm:$0xf]
        %v2152 = vld [vmem:[%s4 + $0x1bc] sm:$0xf]
        %v2153 = vld [vmem:[%s4 + $0x1c0] sm:$0xf]
        %v2154 = vld [vmem:[%s4 + $0x1c4] sm:$0xf]
        %v2155 = vld [vmem:[%s4 + $0x1c8] sm:$0xf]
        %v2156 = vld [vmem:[%s4 + $0x1cc] sm:$0xf]
        %v2157 = vld [vmem:[%s4 + $0x1d0] sm:$0xf]
        %v2158 = vld [vmem:[%s4 + $0x1d4] sm:$0xf]
        %v2159 = vld [vmem:[%s4 + $0x1d8] sm:$0xf]
        %v2160 = vld [vmem:[%s4 + $0x1dc] sm:$0xf]
        %v2161 = vld [vmem:[%s4 + $0x1e0] sm:$0xf]
        %v2162 = vld [vmem:[%s4 + $0x1e4] sm:$0xf]
        %v2163 = vld [vmem:[%s4 + $0x1e8] sm:$0xf]
        %v2164 = vld [vmem:[%s4 + $0x1ec] sm:$0xf]
        %v2165 = vld [vmem:[%s4 + $0x1f0] sm:$0xf]
        %v2166 = vld [vmem:[%s4 + $0x1f4] sm:$0xf]
        %v2167 = vld [vmem:[%s4 + $0x1f8] sm:$0xf]
        %v2168 = vld [vmem:[%s4 + $0x1fc] sm:$0xf]
        %v2169 = vld [vmem:[%s4 + $0x200] sm:$0xf]
        %v2170 = vld [vmem:[%s4 + $0x204] sm:$0xf]
        %v2171 = vld [vmem:[%s4 + $0x208] sm:$0xf]
        %v2172 = vld [vmem:[%s4 + $0x20c] sm:$0xf]
        %v2173 = vld [vmem:[%s4 + $0x210] sm:$0xf]
        %v2174 = vld [vmem:[%s4 + $0x214] sm:$0xf]
        %v2175 = vld [vmem:[%s4 + $0x218] sm:$0xf]
        %v2176 = vld [vmem:[%s4 + $0x21c] sm:$0xf]
        %v2177 = vld [vmem:[%s4 + $0x220] sm:$0xf]
        %v2178 = vld [vmem:[%s4 + $0x224] sm:$0xf]
        %v2179 = vld [vmem:[%s4 + $0x228] sm:$0xf]
        %v2180 = vld [vmem:[%s4 + $0x22c] sm:$0xf]
        %v2181 = vld [vmem:[%s4 + $0x230] sm:$0xf]
        %v2182 = vld [vmem:[%s4 + $0x234] sm:$0xf]
        %v2183 = vld [vmem:[%s4 + $0x238] sm:$0xf]
        %v2184 = vld [vmem:[%s4 + $0x23c] sm:$0xf]
        %v2185 = vld [vmem:[%s4 + $0x240] sm:$0xf]
        %v2186 = vld [vmem:[%s4 + $0x244] sm:$0xf]
        %v2187 = vld [vmem:[%s4 + $0x248] sm:$0xf]
        %v2188 = vld [vmem:[%s4 + $0x24c] sm:$0xf]
        %v2189 = vld [vmem:[%s4 + $0x250] sm:$0xf]
        %v2190 = vld [vmem:[%s4 + $0x254] sm:$0xf]
        %v2191 = vld [vmem:[%s4 + $0x258] sm:$0xf]
        %v2192 = vld [vmem:[%s4 + $0x25c] sm:$0xf]
        %v2193 = vld [vmem:[%s4 + $0x260] sm:$0xf]
        %v2194 = vld [vmem:[%s4 + $0x264] sm:$0xf]
        %v2195 = vld [vmem:[%s4 + $0x268] sm:$0xf]
        %v2196 = vld [vmem:[%s4 + $0x26c] sm:$0xf]
        %v2197 = vld [vmem:[%s4 + $0x270] sm:$0xf]
        %v2198 = vld [vmem:[%s4 + $0x274] sm:$0xf]
        %v2199 = vld [vmem:[%s4 + $0x278] sm:$0xf]
        %v2200 = vld [vmem:[%s4 + $0x27c] sm:$0xf]
        %v2201 = vld [vmem:[%s5] sm:$0x1]
        %v2362 = vunpack.c.l.b16 %v2041
        %v2363 = vunpack.c.l.b16 %v2042
        %v2364 = vunpack.c.l.b16 %v2043
        %v2365 = vunpack.c.l.b16 %v2044
        %v2366 = vunpack.c.l.b16 %v2045
        %v2367 = vunpack.c.l.b16 %v2046
        %v2368 = vunpack.c.l.b16 %v2047
        %v2369 = vunpack.c.l.b16 %v2048
        %v2370 = vunpack.c.l.b16 %v2049
        %v2371 = vunpack.c.l.b16 %v2050
        %v2372 = vunpack.c.l.b16 %v2051
        %v2373 = vunpack.c.l.b16 %v2052
        %v2374 = vunpack.c.l.b16 %v2053
        %v2375 = vunpack.c.l.b16 %v2054
        %v2376 = vunpack.c.l.b16 %v2055
        %v2377 = vunpack.c.l.b16 %v2056
        %v2378 = vunpack.c.l.b16 %v2057
        %v2379 = vunpack.c.l.b16 %v2058
        %v2380 = vunpack.c.l.b16 %v2059
        %v2381 = vunpack.c.l.b16 %v2060
        %v2382 = vunpack.c.l.b16 %v2061
        %v2383 = vunpack.c.l.b16 %v2062
        %v2384 = vunpack.c.l.b16 %v2063
        %v2385 = vunpack.c.l.b16 %v2064
        %v2386 = vunpack.c.l.b16 %v2065
        %v2387 = vunpack.c.l.b16 %v2066
        %v2388 = vunpack.c.l.b16 %v2067
        %v2389 = vunpack.c.l.b16 %v2068
        %v2390 = vunpack.c.l.b16 %v2069
        %v2391 = vunpack.c.l.b16 %v2070
        %v2392 = vunpack.c.l.b16 %v2071
        %v2393 = vunpack.c.l.b16 %v2072
        %v2394 = vunpack.c.l.b16 %v2073
        %v2395 = vunpack.c.l.b16 %v2074
        %v2396 = vunpack.c.l.b16 %v2075
        %v2397 = vunpack.c.l.b16 %v2076
        %v2398 = vunpack.c.l.b16 %v2077
        %v2399 = vunpack.c.l.b16 %v2078
        %v2400 = vunpack.c.l.b16 %v2079
        %v2401 = vunpack.c.l.b16 %v2080
        %v2402 = vunpack.c.l.b16 %v2081
        %v2403 = vunpack.c.l.b16 %v2082
        %v2404 = vunpack.c.l.b16 %v2083
        %v2405 = vunpack.c.l.b16 %v2084
        %v2406 = vunpack.c.l.b16 %v2085
        %v2407 = vunpack.c.l.b16 %v2086
        %v2408 = vunpack.c.l.b16 %v2087
        %v2409 = vunpack.c.l.b16 %v2088
        %v2410 = vunpack.c.l.b16 %v2089
        %v2411 = vunpack.c.l.b16 %v2090
        %v2412 = vunpack.c.l.b16 %v2091
        %v2413 = vunpack.c.l.b16 %v2092
        %v2414 = vunpack.c.l.b16 %v2093
        %v2415 = vunpack.c.l.b16 %v2094
        %v2416 = vunpack.c.l.b16 %v2095
        %v2417 = vunpack.c.l.b16 %v2096
        %v2418 = vunpack.c.l.b16 %v2097
        %v2419 = vunpack.c.l.b16 %v2098
        %v2420 = vunpack.c.l.b16 %v2099
        %v2421 = vunpack.c.l.b16 %v2100
        %v2422 = vunpack.c.l.b16 %v2101
        %v2423 = vunpack.c.l.b16 %v2102
        %v2424 = vunpack.c.l.b16 %v2103
        %v2425 = vunpack.c.l.b16 %v2104
        %v2426 = vunpack.c.l.b16 %v2105
        %v2427 = vunpack.c.l.b16 %v2106
        %v2428 = vunpack.c.l.b16 %v2107
        %v2429 = vunpack.c.l.b16 %v2108
        %v2430 = vunpack.c.l.b16 %v2109
        %v2431 = vunpack.c.l.b16 %v2110
        %v2432 = vunpack.c.l.b16 %v2111
        %v2433 = vunpack.c.l.b16 %v2112
        %v2434 = vunpack.c.l.b16 %v2113
        %v2435 = vunpack.c.l.b16 %v2114
        %v2436 = vunpack.c.l.b16 %v2115
        %v2437 = vunpack.c.l.b16 %v2116
        %v2438 = vunpack.c.l.b16 %v2117
        %v2439 = vunpack.c.l.b16 %v2118
        %v2440 = vunpack.c.l.b16 %v2119
        %v2441 = vunpack.c.l.b16 %v2120
        %v2442 = vunpack.c.l.b16 %v2121
        %v2443 = vunpack.c.l.b16 %v2122
        %v2444 = vunpack.c.l.b16 %v2123
        %v2445 = vunpack.c.l.b16 %v2124
        %v2446 = vunpack.c.l.b16 %v2125
        %v2447 = vunpack.c.l.b16 %v2126
        %v2448 = vunpack.c.l.b16 %v2127
        %v2449 = vunpack.c.l.b16 %v2128
        %v2450 = vunpack.c.l.b16 %v2129
        %v2451 = vunpack.c.l.b16 %v2130
        %v2452 = vunpack.c.l.b16 %v2131
        %v2453 = vunpack.c.l.b16 %v2132
        %v2454 = vunpack.c.l.b16 %v2133
        %v2455 = vunpack.c.l.b16 %v2134
        %v2456 = vunpack.c.l.b16 %v2135
        %v2457 = vunpack.c.l.b16 %v2136
        %v2458 = vunpack.c.l.b16 %v2137
        %v2459 = vunpack.c.l.b16 %v2138
        %v2460 = vunpack.c.l.b16 %v2139
        %v2461 = vunpack.c.l.b16 %v2140
        %v2462 = vunpack.c.l.b16 %v2141
        %v2463 = vunpack.c.l.b16 %v2142
        %v2464 = vunpack.c.l.b16 %v2143
        %v2465 = vunpack.c.l.b16 %v2144
        %v2466 = vunpack.c.l.b16 %v2145
        %v2467 = vunpack.c.l.b16 %v2146
        %v2468 = vunpack.c.l.b16 %v2147
        %v2469 = vunpack.c.l.b16 %v2148
        %v2470 = vunpack.c.l.b16 %v2149
        %v2471 = vunpack.c.l.b16 %v2150
        %v2472 = vunpack.c.l.b16 %v2151
        %v2473 = vunpack.c.l.b16 %v2152
        %v2474 = vunpack.c.l.b16 %v2153
        %v2475 = vunpack.c.l.b16 %v2154
        %v2476 = vunpack.c.l.b16 %v2155
        %v2477 = vunpack.c.l.b16 %v2156
        %v2478 = vunpack.c.l.b16 %v2157
        %v2479 = vunpack.c.l.b16 %v2158
        %v2480 = vunpack.c.l.b16 %v2159
        %v2481 = vunpack.c.l.b16 %v2160
        %v2482 = vunpack.c.l.b16 %v2161
        %v2483 = vunpack.c.l.b16 %v2162
        %v2484 = vunpack.c.l.b16 %v2163
        %v2485 = vunpack.c.l.b16 %v2164
        %v2486 = vunpack.c.l.b16 %v2165
        %v2487 = vunpack.c.l.b16 %v2166
        %v2488 = vunpack.c.l.b16 %v2167
        %v2489 = vunpack.c.l.b16 %v2168
        %v2490 = vunpack.c.l.b16 %v2169
        %v2491 = vunpack.c.l.b16 %v2170
        %v2492 = vunpack.c.l.b16 %v2171
        %v2493 = vunpack.c.l.b16 %v2172
        %v2494 = vunpack.c.l.b16 %v2173
        %v2495 = vunpack.c.l.b16 %v2174
        %v2496 = vunpack.c.l.b16 %v2175
        %v2497 = vunpack.c.l.b16 %v2176
        %v2498 = vunpack.c.l.b16 %v2177
        %v2499 = vunpack.c.l.b16 %v2178
        %v2500 = vunpack.c.l.b16 %v2179
        %v2501 = vunpack.c.l.b16 %v2180
        %v2502 = vunpack.c.l.b16 %v2181
        %v2503 = vunpack.c.l.b16 %v2182
        %v2504 = vunpack.c.l.b16 %v2183
        %v2505 = vunpack.c.l.b16 %v2184
        %v2506 = vunpack.c.l.b16 %v2185
        %v2507 = vunpack.c.l.b16 %v2186
        %v2508 = vunpack.c.l.b16 %v2187
        %v2509 = vunpack.c.l.b16 %v2188
        %v2510 = vunpack.c.l.b16 %v2189
        %v2511 = vunpack.c.l.b16 %v2190
        %v2512 = vunpack.c.l.b16 %v2191
        %v2513 = vunpack.c.l.b16 %v2192
        %v2514 = vunpack.c.l.b16 %v2193
        %v2515 = vunpack.c.l.b16 %v2194
        %v2516 = vunpack.c.l.b16 %v2195
        %v2517 = vunpack.c.l.b16 %v2196
        %v2518 = vunpack.c.l.b16 %v2197
        %v2519 = vunpack.c.l.b16 %v2198
        %v2520 = vunpack.c.l.b16 %v2199
        %v2521 = vunpack.c.l.b16 %v2200
        %v2522 = vpack.c.b16 %v2363, %v2362
        %v2523 = vpack.c.b16 %v2365, %v2364
        %v2524 = vpack.c.b16 %v2367, %v2366
        %v2525 = vpack.c.b16 %v2369, %v2368
        %v2526 = vpack.c.b16 %v2371, %v2370
        %v2527 = vpack.c.b16 %v2373, %v2372
        %v2528 = vpack.c.b16 %v2375, %v2374
        %v2529 = vpack.c.b16 %v2377, %v2376
        %v2530 = vpack.c.b16 %v2379, %v2378
        %v2531 = vpack.c.b16 %v2381, %v2380
        %v2532 = vpack.c.b16 %v2383, %v2382
        %v2533 = vpack.c.b16 %v2385, %v2384
        %v2534 = vpack.c.b16 %v2387, %v2386
        %v2535 = vpack.c.b16 %v2389, %v2388
        %v2536 = vpack.c.b16 %v2391, %v2390
        %v2537 = vpack.c.b16 %v2393, %v2392
        %v2538 = vpack.c.b16 %v2395, %v2394
        %v2539 = vpack.c.b16 %v2397, %v2396
        %v2540 = vpack.c.b16 %v2399, %v2398
        %v2541 = vpack.c.b16 %v2401, %v2400
        %v2542 = vpack.c.b16 %v2403, %v2402
        %v2543 = vpack.c.b16 %v2405, %v2404
        %v2544 = vpack.c.b16 %v2407, %v2406
        %v2545 = vpack.c.b16 %v2409, %v2408
        %v2546 = vpack.c.b16 %v2411, %v2410
        %v2547 = vpack.c.b16 %v2413, %v2412
        %v2548 = vpack.c.b16 %v2415, %v2414
        %v2549 = vpack.c.b16 %v2417, %v2416
        %v2550 = vpack.c.b16 %v2419, %v2418
        %v2551 = vpack.c.b16 %v2421, %v2420
        %v2552 = vpack.c.b16 %v2423, %v2422
        %v2553 = vpack.c.b16 %v2425, %v2424
        %v2554 = vpack.c.b16 %v2427, %v2426
        %v2555 = vpack.c.b16 %v2429, %v2428
        %v2556 = vpack.c.b16 %v2431, %v2430
        %v2557 = vpack.c.b16 %v2433, %v2432
        %v2558 = vpack.c.b16 %v2435, %v2434
        %v2559 = vpack.c.b16 %v2437, %v2436
        %v2560 = vpack.c.b16 %v2439, %v2438
        %v2561 = vpack.c.b16 %v2441, %v2440
        %v2562 = vpack.c.b16 %v2443, %v2442
        %v2563 = vpack.c.b16 %v2445, %v2444
        %v2564 = vpack.c.b16 %v2447, %v2446
        %v2565 = vpack.c.b16 %v2449, %v2448
        %v2566 = vpack.c.b16 %v2451, %v2450
        %v2567 = vpack.c.b16 %v2453, %v2452
        %v2568 = vpack.c.b16 %v2455, %v2454
        %v2569 = vpack.c.b16 %v2457, %v2456
        %v2570 = vpack.c.b16 %v2459, %v2458
        %v2571 = vpack.c.b16 %v2461, %v2460
        %v2572 = vpack.c.b16 %v2463, %v2462
        %v2573 = vpack.c.b16 %v2465, %v2464
        %v2574 = vpack.c.b16 %v2467, %v2466
        %v2575 = vpack.c.b16 %v2469, %v2468
        %v2576 = vpack.c.b16 %v2471, %v2470
        %v2577 = vpack.c.b16 %v2473, %v2472
        %v2578 = vpack.c.b16 %v2475, %v2474
        %v2579 = vpack.c.b16 %v2477, %v2476
        %v2580 = vpack.c.b16 %v2479, %v2478
        %v2581 = vpack.c.b16 %v2481, %v2480
        %v2582 = vpack.c.b16 %v2483, %v2482
        %v2583 = vpack.c.b16 %v2485, %v2484
        %v2584 = vpack.c.b16 %v2487, %v2486
        %v2585 = vpack.c.b16 %v2489, %v2488
        %v2586 = vpack.c.b16 %v2491, %v2490
        %v2587 = vpack.c.b16 %v2493, %v2492
        %v2588 = vpack.c.b16 %v2495, %v2494
        %v2589 = vpack.c.b16 %v2497, %v2496
        %v2590 = vpack.c.b16 %v2499, %v2498
        %v2591 = vpack.c.b16 %v2501, %v2500
        %v2592 = vpack.c.b16 %v2503, %v2502
        %v2593 = vpack.c.b16 %v2505, %v2504
        %v2594 = vpack.c.b16 %v2507, %v2506
        %v2595 = vpack.c.b16 %v2509, %v2508
        %v2596 = vpack.c.b16 %v2511, %v2510
        %v2597 = vpack.c.b16 %v2513, %v2512
        %v2598 = vpack.c.b16 %v2515, %v2514
        %v2599 = vpack.c.b16 %v2517, %v2516
        %v2600 = vpack.c.b16 %v2519, %v2518
        %v2601 = vpack.c.b16 %v2521, %v2520
        %2682 = vmatprep.subr.bf16.mxu0 0
        %2683 = vmatpush1.bf16.msra.mxu0 %v2522
        %2684 = vmatprep.subr.bf16.mxu0 0
        %2685 = vmatpush1.bf16.msra.mxu0 %v2523
        %2686 = vmatprep.subr.bf16.mxu0 0
        %2687 = vmatpush1.bf16.msra.mxu0 %v2524
        %2688 = vmatprep.subr.bf16.mxu0 0
        %2689 = vmatpush1.bf16.msra.mxu0 %v2525
        %2690 = vmatprep.subr.bf16.mxu0 0
        %2691 = vmatpush1.bf16.msra.mxu0 %v2526
        %2692 = vmatprep.subr.bf16.mxu0 0
        %2693 = vmatpush1.bf16.msra.mxu0 %v2527
        %2694 = vmatprep.subr.bf16.mxu0 0
        %2695 = vmatpush1.bf16.msra.mxu0 %v2528
        %2696 = vmatprep.subr.bf16.mxu0 0
        %2697 = vmatpush1.bf16.msra.mxu0 %v2529
        %2698 = vmatprep.subr.bf16.mxu0 0
        %2699 = vmatpush1.bf16.msra.mxu0 %v2530
        %2700 = vmatprep.subr.bf16.mxu0 0
        %2701 = vmatpush1.bf16.msra.mxu0 %v2531
        %2702 = vmatprep.subr.bf16.mxu0 0
        %2703 = vmatpush1.bf16.msra.mxu0 %v2532
        %2704 = vmatprep.subr.bf16.mxu0 0
        %2705 = vmatpush1.bf16.msra.mxu0 %v2533
        %2706 = vmatprep.subr.bf16.mxu0 0
        %2707 = vmatpush1.bf16.msra.mxu0 %v2534
        %2708 = vmatprep.subr.bf16.mxu0 0
        %2709 = vmatpush1.bf16.msra.mxu0 %v2535
        %2710 = vmatprep.subr.bf16.mxu0 0
        %2711 = vmatpush1.bf16.msra.mxu0 %v2536
        %2712 = vmatprep.subr.bf16.mxu0 0
        %2713 = vmatpush1.bf16.msra.mxu0 %v2537
        %2714 = vmatprep.mubr.bf16.mxu0 %v2032
        %2715 = vmatmul.mubr.bf16.gmra.mrb[0].mxu0 %v2031
        %v2716 = vpop.f32.mrb[0].mxu0
        %v2717 = vadd.f32 %v2201, %v2716
        %v2718 = vpop.f32.mrb[0].mxu0
        %v2719 = vpop.f32.mrb[0].mxu0
        %v2720 = vpop.f32.mrb[0].mxu0
        %2721 = vdwg.mxu0
        %2722 = vmatprep.subr.bf16.mxu0 0
        %2723 = vmatpush1.bf16.msra.mxu0 %v2538
        %2724 = vmatprep.subr.bf16.mxu0 0
        %2725 = vmatpush1.bf16.msra.mxu0 %v2539
        %2726 = vmatprep.subr.bf16.mxu0 0
        %2727 = vmatpush1.bf16.msra.mxu0 %v2540
        %2728 = vmatprep.subr.bf16.mxu0 0
        %2729 = vmatpush1.bf16.msra.mxu0 %v2541
        %2730 = vmatprep.subr.bf16.mxu0 0
        %2731 = vmatpush1.bf16.msra.mxu0 %v2542
        %2732 = vmatprep.subr.bf16.mxu0 0
        %2733 = vmatpush1.bf16.msra.mxu0 %v2543
        %2734 = vmatprep.subr.bf16.mxu0 0
        %2735 = vmatpush1.bf16.msra.mxu0 %v2544
        %2736 = vmatprep.subr.bf16.mxu0 0
        %2737 = vmatpush1.bf16.msra.mxu0 %v2545
        %2738 = vmatprep.subr.bf16.mxu0 0
        %2739 = vmatpush1.bf16.msra.mxu0 %v2546
        %2740 = vmatprep.subr.bf16.mxu0 0
        %2741 = vmatpush1.bf16.msra.mxu0 %v2547
        %2742 = vmatprep.subr.bf16.mxu0 0
        %2743 = vmatpush1.bf16.msra.mxu0 %v2548
        %2744 = vmatprep.subr.bf16.mxu0 0
        %2745 = vmatpush1.bf16.msra.mxu0 %v2549
        %2746 = vmatprep.subr.bf16.mxu0 0
        %2747 = vmatpush1.bf16.msra.mxu0 %v2550
        %2748 = vmatprep.subr.bf16.mxu0 0
        %2749 = vmatpush1.bf16.msra.mxu0 %v2551
        %2750 = vmatprep.subr.bf16.mxu0 0
        %2751 = vmatpush1.bf16.msra.mxu0 %v2552
        %2752 = vmatprep.subr.bf16.mxu0 0
        %2753 = vmatpush1.bf16.msra.mxu0 %v2553
        %2754 = vmatprep.mubr.bf16.mxu0 %v2034
        %2755 = vmatmul.mubr.bf16.gmra.mrb[0].mxu0 %v2033
        %v2756 = vpop.f32.mrb[0].mxu0
        %v2757 = vadd.f32 %v2717, %v2756
        %v2758 = vpop.f32.mrb[0].mxu0
        %v2759 = vpop.f32.mrb[0].mxu0
        %v2760 = vpop.f32.mrb[0].mxu0
        %2761 = vdwg.mxu0
        %2762 = vmatprep.subr.bf16.mxu0 0
        %2763 = vmatpush1.bf16.msra.mxu0 %v2554
        %2764 = vmatprep.subr.bf16.mxu0 0
        %2765 = vmatpush1.bf16.msra.mxu0 %v2555
        %2766 = vmatprep.subr.bf16.mxu0 0
        %2767 = vmatpush1.bf16.msra.mxu0 %v2556
        %2768 = vmatprep.subr.bf16.mxu0 0
        %2769 = vmatpush1.bf16.msra.mxu0 %v2557
        %2770 = vmatprep.subr.bf16.mxu0 0
        %2771 = vmatpush1.bf16.msra.mxu0 %v2558
        %2772 = vmatprep.subr.bf16.mxu0 0
        %2773 = vmatpush1.bf16.msra.mxu0 %v2559
        %2774 = vmatprep.subr.bf16.mxu0 0
        %2775 = vmatpush1.bf16.msra.mxu0 %v2560
        %2776 = vmatprep.subr.bf16.mxu0 0
        %2777 = vmatpush1.bf16.msra.mxu0 %v2561
        %2778 = vmatprep.subr.bf16.mxu0 0
        %2779 = vmatpush1.bf16.msra.mxu0 %v2562
        %2780 = vmatprep.subr.bf16.mxu0 0
        %2781 = vmatpush1.bf16.msra.mxu0 %v2563
        %2782 = vmatprep.subr.bf16.mxu0 0
        %2783 = vmatpush1.bf16.msra.mxu0 %v2564
        %2784 = vmatprep.subr.bf16.mxu0 0
        %2785 = vmatpush1.bf16.msra.mxu0 %v2565
        %2786 = vmatprep.subr.bf16.mxu0 0
        %2787 = vmatpush1.bf16.msra.mxu0 %v2566
        %2788 = vmatprep.subr.bf16.mxu0 0
        %2789 = vmatpush1.bf16.msra.mxu0 %v2567
        %2790 = vmatprep.subr.bf16.mxu0 0
        %2791 = vmatpush1.bf16.msra.mxu0 %v2568
        %2792 = vmatprep.subr.bf16.mxu0 0
        %2793 = vmatpush1.bf16.msra.mxu0 %v2569
        %2794 = vmatprep.mubr.bf16.mxu0 %v2036
        %2795 = vmatmul.mubr.bf16.gmra.mrb[0].mxu0 %v2035
        %v2796 = vpop.f32.mrb[0].mxu0
        %v2797 = vadd.f32 %v2757, %v2796
        %v2798 = vpop.f32.mrb[0].mxu0
        %v2799 = vpop.f32.mrb[0].mxu0
        %v2800 = vpop.f32.mrb[0].mxu0
        %2801 = vdwg.mxu0
        %2802 = vmatprep.subr.bf16.mxu0 0
        %2803 = vmatpush1.bf16.msra.mxu0 %v2570
        %2804 = vmatprep.subr.bf16.mxu0 0
        %2805 = vmatpush1.bf16.msra.mxu0 %v2571
        %2806 = vmatprep.subr.bf16.mxu0 0
        %2807 = vmatpush1.bf16.msra.mxu0 %v2572
        %2808 = vmatprep.subr.bf16.mxu0 0
        %2809 = vmatpush1.bf16.msra.mxu0 %v2573
        %2810 = vmatprep.subr.bf16.mxu0 0
        %2811 = vmatpush1.bf16.msra.mxu0 %v2574
        %2812 = vmatprep.subr.bf16.mxu0 0
        %2813 = vmatpush1.bf16.msra.mxu0 %v2575
        %2814 = vmatprep.subr.bf16.mxu0 0
        %2815 = vmatpush1.bf16.msra.mxu0 %v2576
        %2816 = vmatprep.subr.bf16.mxu0 0
        %2817 = vmatpush1.bf16.msra.mxu0 %v2577
        %2818 = vmatprep.subr.bf16.mxu0 0
        %2819 = vmatpush1.bf16.msra.mxu0 %v2578
        %2820 = vmatprep.subr.bf16.mxu0 0
        %2821 = vmatpush1.bf16.msra.mxu0 %v2579
        %2822 = vmatprep.subr.bf16.mxu0 0
        %2823 = vmatpush1.bf16.msra.mxu0 %v2580
        %2824 = vmatprep.subr.bf16.mxu0 0
        %2825 = vmatpush1.bf16.msra.mxu0 %v2581
        %2826 = vmatprep.subr.bf16.mxu0 0
        %2827 = vmatpush1.bf16.msra.mxu0 %v2582
        %2828 = vmatprep.subr.bf16.mxu0 0
        %2829 = vmatpush1.bf16.msra.mxu0 %v2583
        %2830 = vmatprep.subr.bf16.mxu0 0
        %2831 = vmatpush1.bf16.msra.mxu0 %v2584
        %2832 = vmatprep.subr.bf16.mxu0 0
        %2833 = vmatpush1.bf16.msra.mxu0 %v2585
        %2834 = vmatprep.mubr.bf16.mxu0 %v2038
        %2835 = vmatmul.mubr.bf16.gmra.mrb[0].mxu0 %v2037
        %v2836 = vpop.f32.mrb[0].mxu0
        %v2837 = vadd.f32 %v2797, %v2836
        %v2838 = vpop.f32.mrb[0].mxu0
        %v2839 = vpop.f32.mrb[0].mxu0
        %v2840 = vpop.f32.mrb[0].mxu0
        %2841 = vdwg.mxu0
        %2842 = vmatprep.subr.bf16.mxu0 0
        %2843 = vmatpush1.bf16.msra.mxu0 %v2586
        %2844 = vmatprep.subr.bf16.mxu0 0
        %2845 = vmatpush1.bf16.msra.mxu0 %v2587
        %2846 = vmatprep.subr.bf16.mxu0 0
        %2847 = vmatpush1.bf16.msra.mxu0 %v2588
        %2848 = vmatprep.subr.bf16.mxu0 0
        %2849 = vmatpush1.bf16.msra.mxu0 %v2589
        %2850 = vmatprep.subr.bf16.mxu0 0
        %2851 = vmatpush1.bf16.msra.mxu0 %v2590
        %2852 = vmatprep.subr.bf16.mxu0 0
        %2853 = vmatpush1.bf16.msra.mxu0 %v2591
        %2854 = vmatprep.subr.bf16.mxu0 0
        %2855 = vmatpush1.bf16.msra.mxu0 %v2592
        %2856 = vmatprep.subr.bf16.mxu0 0
        %2857 = vmatpush1.bf16.msra.mxu0 %v2593
        %2858 = vmatprep.subr.bf16.mxu0 0
        %2859 = vmatpush1.bf16.msra.mxu0 %v2594
        %2860 = vmatprep.subr.bf16.mxu0 0
        %2861 = vmatpush1.bf16.msra.mxu0 %v2595
        %2862 = vmatprep.subr.bf16.mxu0 0
        %2863 = vmatpush1.bf16.msra.mxu0 %v2596
        %2864 = vmatprep.subr.bf16.mxu0 0
        %2865 = vmatpush1.bf16.msra.mxu0 %v2597
        %2866 = vmatprep.subr.bf16.mxu0 0
        %2867 = vmatpush1.bf16.msra.mxu0 %v2598
        %2868 = vmatprep.subr.bf16.mxu0 0
        %2869 = vmatpush1.bf16.msra.mxu0 %v2599
        %2870 = vmatprep.subr.bf16.mxu0 0
        %2871 = vmatpush1.bf16.msra.mxu0 %v2600
        %2872 = vmatprep.subr.bf16.mxu0 0
        %2873 = vmatpush1.bf16.msra.mxu0 %v2601
        %2874 = vmatprep.mubr.bf16.mxu0 %v2040
        %2875 = vmatmul.mubr.bf16.gmra.mrb[0].mxu0 %v2039
        %v2876 = vpop.f32.mrb[0].mxu0
        %v2877 = vadd.f32 %v2837, %v2876
        %v2878 = vpop.f32.mrb[0].mxu0
        %v2879 = vpop.f32.mrb[0].mxu0
        %v2880 = vpop.f32.mrb[0].mxu0
        %2881 = vdwg.mxu0
        %v2882 = vld [vmem:[%s397] sm:$0x1]
        %v2883 = vpack.c.bf16 %v2882, %v2882
        %v2884 = vpack.c.bf16 %v2877, %v2877
        %v2885 = vld [vmem:[%s6] sm:$0xf]
        %v2886 = vld [vmem:[%s6 + $0x4] sm:$0xf]
        %v2887 = vld [vmem:[%s6 + $0x8] sm:$0xf]
        %v2888 = vld [vmem:[%s6 + $0xc] sm:$0xf]
        %v2889 = vld [vmem:[%s6 + $0x10] sm:$0xf]
        %v2890 = vld [vmem:[%s6 + $0x14] sm:$0xf]
        %v2891 = vld [vmem:[%s6 + $0x18] sm:$0xf]
        %v2892 = vld [vmem:[%s6 + $0x1c] sm:$0xf]
        %v2893 = vld [vmem:[%s6 + $0x20] sm:$0xf]
        %v2894 = vld [vmem:[%s6 + $0x24] sm:$0xf]
        %v2895 = vld [vmem:[%s6 + $0x28] sm:$0xf]
        %v2896 = vld [vmem:[%s6 + $0x2c] sm:$0xf]
        %v2897 = vld [vmem:[%s6 + $0x30] sm:$0xf]
        %v2898 = vld [vmem:[%s6 + $0x34] sm:$0xf]
        %v2899 = vld [vmem:[%s6 + $0x38] sm:$0xf]
        %v2900 = vld [vmem:[%s6 + $0x3c] sm:$0xf]
        %v2901 = vld [vmem:[%s7] sm:$0xf]
        %v2902 = vld [vmem:[%s7 + $0x4] sm:$0xf]
        %v2903 = vld [vmem:[%s7 + $0x8] sm:$0x1]
        %v2907 = vunpack.c.l.b16 %v2901
        %v2908 = vunpack.c.l.b16 %v2902
        %v2909 = vunpack.c.l.b16 %v2903
        %v2910 = vpack.c.b16 %v2908, %v2907
        %v2911 = vpack.c.b16 %v2909, %v2909
        %vm2913 = vcmask 146432
        %v2915 = vsel %vm2913, %v2883, 0
        %vm2917 = vcmask 1040384
        %v2919 = vsel %vm2917, %v2911, 0
        %2921 = vmatprep.subr.bf16.mxu0 0
        %2922 = vmatpush1.bf16.msra.mxu0 %v2910
        %2923 = vmatprep.subr.bf16.mxu0 0
        %2924 = vmatpush1.bf16.msra.mxu0 %v2919
        %2925 = vmatprep.subr.bf16.mxu0 0
        %2926 = vmatpush1.bf16.msra.mxu0 0
        %2927 = vmatprep.subr.bf16.mxu0 0
        %2928 = vmatpush1.bf16.msra.mxu0 0
        %2929 = vmatprep.subr.bf16.mxu0 0
        %2930 = vmatpush1.bf16.msra.mxu0 0
        %2931 = vmatprep.subr.bf16.mxu0 0
        %2932 = vmatpush1.bf16.msra.mxu0 0
        %2933 = vmatprep.subr.bf16.mxu0 0
        %2934 = vmatpush1.bf16.msra.mxu0 0
        %2935 = vmatprep.subr.bf16.mxu0 0
        %2936 = vmatpush1.bf16.msra.mxu0 0
        %2937 = vmatprep.subr.bf16.mxu0 0
        %2938 = vmatpush1.bf16.msra.mxu0 0
        %2939 = vmatprep.subr.bf16.mxu0 0
        %2940 = vmatpush1.bf16.msra.mxu0 0
        %2941 = vmatprep.subr.bf16.mxu0 0
        %2942 = vmatpush1.bf16.msra.mxu0 0
        %2943 = vmatprep.subr.bf16.mxu0 0
        %2944 = vmatpush1.bf16.msra.mxu0 0
        %2945 = vmatprep.subr.bf16.mxu0 0
        %2946 = vmatpush1.bf16.msra.mxu0 0
        %2947 = vmatprep.subr.bf16.mxu0 0
        %2948 = vmatpush1.bf16.msra.mxu0 0
        %2949 = vmatprep.subr.bf16.mxu0 0
        %2950 = vmatpush1.bf16.msra.mxu0 0
        %2951 = vmatprep.subr.bf16.mxu0 0
        %2952 = vmatpush1.bf16.msra.mxu0 0
        %2953 = vmatprep.mubr.bf16.mxu0 0
        %2954 = vmatmul.mubr.bf16.gmra.mrb[0].mxu0 %v2915
        %v2955 = vpop.f32.mrb[0].mxu0
        %v2956 = vadd.f32 0.0, %v2955
        %v2957 = vpop.f32.mrb[0].mxu0
        %v2958 = vpop.f32.mrb[0].mxu0
        %v2959 = vpop.f32.mrb[0].mxu0
        %2960 = vdwg.mxu0
        %v2977 = vunpack.c.l.b16 %v2885
        %v2978 = vunpack.c.l.b16 %v2886
        %v2979 = vunpack.c.l.b16 %v2887
        %v2980 = vunpack.c.l.b16 %v2888
        %v2981 = vunpack.c.l.b16 %v2889
        %v2982 = vunpack.c.l.b16 %v2890
        %v2983 = vunpack.c.l.b16 %v2891
        %v2984 = vunpack.c.l.b16 %v2892
        %v2985 = vunpack.c.l.b16 %v2893
        %v2986 = vunpack.c.l.b16 %v2894
        %v2987 = vunpack.c.l.b16 %v2895
        %v2988 = vunpack.c.l.b16 %v2896
        %v2989 = vunpack.c.l.b16 %v2897
        %v2990 = vunpack.c.l.b16 %v2898
        %v2991 = vunpack.c.l.b16 %v2899
        %v2992 = vunpack.c.l.b16 %v2900
        %v2993 = vpack.c.b16 %v2978, %v2977
        %v2994 = vpack.c.b16 %v2980, %v2979
        %v2995 = vpack.c.b16 %v2982, %v2981
        %v2996 = vpack.c.b16 %v2984, %v2983
        %v2997 = vpack.c.b16 %v2986, %v2985
        %v2998 = vpack.c.b16 %v2988, %v2987
        %v2999 = vpack.c.b16 %v2990, %v2989
        %v3000 = vpack.c.b16 %v2992, %v2991
        %3009 = vmatprep.subr.bf16.mxu0 0
        %3010 = vmatpush1.bf16.msra.mxu0 %v2993
        %3011 = vmatprep.subr.bf16.mxu0 0
        %3012 = vmatpush1.bf16.msra.mxu0 %v2994
        %3013 = vmatprep.subr.bf16.mxu0 0
        %3014 = vmatpush1.bf16.msra.mxu0 %v2995
        %3015 = vmatprep.subr.bf16.mxu0 0
        %3016 = vmatpush1.bf16.msra.mxu0 %v2996
        %3017 = vmatprep.subr.bf16.mxu0 0
        %3018 = vmatpush1.bf16.msra.mxu0 %v2997
        %3019 = vmatprep.subr.bf16.mxu0 0
        %3020 = vmatpush1.bf16.msra.mxu0 %v2998
        %3021 = vmatprep.subr.bf16.mxu0 0
        %3022 = vmatpush1.bf16.msra.mxu0 %v2999
        %3023 = vmatprep.subr.bf16.mxu0 0
        %3024 = vmatpush1.bf16.msra.mxu0 %v3000
        %3025 = vmatprep.subr.bf16.mxu0 0
        %3026 = vmatpush1.bf16.msra.mxu0 0
        %3027 = vmatprep.subr.bf16.mxu0 0
        %3028 = vmatpush1.bf16.msra.mxu0 0
        %3029 = vmatprep.subr.bf16.mxu0 0
        %3030 = vmatpush1.bf16.msra.mxu0 0
        %3031 = vmatprep.subr.bf16.mxu0 0
        %3032 = vmatpush1.bf16.msra.mxu0 0
        %3033 = vmatprep.subr.bf16.mxu0 0
        %3034 = vmatpush1.bf16.msra.mxu0 0
        %3035 = vmatprep.subr.bf16.mxu0 0
        %3036 = vmatpush1.bf16.msra.mxu0 0
        %3037 = vmatprep.subr.bf16.mxu0 0
        %3038 = vmatpush1.bf16.msra.mxu0 0
        %3039 = vmatprep.subr.bf16.mxu0 0
        %3040 = vmatpush1.bf16.msra.mxu0 0
        %3041 = vmatprep.mubr.bf16.mxu0 0
        %3042 = vmatmul.mubr.bf16.gmra.mrb[0].mxu0 %v2884
        %v3043 = vpop.f32.mrb[0].mxu0
        %v3044 = vadd.f32 %v2956, %v3043
        %v3045 = vpop.f32.mrb[0].mxu0
        %v3046 = vpop.f32.mrb[0].mxu0
        %v3047 = vpop.f32.mrb[0].mxu0
        %3048 = vdwg.mxu0
        %v3049 = vld [vmem:[%s8] sm:$0x1]
        %v3050 = vadd.f32 %v3044, %v3049
        %v3051 = vmax.f32 %v3050, 0.0
        %v3052 = vpack.c.bf16 %v3051, %v3051
        %v3053 = vld [vmem:[%s9] sm:$0xf]
        %v3054 = vld [vmem:[%s9 + $0x4] sm:$0xf]
        %v3055 = vld [vmem:[%s9 + $0x8] sm:$0xf]
        %v3056 = vld [vmem:[%s9 + $0xc] sm:$0xf]
        %v3057 = vld [vmem:[%s9 + $0x10] sm:$0xf]
        %v3058 = vld [vmem:[%s9 + $0x14] sm:$0xf]
        %v3059 = vld [vmem:[%s9 + $0x18] sm:$0xf]
        %v3060 = vld [vmem:[%s9 + $0x1c] sm:$0xf]
        %v3061 = vld [vmem:[%s10] sm:$0x1]
        %v3070 = vunpack.c.l.b16 %v3053
        %v3071 = vunpack.c.l.b16 %v3054
        %v3072 = vunpack.c.l.b16 %v3055
        %v3073 = vunpack.c.l.b16 %v3056
        %v3074 = vunpack.c.l.b16 %v3057
        %v3075 = vunpack.c.l.b16 %v3058
        %v3076 = vunpack.c.l.b16 %v3059
        %v3077 = vunpack.c.l.b16 %v3060
        %v3078 = vpack.c.b16 %v3071, %v3070
        %v3079 = vpack.c.b16 %v3073, %v3072
        %v3080 = vpack.c.b16 %v3075, %v3074
        %v3081 = vpack.c.b16 %v3077, %v3076
        %vm3086 = vcmask 523264
        %v3088 = vsel %vm3086, %v3052, 0
        %3090 = vmatprep.subr.bf16.mxu0 0
        %3091 = vmatpush1.bf16.msra.mxu0 %v3078
        %3092 = vmatprep.subr.bf16.mxu0 0
        %3093 = vmatpush1.bf16.msra.mxu0 %v3079
        %3094 = vmatprep.subr.bf16.mxu0 0
        %3095 = vmatpush1.bf16.msra.mxu0 %v3080
        %3096 = vmatprep.subr.bf16.mxu0 0
        %3097 = vmatpush1.bf16.msra.mxu0 %v3081
        %3098 = vmatprep.subr.bf16.mxu0 0
        %3099 = vmatpush1.bf16.msra.mxu0 0
        %3100 = vmatprep.subr.bf16.mxu0 0
        %3101 = vmatpush1.bf16.msra.mxu0 0
        %3102 = vmatprep.subr.bf16.mxu0 0
        %3103 = vmatpush1.bf16.msra.mxu0 0
        %3104 = vmatprep.subr.bf16.mxu0 0
        %3105 = vmatpush1.bf16.msra.mxu0 0
        %3106 = vmatprep.subr.bf16.mxu0 0
        %3107 = vmatpush1.bf16.msra.mxu0 0
        %3108 = vmatprep.subr.bf16.mxu0 0
        %3109 = vmatpush1.bf16.msra.mxu0 0
        %3110 = vmatprep.subr.bf16.mxu0 0
        %3111 = vmatpush1.bf16.msra.mxu0 0
        %3112 = vmatprep.subr.bf16.mxu0 0
        %3113 = vmatpush1.bf16.msra.mxu0 0
        %3114 = vmatprep.subr.bf16.mxu0 0
        %3115 = vmatpush1.bf16.msra.mxu0 0
        %3116 = vmatprep.subr.bf16.mxu0 0
        %3117 = vmatpush1.bf16.msra.mxu0 0
        %3118 = vmatprep.subr.bf16.mxu0 0
        %3119 = vmatpush1.bf16.msra.mxu0 0
        %3120 = vmatprep.subr.bf16.mxu0 0
        %3121 = vmatpush1.bf16.msra.mxu0 0
        %3122 = vmatprep.mubr.bf16.mxu0 0
        %3123 = vmatmul.mubr.bf16.gmra.mrb[0].mxu0 %v3088
        %v3124 = vpop.f32.mrb[0].mxu0
        %v3125 = vadd.f32 %v3061, %v3124
        %v3126 = vpop.f32.mrb[0].mxu0
        %v3127 = vpop.f32.mrb[0].mxu0
        %v3128 = vpop.f32.mrb[0].mxu0
        %3129 = vdwg.mxu0
        %vm3130 = vcmask 8192
        %3131 = vst.msk [vmem:[%s389] sm:$0x1] %vm3130, %v3125
        %s3132 = sand.u32 %s274, 1
        %s3133 = scalar_lea.sflag [#allocation3], %s3132
        %s3134 = sand.u32 %s274, 1
        %s3135 = scalar_lea.vmem [#allocation2], %s3134
        // Predicated region
        $region65: #{efficientnet_haralick_forward.5} parent=63 // pred_check
          %p3136 = pneg %p284
        $region66: #{efficientnet_haralick_forward.5} parent=63 // pred_check_branch
          %3138 = sbr.rel (%p3136) target = $region68
        $region67: #{efficientnet_haralick_forward.5} parent=63 // pred_region
          %s3140 = ssub.s32 16, 16
          %3141 = vsyncadd %s3133, %s3140
          %s3142 = smul.addr %s25, 16
          %s3143 = scalar_lea.hbm %s11, %s3142
          %s3145 = sshll.u32 %s3135, 4
          %s3146 = int_to_ptr.vmem [resolvable:$true] %s3145
          %3148 = dma.vmem_to_hbm [thread:$0]  %s3146, 16, %s3143, %s3133
        $region68: #{efficientnet_haralick_forward.5} parent=63 // pred_fallthru
          _
      $region64: #{efficientnet_haralick_forward.5} parent=5 // pred_fallthru
        _
      %p3149 = scmp.le.s32.totalorder 2, %s20
      // Predicated region
      $region69: #{efficientnet_haralick_forward.5} parent=5 // pred_check
        %p3150 = pneg %p3149
      $region70: #{efficientnet_haralick_forward.5} parent=5 // pred_check_branch
        %3152 = sbr.rel (%p3150) target = $region72
      $region71: #{efficientnet_haralick_forward.5} parent=5 // pred_region
        %s3153 = ssub.s32 %s20, 2
        // Predicated region
        $region73: #{efficientnet_haralick_forward.5} parent=71 // pred_check
          %p3154 = pneg %p290
        $region74: #{efficientnet_haralick_forward.5} parent=71 // pred_check_branch
          %3156 = sbr.rel (%p3154) target = $region76
        $region75: #{efficientnet_haralick_forward.5} parent=71 // pred_region
          %s3157 = sand.u32 %s275, 1
          %s3158 = scalar_lea.sflag [#allocation3], %s3157
          %s3159 = sand.u32 %s275, 1
          %s3160 = scalar_lea.vmem [#allocation2], %s3159
          %3161 = dma.done %s3158, 16
        $region76: #{efficientnet_haralick_forward.5} parent=71 // pred_fallthru
          _
      $region72: #{efficientnet_haralick_forward.5} parent=5 // pred_fallthru
        _
    $region6: #{efficientnet_haralick_forward.5} parent=1 // loop_footer
      %s24 = sadd.s32 1, %s20
    $region7: #{efficientnet_haralick_forward.5} parent=1 // loop_footer_branch
      %19 = sbr.rel target = $region3
    $region8: #{efficientnet_haralick_forward.5} parent=1 // loop_exit
      _
    %3162 = vsyncpa [#allocation3], 1
    %s3163 = scalar_lea.sflag [#allocation3], 1
    %3164 = vsyncpa %s3163, 1

</llo_original>
